<compile_context>
chip_gen: v5e
topology: v5e:2x2
jax: 0.10.0
libtpu: 0.0.40
codegen_flags: <defaults>
</compile_context>

<pallas_src>
import functools

import jax
import jax.numpy as jnp
from jax import lax
from jax.experimental import pallas as pl
from jax.experimental.pallas import tpu as pltpu


# ---------------------------------------------------------------------------
# Fused forward kernel (one batch element per grid step).
# ---------------------------------------------------------------------------
def _fused_forward_kernel(x_ref, w1_ref, b1_ref, w2_ref, b2_ref,
                          fc1w_ref, fc1b_ref, fc2w_ref, fc2b_ref,
                          o_ref,
                          pad1_ref, patches1_ref, pad2_ref, patches2_ref,
                          *, H, W):
    H2, W2 = H // 2, W // 2            # after pool 1
    H4, W4 = H2 // 2, W2 // 2          # after pool 2
    C1, C2 = 32, 64

    def conv3x3_relu(pad_ref, patches_ref, w_ref, b_ref, h, w, cin):
        # pad_ref:     (h+2, w+2, cin) zero-padded input (already filled)
        # patches_ref: (h*w, 9*cin)    im2col scratch assembled in VMEM
        for kh in range(3):
            for kw in range(3):
                t = kh * 3 + kw
                col = pad_ref[kh:kh + h, kw:kw + w, :].reshape(h * w, cin)
                patches_ref[:, t * cin:(t + 1) * cin] = col
        # Single MXU matmul with contraction depth 9*cin.
        y = jnp.dot(patches_ref[...], w_ref[...],
                    preferred_element_type=jnp.float32)
        return jnp.maximum(y + b_ref[...], 0.0)           # (h*w, cout)

    def maxpool2x2(y, h, w, c):
        # y: (h*w, c) with rows ordered r = hh*w + ww
        a = y.reshape(h // 2, 2, w, c)
        a = jnp.max(a, axis=1)                            # pool along H
        a = a.reshape(h // 2, w // 2, 2, c)
        return jnp.max(a, axis=2)                         # pool along W

    # ---- conv1 (1 -> 32) + ReLU + 2x2 max pool ---------------------------
    pad1_ref[...] = jnp.zeros_like(pad1_ref)              # in-kernel pad=1 halo
    pad1_ref[1:H + 1, 1:W + 1, :] = x_ref[0]
    y1 = conv3x3_relu(pad1_ref, patches1_ref, w1_ref, b1_ref, H, W, 1)
    p1 = maxpool2x2(y1, H, W, C1)                         # (H2, W2, 32)

    # ---- conv2 (32 -> 64) + ReLU + 2x2 max pool --------------------------
    pad2_ref[...] = jnp.zeros_like(pad2_ref)
    pad2_ref[1:H2 + 1, 1:W2 + 1, :] = p1
    y2 = conv3x3_relu(pad2_ref, patches2_ref, w2_ref, b2_ref, H2, W2, C1)
    p2 = maxpool2x2(y2, H2, W2, C2)                       # (H4, W4, 64)

    # ---- classifier head: fc1 + ReLU + fc2 -------------------------------
    # The PyTorch NCHW flatten is pre-folded into fc1w_ref, which is laid out
    # as (s, c, 128) with s = h*W4 + w, so no activation transpose/flatten is
    # needed: fc1 accumulates (1, C2) x (C2, 128) dots over the 32 positions.
    feat = p2.reshape(H4 * W4, C2)                        # (32, 64)
    hid = fc1b_ref[...]                                   # (1, 128)
    for s in range(H4 * W4):
        hid = hid + jnp.dot(feat[s:s + 1, :], fc1w_ref[s],
                            preferred_element_type=jnp.float32)
    hid = jnp.maximum(hid, 0.0)
    # TODO(synk): dropout(0.5) / dropout_fc(0.5) are identity in eval mode;
    # train-mode RNG masking is not implemented here.
    out = jnp.dot(hid, fc2w_ref[...],
                  preferred_element_type=jnp.float32) + fc2b_ref[...]
    o_ref[0] = out.astype(o_ref.dtype)


def fused_forward(x_nhwc, kp):
    N, H, W, _ = x_nhwc.shape
    H2, W2 = H // 2, W // 2
    H4, W4 = H2 // 2, W2 // 2
    G = kp["fc2_w"].shape[1]

    kernel = functools.partial(_fused_forward_kernel, H=H, W=W)

    flops = 2 * N * (H * W * 9 * 1 * 32 + H2 * W2 * 9 * 32 * 64
                     + H4 * W4 * 64 * 128 + 128 * G)
    weight_elems = sum(int(kp[k].size) for k in
                       ("w1", "b1", "w2", "b2", "fc1_w", "fc1_b", "fc2_w", "fc2_b"))
    bytes_accessed = 4 * (int(x_nhwc.size) + weight_elems + N * G)

    out = pl.pallas_call(
        kernel,
        out_shape=jax.ShapeDtypeStruct((N, 1, G), jnp.float32),
        grid=(N,),
        in_specs=[
            pl.BlockSpec((1, H, W, 1), lambda n: (n, 0, 0, 0)),      # x
            pl.BlockSpec((9, 32), lambda n: (0, 0)),                 # conv1 w (9*1, 32)
            pl.BlockSpec((1, 32), lambda n: (0, 0)),                 # conv1 b
            pl.BlockSpec((9 * 32, 64), lambda n: (0, 0)),            # conv2 w (288, 64)
            pl.BlockSpec((1, 64), lambda n: (0, 0)),                 # conv2 b
            pl.BlockSpec((H4 * W4, 64, 128), lambda n: (0, 0, 0)),   # fc1 w (s, c, j)
            pl.BlockSpec((1, 128), lambda n: (0, 0)),                # fc1 b
            pl.BlockSpec((128, G), lambda n: (0, 0)),                # fc2 w
            pl.BlockSpec((1, G), lambda n: (0, 0)),                  # fc2 b
        ],
        out_specs=pl.BlockSpec((1, 1, G), lambda n: (n, 0, 0)),
        scratch_shapes=[
            pltpu.VMEM((H + 2, W + 2, 1), jnp.float32),              # conv1 padded input
            pltpu.VMEM((H * W, 9), jnp.float32),                     # conv1 im2col patches
            pltpu.VMEM((H2 + 2, W2 + 2, 32), jnp.float32),           # conv2 padded input
            pltpu.VMEM((H2 * W2, 9 * 32), jnp.float32),              # conv2 im2col patches
        ],
        compiler_params=pltpu.CompilerParams(
            dimension_semantics=("parallel",)),
        cost_estimate=pl.CostEstimate(flops=flops, transcendentals=0,
                                      bytes_accessed=bytes_accessed),
    )(x_nhwc, kp["w1"], kp["b1"], kp["w2"], kp["b2"],
      kp["fc1_w"], kp["fc1_b"], kp["fc2_w"], kp["fc2_b"])
    return out.reshape(N, G)


# ---------------------------------------------------------------------------
# Parameter creation (deterministic, synthetic) + offline repacking.
# ---------------------------------------------------------------------------
def init_params(key, num_genres, input_length, n_mfcc):
    H4, W4 = n_mfcc // 4, input_length // 4              # two 2x2 pools
    flattened = 64 * H4 * W4
    ks = jax.random.split(key, 8)
    return {  # PyTorch-layout parameters
        "conv1_w": jax.random.normal(ks[0], (32, 1, 3, 3), jnp.float32) * 0.10,
        "conv1_b": jax.random.normal(ks[1], (32,), jnp.float32) * 0.10,
        "conv2_w": jax.random.normal(ks[2], (64, 32, 3, 3), jnp.float32) * 0.05,
        "conv2_b": jax.random.normal(ks[3], (64,), jnp.float32) * 0.10,
        "fc1_w": jax.random.normal(ks[4], (128, flattened), jnp.float32) * 0.02,
        "fc1_b": jax.random.normal(ks[5], (128,), jnp.float32) * 0.10,
        "fc2_w": jax.random.normal(ks[6], (num_genres, 128), jnp.float32) * 0.05,
        "fc2_b": jax.random.normal(ks[7], (num_genres,), jnp.float32) * 0.10,
    }


def to_kernel_params(p, n_mfcc, input_length):
    """One-time offline repacking of PyTorch-layout params for the kernel."""
    H4, W4 = n_mfcc // 4, input_length // 4

    def conv_w_im2col(w):
        # (Cout, Cin, 3, 3) -> (9*Cin, Cout), row index = (kh*3+kw)*Cin + cin
        cout, cin = w.shape[0], w.shape[1]
        return jnp.transpose(w, (2, 3, 1, 0)).reshape(9 * cin, cout)

    # Fold the PyTorch NCHW flatten (index = c*H4*W4 + h*W4 + w) into fc1's
    # weights so the kernel consumes the pooled NHWC activations directly:
    # fc1_w_k[s, c, j] with s = h*W4 + w.
    fc1 = p["fc1_w"].reshape(128, 64, H4, W4)             # (j, c, h, w)
    fc1 = jnp.transpose(fc1, (2, 3, 1, 0))                # (h, w, c, j)
    fc1 = fc1.reshape(H4 * W4, 64, 128)                   # (s, c, j)

    return {
        "w1": conv_w_im2col(p["conv1_w"]), "b1": p["conv1_b"][None, :],
        "w2": conv_w_im2col(p["conv2_w"]), "b2": p["conv2_b"][None, :],
        "fc1_w": fc1, "fc1_b": p["fc1_b"][None, :],
        "fc2_w": p["fc2_w"].T, "fc2_b": p["fc2_b"][None, :],
    }


@jax.jit
def music_genre_cnn_forward(x_nchw, kp):
    N, _, H, W = x_nchw.shape
    x = x_nchw.reshape(N, H, W, 1)        # NCHW with Cin=1 -> NHWC (free)
    return fused_forward(x, kp)


# ---------------------------------------------------------------------------
# Pure-JAX reference of the PyTorch forward (f32 precision) for sanity check.
# ---------------------------------------------------------------------------
def reference_forward(x, p):
    hp = lax.Precision.HIGHEST

    def conv(x, w, b):
        y = lax.conv_general_dilated(
            x, w, window_strides=(1, 1), padding="SAME",
            dimension_numbers=("NCHW", "OIHW", "NCHW"), precision=hp)
        return y + b[None, :, None, None]

    def pool(x):
        return lax.reduce_window(
            x, -jnp.inf, lax.max, (1, 1, 2, 2), (1, 1, 2, 2), "VALID")

    y = pool(jax.nn.relu(conv(x, p["conv1_w"], p["conv1_b"])))
    y = pool(jax.nn.relu(conv(y, p["conv2_w"], p["conv2_b"])))
    y = y.reshape(y.shape[0], -1)                          # NCHW flatten
    y = jax.nn.relu(jnp.dot(y, p["fc1_w"].T, precision=hp) + p["fc1_b"])
    return jnp.dot(y, p["fc2_w"].T, precision=hp) + p["fc2_b"]


if __name__ == "__main__":
    # Small-shape instantiation consistent with the module:
    # batch=2, 1 input channel, n_mfcc=16, input_length=32, num_genres=8.
    batch, n_mfcc, input_length, num_genres = 2, 16, 32, 8

    key = jax.random.PRNGKey(0)
    kx, kparam = jax.random.split(key)
    x = jax.random.normal(kx, (batch, 1, n_mfcc, input_length), jnp.float32)

    params = init_params(kparam, num_genres, input_length, n_mfcc)
    kparams = to_kernel_params(params, n_mfcc, input_length)

    out = music_genre_cnn_forward(x, kparams)
    out = jax.block_until_ready(out)
    assert out.shape == (batch, num_genres)

    ref = reference_forward(x, params)
    rel_err = float(jnp.max(jnp.abs(out - ref)) / (jnp.max(jnp.abs(ref)) + 1e-6))
    assert rel_err < 1e-3, f"mismatch vs reference: rel_err={rel_err}"

    print("KERNEL_OK")
</pallas_src>

<mosaic_0001>
module attributes {stable_mosaic.version = 11 : i64} {
  func.func @_fused_forward_kernel(%arg0: i32, %arg1: memref<1x16x32x1xf32, #tpu.memory_space<vmem>>, %arg2: memref<9x32xf32, #tpu.memory_space<vmem>>, %arg3: memref<1x32xf32, #tpu.memory_space<vmem>>, %arg4: memref<288x64xf32, #tpu.memory_space<vmem>>, %arg5: memref<1x64xf32, #tpu.memory_space<vmem>>, %arg6: memref<32x64x128xf32, #tpu.memory_space<vmem>>, %arg7: memref<1x128xf32, #tpu.memory_space<vmem>>, %arg8: memref<128x8xf32, #tpu.memory_space<vmem>>, %arg9: memref<1x8xf32, #tpu.memory_space<vmem>>, %arg10: memref<1x1x8xf32, #tpu.memory_space<vmem>>, %arg11: memref<18x34x1xf32, #tpu.memory_space<vmem>>, %arg12: memref<512x9xf32, #tpu.memory_space<vmem>>, %arg13: memref<10x18x32xf32, #tpu.memory_space<vmem>>, %arg14: memref<128x288xf32, #tpu.memory_space<vmem>>) attributes {dimension_semantics = [#tpu.dimension_semantics<parallel>], iteration_bounds = array<i64: 2>, scalar_prefetch = 0 : i64, scratch_operands = 4 : i64, tpu.core_type = #tpu.core_type<tc>, window_params = [{transform_indices = @transform_0, window_bounds = array<i64: 1, 16, 32, 1>}, {pipeline_mode = #tpu.pipeline_mode<synchronous>, transform_indices = @transform_1, window_bounds = array<i64: 9, 32>}, {pipeline_mode = #tpu.pipeline_mode<synchronous>, transform_indices = @transform_2, window_bounds = array<i64: 1, 32>}, {pipeline_mode = #tpu.pipeline_mode<synchronous>, transform_indices = @transform_3, window_bounds = array<i64: 288, 64>}, {pipeline_mode = #tpu.pipeline_mode<synchronous>, transform_indices = @transform_4, window_bounds = array<i64: 1, 64>}, {pipeline_mode = #tpu.pipeline_mode<synchronous>, transform_indices = @transform_5, window_bounds = array<i64: 32, 64, 128>}, {pipeline_mode = #tpu.pipeline_mode<synchronous>, transform_indices = @transform_6, window_bounds = array<i64: 1, 128>}, {pipeline_mode = #tpu.pipeline_mode<synchronous>, transform_indices = @transform_7, window_bounds = array<i64: 128, 8>}, {pipeline_mode = #tpu.pipeline_mode<synchronous>, transform_indices = @transform_8, window_bounds = array<i64: 1, 8>}, {transform_indices = @transform_9, window_bounds = array<i64: 1, 1, 8>}]} {
    %cst = arith.constant 0.000000e+00 : f32
    %0 = vector.broadcast %cst : f32 to vector<18x34x1xf32>
    %c0 = arith.constant 0 : index
    %c0_0 = arith.constant 0 : index
    %c0_1 = arith.constant 0 : index
    %1 = vector.load %arg11[%c0, %c0_0, %c0_1] : memref<18x34x1xf32, #tpu.memory_space<vmem>>, vector<18x34x1xf32>
    tpu.vector_store %arg11[%c0, %c0_0, %c0_1], %0 {strides = array<i32>} : memref<18x34x1xf32, #tpu.memory_space<vmem>>, vector<18x34x1xf32>,
    %c0_2 = arith.constant 0 : index
    %c0_3 = arith.constant 0 : index
    %c0_4 = arith.constant 0 : index
    %c0_5 = arith.constant 0 : index
    %2 = vector.load %arg1[%c0_2, %c0_3, %c0_4, %c0_5] : memref<1x16x32x1xf32, #tpu.memory_space<vmem>>, vector<1x16x32x1xf32>
    %3 = vector.shape_cast %2 : vector<1x16x32x1xf32> to vector<16x32x1xf32>
    %c1 = arith.constant 1 : index
    %c1_6 = arith.constant 1 : index
    %c0_7 = arith.constant 0 : index
    %4 = vector.load %arg11[%c1, %c1_6, %c0_7] : memref<18x34x1xf32, #tpu.memory_space<vmem>>, vector<16x32x1xf32>
    tpu.vector_store %arg11[%c1, %c1_6, %c0_7], %3 {strides = array<i32>} : memref<18x34x1xf32, #tpu.memory_space<vmem>>, vector<16x32x1xf32>,
    %c0_8 = arith.constant 0 : index
    %c0_9 = arith.constant 0 : index
    %c0_10 = arith.constant 0 : index
    %5 = vector.load %arg11[%c0_8, %c0_9, %c0_10] : memref<18x34x1xf32, #tpu.memory_space<vmem>>, vector<16x32x1xf32>
    %6 = vector.shape_cast %5 : vector<16x32x1xf32> to vector<512x1xf32>
    %c0_11 = arith.constant 0 : index
    %c0_12 = arith.constant 0 : index
    %7 = vector.load %arg12[%c0_11, %c0_12] : memref<512x9xf32, #tpu.memory_space<vmem>>, vector<512x1xf32>
    tpu.vector_store %arg12[%c0_11, %c0_12], %6 {strides = array<i32>} : memref<512x9xf32, #tpu.memory_space<vmem>>, vector<512x1xf32>,
    %c0_13 = arith.constant 0 : index
    %c1_14 = arith.constant 1 : index
    %c0_15 = arith.constant 0 : index
    %8 = vector.load %arg11[%c0_13, %c1_14, %c0_15] : memref<18x34x1xf32, #tpu.memory_space<vmem>>, vector<16x32x1xf32>
    %9 = vector.shape_cast %8 : vector<16x32x1xf32> to vector<512x1xf32>
    %c0_16 = arith.constant 0 : index
    %c1_17 = arith.constant 1 : index
    %10 = vector.load %arg12[%c0_16, %c1_17] : memref<512x9xf32, #tpu.memory_space<vmem>>, vector<512x1xf32>
    tpu.vector_store %arg12[%c0_16, %c1_17], %9 {strides = array<i32>} : memref<512x9xf32, #tpu.memory_space<vmem>>, vector<512x1xf32>,
    %c0_18 = arith.constant 0 : index
    %c2 = arith.constant 2 : index
    %c0_19 = arith.constant 0 : index
    %11 = vector.load %arg11[%c0_18, %c2, %c0_19] : memref<18x34x1xf32, #tpu.memory_space<vmem>>, vector<16x32x1xf32>
    %12 = vector.shape_cast %11 : vector<16x32x1xf32> to vector<512x1xf32>
    %c0_20 = arith.constant 0 : index
    %c2_21 = arith.constant 2 : index
    %13 = vector.load %arg12[%c0_20, %c2_21] : memref<512x9xf32, #tpu.memory_space<vmem>>, vector<512x1xf32>
    tpu.vector_store %arg12[%c0_20, %c2_21], %12 {strides = array<i32>} : memref<512x9xf32, #tpu.memory_space<vmem>>, vector<512x1xf32>,
    %c1_22 = arith.constant 1 : index
    %c0_23 = arith.constant 0 : index
    %c0_24 = arith.constant 0 : index
    %14 = vector.load %arg11[%c1_22, %c0_23, %c0_24] : memref<18x34x1xf32, #tpu.memory_space<vmem>>, vector<16x32x1xf32>
    %15 = vector.shape_cast %14 : vector<16x32x1xf32> to vector<512x1xf32>
    %c0_25 = arith.constant 0 : index
    %c3 = arith.constant 3 : index
    %16 = vector.load %arg12[%c0_25, %c3] : memref<512x9xf32, #tpu.memory_space<vmem>>, vector<512x1xf32>
    tpu.vector_store %arg12[%c0_25, %c3], %15 {strides = array<i32>} : memref<512x9xf32, #tpu.memory_space<vmem>>, vector<512x1xf32>,
    %c1_26 = arith.constant 1 : index
    %c1_27 = arith.constant 1 : index
    %c0_28 = arith.constant 0 : index
    %17 = vector.load %arg11[%c1_26, %c1_27, %c0_28] : memref<18x34x1xf32, #tpu.memory_space<vmem>>, vector<16x32x1xf32>
    %18 = vector.shape_cast %17 : vector<16x32x1xf32> to vector<512x1xf32>
    %c0_29 = arith.constant 0 : index
    %c4 = arith.constant 4 : index
    %19 = vector.load %arg12[%c0_29, %c4] : memref<512x9xf32, #tpu.memory_space<vmem>>, vector<512x1xf32>
    tpu.vector_store %arg12[%c0_29, %c4], %18 {strides = array<i32>} : memref<512x9xf32, #tpu.memory_space<vmem>>, vector<512x1xf32>,
    %c1_30 = arith.constant 1 : index
    %c2_31 = arith.constant 2 : index
    %c0_32 = arith.constant 0 : index
    %20 = vector.load %arg11[%c1_30, %c2_31, %c0_32] : memref<18x34x1xf32, #tpu.memory_space<vmem>>, vector<16x32x1xf32>
    %21 = vector.shape_cast %20 : vector<16x32x1xf32> to vector<512x1xf32>
    %c0_33 = arith.constant 0 : index
    %c5 = arith.constant 5 : index
    %22 = vector.load %arg12[%c0_33, %c5] : memref<512x9xf32, #tpu.memory_space<vmem>>, vector<512x1xf32>
    tpu.vector_store %arg12[%c0_33, %c5], %21 {strides = array<i32>} : memref<512x9xf32, #tpu.memory_space<vmem>>, vector<512x1xf32>,
    %c2_34 = arith.constant 2 : index
    %c0_35 = arith.constant 0 : index
    %c0_36 = arith.constant 0 : index
    %23 = vector.load %arg11[%c2_34, %c0_35, %c0_36] : memref<18x34x1xf32, #tpu.memory_space<vmem>>, vector<16x32x1xf32>
    %24 = vector.shape_cast %23 : vector<16x32x1xf32> to vector<512x1xf32>
    %c0_37 = arith.constant 0 : index
    %c6 = arith.constant 6 : index
    %25 = vector.load %arg12[%c0_37, %c6] : memref<512x9xf32, #tpu.memory_space<vmem>>, vector<512x1xf32>
    tpu.vector_store %arg12[%c0_37, %c6], %24 {strides = array<i32>} : memref<512x9xf32, #tpu.memory_space<vmem>>, vector<512x1xf32>,
    %c2_38 = arith.constant 2 : index
    %c1_39 = arith.constant 1 : index
    %c0_40 = arith.constant 0 : index
    %26 = vector.load %arg11[%c2_38, %c1_39, %c0_40] : memref<18x34x1xf32, #tpu.memory_space<vmem>>, vector<16x32x1xf32>
    %27 = vector.shape_cast %26 : vector<16x32x1xf32> to vector<512x1xf32>
    %c0_41 = arith.constant 0 : index
    %c7 = arith.constant 7 : index
    %28 = vector.load %arg12[%c0_41, %c7] : memref<512x9xf32, #tpu.memory_space<vmem>>, vector<512x1xf32>
    tpu.vector_store %arg12[%c0_41, %c7], %27 {strides = array<i32>} : memref<512x9xf32, #tpu.memory_space<vmem>>, vector<512x1xf32>,
    %c2_42 = arith.constant 2 : index
    %c2_43 = arith.constant 2 : index
    %c0_44 = arith.constant 0 : index
    %29 = vector.load %arg11[%c2_42, %c2_43, %c0_44] : memref<18x34x1xf32, #tpu.memory_space<vmem>>, vector<16x32x1xf32>
    %30 = vector.shape_cast %29 : vector<16x32x1xf32> to vector<512x1xf32>
    %c0_45 = arith.constant 0 : index
    %c8 = arith.constant 8 : index
    %31 = vector.load %arg12[%c0_45, %c8] : memref<512x9xf32, #tpu.memory_space<vmem>>, vector<512x1xf32>
    tpu.vector_store %arg12[%c0_45, %c8], %30 {strides = array<i32>} : memref<512x9xf32, #tpu.memory_space<vmem>>, vector<512x1xf32>,
    %c0_46 = arith.constant 0 : index
    %c0_47 = arith.constant 0 : index
    %32 = vector.load %arg12[%c0_46, %c0_47] : memref<512x9xf32, #tpu.memory_space<vmem>>, vector<512x9xf32>
    %c0_48 = arith.constant 0 : index
    %c0_49 = arith.constant 0 : index
    %33 = vector.load %arg2[%c0_48, %c0_49] : memref<9x32xf32, #tpu.memory_space<vmem>>, vector<9x32xf32>
    %cst_50 = arith.constant dense<0.000000e+00> : vector<512x32xf32>
    %34 = tpu.matmul %32, %33, %cst_50 {dimension_numbers = #tpu.dot_dimension_numbers<[1], [0], [0], [1], [0, 0, 1, 1], [], []>} : vector<512x9xf32>, vector<9x32xf32>, vector<512x32xf32> -> vector<512x32xf32>
    %c0_51 = arith.constant 0 : index
    %c0_52 = arith.constant 0 : index
    %35 = vector.load %arg3[%c0_51, %c0_52] : memref<1x32xf32, #tpu.memory_space<vmem>>, vector<1x32xf32>
    %36 = vector.broadcast %35 : vector<1x32xf32> to vector<512x32xf32>
    %37 = arith.addf %34, %36 : vector<512x32xf32>
    %cst_53 = arith.constant 0.000000e+00 : f32
    %38 = vector.broadcast %cst_53 : f32 to vector<512x32xf32>
    %39 = arith.maximumf %37, %38 : vector<512x32xf32>
    %40 = vector.shape_cast %39 : vector<512x32xf32> to vector<8x2x32x32xf32>
    %cst_54 = arith.constant dense<0xFF800000> : vector<8x32x32xf32>
    %41 = vector.multi_reduction <maximumf>, %40, %cst_54 [1] : vector<8x2x32x32xf32> to vector<8x32x32xf32>
    %42 = vector.shape_cast %41 : vector<8x32x32xf32> to vector<8x16x2x32xf32>
    %cst_55 = arith.constant dense<0xFF800000> : vector<8x16x32xf32>
    %43 = vector.multi_reduction <maximumf>, %42, %cst_55 [2] : vector<8x16x2x32xf32> to vector<8x16x32xf32>
    %cst_56 = arith.constant 0.000000e+00 : f32
    %44 = vector.broadcast %cst_56 : f32 to vector<10x18x32xf32>
    %c0_57 = arith.constant 0 : index
    %c0_58 = arith.constant 0 : index
    %c0_59 = arith.constant 0 : index
    %45 = vector.load %arg13[%c0_57, %c0_58, %c0_59] : memref<10x18x32xf32, #tpu.memory_space<vmem>>, vector<10x18x32xf32>
    tpu.vector_store %arg13[%c0_57, %c0_58, %c0_59], %44 {strides = array<i32>} : memref<10x18x32xf32, #tpu.memory_space<vmem>>, vector<10x18x32xf32>,
    %c1_60 = arith.constant 1 : index
    %c1_61 = arith.constant 1 : index
    %c0_62 = arith.constant 0 : index
    %46 = vector.load %arg13[%c1_60, %c1_61, %c0_62] : memref<10x18x32xf32, #tpu.memory_space<vmem>>, vector<8x16x32xf32>
    tpu.vector_store %arg13[%c1_60, %c1_61, %c0_62], %43 {strides = array<i32>} : memref<10x18x32xf32, #tpu.memory_space<vmem>>, vector<8x16x32xf32>,
    %c0_63 = arith.constant 0 : index
    %c0_64 = arith.constant 0 : index
    %c0_65 = arith.constant 0 : index
    %47 = vector.load %arg13[%c0_63, %c0_64, %c0_65] : memref<10x18x32xf32, #tpu.memory_space<vmem>>, vector<8x16x32xf32>
    %48 = vector.shape_cast %47 : vector<8x16x32xf32> to vector<128x32xf32>
    %c0_66 = arith.constant 0 : index
    %c0_67 = arith.constant 0 : index
    %49 = vector.load %arg14[%c0_66, %c0_67] : memref<128x288xf32, #tpu.memory_space<vmem>>, vector<128x32xf32>
    tpu.vector_store %arg14[%c0_66, %c0_67], %48 {strides = array<i32>} : memref<128x288xf32, #tpu.memory_space<vmem>>, vector<128x32xf32>,
    %c0_68 = arith.constant 0 : index
    %c1_69 = arith.constant 1 : index
    %c0_70 = arith.constant 0 : index
    %50 = vector.load %arg13[%c0_68, %c1_69, %c0_70] : memref<10x18x32xf32, #tpu.memory_space<vmem>>, vector<8x16x32xf32>
    %51 = vector.shape_cast %50 : vector<8x16x32xf32> to vector<128x32xf32>
    %c0_71 = arith.constant 0 : index
    %c32 = arith.constant 32 : index
    %52 = vector.load %arg14[%c0_71, %c32] : memref<128x288xf32, #tpu.memory_space<vmem>>, vector<128x32xf32>
    tpu.vector_store %arg14[%c0_71, %c32], %51 {strides = array<i32>} : memref<128x288xf32, #tpu.memory_space<vmem>>, vector<128x32xf32>,
    %c0_72 = arith.constant 0 : index
    %c2_73 = arith.constant 2 : index
    %c0_74 = arith.constant 0 : index
    %53 = vector.load %arg13[%c0_72, %c2_73, %c0_74] : memref<10x18x32xf32, #tpu.memory_space<vmem>>, vector<8x16x32xf32>
    %54 = vector.shape_cast %53 : vector<8x16x32xf32> to vector<128x32xf32>
    %c0_75 = arith.constant 0 : index
    %c64 = arith.constant 64 : index
    %55 = vector.load %arg14[%c0_75, %c64] : memref<128x288xf32, #tpu.memory_space<vmem>>, vector<128x32xf32>
    tpu.vector_store %arg14[%c0_75, %c64], %54 {strides = array<i32>} : memref<128x288xf32, #tpu.memory_space<vmem>>, vector<128x32xf32>,
    %c1_76 = arith.constant 1 : index
    %c0_77 = arith.constant 0 : index
    %c0_78 = arith.constant 0 : index
    %56 = vector.load %arg13[%c1_76, %c0_77, %c0_78] : memref<10x18x32xf32, #tpu.memory_space<vmem>>, vector<8x16x32xf32>
    %57 = vector.shape_cast %56 : vector<8x16x32xf32> to vector<128x32xf32>
    %c0_79 = arith.constant 0 : index
    %c96 = arith.constant 96 : index
    %58 = vector.load %arg14[%c0_79, %c96] : memref<128x288xf32, #tpu.memory_space<vmem>>, vector<128x32xf32>
    tpu.vector_store %arg14[%c0_79, %c96], %57 {strides = array<i32>} : memref<128x288xf32, #tpu.memory_space<vmem>>, vector<128x32xf32>,
    %c1_80 = arith.constant 1 : index
    %c1_81 = arith.constant 1 : index
    %c0_82 = arith.constant 0 : index
    %59 = vector.load %arg13[%c1_80, %c1_81, %c0_82] : memref<10x18x32xf32, #tpu.memory_space<vmem>>, vector<8x16x32xf32>
    %60 = vector.shape_cast %59 : vector<8x16x32xf32> to vector<128x32xf32>
    %c0_83 = arith.constant 0 : index
    %c128 = arith.constant 128 : index
    %61 = vector.load %arg14[%c0_83, %c128] : memref<128x288xf32, #tpu.memory_space<vmem>>, vector<128x32xf32>
    tpu.vector_store %arg14[%c0_83, %c128], %60 {strides = array<i32>} : memref<128x288xf32, #tpu.memory_space<vmem>>, vector<128x32xf32>,
    %c1_84 = arith.constant 1 : index
    %c2_85 = arith.constant 2 : index
    %c0_86 = arith.constant 0 : index
    %62 = vector.load %arg13[%c1_84, %c2_85, %c0_86] : memref<10x18x32xf32, #tpu.memory_space<vmem>>, vector<8x16x32xf32>
    %63 = vector.shape_cast %62 : vector<8x16x32xf32> to vector<128x32xf32>
    %c0_87 = arith.constant 0 : index
    %c160 = arith.constant 160 : index
    %64 = vector.load %arg14[%c0_87, %c160] : memref<128x288xf32, #tpu.memory_space<vmem>>, vector<128x32xf32>
    tpu.vector_store %arg14[%c0_87, %c160], %63 {strides = array<i32>} : memref<128x288xf32, #tpu.memory_space<vmem>>, vector<128x32xf32>,
    %c2_88 = arith.constant 2 : index
    %c0_89 = arith.constant 0 : index
    %c0_90 = arith.constant 0 : index
    %65 = vector.load %arg13[%c2_88, %c0_89, %c0_90] : memref<10x18x32xf32, #tpu.memory_space<vmem>>, vector<8x16x32xf32>
    %66 = vector.shape_cast %65 : vector<8x16x32xf32> to vector<128x32xf32>
    %c0_91 = arith.constant 0 : index
    %c192 = arith.constant 192 : index
    %67 = vector.load %arg14[%c0_91, %c192] : memref<128x288xf32, #tpu.memory_space<vmem>>, vector<128x32xf32>
    tpu.vector_store %arg14[%c0_91, %c192], %66 {strides = array<i32>} : memref<128x288xf32, #tpu.memory_space<vmem>>, vector<128x32xf32>,
    %c2_92 = arith.constant 2 : index
    %c1_93 = arith.constant 1 : index
    %c0_94 = arith.constant 0 : index
    %68 = vector.load %arg13[%c2_92, %c1_93, %c0_94] : memref<10x18x32xf32, #tpu.memory_space<vmem>>, vector<8x16x32xf32>
    %69 = vector.shape_cast %68 : vector<8x16x32xf32> to vector<128x32xf32>
    %c0_95 = arith.constant 0 : index
    %c224 = arith.constant 224 : index
    %70 = vector.load %arg14[%c0_95, %c224] : memref<128x288xf32, #tpu.memory_space<vmem>>, vector<128x32xf32>
    tpu.vector_store %arg14[%c0_95, %c224], %69 {strides = array<i32>} : memref<128x288xf32, #tpu.memory_space<vmem>>, vector<128x32xf32>,
    %c2_96 = arith.constant 2 : index
    %c2_97 = arith.constant 2 : index
    %c0_98 = arith.constant 0 : index
    %71 = vector.load %arg13[%c2_96, %c2_97, %c0_98] : memref<10x18x32xf32, #tpu.memory_space<vmem>>, vector<8x16x32xf32>
    %72 = vector.shape_cast %71 : vector<8x16x32xf32> to vector<128x32xf32>
    %c0_99 = arith.constant 0 : index
    %c256 = arith.constant 256 : index
    %73 = vector.load %arg14[%c0_99, %c256] : memref<128x288xf32, #tpu.memory_space<vmem>>, vector<128x32xf32>
    tpu.vector_store %arg14[%c0_99, %c256], %72 {strides = array<i32>} : memref<128x288xf32, #tpu.memory_space<vmem>>, vector<128x32xf32>,
    %c0_100 = arith.constant 0 : index
    %c0_101 = arith.constant 0 : index
    %74 = vector.load %arg14[%c0_100, %c0_101] : memref<128x288xf32, #tpu.memory_space<vmem>>, vector<128x288xf32>
    %c0_102 = arith.constant 0 : index
    %c0_103 = arith.constant 0 : index
    %75 = vector.load %arg4[%c0_102, %c0_103] : memref<288x64xf32, #tpu.memory_space<vmem>>, vector<288x64xf32>
    %cst_104 = arith.constant dense<0.000000e+00> : vector<128x64xf32>
    %76 = tpu.matmul %74, %75, %cst_104 {dimension_numbers = #tpu.dot_dimension_numbers<[1], [0], [0], [1], [0, 0, 1, 1], [], []>} : vector<128x288xf32>, vector<288x64xf32>, vector<128x64xf32> -> vector<128x64xf32>
    %c0_105 = arith.constant 0 : index
    %c0_106 = arith.constant 0 : index
    %77 = vector.load %arg5[%c0_105, %c0_106] : memref<1x64xf32, #tpu.memory_space<vmem>>, vector<1x64xf32>
    %78 = vector.broadcast %77 : vector<1x64xf32> to vector<128x64xf32>
    %79 = arith.addf %76, %78 : vector<128x64xf32>
    %cst_107 = arith.constant 0.000000e+00 : f32
    %80 = vector.broadcast %cst_107 : f32 to vector<128x64xf32>
    %81 = arith.maximumf %79, %80 : vector<128x64xf32>
    %82 = vector.shape_cast %81 : vector<128x64xf32> to vector<4x2x16x64xf32>
    %cst_108 = arith.constant dense<0xFF800000> : vector<4x16x64xf32>
    %83 = vector.multi_reduction <maximumf>, %82, %cst_108 [1] : vector<4x2x16x64xf32> to vector<4x16x64xf32>
    %84 = vector.shape_cast %83 : vector<4x16x64xf32> to vector<4x8x2x64xf32>
    %cst_109 = arith.constant dense<0xFF800000> : vector<4x8x64xf32>
    %85 = vector.multi_reduction <maximumf>, %84, %cst_109 [2] : vector<4x8x2x64xf32> to vector<4x8x64xf32>
    %86 = vector.shape_cast %85 : vector<4x8x64xf32> to vector<32x64xf32>
    %c0_110 = arith.constant 0 : index
    %c0_111 = arith.constant 0 : index
    %87 = vector.load %arg7[%c0_110, %c0_111] : memref<1x128xf32, #tpu.memory_space<vmem>>, vector<1x128xf32>
    %88 = vector.extract_strided_slice %86 {offsets = [0, 0], sizes = [1, 64], strides = [1, 1]} : vector<32x64xf32> to vector<1x64xf32>
    %c0_112 = arith.constant 0 : index
    %c0_113 = arith.constant 0 : index
    %c0_114 = arith.constant 0 : index
    %89 = vector.load %arg6[%c0_112, %c0_113, %c0_114] : memref<32x64x128xf32, #tpu.memory_space<vmem>>, vector<1x64x128xf32>
    %90 = vector.shape_cast %89 : vector<1x64x128xf32> to vector<64x128xf32>
    %cst_115 = arith.constant dense<0.000000e+00> : vector<1x128xf32>
    %91 = tpu.matmul %88, %90, %cst_115 {dimension_numbers = #tpu.dot_dimension_numbers<[1], [0], [0], [1], [0, 0, 1, 1], [], []>} : vector<1x64xf32>, vector<64x128xf32>, vector<1x128xf32> -> vector<1x128xf32>
    %92 = arith.addf %87, %91 : vector<1x128xf32>
    %93 = vector.extract_strided_slice %86 {offsets = [1, 0], sizes = [1, 64], strides = [1, 1]} : vector<32x64xf32> to vector<1x64xf32>
    %c1_116 = arith.constant 1 : index
    %c0_117 = arith.constant 0 : index
    %c0_118 = arith.constant 0 : index
    %94 = vector.load %arg6[%c1_116, %c0_117, %c0_118] : memref<32x64x128xf32, #tpu.memory_space<vmem>>, vector<1x64x128xf32>
    %95 = vector.shape_cast %94 : vector<1x64x128xf32> to vector<64x128xf32>
    %cst_119 = arith.constant dense<0.000000e+00> : vector<1x128xf32>
    %96 = tpu.matmul %93, %95, %cst_119 {dimension_numbers = #tpu.dot_dimension_numbers<[1], [0], [0], [1], [0, 0, 1, 1], [], []>} : vector<1x64xf32>, vector<64x128xf32>, vector<1x128xf32> -> vector<1x128xf32>
    %97 = arith.addf %92, %96 : vector<1x128xf32>
    %98 = vector.extract_strided_slice %86 {offsets = [2, 0], sizes = [1, 64], strides = [1, 1]} : vector<32x64xf32> to vector<1x64xf32>
    %c2_120 = arith.constant 2 : index
    %c0_121 = arith.constant 0 : index
    %c0_122 = arith.constant 0 : index
    %99 = vector.load %arg6[%c2_120, %c0_121, %c0_122] : memref<32x64x128xf32, #tpu.memory_space<vmem>>, vector<1x64x128xf32>
    %100 = vector.shape_cast %99 : vector<1x64x128xf32> to vector<64x128xf32>
    %cst_123 = arith.constant dense<0.000000e+00> : vector<1x128xf32>
    %101 = tpu.matmul %98, %100, %cst_123 {dimension_numbers = #tpu.dot_dimension_numbers<[1], [0], [0], [1], [0, 0, 1, 1], [], []>} : vector<1x64xf32>, vector<64x128xf32>, vector<1x128xf32> -> vector<1x128xf32>
    %102 = arith.addf %97, %101 : vector<1x128xf32>
    %103 = vector.extract_strided_slice %86 {offsets = [3, 0], sizes = [1, 64], strides = [1, 1]} : vector<32x64xf32> to vector<1x64xf32>
    %c3_124 = arith.constant 3 : index
    %c0_125 = arith.constant 0 : index
    %c0_126 = arith.constant 0 : index
    %104 = vector.load %arg6[%c3_124, %c0_125, %c0_126] : memref<32x64x128xf32, #tpu.memory_space<vmem>>, vector<1x64x128xf32>
    %105 = vector.shape_cast %104 : vector<1x64x128xf32> to vector<64x128xf32>
    %cst_127 = arith.constant dense<0.000000e+00> : vector<1x128xf32>
    %106 = tpu.matmul %103, %105, %cst_127 {dimension_numbers = #tpu.dot_dimension_numbers<[1], [0], [0], [1], [0, 0, 1, 1], [], []>} : vector<1x64xf32>, vector<64x128xf32>, vector<1x128xf32> -> vector<1x128xf32>
    %107 = arith.addf %102, %106 : vector<1x128xf32>
    %108 = vector.extract_strided_slice %86 {offsets = [4, 0], sizes = [1, 64], strides = [1, 1]} : vector<32x64xf32> to vector<1x64xf32>
    %c4_128 = arith.constant 4 : index
    %c0_129 = arith.constant 0 : index
    %c0_130 = arith.constant 0 : index
    %109 = vector.load %arg6[%c4_128, %c0_129, %c0_130] : memref<32x64x128xf32, #tpu.memory_space<vmem>>, vector<1x64x128xf32>
    %110 = vector.shape_cast %109 : vector<1x64x128xf32> to vector<64x128xf32>
    %cst_131 = arith.constant dense<0.000000e+00> : vector<1x128xf32>
    %111 = tpu.matmul %108, %110, %cst_131 {dimension_numbers = #tpu.dot_dimension_numbers<[1], [0], [0], [1], [0, 0, 1, 1], [], []>} : vector<1x64xf32>, vector<64x128xf32>, vector<1x128xf32> -> vector<1x128xf32>
    %112 = arith.addf %107, %111 : vector<1x128xf32>
    %113 = vector.extract_strided_slice %86 {offsets = [5, 0], sizes = [1, 64], strides = [1, 1]} : vector<32x64xf32> to vector<1x64xf32>
    %c5_132 = arith.constant 5 : index
    %c0_133 = arith.constant 0 : index
    %c0_134 = arith.constant 0 : index
    %114 = vector.load %arg6[%c5_132, %c0_133, %c0_134] : memref<32x64x128xf32, #tpu.memory_space<vmem>>, vector<1x64x128xf32>
    %115 = vector.shape_cast %114 : vector<1x64x128xf32> to vector<64x128xf32>
    %cst_135 = arith.constant dense<0.000000e+00> : vector<1x128xf32>
    %116 = tpu.matmul %113, %115, %cst_135 {dimension_numbers = #tpu.dot_dimension_numbers<[1], [0], [0], [1], [0, 0, 1, 1], [], []>} : vector<1x64xf32>, vector<64x128xf32>, vector<1x128xf32> -> vector<1x128xf32>
    %117 = arith.addf %112, %116 : vector<1x128xf32>
    %118 = vector.extract_strided_slice %86 {offsets = [6, 0], sizes = [1, 64], strides = [1, 1]} : vector<32x64xf32> to vector<1x64xf32>
    %c6_136 = arith.constant 6 : index
    %c0_137 = arith.constant 0 : index
    %c0_138 = arith.constant 0 : index
    %119 = vector.load %arg6[%c6_136, %c0_137, %c0_138] : memref<32x64x128xf32, #tpu.memory_space<vmem>>, vector<1x64x128xf32>
    %120 = vector.shape_cast %119 : vector<1x64x128xf32> to vector<64x128xf32>
    %cst_139 = arith.constant dense<0.000000e+00> : vector<1x128xf32>
    %121 = tpu.matmul %118, %120, %cst_139 {dimension_numbers = #tpu.dot_dimension_numbers<[1], [0], [0], [1], [0, 0, 1, 1], [], []>} : vector<1x64xf32>, vector<64x128xf32>, vector<1x128xf32> -> vector<1x128xf32>
    %122 = arith.addf %117, %121 : vector<1x128xf32>
    %123 = vector.extract_strided_slice %86 {offsets = [7, 0], sizes = [1, 64], strides = [1, 1]} : vector<32x64xf32> to vector<1x64xf32>
    %c7_140 = arith.constant 7 : index
    %c0_141 = arith.constant 0 : index
    %c0_142 = arith.constant 0 : index
    %124 = vector.load %arg6[%c7_140, %c0_141, %c0_142] : memref<32x64x128xf32, #tpu.memory_space<vmem>>, vector<1x64x128xf32>
    %125 = vector.shape_cast %124 : vector<1x64x128xf32> to vector<64x128xf32>
    %cst_143 = arith.constant dense<0.000000e+00> : vector<1x128xf32>
    %126 = tpu.matmul %123, %125, %cst_143 {dimension_numbers = #tpu.dot_dimension_numbers<[1], [0], [0], [1], [0, 0, 1, 1], [], []>} : vector<1x64xf32>, vector<64x128xf32>, vector<1x128xf32> -> vector<1x128xf32>
    %127 = arith.addf %122, %126 : vector<1x128xf32>
    %128 = vector.extract_strided_slice %86 {offsets = [8, 0], sizes = [1, 64], strides = [1, 1]} : vector<32x64xf32> to vector<1x64xf32>
    %c8_144 = arith.constant 8 : index
    %c0_145 = arith.constant 0 : index
    %c0_146 = arith.constant 0 : index
    %129 = vector.load %arg6[%c8_144, %c0_145, %c0_146] : memref<32x64x128xf32, #tpu.memory_space<vmem>>, vector<1x64x128xf32>
    %130 = vector.shape_cast %129 : vector<1x64x128xf32> to vector<64x128xf32>
    %cst_147 = arith.constant dense<0.000000e+00> : vector<1x128xf32>
    %131 = tpu.matmul %128, %130, %cst_147 {dimension_numbers = #tpu.dot_dimension_numbers<[1], [0], [0], [1], [0, 0, 1, 1], [], []>} : vector<1x64xf32>, vector<64x128xf32>, vector<1x128xf32> -> vector<1x128xf32>
    %132 = arith.addf %127, %131 : vector<1x128xf32>
    %133 = vector.extract_strided_slice %86 {offsets = [9, 0], sizes = [1, 64], strides = [1, 1]} : vector<32x64xf32> to vector<1x64xf32>
    %c9 = arith.constant 9 : index
    %c0_148 = arith.constant 0 : index
    %c0_149 = arith.constant 0 : index
    %134 = vector.load %arg6[%c9, %c0_148, %c0_149] : memref<32x64x128xf32, #tpu.memory_space<vmem>>, vector<1x64x128xf32>
    %135 = vector.shape_cast %134 : vector<1x64x128xf32> to vector<64x128xf32>
    %cst_150 = arith.constant dense<0.000000e+00> : vector<1x128xf32>
    %136 = tpu.matmul %133, %135, %cst_150 {dimension_numbers = #tpu.dot_dimension_numbers<[1], [0], [0], [1], [0, 0, 1, 1], [], []>} : vector<1x64xf32>, vector<64x128xf32>, vector<1x128xf32> -> vector<1x128xf32>
    %137 = arith.addf %132, %136 : vector<1x128xf32>
    %138 = vector.extract_strided_slice %86 {offsets = [10, 0], sizes = [1, 64], strides = [1, 1]} : vector<32x64xf32> to vector<1x64xf32>
    %c10 = arith.constant 10 : index
    %c0_151 = arith.constant 0 : index
    %c0_152 = arith.constant 0 : index
    %139 = vector.load %arg6[%c10, %c0_151, %c0_152] : memref<32x64x128xf32, #tpu.memory_space<vmem>>, vector<1x64x128xf32>
    %140 = vector.shape_cast %139 : vector<1x64x128xf32> to vector<64x128xf32>
    %cst_153 = arith.constant dense<0.000000e+00> : vector<1x128xf32>
    %141 = tpu.matmul %138, %140, %cst_153 {dimension_numbers = #tpu.dot_dimension_numbers<[1], [0], [0], [1], [0, 0, 1, 1], [], []>} : vector<1x64xf32>, vector<64x128xf32>, vector<1x128xf32> -> vector<1x128xf32>
    %142 = arith.addf %137, %141 : vector<1x128xf32>
    %143 = vector.extract_strided_slice %86 {offsets = [11, 0], sizes = [1, 64], strides = [1, 1]} : vector<32x64xf32> to vector<1x64xf32>
    %c11 = arith.constant 11 : index
    %c0_154 = arith.constant 0 : index
    %c0_155 = arith.constant 0 : index
    %144 = vector.load %arg6[%c11, %c0_154, %c0_155] : memref<32x64x128xf32, #tpu.memory_space<vmem>>, vector<1x64x128xf32>
    %145 = vector.shape_cast %144 : vector<1x64x128xf32> to vector<64x128xf32>
    %cst_156 = arith.constant dense<0.000000e+00> : vector<1x128xf32>
    %146 = tpu.matmul %143, %145, %cst_156 {dimension_numbers = #tpu.dot_dimension_numbers<[1], [0], [0], [1], [0, 0, 1, 1], [], []>} : vector<1x64xf32>, vector<64x128xf32>, vector<1x128xf32> -> vector<1x128xf32>
    %147 = arith.addf %142, %146 : vector<1x128xf32>
    %148 = vector.extract_strided_slice %86 {offsets = [12, 0], sizes = [1, 64], strides = [1, 1]} : vector<32x64xf32> to vector<1x64xf32>
    %c12 = arith.constant 12 : index
    %c0_157 = arith.constant 0 : index
    %c0_158 = arith.constant 0 : index
    %149 = vector.load %arg6[%c12, %c0_157, %c0_158] : memref<32x64x128xf32, #tpu.memory_space<vmem>>, vector<1x64x128xf32>
    %150 = vector.shape_cast %149 : vector<1x64x128xf32> to vector<64x128xf32>
    %cst_159 = arith.constant dense<0.000000e+00> : vector<1x128xf32>
    %151 = tpu.matmul %148, %150, %cst_159 {dimension_numbers = #tpu.dot_dimension_numbers<[1], [0], [0], [1], [0, 0, 1, 1], [], []>} : vector<1x64xf32>, vector<64x128xf32>, vector<1x128xf32> -> vector<1x128xf32>
    %152 = arith.addf %147, %151 : vector<1x128xf32>
    %153 = vector.extract_strided_slice %86 {offsets = [13, 0], sizes = [1, 64], strides = [1, 1]} : vector<32x64xf32> to vector<1x64xf32>
    %c13 = arith.constant 13 : index
    %c0_160 = arith.constant 0 : index
    %c0_161 = arith.constant 0 : index
    %154 = vector.load %arg6[%c13, %c0_160, %c0_161] : memref<32x64x128xf32, #tpu.memory_space<vmem>>, vector<1x64x128xf32>
    %155 = vector.shape_cast %154 : vector<1x64x128xf32> to vector<64x128xf32>
    %cst_162 = arith.constant dense<0.000000e+00> : vector<1x128xf32>
    %156 = tpu.matmul %153, %155, %cst_162 {dimension_numbers = #tpu.dot_dimension_numbers<[1], [0], [0], [1], [0, 0, 1, 1], [], []>} : vector<1x64xf32>, vector<64x128xf32>, vector<1x128xf32> -> vector<1x128xf32>
    %157 = arith.addf %152, %156 : vector<1x128xf32>
    %158 = vector.extract_strided_slice %86 {offsets = [14, 0], sizes = [1, 64], strides = [1, 1]} : vector<32x64xf32> to vector<1x64xf32>
    %c14 = arith.constant 14 : index
    %c0_163 = arith.constant 0 : index
    %c0_164 = arith.constant 0 : index
    %159 = vector.load %arg6[%c14, %c0_163, %c0_164] : memref<32x64x128xf32, #tpu.memory_space<vmem>>, vector<1x64x128xf32>
    %160 = vector.shape_cast %159 : vector<1x64x128xf32> to vector<64x128xf32>
    %cst_165 = arith.constant dense<0.000000e+00> : vector<1x128xf32>
    %161 = tpu.matmul %158, %160, %cst_165 {dimension_numbers = #tpu.dot_dimension_numbers<[1], [0], [0], [1], [0, 0, 1, 1], [], []>} : vector<1x64xf32>, vector<64x128xf32>, vector<1x128xf32> -> vector<1x128xf32>
    %162 = arith.addf %157, %161 : vector<1x128xf32>
    %163 = vector.extract_strided_slice %86 {offsets = [15, 0], sizes = [1, 64], strides = [1, 1]} : vector<32x64xf32> to vector<1x64xf32>
    %c15 = arith.constant 15 : index
    %c0_166 = arith.constant 0 : index
    %c0_167 = arith.constant 0 : index
    %164 = vector.load %arg6[%c15, %c0_166, %c0_167] : memref<32x64x128xf32, #tpu.memory_space<vmem>>, vector<1x64x128xf32>
    %165 = vector.shape_cast %164 : vector<1x64x128xf32> to vector<64x128xf32>
    %cst_168 = arith.constant dense<0.000000e+00> : vector<1x128xf32>
    %166 = tpu.matmul %163, %165, %cst_168 {dimension_numbers = #tpu.dot_dimension_numbers<[1], [0], [0], [1], [0, 0, 1, 1], [], []>} : vector<1x64xf32>, vector<64x128xf32>, vector<1x128xf32> -> vector<1x128xf32>
    %167 = arith.addf %162, %166 : vector<1x128xf32>
    %168 = vector.extract_strided_slice %86 {offsets = [16, 0], sizes = [1, 64], strides = [1, 1]} : vector<32x64xf32> to vector<1x64xf32>
    %c16 = arith.constant 16 : index
    %c0_169 = arith.constant 0 : index
    %c0_170 = arith.constant 0 : index
    %169 = vector.load %arg6[%c16, %c0_169, %c0_170] : memref<32x64x128xf32, #tpu.memory_space<vmem>>, vector<1x64x128xf32>
    %170 = vector.shape_cast %169 : vector<1x64x128xf32> to vector<64x128xf32>
    %cst_171 = arith.constant dense<0.000000e+00> : vector<1x128xf32>
    %171 = tpu.matmul %168, %170, %cst_171 {dimension_numbers = #tpu.dot_dimension_numbers<[1], [0], [0], [1], [0, 0, 1, 1], [], []>} : vector<1x64xf32>, vector<64x128xf32>, vector<1x128xf32> -> vector<1x128xf32>
    %172 = arith.addf %167, %171 : vector<1x128xf32>
    %173 = vector.extract_strided_slice %86 {offsets = [17, 0], sizes = [1, 64], strides = [1, 1]} : vector<32x64xf32> to vector<1x64xf32>
    %c17 = arith.constant 17 : index
    %c0_172 = arith.constant 0 : index
    %c0_173 = arith.constant 0 : index
    %174 = vector.load %arg6[%c17, %c0_172, %c0_173] : memref<32x64x128xf32, #tpu.memory_space<vmem>>, vector<1x64x128xf32>
    %175 = vector.shape_cast %174 : vector<1x64x128xf32> to vector<64x128xf32>
    %cst_174 = arith.constant dense<0.000000e+00> : vector<1x128xf32>
    %176 = tpu.matmul %173, %175, %cst_174 {dimension_numbers = #tpu.dot_dimension_numbers<[1], [0], [0], [1], [0, 0, 1, 1], [], []>} : vector<1x64xf32>, vector<64x128xf32>, vector<1x128xf32> -> vector<1x128xf32>
    %177 = arith.addf %172, %176 : vector<1x128xf32>
    %178 = vector.extract_strided_slice %86 {offsets = [18, 0], sizes = [1, 64], strides = [1, 1]} : vector<32x64xf32> to vector<1x64xf32>
    %c18 = arith.constant 18 : index
    %c0_175 = arith.constant 0 : index
    %c0_176 = arith.constant 0 : index
    %179 = vector.load %arg6[%c18, %c0_175, %c0_176] : memref<32x64x128xf32, #tpu.memory_space<vmem>>, vector<1x64x128xf32>
    %180 = vector.shape_cast %179 : vector<1x64x128xf32> to vector<64x128xf32>
    %cst_177 = arith.constant dense<0.000000e+00> : vector<1x128xf32>
    %181 = tpu.matmul %178, %180, %cst_177 {dimension_numbers = #tpu.dot_dimension_numbers<[1], [0], [0], [1], [0, 0, 1, 1], [], []>} : vector<1x64xf32>, vector<64x128xf32>, vector<1x128xf32> -> vector<1x128xf32>
    %182 = arith.addf %177, %181 : vector<1x128xf32>
    %183 = vector.extract_strided_slice %86 {offsets = [19, 0], sizes = [1, 64], strides = [1, 1]} : vector<32x64xf32> to vector<1x64xf32>
    %c19 = arith.constant 19 : index
    %c0_178 = arith.constant 0 : index
    %c0_179 = arith.constant 0 : index
    %184 = vector.load %arg6[%c19, %c0_178, %c0_179] : memref<32x64x128xf32, #tpu.memory_space<vmem>>, vector<1x64x128xf32>
    %185 = vector.shape_cast %184 : vector<1x64x128xf32> to vector<64x128xf32>
    %cst_180 = arith.constant dense<0.000000e+00> : vector<1x128xf32>
    %186 = tpu.matmul %183, %185, %cst_180 {dimension_numbers = #tpu.dot_dimension_numbers<[1], [0], [0], [1], [0, 0, 1, 1], [], []>} : vector<1x64xf32>, vector<64x128xf32>, vector<1x128xf32> -> vector<1x128xf32>
    %187 = arith.addf %182, %186 : vector<1x128xf32>
    %188 = vector.extract_strided_slice %86 {offsets = [20, 0], sizes = [1, 64], strides = [1, 1]} : vector<32x64xf32> to vector<1x64xf32>
    %c20 = arith.constant 20 : index
    %c0_181 = arith.constant 0 : index
    %c0_182 = arith.constant 0 : index
    %189 = vector.load %arg6[%c20, %c0_181, %c0_182] : memref<32x64x128xf32, #tpu.memory_space<vmem>>, vector<1x64x128xf32>
    %190 = vector.shape_cast %189 : vector<1x64x128xf32> to vector<64x128xf32>
    %cst_183 = arith.constant dense<0.000000e+00> : vector<1x128xf32>
    %191 = tpu.matmul %188, %190, %cst_183 {dimension_numbers = #tpu.dot_dimension_numbers<[1], [0], [0], [1], [0, 0, 1, 1], [], []>} : vector<1x64xf32>, vector<64x128xf32>, vector<1x128xf32> -> vector<1x128xf32>
    %192 = arith.addf %187, %191 : vector<1x128xf32>
    %193 = vector.extract_strided_slice %86 {offsets = [21, 0], sizes = [1, 64], strides = [1, 1]} : vector<32x64xf32> to vector<1x64xf32>
    %c21 = arith.constant 21 : index
    %c0_184 = arith.constant 0 : index
    %c0_185 = arith.constant 0 : index
    %194 = vector.load %arg6[%c21, %c0_184, %c0_185] : memref<32x64x128xf32, #tpu.memory_space<vmem>>, vector<1x64x128xf32>
    %195 = vector.shape_cast %194 : vector<1x64x128xf32> to vector<64x128xf32>
    %cst_186 = arith.constant dense<0.000000e+00> : vector<1x128xf32>
    %196 = tpu.matmul %193, %195, %cst_186 {dimension_numbers = #tpu.dot_dimension_numbers<[1], [0], [0], [1], [0, 0, 1, 1], [], []>} : vector<1x64xf32>, vector<64x128xf32>, vector<1x128xf32> -> vector<1x128xf32>
    %197 = arith.addf %192, %196 : vector<1x128xf32>
    %198 = vector.extract_strided_slice %86 {offsets = [22, 0], sizes = [1, 64], strides = [1, 1]} : vector<32x64xf32> to vector<1x64xf32>
    %c22 = arith.constant 22 : index
    %c0_187 = arith.constant 0 : index
    %c0_188 = arith.constant 0 : index
    %199 = vector.load %arg6[%c22, %c0_187, %c0_188] : memref<32x64x128xf32, #tpu.memory_space<vmem>>, vector<1x64x128xf32>
    %200 = vector.shape_cast %199 : vector<1x64x128xf32> to vector<64x128xf32>
    %cst_189 = arith.constant dense<0.000000e+00> : vector<1x128xf32>
    %201 = tpu.matmul %198, %200, %cst_189 {dimension_numbers = #tpu.dot_dimension_numbers<[1], [0], [0], [1], [0, 0, 1, 1], [], []>} : vector<1x64xf32>, vector<64x128xf32>, vector<1x128xf32> -> vector<1x128xf32>
    %202 = arith.addf %197, %201 : vector<1x128xf32>
    %203 = vector.extract_strided_slice %86 {offsets = [23, 0], sizes = [1, 64], strides = [1, 1]} : vector<32x64xf32> to vector<1x64xf32>
    %c23 = arith.constant 23 : index
    %c0_190 = arith.constant 0 : index
    %c0_191 = arith.constant 0 : index
    %204 = vector.load %arg6[%c23, %c0_190, %c0_191] : memref<32x64x128xf32, #tpu.memory_space<vmem>>, vector<1x64x128xf32>
    %205 = vector.shape_cast %204 : vector<1x64x128xf32> to vector<64x128xf32>
    %cst_192 = arith.constant dense<0.000000e+00> : vector<1x128xf32>
    %206 = tpu.matmul %203, %205, %cst_192 {dimension_numbers = #tpu.dot_dimension_numbers<[1], [0], [0], [1], [0, 0, 1, 1], [], []>} : vector<1x64xf32>, vector<64x128xf32>, vector<1x128xf32> -> vector<1x128xf32>
    %207 = arith.addf %202, %206 : vector<1x128xf32>
    %208 = vector.extract_strided_slice %86 {offsets = [24, 0], sizes = [1, 64], strides = [1, 1]} : vector<32x64xf32> to vector<1x64xf32>
    %c24 = arith.constant 24 : index
    %c0_193 = arith.constant 0 : index
    %c0_194 = arith.constant 0 : index
    %209 = vector.load %arg6[%c24, %c0_193, %c0_194] : memref<32x64x128xf32, #tpu.memory_space<vmem>>, vector<1x64x128xf32>
    %210 = vector.shape_cast %209 : vector<1x64x128xf32> to vector<64x128xf32>
    %cst_195 = arith.constant dense<0.000000e+00> : vector<1x128xf32>
    %211 = tpu.matmul %208, %210, %cst_195 {dimension_numbers = #tpu.dot_dimension_numbers<[1], [0], [0], [1], [0, 0, 1, 1], [], []>} : vector<1x64xf32>, vector<64x128xf32>, vector<1x128xf32> -> vector<1x128xf32>
    %212 = arith.addf %207, %211 : vector<1x128xf32>
    %213 = vector.extract_strided_slice %86 {offsets = [25, 0], sizes = [1, 64], strides = [1, 1]} : vector<32x64xf32> to vector<1x64xf32>
    %c25 = arith.constant 25 : index
    %c0_196 = arith.constant 0 : index
    %c0_197 = arith.constant 0 : index
    %214 = vector.load %arg6[%c25, %c0_196, %c0_197] : memref<32x64x128xf32, #tpu.memory_space<vmem>>, vector<1x64x128xf32>
    %215 = vector.shape_cast %214 : vector<1x64x128xf32> to vector<64x128xf32>
    %cst_198 = arith.constant dense<0.000000e+00> : vector<1x128xf32>
    %216 = tpu.matmul %213, %215, %cst_198 {dimension_numbers = #tpu.dot_dimension_numbers<[1], [0], [0], [1], [0, 0, 1, 1], [], []>} : vector<1x64xf32>, vector<64x128xf32>, vector<1x128xf32> -> vector<1x128xf32>
    %217 = arith.addf %212, %216 : vector<1x128xf32>
    %218 = vector.extract_strided_slice %86 {offsets = [26, 0], sizes = [1, 64], strides = [1, 1]} : vector<32x64xf32> to vector<1x64xf32>
    %c26 = arith.constant 26 : index
    %c0_199 = arith.constant 0 : index
    %c0_200 = arith.constant 0 : index
    %219 = vector.load %arg6[%c26, %c0_199, %c0_200] : memref<32x64x128xf32, #tpu.memory_space<vmem>>, vector<1x64x128xf32>
    %220 = vector.shape_cast %219 : vector<1x64x128xf32> to vector<64x128xf32>
    %cst_201 = arith.constant dense<0.000000e+00> : vector<1x128xf32>
    %221 = tpu.matmul %218, %220, %cst_201 {dimension_numbers = #tpu.dot_dimension_numbers<[1], [0], [0], [1], [0, 0, 1, 1], [], []>} : vector<1x64xf32>, vector<64x128xf32>, vector<1x128xf32> -> vector<1x128xf32>
    %222 = arith.addf %217, %221 : vector<1x128xf32>
    %223 = vector.extract_strided_slice %86 {offsets = [27, 0], sizes = [1, 64], strides = [1, 1]} : vector<32x64xf32> to vector<1x64xf32>
    %c27 = arith.constant 27 : index
    %c0_202 = arith.constant 0 : index
    %c0_203 = arith.constant 0 : index
    %224 = vector.load %arg6[%c27, %c0_202, %c0_203] : memref<32x64x128xf32, #tpu.memory_space<vmem>>, vector<1x64x128xf32>
    %225 = vector.shape_cast %224 : vector<1x64x128xf32> to vector<64x128xf32>
    %cst_204 = arith.constant dense<0.000000e+00> : vector<1x128xf32>
    %226 = tpu.matmul %223, %225, %cst_204 {dimension_numbers = #tpu.dot_dimension_numbers<[1], [0], [0], [1], [0, 0, 1, 1], [], []>} : vector<1x64xf32>, vector<64x128xf32>, vector<1x128xf32> -> vector<1x128xf32>
    %227 = arith.addf %222, %226 : vector<1x128xf32>
    %228 = vector.extract_strided_slice %86 {offsets = [28, 0], sizes = [1, 64], strides = [1, 1]} : vector<32x64xf32> to vector<1x64xf32>
    %c28 = arith.constant 28 : index
    %c0_205 = arith.constant 0 : index
    %c0_206 = arith.constant 0 : index
    %229 = vector.load %arg6[%c28, %c0_205, %c0_206] : memref<32x64x128xf32, #tpu.memory_space<vmem>>, vector<1x64x128xf32>
    %230 = vector.shape_cast %229 : vector<1x64x128xf32> to vector<64x128xf32>
    %cst_207 = arith.constant dense<0.000000e+00> : vector<1x128xf32>
    %231 = tpu.matmul %228, %230, %cst_207 {dimension_numbers = #tpu.dot_dimension_numbers<[1], [0], [0], [1], [0, 0, 1, 1], [], []>} : vector<1x64xf32>, vector<64x128xf32>, vector<1x128xf32> -> vector<1x128xf32>
    %232 = arith.addf %227, %231 : vector<1x128xf32>
    %233 = vector.extract_strided_slice %86 {offsets = [29, 0], sizes = [1, 64], strides = [1, 1]} : vector<32x64xf32> to vector<1x64xf32>
    %c29 = arith.constant 29 : index
    %c0_208 = arith.constant 0 : index
    %c0_209 = arith.constant 0 : index
    %234 = vector.load %arg6[%c29, %c0_208, %c0_209] : memref<32x64x128xf32, #tpu.memory_space<vmem>>, vector<1x64x128xf32>
    %235 = vector.shape_cast %234 : vector<1x64x128xf32> to vector<64x128xf32>
    %cst_210 = arith.constant dense<0.000000e+00> : vector<1x128xf32>
    %236 = tpu.matmul %233, %235, %cst_210 {dimension_numbers = #tpu.dot_dimension_numbers<[1], [0], [0], [1], [0, 0, 1, 1], [], []>} : vector<1x64xf32>, vector<64x128xf32>, vector<1x128xf32> -> vector<1x128xf32>
    %237 = arith.addf %232, %236 : vector<1x128xf32>
    %238 = vector.extract_strided_slice %86 {offsets = [30, 0], sizes = [1, 64], strides = [1, 1]} : vector<32x64xf32> to vector<1x64xf32>
    %c30 = arith.constant 30 : index
    %c0_211 = arith.constant 0 : index
    %c0_212 = arith.constant 0 : index
    %239 = vector.load %arg6[%c30, %c0_211, %c0_212] : memref<32x64x128xf32, #tpu.memory_space<vmem>>, vector<1x64x128xf32>
    %240 = vector.shape_cast %239 : vector<1x64x128xf32> to vector<64x128xf32>
    %cst_213 = arith.constant dense<0.000000e+00> : vector<1x128xf32>
    %241 = tpu.matmul %238, %240, %cst_213 {dimension_numbers = #tpu.dot_dimension_numbers<[1], [0], [0], [1], [0, 0, 1, 1], [], []>} : vector<1x64xf32>, vector<64x128xf32>, vector<1x128xf32> -> vector<1x128xf32>
    %242 = arith.addf %237, %241 : vector<1x128xf32>
    %243 = vector.extract_strided_slice %86 {offsets = [31, 0], sizes = [1, 64], strides = [1, 1]} : vector<32x64xf32> to vector<1x64xf32>
    %c31 = arith.constant 31 : index
    %c0_214 = arith.constant 0 : index
    %c0_215 = arith.constant 0 : index
    %244 = vector.load %arg6[%c31, %c0_214, %c0_215] : memref<32x64x128xf32, #tpu.memory_space<vmem>>, vector<1x64x128xf32>
    %245 = vector.shape_cast %244 : vector<1x64x128xf32> to vector<64x128xf32>
    %cst_216 = arith.constant dense<0.000000e+00> : vector<1x128xf32>
    %246 = tpu.matmul %243, %245, %cst_216 {dimension_numbers = #tpu.dot_dimension_numbers<[1], [0], [0], [1], [0, 0, 1, 1], [], []>} : vector<1x64xf32>, vector<64x128xf32>, vector<1x128xf32> -> vector<1x128xf32>
    %247 = arith.addf %242, %246 : vector<1x128xf32>
    %cst_217 = arith.constant 0.000000e+00 : f32
    %248 = vector.broadcast %cst_217 : f32 to vector<1x128xf32>
    %249 = arith.maximumf %247, %248 : vector<1x128xf32>
    %c0_218 = arith.constant 0 : index
    %c0_219 = arith.constant 0 : index
    %250 = vector.load %arg8[%c0_218, %c0_219] : memref<128x8xf32, #tpu.memory_space<vmem>>, vector<128x8xf32>
    %cst_220 = arith.constant dense<0.000000e+00> : vector<1x8xf32>
    %251 = tpu.matmul %249, %250, %cst_220 {dimension_numbers = #tpu.dot_dimension_numbers<[1], [0], [0], [1], [0, 0, 1, 1], [], []>} : vector<1x128xf32>, vector<128x8xf32>, vector<1x8xf32> -> vector<1x8xf32>
    %c0_221 = arith.constant 0 : index
    %c0_222 = arith.constant 0 : index
    %252 = vector.load %arg9[%c0_221, %c0_222] : memref<1x8xf32, #tpu.memory_space<vmem>>, vector<1x8xf32>
    %253 = arith.addf %251, %252 : vector<1x8xf32>
    %c0_223 = arith.constant 0 : index
    %c0_224 = arith.constant 0 : index
    %c0_225 = arith.constant 0 : index
    %254 = vector.load %arg10[%c0_223, %c0_224, %c0_225] : memref<1x1x8xf32, #tpu.memory_space<vmem>>, vector<1x1x8xf32>
    %255 = vector.shape_cast %254 : vector<1x1x8xf32> to vector<1x8xf32>
    %256 = vector.shape_cast %253 : vector<1x8xf32> to vector<1x1x8xf32>
    tpu.vector_store %arg10[%c0_223, %c0_224, %c0_225], %256 {strides = array<i32>} : memref<1x1x8xf32, #tpu.memory_space<vmem>>, vector<1x1x8xf32>,
    return
  }
  func.func @transform_0(%arg0: i32) -> (i32, i32, i32, i32) {
    %c0_i32 = arith.constant 0 : i32
    %c0_i32_0 = arith.constant 0 : i32
    %c0_i32_1 = arith.constant 0 : i32
    %c0_i32_2 = arith.constant 0 : i32
    return %arg0, %c0_i32, %c0_i32_0, %c0_i32_1 : i32, i32, i32, i32
  }
  func.func @transform_1(%arg0: i32) -> (i32, i32) {
    %c0_i32 = arith.constant 0 : i32
    %c0_i32_0 = arith.constant 0 : i32
    %c0_i32_1 = arith.constant 0 : i32
    return %c0_i32, %c0_i32_0 : i32, i32
  }
  func.func @transform_2(%arg0: i32) -> (i32, i32) {
    %c0_i32 = arith.constant 0 : i32
    %c0_i32_0 = arith.constant 0 : i32
    %c0_i32_1 = arith.constant 0 : i32
    return %c0_i32, %c0_i32_0 : i32, i32
  }
  func.func @transform_3(%arg0: i32) -> (i32, i32) {
    %c0_i32 = arith.constant 0 : i32
    %c0_i32_0 = arith.constant 0 : i32
    %c0_i32_1 = arith.constant 0 : i32
    return %c0_i32, %c0_i32_0 : i32, i32
  }
  func.func @transform_4(%arg0: i32) -> (i32, i32) {
    %c0_i32 = arith.constant 0 : i32
    %c0_i32_0 = arith.constant 0 : i32
    %c0_i32_1 = arith.constant 0 : i32
    return %c0_i32, %c0_i32_0 : i32, i32
  }
  func.func @transform_5(%arg0: i32) -> (i32, i32, i32) {
    %c0_i32 = arith.constant 0 : i32
    %c0_i32_0 = arith.constant 0 : i32
    %c0_i32_1 = arith.constant 0 : i32
    %c0_i32_2 = arith.constant 0 : i32
    return %c0_i32, %c0_i32_0, %c0_i32_1 : i32, i32, i32
  }
  func.func @transform_6(%arg0: i32) -> (i32, i32) {
    %c0_i32 = arith.constant 0 : i32
    %c0_i32_0 = arith.constant 0 : i32
    %c0_i32_1 = arith.constant 0 : i32
    return %c0_i32, %c0_i32_0 : i32, i32
  }
  func.func @transform_7(%arg0: i32) -> (i32, i32) {
    %c0_i32 = arith.constant 0 : i32
    %c0_i32_0 = arith.constant 0 : i32
    %c0_i32_1 = arith.constant 0 : i32
    return %c0_i32, %c0_i32_0 : i32, i32
  }
  func.func @transform_8(%arg0: i32) -> (i32, i32) {
    %c0_i32 = arith.constant 0 : i32
    %c0_i32_0 = arith.constant 0 : i32
    %c0_i32_1 = arith.constant 0 : i32
    return %c0_i32, %c0_i32_0 : i32, i32
  }
  func.func @transform_9(%arg0: i32) -> (i32, i32, i32) {
    %c0_i32 = arith.constant 0 : i32
    %c0_i32_0 = arith.constant 0 : i32
    %c0_i32_1 = arith.constant 0 : i32
    return %arg0, %c0_i32, %c0_i32_0 : i32, i32, i32
  }
}

</mosaic_0001>

<llo_original>
// kernel: music_genre_cnn_forward.1
$region0: #{music_genre_cnn_forward.1}
  #allocation0 [shape = 'u32[]', space=smem, size = 0x4, offset = 0x4, fixed_abs, tag = 'smem constant byte address 0x4 - core index']
  #allocation1 [shape = 'u32[72,128]{1,0:T(1,128)}', space=vmem, size = 0x9000, scoped, tag = 'internal scratch']
  #allocation2 [shape = 'f32[18,34,1]{2,1,0:T(8,128)}', space=vmem, size = 0x5a000, scoped, tag = 'scratch operand']
  #allocation3 [shape = 'f32[512,9]{1,0:T(8,128)}', space=vmem, size = 0x40000, scoped, tag = 'scratch operand']
  #allocation4 [shape = 'f32[10,18,32]{2,1,0:T(8,128)}', space=vmem, size = 0x1e000, scoped, tag = 'scratch operand']
  #allocation5 [shape = 'f32[128,288]{1,0:T(8,128)}', space=vmem, size = 0x30000, scoped, tag = 'scratch operand']
  %s0 = inlined_call_operand.vmem [shape: f32[2,16,32,1], index: 0, kind: input, shape index: {}]
  %s1 = inlined_call_operand.vmem [shape: f32[9,32], index: 1, kind: input, shape index: {}]
  %s2 = inlined_call_operand.vmem [shape: f32[1,32], index: 2, kind: input, shape index: {}]
  %s3 = inlined_call_operand.vmem [shape: f32[288,64], index: 3, kind: input, shape index: {}]
  %s4 = inlined_call_operand.vmem [shape: f32[1,64], index: 4, kind: input, shape index: {}]
  %s5 = inlined_call_operand.hbm [shape: f32[32,64,128], index: 5, kind: input, shape index: {}]
  %s6 = inlined_call_operand.vmem [shape: f32[1,128], index: 6, kind: input, shape index: {}]
  %s7 = inlined_call_operand.vmem [shape: f32[128,8], index: 7, kind: input, shape index: {}]
  %s8 = inlined_call_operand.vmem [shape: f32[1,8], index: 8, kind: input, shape index: {}]
  %s9 = inlined_call_operand.hbm [shape: f32[2,1,8], index: 9, kind: output, shape index: {}]
  %s10 = sld [smem:[#allocation0]]
  $region73: #{music_genre_cnn_forward.1} parent=0
    _
  %s12 = ssub.s32 1, %s10
  %s13 = scalar_select 0, %s12, %s10
  $region1: #{music_genre_cnn_forward.1} parent=0
    #allocation6 [shape = 'u8[1048576]{0}', space=vmem, size = 0x100000, scoped, tag = 'input window, operand 5, single buffered']
    #allocation7 [shape = 's32[2]{0}', space=sflag, size = 0x8, scoped, tag = 'scoped memory for music_genre_cnn_forward.1']
    #allocation8 [shape = 's32[2]{0}', space=sflag, size = 0x8, scoped, tag = 'scoped memory for music_genre_cnn_forward.1']
    #allocation9 [shape = 'u8[1024]{0}', space=vmem, size = 0x400, scoped, tag = 'output window, operand 0']
    %14 = vsyncpa [#allocation7], 0
    %15 = vsyncpa [#allocation8], 0
    %s16 = scalar_lea.sflag [#allocation8], 1
    %17 = vsyncpa %s16, 0
    loop: start=0, step=1, limit=4
    $region2: #{music_genre_cnn_forward.1} parent=1 // loop_pre_header
      _
    $region3: #{music_genre_cnn_forward.1} parent=1 // loop_header
      %s19 = sphi 0, %s23
      %p20 = scmp.ge.s32.totalorder %s19, 4
      %s29 = sphi 0, %s31
      %s32 = sphi 0, %s29
      %s33 = sphi 0, %s32
      %s49 = sphi 0, %s33
      %s53 = sphi 0, %s53
      %s55 = sphi 0, %s53
      %s56 = sphi 0, %s55
      %s70 = sphi 0, %s56
      %s74 = sphi 0, %s74
      %s76 = sphi 0, %s74
      %s77 = sphi 0, %s76
      %s91 = sphi 0, %s77
      %s95 = sphi 0, %s95
      %s97 = sphi 0, %s95
      %s98 = sphi 0, %s97
      %s112 = sphi 0, %s98
      %s116 = sphi 0, %s116
      %s118 = sphi 0, %s116
      %s119 = sphi 0, %s118
      %s133 = sphi 0, %s119
      %s137 = sphi 0, %s137
      %s139 = sphi 0, %s137
      %s140 = sphi 0, %s139
      %s154 = sphi 0, %s140
      %s158 = sphi 0, %s158
      %s160 = sphi 0, %s158
      %s161 = sphi 0, %s160
      %s175 = sphi 0, %s161
      %s179 = sphi 0, %s179
      %s181 = sphi 0, %s179
      %s182 = sphi 0, %s181
      %s196 = sphi 0, %s182
      %s200 = sphi 0, %s200
      %s202 = sphi 0, %s200
      %s203 = sphi 0, %s202
      %s217 = sphi 0, %s203
      %s223 = sphi 0, %s225
      %s226 = sphi 0, %s223
      %s227 = sphi 0, %s226
      %s243 = sphi 0, %s227
    $region4: #{music_genre_cnn_forward.1} parent=1 // loop_header_branch
      %22 = sbr.rel (%p20) target = $region8
    $region5: #{music_genre_cnn_forward.1} parent=1 // loop_body
      %s24 = ssub.s32 %s19, 1
      %s25 = ssub.s32 %s19, 2
      %s26 = sadd.s32 %s19, 1
      %s27 = ssub.s32 %s19, %s26
      %p28 = scmp.eq.s32.totalorder %s27, 0
      %s30 = sadd.s32 %s29, 1
      %s31 = scalar_select %p28, %s29, %s30
      %p34 = pneg %p28
      %p35 = scmp.eq.s32.totalorder %s19, 1
      %p36 = por %p34, %p35
      %p37 = scmp.ne.s32.totalorder %s29, %s32
      %p38 = scmp.eq.s32.totalorder %s19, 0
      %p39 = por %p37, %p38
      %p40 = scmp.ne.s32.totalorder %s29, %s32
      %p41 = scmp.eq.s32.totalorder %s24, 1
      %p42 = por %p40, %p41
      %p43 = scmp.ne.s32.totalorder %s32, %s33
      %p44 = scmp.eq.s32.totalorder %s24, 0
      %p45 = por %p43, %p44
      %p46 = scmp.ne.s32.totalorder %s32, %s33
      %p47 = scmp.eq.s32.totalorder %s25, 1
      %p48 = por %p46, %p47
      %p50 = scmp.ne.s32.totalorder %s33, %s49
      %p51 = scmp.eq.s32.totalorder %s25, 0
      %p52 = por %p50, %p51
      %s54 = sadd.s32 %s53, 1
      %p57 = scmp.eq.s32.totalorder %s19, 1
      %p58 = scmp.ne.s32.totalorder %s53, %s55
      %p59 = scmp.eq.s32.totalorder %s19, 0
      %p60 = por %p58, %p59
      %p61 = scmp.ne.s32.totalorder %s53, %s55
      %p62 = scmp.eq.s32.totalorder %s24, 1
      %p63 = por %p61, %p62
      %p64 = scmp.ne.s32.totalorder %s55, %s56
      %p65 = scmp.eq.s32.totalorder %s24, 0
      %p66 = por %p64, %p65
      %p67 = scmp.ne.s32.totalorder %s55, %s56
      %p68 = scmp.eq.s32.totalorder %s25, 1
      %p69 = por %p67, %p68
      %p71 = scmp.ne.s32.totalorder %s56, %s70
      %p72 = scmp.eq.s32.totalorder %s25, 0
      %p73 = por %p71, %p72
      %s75 = sadd.s32 %s74, 1
      %p78 = scmp.eq.s32.totalorder %s19, 1
      %p79 = scmp.ne.s32.totalorder %s74, %s76
      %p80 = scmp.eq.s32.totalorder %s19, 0
      %p81 = por %p79, %p80
      %p82 = scmp.ne.s32.totalorder %s74, %s76
      %p83 = scmp.eq.s32.totalorder %s24, 1
      %p84 = por %p82, %p83
      %p85 = scmp.ne.s32.totalorder %s76, %s77
      %p86 = scmp.eq.s32.totalorder %s24, 0
      %p87 = por %p85, %p86
      %p88 = scmp.ne.s32.totalorder %s76, %s77
      %p89 = scmp.eq.s32.totalorder %s25, 1
      %p90 = por %p88, %p89
      %p92 = scmp.ne.s32.totalorder %s77, %s91
      %p93 = scmp.eq.s32.totalorder %s25, 0
      %p94 = por %p92, %p93
      %s96 = sadd.s32 %s95, 1
      %p99 = scmp.eq.s32.totalorder %s19, 1
      %p100 = scmp.ne.s32.totalorder %s95, %s97
      %p101 = scmp.eq.s32.totalorder %s19, 0
      %p102 = por %p100, %p101
      %p103 = scmp.ne.s32.totalorder %s95, %s97
      %p104 = scmp.eq.s32.totalorder %s24, 1
      %p105 = por %p103, %p104
      %p106 = scmp.ne.s32.totalorder %s97, %s98
      %p107 = scmp.eq.s32.totalorder %s24, 0
      %p108 = por %p106, %p107
      %p109 = scmp.ne.s32.totalorder %s97, %s98
      %p110 = scmp.eq.s32.totalorder %s25, 1
      %p111 = por %p109, %p110
      %p113 = scmp.ne.s32.totalorder %s98, %s112
      %p114 = scmp.eq.s32.totalorder %s25, 0
      %p115 = por %p113, %p114
      %s117 = sadd.s32 %s116, 1
      %p120 = scmp.eq.s32.totalorder %s19, 1
      %p121 = scmp.ne.s32.totalorder %s116, %s118
      %p122 = scmp.eq.s32.totalorder %s19, 0
      %p123 = por %p121, %p122
      %p124 = scmp.ne.s32.totalorder %s116, %s118
      %p125 = scmp.eq.s32.totalorder %s24, 1
      %p126 = por %p124, %p125
      %p127 = scmp.ne.s32.totalorder %s118, %s119
      %p128 = scmp.eq.s32.totalorder %s24, 0
      %p129 = por %p127, %p128
      %p130 = scmp.ne.s32.totalorder %s118, %s119
      %p131 = scmp.eq.s32.totalorder %s25, 1
      %p132 = por %p130, %p131
      %p134 = scmp.ne.s32.totalorder %s119, %s133
      %p135 = scmp.eq.s32.totalorder %s25, 0
      %p136 = por %p134, %p135
      %s138 = sadd.s32 %s137, 1
      %p141 = scmp.eq.s32.totalorder %s19, 1
      %p142 = scmp.ne.s32.totalorder %s137, %s139
      %p143 = scmp.eq.s32.totalorder %s19, 0
      %p144 = por %p142, %p143
      %p145 = scmp.ne.s32.totalorder %s137, %s139
      %p146 = scmp.eq.s32.totalorder %s24, 1
      %p147 = por %p145, %p146
      %p148 = scmp.ne.s32.totalorder %s139, %s140
      %p149 = scmp.eq.s32.totalorder %s24, 0
      %p150 = por %p148, %p149
      %p151 = scmp.ne.s32.totalorder %s139, %s140
      %p152 = scmp.eq.s32.totalorder %s25, 1
      %p153 = por %p151, %p152
      %p155 = scmp.ne.s32.totalorder %s140, %s154
      %p156 = scmp.eq.s32.totalorder %s25, 0
      %p157 = por %p155, %p156
      %s159 = sadd.s32 %s158, 1
      %p162 = scmp.eq.s32.totalorder %s19, 1
      %p163 = scmp.ne.s32.totalorder %s158, %s160
      %p164 = scmp.eq.s32.totalorder %s19, 0
      %p165 = por %p163, %p164
      %p166 = scmp.ne.s32.totalorder %s158, %s160
      %p167 = scmp.eq.s32.totalorder %s24, 1
      %p168 = por %p166, %p167
      %p169 = scmp.ne.s32.totalorder %s160, %s161
      %p170 = scmp.eq.s32.totalorder %s24, 0
      %p171 = por %p169, %p170
      %p172 = scmp.ne.s32.totalorder %s160, %s161
      %p173 = scmp.eq.s32.totalorder %s25, 1
      %p174 = por %p172, %p173
      %p176 = scmp.ne.s32.totalorder %s161, %s175
      %p177 = scmp.eq.s32.totalorder %s25, 0
      %p178 = por %p176, %p177
      %s180 = sadd.s32 %s179, 1
      %p183 = scmp.eq.s32.totalorder %s19, 1
      %p184 = scmp.ne.s32.totalorder %s179, %s181
      %p185 = scmp.eq.s32.totalorder %s19, 0
      %p186 = por %p184, %p185
      %p187 = scmp.ne.s32.totalorder %s179, %s181
      %p188 = scmp.eq.s32.totalorder %s24, 1
      %p189 = por %p187, %p188
      %p190 = scmp.ne.s32.totalorder %s181, %s182
      %p191 = scmp.eq.s32.totalorder %s24, 0
      %p192 = por %p190, %p191
      %p193 = scmp.ne.s32.totalorder %s181, %s182
      %p194 = scmp.eq.s32.totalorder %s25, 1
      %p195 = por %p193, %p194
      %p197 = scmp.ne.s32.totalorder %s182, %s196
      %p198 = scmp.eq.s32.totalorder %s25, 0
      %p199 = por %p197, %p198
      %s201 = sadd.s32 %s200, 1
      %p204 = scmp.eq.s32.totalorder %s19, 1
      %p205 = scmp.ne.s32.totalorder %s200, %s202
      %p206 = scmp.eq.s32.totalorder %s19, 0
      %p207 = por %p205, %p206
      %p208 = scmp.ne.s32.totalorder %s200, %s202
      %p209 = scmp.eq.s32.totalorder %s24, 1
      %p210 = por %p208, %p209
      %p211 = scmp.ne.s32.totalorder %s202, %s203
      %p212 = scmp.eq.s32.totalorder %s24, 0
      %p213 = por %p211, %p212
      %p214 = scmp.ne.s32.totalorder %s202, %s203
      %p215 = scmp.eq.s32.totalorder %s25, 1
      %p216 = por %p214, %p215
      %p218 = scmp.ne.s32.totalorder %s203, %s217
      %p219 = scmp.eq.s32.totalorder %s25, 0
      %p220 = por %p218, %p219
      %s221 = ssub.s32 %s19, %s26
      %p222 = scmp.eq.s32.totalorder %s221, 0
      %s224 = sadd.s32 %s223, 1
      %s225 = scalar_select %p222, %s223, %s224
      %p228 = pneg %p222
      %p229 = scmp.eq.s32.totalorder %s19, 1
      %p230 = por %p228, %p229
      %p231 = scmp.ne.s32.totalorder %s223, %s226
      %p232 = scmp.eq.s32.totalorder %s19, 0
      %p233 = por %p231, %p232
      %p234 = scmp.ne.s32.totalorder %s223, %s226
      %p235 = scmp.eq.s32.totalorder %s24, 1
      %p236 = por %p234, %p235
      %p237 = scmp.ne.s32.totalorder %s226, %s227
      %p238 = scmp.eq.s32.totalorder %s24, 0
      %p239 = por %p237, %p238
      %p240 = scmp.ne.s32.totalorder %s226, %s227
      %p241 = scmp.eq.s32.totalorder %s25, 1
      %p242 = por %p240, %p241
      %p244 = scmp.ne.s32.totalorder %s227, %s243
      %p245 = scmp.eq.s32.totalorder %s25, 0
      %p246 = por %p244, %p245
      %p247 = scmp.le.s32.totalorder 1, %s19
      %p248 = scmp.lt.s32.totalorder %s19, 3
      %p249 = pnand %p247, %p248
      %p250 = pneg %p249
      // Predicated region
      $region9: #{music_genre_cnn_forward.1} parent=5 // pred_check
        _
      $region10: #{music_genre_cnn_forward.1} parent=5 // pred_check_branch
        %252 = sbr.rel (%p249) target = $region12
      $region11: #{music_genre_cnn_forward.1} parent=5 // pred_region
        %s253 = ssub.s32 %s19, 1
        // Predicated region
        $region13: #{music_genre_cnn_forward.1} parent=11 // pred_check
          %p254 = pneg %p66
        $region14: #{music_genre_cnn_forward.1} parent=11 // pred_check_branch
          %256 = sbr.rel (%p254) target = $region16
        $region15: #{music_genre_cnn_forward.1} parent=11 // pred_region
          _
        $region16: #{music_genre_cnn_forward.1} parent=11 // pred_fallthru
          _
        // Predicated region
        $region17: #{music_genre_cnn_forward.1} parent=11 // pred_check
          %p257 = pneg %p87
        $region18: #{music_genre_cnn_forward.1} parent=11 // pred_check_branch
          %259 = sbr.rel (%p257) target = $region20
        $region19: #{music_genre_cnn_forward.1} parent=11 // pred_region
          _
        $region20: #{music_genre_cnn_forward.1} parent=11 // pred_fallthru
          _
        // Predicated region
        $region21: #{music_genre_cnn_forward.1} parent=11 // pred_check
          %p260 = pneg %p108
        $region22: #{music_genre_cnn_forward.1} parent=11 // pred_check_branch
          %262 = sbr.rel (%p260) target = $region24
        $region23: #{music_genre_cnn_forward.1} parent=11 // pred_region
          _
        $region24: #{music_genre_cnn_forward.1} parent=11 // pred_fallthru
          _
        // Predicated region
        $region25: #{music_genre_cnn_forward.1} parent=11 // pred_check
          %p263 = pneg %p129
        $region26: #{music_genre_cnn_forward.1} parent=11 // pred_check_branch
          %265 = sbr.rel (%p263) target = $region28
        $region27: #{music_genre_cnn_forward.1} parent=11 // pred_region
          _
        $region28: #{music_genre_cnn_forward.1} parent=11 // pred_fallthru
          _
        // Predicated region
        $region29: #{music_genre_cnn_forward.1} parent=11 // pred_check
          %p266 = pneg %p150
        $region30: #{music_genre_cnn_forward.1} parent=11 // pred_check_branch
          %268 = sbr.rel (%p266) target = $region32
        $region31: #{music_genre_cnn_forward.1} parent=11 // pred_region
          %270 = vsyncadd [#allocation7], 0
          %s271 = sshll.u32 %s5, 4
          %s272 = int_to_ptr.hbm [resolvable:$true] %s271
          %s273 = sshll.u32 [#allocation6], 4
          %s274 = int_to_ptr.vmem [resolvable:$true] %s273
          %279 = dma.hbm_to_vmem [thread:$0]  %s272, 32768, %s274, [#allocation7], 128, 128, 8
        $region32: #{music_genre_cnn_forward.1} parent=11 // pred_fallthru
          _
        // Predicated region
        $region33: #{music_genre_cnn_forward.1} parent=11 // pred_check
          %p280 = pneg %p171
        $region34: #{music_genre_cnn_forward.1} parent=11 // pred_check_branch
          %282 = sbr.rel (%p280) target = $region36
        $region35: #{music_genre_cnn_forward.1} parent=11 // pred_region
          _
        $region36: #{music_genre_cnn_forward.1} parent=11 // pred_fallthru
          _
        // Predicated region
        $region37: #{music_genre_cnn_forward.1} parent=11 // pred_check
          %p283 = pneg %p192
        $region38: #{music_genre_cnn_forward.1} parent=11 // pred_check_branch
          %285 = sbr.rel (%p283) target = $region40
        $region39: #{music_genre_cnn_forward.1} parent=11 // pred_region
          _
        $region40: #{music_genre_cnn_forward.1} parent=11 // pred_fallthru
          _
        // Predicated region
        $region41: #{music_genre_cnn_forward.1} parent=11 // pred_check
          %p286 = pneg %p213
        $region42: #{music_genre_cnn_forward.1} parent=11 // pred_check_branch
          %288 = sbr.rel (%p286) target = $region44
        $region43: #{music_genre_cnn_forward.1} parent=11 // pred_region
          _
        $region44: #{music_genre_cnn_forward.1} parent=11 // pred_fallthru
          _
      $region12: #{music_genre_cnn_forward.1} parent=5 // pred_fallthru
        _
      %p289 = scmp.lt.s32.totalorder %s19, 2
      // Predicated region
      $region45: #{music_genre_cnn_forward.1} parent=5 // pred_check
        %p290 = pneg %p289
      $region46: #{music_genre_cnn_forward.1} parent=5 // pred_check_branch
        %292 = sbr.rel (%p290) target = $region48
      $region47: #{music_genre_cnn_forward.1} parent=5 // pred_region
        // Predicated region
        $region49: #{music_genre_cnn_forward.1} parent=47 // pred_check
          %p293 = pneg %p39
        $region50: #{music_genre_cnn_forward.1} parent=47 // pred_check_branch
          %295 = sbr.rel (%p293) target = $region52
        $region51: #{music_genre_cnn_forward.1} parent=47 // pred_region
          %p296 = scmp.lt.s32.totalorder %s19, 1
          %s297 = scalar_select %p296, %s19, 1
          %s298 = smul.addr %s297, 64
          %s299 = smul.addr %s298, 8
          %s300 = scalar_lea.vmem %s0, %s299
        $region52: #{music_genre_cnn_forward.1} parent=47 // pred_fallthru
          _
      $region48: #{music_genre_cnn_forward.1} parent=5 // pred_fallthru
        _
      %p301 = scmp.le.s32.totalorder 1, %s19
      %p302 = scmp.lt.s32.totalorder %s19, 3
      %p303 = pnand %p301, %p302
      %p304 = pneg %p303
      // Predicated region
      $region53: #{music_genre_cnn_forward.1} parent=5 // pred_check
        _
      $region54: #{music_genre_cnn_forward.1} parent=5 // pred_check_branch
        %306 = sbr.rel (%p303) target = $region56
      $region55: #{music_genre_cnn_forward.1} parent=5 // pred_region
        %s307 = ssub.s32 %s19, 1
        // Predicated region
        $region57: #{music_genre_cnn_forward.1} parent=55 // pred_check
          %p308 = pneg %p150
        $region58: #{music_genre_cnn_forward.1} parent=55 // pred_check_branch
          %310 = sbr.rel (%p308) target = $region60
        $region59: #{music_genre_cnn_forward.1} parent=55 // pred_region
          %312 = dma.done [#allocation7], 32768
        $region60: #{music_genre_cnn_forward.1} parent=55 // pred_fallthru
          _
        %p313 = scmp.lt.s32.totalorder %s24, 1
        %s314 = scalar_select %p313, %s24, 1
        %s315 = smul.addr %s314, 64
        %s316 = smul.addr %s315, 8
        %s317 = scalar_lea.vmem %s0, %s316
        %p318 = pneg %p45
        %p319 = pneg %p42
        %p320 = pneg %p66
        %p321 = pneg %p63
        %p322 = pneg %p87
        %p323 = pneg %p84
        %p324 = pneg %p108
        %p325 = pneg %p105
        %p326 = pneg %p129
        %p327 = pneg %p126
        %p328 = pneg %p150
        %p329 = pneg %p147
        %p330 = pneg %p171
        %p331 = pneg %p168
        %p332 = pneg %p192
        %p333 = pneg %p189
        %p334 = pneg %p213
        %p335 = pneg %p210
        %p336 = pneg %p239
        %p337 = pneg %p236
        %s338 = sand.u32 %s226, 1
        %s339 = scalar_lea.sflag [#allocation8], %s338
        %s340 = sand.u32 %s226, 1
        %s341 = scalar_lea.vmem [#allocation9], %s340
        %p342 = scmp.lt.s32.totalorder %s24, 1
        %s343 = scalar_select %p342, %s24, 1
        %s344 = smul.addr %s343, 64
        %s345 = smul.addr %s344, 8
        %s346 = scalar_lea.vmem %s0, %s345
        %vm347 = vcmask 7168
        %348 = vst.msk [vmem:[#allocation2] sm:$0xff] %vm347, 0.0
        %349 = vst.msk [vmem:[#allocation2 + $0x8] sm:$0xff] %vm347, 0.0
        %350 = vst.msk [vmem:[#allocation2 + $0x10] sm:$0xff] %vm347, 0.0
        %351 = vst.msk [vmem:[#allocation2 + $0x18] sm:$0xff] %vm347, 0.0
        %vm352 = vcmask 1024
        %353 = vst.msk [vmem:[#allocation2 + $0x20] sm:$0x3] %vm352, 0.0
        %354 = vst.msk [vmem:[#allocation2 + $0x28] sm:$0xff] %vm347, 0.0
        %355 = vst.msk [vmem:[#allocation2 + $0x30] sm:$0xff] %vm347, 0.0
        %356 = vst.msk [vmem:[#allocation2 + $0x38] sm:$0xff] %vm347, 0.0
        %357 = vst.msk [vmem:[#allocation2 + $0x40] sm:$0xff] %vm347, 0.0
        %358 = vst.msk [vmem:[#allocation2 + $0x48] sm:$0x3] %vm352, 0.0
        %359 = vst.msk [vmem:[#allocation2 + $0x50] sm:$0xff] %vm347, 0.0
        %360 = vst.msk [vmem:[#allocation2 + $0x58] sm:$0xff] %vm347, 0.0
        %361 = vst.msk [vmem:[#allocation2 + $0x60] sm:$0xff] %vm347, 0.0
        %362 = vst.msk [vmem:[#allocation2 + $0x68] sm:$0xff] %vm347, 0.0
        %363 = vst.msk [vmem:[#allocation2 + $0x70] sm:$0x3] %vm352, 0.0
        %364 = vst.msk [vmem:[#allocation2 + $0x78] sm:$0xff] %vm347, 0.0
        %365 = vst.msk [vmem:[#allocation2 + $0x80] sm:$0xff] %vm347, 0.0
        %366 = vst.msk [vmem:[#allocation2 + $0x88] sm:$0xff] %vm347, 0.0
        %367 = vst.msk [vmem:[#allocation2 + $0x90] sm:$0xff] %vm347, 0.0
        %368 = vst.msk [vmem:[#allocation2 + $0x98] sm:$0x3] %vm352, 0.0
        %369 = vst.msk [vmem:[#allocation2 + $0xa0] sm:$0xff] %vm347, 0.0
        %370 = vst.msk [vmem:[#allocation2 + $0xa8] sm:$0xff] %vm347, 0.0
        %371 = vst.msk [vmem:[#allocation2 + $0xb0] sm:$0xff] %vm347, 0.0
        %372 = vst.msk [vmem:[#allocation2 + $0xb8] sm:$0xff] %vm347, 0.0
        %373 = vst.msk [vmem:[#allocation2 + $0xc0] sm:$0x3] %vm352, 0.0
        %374 = vst.msk [vmem:[#allocation2 + $0xc8] sm:$0xff] %vm347, 0.0
        %375 = vst.msk [vmem:[#allocation2 + $0xd0] sm:$0xff] %vm347, 0.0
        %376 = vst.msk [vmem:[#allocation2 + $0xd8] sm:$0xff] %vm347, 0.0
        %377 = vst.msk [vmem:[#allocation2 + $0xe0] sm:$0xff] %vm347, 0.0
        %378 = vst.msk [vmem:[#allocation2 + $0xe8] sm:$0x3] %vm352, 0.0
        %379 = vst.msk [vmem:[#allocation2 + $0xf0] sm:$0xff] %vm347, 0.0
        %380 = vst.msk [vmem:[#allocation2 + $0xf8] sm:$0xff] %vm347, 0.0
        %381 = vst.msk [vmem:[#allocation2 + $0x100] sm:$0xff] %vm347, 0.0
        %382 = vst.msk [vmem:[#allocation2 + $0x108] sm:$0xff] %vm347, 0.0
        %383 = vst.msk [vmem:[#allocation2 + $0x110] sm:$0x3] %vm352, 0.0
        %384 = vst.msk [vmem:[#allocation2 + $0x118] sm:$0xff] %vm347, 0.0
        %385 = vst.msk [vmem:[#allocation2 + $0x120] sm:$0xff] %vm347, 0.0
        %386 = vst.msk [vmem:[#allocation2 + $0x128] sm:$0xff] %vm347, 0.0
        %387 = vst.msk [vmem:[#allocation2 + $0x130] sm:$0xff] %vm347, 0.0
        %388 = vst.msk [vmem:[#allocation2 + $0x138] sm:$0x3] %vm352, 0.0
        %389 = vst.msk [vmem:[#allocation2 + $0x140] sm:$0xff] %vm347, 0.0
        %390 = vst.msk [vmem:[#allocation2 + $0x148] sm:$0xff] %vm347, 0.0
        %391 = vst.msk [vmem:[#allocation2 + $0x150] sm:$0xff] %vm347, 0.0
        %392 = vst.msk [vmem:[#allocation2 + $0x158] sm:$0xff] %vm347, 0.0
        %393 = vst.msk [vmem:[#allocation2 + $0x160] sm:$0x3] %vm352, 0.0
        %394 = vst.msk [vmem:[#allocation2 + $0x168] sm:$0xff] %vm347, 0.0
        %395 = vst.msk [vmem:[#allocation2 + $0x170] sm:$0xff] %vm347, 0.0
        %396 = vst.msk [vmem:[#allocation2 + $0x178] sm:$0xff] %vm347, 0.0
        %397 = vst.msk [vmem:[#allocation2 + $0x180] sm:$0xff] %vm347, 0.0
        %398 = vst.msk [vmem:[#allocation2 + $0x188] sm:$0x3] %vm352, 0.0
        %399 = vst.msk [vmem:[#allocation2 + $0x190] sm:$0xff] %vm347, 0.0
        %400 = vst.msk [vmem:[#allocation2 + $0x198] sm:$0xff] %vm347, 0.0
        %401 = vst.msk [vmem:[#allocation2 + $0x1a0] sm:$0xff] %vm347, 0.0
        %402 = vst.msk [vmem:[#allocation2 + $0x1a8] sm:$0xff] %vm347, 0.0
        %403 = vst.msk [vmem:[#allocation2 + $0x1b0] sm:$0x3] %vm352, 0.0
        %404 = vst.msk [vmem:[#allocation2 + $0x1b8] sm:$0xff] %vm347, 0.0
        %405 = vst.msk [vmem:[#allocation2 + $0x1c0] sm:$0xff] %vm347, 0.0
        %406 = vst.msk [vmem:[#allocation2 + $0x1c8] sm:$0xff] %vm347, 0.0
        %407 = vst.msk [vmem:[#allocation2 + $0x1d0] sm:$0xff] %vm347, 0.0
        %408 = vst.msk [vmem:[#allocation2 + $0x1d8] sm:$0x3] %vm352, 0.0
        %409 = vst.msk [vmem:[#allocation2 + $0x1e0] sm:$0xff] %vm347, 0.0
        %410 = vst.msk [vmem:[#allocation2 + $0x1e8] sm:$0xff] %vm347, 0.0
        %411 = vst.msk [vmem:[#allocation2 + $0x1f0] sm:$0xff] %vm347, 0.0
        %412 = vst.msk [vmem:[#allocation2 + $0x1f8] sm:$0xff] %vm347, 0.0
        %413 = vst.msk [vmem:[#allocation2 + $0x200] sm:$0x3] %vm352, 0.0
        %414 = vst.msk [vmem:[#allocation2 + $0x208] sm:$0xff] %vm347, 0.0
        %415 = vst.msk [vmem:[#allocation2 + $0x210] sm:$0xff] %vm347, 0.0
        %416 = vst.msk [vmem:[#allocation2 + $0x218] sm:$0xff] %vm347, 0.0
        %417 = vst.msk [vmem:[#allocation2 + $0x220] sm:$0xff] %vm347, 0.0
        %418 = vst.msk [vmem:[#allocation2 + $0x228] sm:$0x3] %vm352, 0.0
        %419 = vst.msk [vmem:[#allocation2 + $0x230] sm:$0xff] %vm347, 0.0
        %420 = vst.msk [vmem:[#allocation2 + $0x238] sm:$0xff] %vm347, 0.0
        %421 = vst.msk [vmem:[#allocation2 + $0x240] sm:$0xff] %vm347, 0.0
        %422 = vst.msk [vmem:[#allocation2 + $0x248] sm:$0xff] %vm347, 0.0
        %423 = vst.msk [vmem:[#allocation2 + $0x250] sm:$0x3] %vm352, 0.0
        %424 = vst.msk [vmem:[#allocation2 + $0x258] sm:$0xff] %vm347, 0.0
        %425 = vst.msk [vmem:[#allocation2 + $0x260] sm:$0xff] %vm347, 0.0
        %426 = vst.msk [vmem:[#allocation2 + $0x268] sm:$0xff] %vm347, 0.0
        %427 = vst.msk [vmem:[#allocation2 + $0x270] sm:$0xff] %vm347, 0.0
        %428 = vst.msk [vmem:[#allocation2 + $0x278] sm:$0x3] %vm352, 0.0
        %429 = vst.msk [vmem:[#allocation2 + $0x280] sm:$0xff] %vm347, 0.0
        %430 = vst.msk [vmem:[#allocation2 + $0x288] sm:$0xff] %vm347, 0.0
        %431 = vst.msk [vmem:[#allocation2 + $0x290] sm:$0xff] %vm347, 0.0
        %432 = vst.msk [vmem:[#allocation2 + $0x298] sm:$0xff] %vm347, 0.0
        %433 = vst.msk [vmem:[#allocation2 + $0x2a0] sm:$0x3] %vm352, 0.0
        %434 = vst.msk [vmem:[#allocation2 + $0x2a8] sm:$0xff] %vm347, 0.0
        %435 = vst.msk [vmem:[#allocation2 + $0x2b0] sm:$0xff] %vm347, 0.0
        %436 = vst.msk [vmem:[#allocation2 + $0x2b8] sm:$0xff] %vm347, 0.0
        %437 = vst.msk [vmem:[#allocation2 + $0x2c0] sm:$0xff] %vm347, 0.0
        %438 = vst.msk [vmem:[#allocation2 + $0x2c8] sm:$0x3] %vm352, 0.0
        %v439 = vld [vmem:[%s346] sm:$0xff]
        %v440 = vld [vmem:[%s346 + $0x8] sm:$0xff]
        %v441 = vld [vmem:[%s346 + $0x10] sm:$0xff]
        %v442 = vld [vmem:[%s346 + $0x18] sm:$0xff]
        %v443 = vld [vmem:[%s346 + $0x20] sm:$0xff]
        %v444 = vld [vmem:[%s346 + $0x28] sm:$0xff]
        %v445 = vld [vmem:[%s346 + $0x30] sm:$0xff]
        %v446 = vld [vmem:[%s346 + $0x38] sm:$0xff]
        %v447 = vld [vmem:[%s346 + $0x40] sm:$0xff]
        %v448 = vld [vmem:[%s346 + $0x48] sm:$0xff]
        %v449 = vld [vmem:[%s346 + $0x50] sm:$0xff]
        %v450 = vld [vmem:[%s346 + $0x58] sm:$0xff]
        %v451 = vld [vmem:[%s346 + $0x60] sm:$0xff]
        %v452 = vld [vmem:[%s346 + $0x68] sm:$0xff]
        %v453 = vld [vmem:[%s346 + $0x70] sm:$0xff]
        %v454 = vld [vmem:[%s346 + $0x78] sm:$0xff]
        %v455 = vld [vmem:[%s346 + $0x80] sm:$0xff]
        %v456 = vld [vmem:[%s346 + $0x88] sm:$0xff]
        %v457 = vld [vmem:[%s346 + $0x90] sm:$0xff]
        %v458 = vld [vmem:[%s346 + $0x98] sm:$0xff]
        %v459 = vld [vmem:[%s346 + $0xa0] sm:$0xff]
        %v460 = vld [vmem:[%s346 + $0xa8] sm:$0xff]
        %v461 = vld [vmem:[%s346 + $0xb0] sm:$0xff]
        %v462 = vld [vmem:[%s346 + $0xb8] sm:$0xff]
        %v463 = vld [vmem:[%s346 + $0xc0] sm:$0xff]
        %v464 = vld [vmem:[%s346 + $0xc8] sm:$0xff]
        %v465 = vld [vmem:[%s346 + $0xd0] sm:$0xff]
        %v466 = vld [vmem:[%s346 + $0xd8] sm:$0xff]
        %v467 = vld [vmem:[%s346 + $0xe0] sm:$0xff]
        %v468 = vld [vmem:[%s346 + $0xe8] sm:$0xff]
        %v469 = vld [vmem:[%s346 + $0xf0] sm:$0xff]
        %v470 = vld [vmem:[%s346 + $0xf8] sm:$0xff]
        %v471 = vld [vmem:[%s346 + $0x100] sm:$0xff]
        %v472 = vld [vmem:[%s346 + $0x108] sm:$0xff]
        %v473 = vld [vmem:[%s346 + $0x110] sm:$0xff]
        %v474 = vld [vmem:[%s346 + $0x118] sm:$0xff]
        %v475 = vld [vmem:[%s346 + $0x120] sm:$0xff]
        %v476 = vld [vmem:[%s346 + $0x128] sm:$0xff]
        %v477 = vld [vmem:[%s346 + $0x130] sm:$0xff]
        %v478 = vld [vmem:[%s346 + $0x138] sm:$0xff]
        %v479 = vld [vmem:[%s346 + $0x140] sm:$0xff]
        %v480 = vld [vmem:[%s346 + $0x148] sm:$0xff]
        %v481 = vld [vmem:[%s346 + $0x150] sm:$0xff]
        %v482 = vld [vmem:[%s346 + $0x158] sm:$0xff]
        %v483 = vld [vmem:[%s346 + $0x160] sm:$0xff]
        %v484 = vld [vmem:[%s346 + $0x168] sm:$0xff]
        %v485 = vld [vmem:[%s346 + $0x170] sm:$0xff]
        %v486 = vld [vmem:[%s346 + $0x178] sm:$0xff]
        %v487 = vld [vmem:[%s346 + $0x180] sm:$0xff]
        %v488 = vld [vmem:[%s346 + $0x188] sm:$0xff]
        %v489 = vld [vmem:[%s346 + $0x190] sm:$0xff]
        %v490 = vld [vmem:[%s346 + $0x198] sm:$0xff]
        %v491 = vld [vmem:[%s346 + $0x1a0] sm:$0xff]
        %v492 = vld [vmem:[%s346 + $0x1a8] sm:$0xff]
        %v493 = vld [vmem:[%s346 + $0x1b0] sm:$0xff]
        %v494 = vld [vmem:[%s346 + $0x1b8] sm:$0xff]
        %v495 = vld [vmem:[%s346 + $0x1c0] sm:$0xff]
        %v496 = vld [vmem:[%s346 + $0x1c8] sm:$0xff]
        %v497 = vld [vmem:[%s346 + $0x1d0] sm:$0xff]
        %v498 = vld [vmem:[%s346 + $0x1d8] sm:$0xff]
        %v499 = vld [vmem:[%s346 + $0x1e0] sm:$0xff]
        %v500 = vld [vmem:[%s346 + $0x1e8] sm:$0xff]
        %v501 = vld [vmem:[%s346 + $0x1f0] sm:$0xff]
        %v502 = vld [vmem:[%s346 + $0x1f8] sm:$0xff]
        %s503 = scalar_lea.vmem [#allocation2], 40
        %504 = vst.msk [vmem:[%s503 + $0x1] sm:$0xff] %vm347, %v439
        %505 = vst.msk [vmem:[%s503 + $0x9] sm:$0xff] %vm347, %v440
        %506 = vst.msk [vmem:[%s503 + $0x11] sm:$0xff] %vm347, %v441
        %507 = vst.msk [vmem:[%s503 + $0x19] sm:$0xff] %vm347, %v442
        %508 = vst.msk [vmem:[%s503 + $0x29] sm:$0xff] %vm347, %v443
        %509 = vst.msk [vmem:[%s503 + $0x31] sm:$0xff] %vm347, %v444
        %510 = vst.msk [vmem:[%s503 + $0x39] sm:$0xff] %vm347, %v445
        %511 = vst.msk [vmem:[%s503 + $0x41] sm:$0xff] %vm347, %v446
        %512 = vst.msk [vmem:[%s503 + $0x51] sm:$0xff] %vm347, %v447
        %513 = vst.msk [vmem:[%s503 + $0x59] sm:$0xff] %vm347, %v448
        %514 = vst.msk [vmem:[%s503 + $0x61] sm:$0xff] %vm347, %v449
        %515 = vst.msk [vmem:[%s503 + $0x69] sm:$0xff] %vm347, %v450
        %516 = vst.msk [vmem:[%s503 + $0x79] sm:$0xff] %vm347, %v451
        %517 = vst.msk [vmem:[%s503 + $0x81] sm:$0xff] %vm347, %v452
        %518 = vst.msk [vmem:[%s503 + $0x89] sm:$0xff] %vm347, %v453
        %519 = vst.msk [vmem:[%s503 + $0x91] sm:$0xff] %vm347, %v454
        %520 = vst.msk [vmem:[%s503 + $0xa1] sm:$0xff] %vm347, %v455
        %521 = vst.msk [vmem:[%s503 + $0xa9] sm:$0xff] %vm347, %v456
        %522 = vst.msk [vmem:[%s503 + $0xb1] sm:$0xff] %vm347, %v457
        %523 = vst.msk [vmem:[%s503 + $0xb9] sm:$0xff] %vm347, %v458
        %524 = vst.msk [vmem:[%s503 + $0xc9] sm:$0xff] %vm347, %v459
        %525 = vst.msk [vmem:[%s503 + $0xd1] sm:$0xff] %vm347, %v460
        %526 = vst.msk [vmem:[%s503 + $0xd9] sm:$0xff] %vm347, %v461
        %527 = vst.msk [vmem:[%s503 + $0xe1] sm:$0xff] %vm347, %v462
        %528 = vst.msk [vmem:[%s503 + $0xf1] sm:$0xff] %vm347, %v463
        %529 = vst.msk [vmem:[%s503 + $0xf9] sm:$0xff] %vm347, %v464
        %530 = vst.msk [vmem:[%s503 + $0x101] sm:$0xff] %vm347, %v465
        %531 = vst.msk [vmem:[%s503 + $0x109] sm:$0xff] %vm347, %v466
        %532 = vst.msk [vmem:[%s503 + $0x119] sm:$0xff] %vm347, %v467
        %533 = vst.msk [vmem:[%s503 + $0x121] sm:$0xff] %vm347, %v468
        %534 = vst.msk [vmem:[%s503 + $0x129] sm:$0xff] %vm347, %v469
        %535 = vst.msk [vmem:[%s503 + $0x131] sm:$0xff] %vm347, %v470
        %536 = vst.msk [vmem:[%s503 + $0x141] sm:$0xff] %vm347, %v471
        %537 = vst.msk [vmem:[%s503 + $0x149] sm:$0xff] %vm347, %v472
        %538 = vst.msk [vmem:[%s503 + $0x151] sm:$0xff] %vm347, %v473
        %539 = vst.msk [vmem:[%s503 + $0x159] sm:$0xff] %vm347, %v474
        %540 = vst.msk [vmem:[%s503 + $0x169] sm:$0xff] %vm347, %v475
        %541 = vst.msk [vmem:[%s503 + $0x171] sm:$0xff] %vm347, %v476
        %542 = vst.msk [vmem:[%s503 + $0x179] sm:$0xff] %vm347, %v477
        %543 = vst.msk [vmem:[%s503 + $0x181] sm:$0xff] %vm347, %v478
        %544 = vst.msk [vmem:[%s503 + $0x191] sm:$0xff] %vm347, %v479
        %545 = vst.msk [vmem:[%s503 + $0x199] sm:$0xff] %vm347, %v480
        %546 = vst.msk [vmem:[%s503 + $0x1a1] sm:$0xff] %vm347, %v481
        %547 = vst.msk [vmem:[%s503 + $0x1a9] sm:$0xff] %vm347, %v482
        %548 = vst.msk [vmem:[%s503 + $0x1b9] sm:$0xff] %vm347, %v483
        %549 = vst.msk [vmem:[%s503 + $0x1c1] sm:$0xff] %vm347, %v484
        %550 = vst.msk [vmem:[%s503 + $0x1c9] sm:$0xff] %vm347, %v485
        %551 = vst.msk [vmem:[%s503 + $0x1d1] sm:$0xff] %vm347, %v486
        %552 = vst.msk [vmem:[%s503 + $0x1e1] sm:$0xff] %vm347, %v487
        %553 = vst.msk [vmem:[%s503 + $0x1e9] sm:$0xff] %vm347, %v488
        %554 = vst.msk [vmem:[%s503 + $0x1f1] sm:$0xff] %vm347, %v489
        %555 = vst.msk [vmem:[%s503 + $0x1f9] sm:$0xff] %vm347, %v490
        %556 = vst.msk [vmem:[%s503 + $0x209] sm:$0xff] %vm347, %v491
        %557 = vst.msk [vmem:[%s503 + $0x211] sm:$0xff] %vm347, %v492
        %558 = vst.msk [vmem:[%s503 + $0x219] sm:$0xff] %vm347, %v493
        %559 = vst.msk [vmem:[%s503 + $0x221] sm:$0xff] %vm347, %v494
        %560 = vst.msk [vmem:[%s503 + $0x231] sm:$0xff] %vm347, %v495
        %561 = vst.msk [vmem:[%s503 + $0x239] sm:$0xff] %vm347, %v496
        %562 = vst.msk [vmem:[%s503 + $0x241] sm:$0xff] %vm347, %v497
        %563 = vst.msk [vmem:[%s503 + $0x249] sm:$0xff] %vm347, %v498
        %564 = vst.msk [vmem:[%s503 + $0x259] sm:$0xff] %vm347, %v499
        %565 = vst.msk [vmem:[%s503 + $0x261] sm:$0xff] %vm347, %v500
        %566 = vst.msk [vmem:[%s503 + $0x269] sm:$0xff] %vm347, %v501
        %567 = vst.msk [vmem:[%s503 + $0x271] sm:$0xff] %vm347, %v502
        %v568 = vld [vmem:[#allocation2] sm:$0xff]
        %v569 = vld [vmem:[#allocation2 + $0x8] sm:$0xff]
        %v570 = vld [vmem:[#allocation2 + $0x10] sm:$0xff]
        %v571 = vld [vmem:[#allocation2 + $0x18] sm:$0xff]
        %v572 = vld [vmem:[#allocation2 + $0x28] sm:$0xff]
        %v573 = vld [vmem:[#allocation2 + $0x30] sm:$0xff]
        %v574 = vld [vmem:[#allocation2 + $0x38] sm:$0xff]
        %v575 = vld [vmem:[#allocation2 + $0x40] sm:$0xff]
        %v576 = vld [vmem:[#allocation2 + $0x50] sm:$0xff]
        %v577 = vld [vmem:[#allocation2 + $0x58] sm:$0xff]
        %v578 = vld [vmem:[#allocation2 + $0x60] sm:$0xff]
        %v579 = vld [vmem:[#allocation2 + $0x68] sm:$0xff]
        %v580 = vld [vmem:[#allocation2 + $0x78] sm:$0xff]
        %v581 = vld [vmem:[#allocation2 + $0x80] sm:$0xff]
        %v582 = vld [vmem:[#allocation2 + $0x88] sm:$0xff]
        %v583 = vld [vmem:[#allocation2 + $0x90] sm:$0xff]
        %v584 = vld [vmem:[#allocation2 + $0xa0] sm:$0xff]
        %v585 = vld [vmem:[#allocation2 + $0xa8] sm:$0xff]
        %v586 = vld [vmem:[#allocation2 + $0xb0] sm:$0xff]
        %v587 = vld [vmem:[#allocation2 + $0xb8] sm:$0xff]
        %v588 = vld [vmem:[#allocation2 + $0xc8] sm:$0xff]
        %v589 = vld [vmem:[#allocation2 + $0xd0] sm:$0xff]
        %v590 = vld [vmem:[#allocation2 + $0xd8] sm:$0xff]
        %v591 = vld [vmem:[#allocation2 + $0xe0] sm:$0xff]
        %v592 = vld [vmem:[#allocation2 + $0xf0] sm:$0xff]
        %v593 = vld [vmem:[#allocation2 + $0xf8] sm:$0xff]
        %v594 = vld [vmem:[#allocation2 + $0x100] sm:$0xff]
        %v595 = vld [vmem:[#allocation2 + $0x108] sm:$0xff]
        %v596 = vld [vmem:[#allocation2 + $0x118] sm:$0xff]
        %v597 = vld [vmem:[#allocation2 + $0x120] sm:$0xff]
        %v598 = vld [vmem:[#allocation2 + $0x128] sm:$0xff]
        %v599 = vld [vmem:[#allocation2 + $0x130] sm:$0xff]
        %v600 = vld [vmem:[#allocation2 + $0x140] sm:$0xff]
        %v601 = vld [vmem:[#allocation2 + $0x148] sm:$0xff]
        %v602 = vld [vmem:[#allocation2 + $0x150] sm:$0xff]
        %v603 = vld [vmem:[#allocation2 + $0x158] sm:$0xff]
        %v604 = vld [vmem:[#allocation2 + $0x168] sm:$0xff]
        %v605 = vld [vmem:[#allocation2 + $0x170] sm:$0xff]
        %v606 = vld [vmem:[#allocation2 + $0x178] sm:$0xff]
        %v607 = vld [vmem:[#allocation2 + $0x180] sm:$0xff]
        %v608 = vld [vmem:[#allocation2 + $0x190] sm:$0xff]
        %v609 = vld [vmem:[#allocation2 + $0x198] sm:$0xff]
        %v610 = vld [vmem:[#allocation2 + $0x1a0] sm:$0xff]
        %v611 = vld [vmem:[#allocation2 + $0x1a8] sm:$0xff]
        %v612 = vld [vmem:[#allocation2 + $0x1b8] sm:$0xff]
        %v613 = vld [vmem:[#allocation2 + $0x1c0] sm:$0xff]
        %v614 = vld [vmem:[#allocation2 + $0x1c8] sm:$0xff]
        %v615 = vld [vmem:[#allocation2 + $0x1d0] sm:$0xff]
        %v616 = vld [vmem:[#allocation2 + $0x1e0] sm:$0xff]
        %v617 = vld [vmem:[#allocation2 + $0x1e8] sm:$0xff]
        %v618 = vld [vmem:[#allocation2 + $0x1f0] sm:$0xff]
        %v619 = vld [vmem:[#allocation2 + $0x1f8] sm:$0xff]
        %v620 = vld [vmem:[#allocation2 + $0x208] sm:$0xff]
        %v621 = vld [vmem:[#allocation2 + $0x210] sm:$0xff]
        %v622 = vld [vmem:[#allocation2 + $0x218] sm:$0xff]
        %v623 = vld [vmem:[#allocation2 + $0x220] sm:$0xff]
        %v624 = vld [vmem:[#allocation2 + $0x230] sm:$0xff]
        %v625 = vld [vmem:[#allocation2 + $0x238] sm:$0xff]
        %v626 = vld [vmem:[#allocation2 + $0x240] sm:$0xff]
        %v627 = vld [vmem:[#allocation2 + $0x248] sm:$0xff]
        %v628 = vld [vmem:[#allocation2 + $0x258] sm:$0xff]
        %v629 = vld [vmem:[#allocation2 + $0x260] sm:$0xff]
        %v630 = vld [vmem:[#allocation2 + $0x268] sm:$0xff]
        %v631 = vld [vmem:[#allocation2 + $0x270] sm:$0xff]
        %632 = vst.msk [vmem:[#allocation3] sm:$0xff] %vm347, %v568
        %633 = vst.msk [vmem:[#allocation3 + $0x8] sm:$0xff] %vm347, %v569
        %634 = vst.msk [vmem:[#allocation3 + $0x10] sm:$0xff] %vm347, %v570
        %635 = vst.msk [vmem:[#allocation3 + $0x18] sm:$0xff] %vm347, %v571
        %636 = vst.msk [vmem:[#allocation3 + $0x20] sm:$0xff] %vm347, %v572
        %637 = vst.msk [vmem:[#allocation3 + $0x28] sm:$0xff] %vm347, %v573
        %638 = vst.msk [vmem:[#allocation3 + $0x30] sm:$0xff] %vm347, %v574
        %639 = vst.msk [vmem:[#allocation3 + $0x38] sm:$0xff] %vm347, %v575
        %640 = vst.msk [vmem:[#allocation3 + $0x40] sm:$0xff] %vm347, %v576
        %641 = vst.msk [vmem:[#allocation3 + $0x48] sm:$0xff] %vm347, %v577
        %642 = vst.msk [vmem:[#allocation3 + $0x50] sm:$0xff] %vm347, %v578
        %643 = vst.msk [vmem:[#allocation3 + $0x58] sm:$0xff] %vm347, %v579
        %644 = vst.msk [vmem:[#allocation3 + $0x60] sm:$0xff] %vm347, %v580
        %645 = vst.msk [vmem:[#allocation3 + $0x68] sm:$0xff] %vm347, %v581
        %646 = vst.msk [vmem:[#allocation3 + $0x70] sm:$0xff] %vm347, %v582
        %647 = vst.msk [vmem:[#allocation3 + $0x78] sm:$0xff] %vm347, %v583
        %648 = vst.msk [vmem:[#allocation3 + $0x80] sm:$0xff] %vm347, %v584
        %649 = vst.msk [vmem:[#allocation3 + $0x88] sm:$0xff] %vm347, %v585
        %650 = vst.msk [vmem:[#allocation3 + $0x90] sm:$0xff] %vm347, %v586
        %651 = vst.msk [vmem:[#allocation3 + $0x98] sm:$0xff] %vm347, %v587
        %652 = vst.msk [vmem:[#allocation3 + $0xa0] sm:$0xff] %vm347, %v588
        %653 = vst.msk [vmem:[#allocation3 + $0xa8] sm:$0xff] %vm347, %v589
        %654 = vst.msk [vmem:[#allocation3 + $0xb0] sm:$0xff] %vm347, %v590
        %655 = vst.msk [vmem:[#allocation3 + $0xb8] sm:$0xff] %vm347, %v591
        %656 = vst.msk [vmem:[#allocation3 + $0xc0] sm:$0xff] %vm347, %v592
        %657 = vst.msk [vmem:[#allocation3 + $0xc8] sm:$0xff] %vm347, %v593
        %658 = vst.msk [vmem:[#allocation3 + $0xd0] sm:$0xff] %vm347, %v594
        %659 = vst.msk [vmem:[#allocation3 + $0xd8] sm:$0xff] %vm347, %v595
        %660 = vst.msk [vmem:[#allocation3 + $0xe0] sm:$0xff] %vm347, %v596
        %661 = vst.msk [vmem:[#allocation3 + $0xe8] sm:$0xff] %vm347, %v597
        %662 = vst.msk [vmem:[#allocation3 + $0xf0] sm:$0xff] %vm347, %v598
        %663 = vst.msk [vmem:[#allocation3 + $0xf8] sm:$0xff] %vm347, %v599
        %664 = vst.msk [vmem:[#allocation3 + $0x100] sm:$0xff] %vm347, %v600
        %665 = vst.msk [vmem:[#allocation3 + $0x108] sm:$0xff] %vm347, %v601
        %666 = vst.msk [vmem:[#allocation3 + $0x110] sm:$0xff] %vm347, %v602
        %667 = vst.msk [vmem:[#allocation3 + $0x118] sm:$0xff] %vm347, %v603
        %668 = vst.msk [vmem:[#allocation3 + $0x120] sm:$0xff] %vm347, %v604
        %669 = vst.msk [vmem:[#allocation3 + $0x128] sm:$0xff] %vm347, %v605
        %670 = vst.msk [vmem:[#allocation3 + $0x130] sm:$0xff] %vm347, %v606
        %671 = vst.msk [vmem:[#allocation3 + $0x138] sm:$0xff] %vm347, %v607
        %672 = vst.msk [vmem:[#allocation3 + $0x140] sm:$0xff] %vm347, %v608
        %673 = vst.msk [vmem:[#allocation3 + $0x148] sm:$0xff] %vm347, %v609
        %674 = vst.msk [vmem:[#allocation3 + $0x150] sm:$0xff] %vm347, %v610
        %675 = vst.msk [vmem:[#allocation3 + $0x158] sm:$0xff] %vm347, %v611
        %676 = vst.msk [vmem:[#allocation3 + $0x160] sm:$0xff] %vm347, %v612
        %677 = vst.msk [vmem:[#allocation3 + $0x168] sm:$0xff] %vm347, %v613
        %678 = vst.msk [vmem:[#allocation3 + $0x170] sm:$0xff] %vm347, %v614
        %679 = vst.msk [vmem:[#allocation3 + $0x178] sm:$0xff] %vm347, %v615
        %680 = vst.msk [vmem:[#allocation3 + $0x180] sm:$0xff] %vm347, %v616
        %681 = vst.msk [vmem:[#allocation3 + $0x188] sm:$0xff] %vm347, %v617
        %682 = vst.msk [vmem:[#allocation3 + $0x190] sm:$0xff] %vm347, %v618
        %683 = vst.msk [vmem:[#allocation3 + $0x198] sm:$0xff] %vm347, %v619
        %684 = vst.msk [vmem:[#allocation3 + $0x1a0] sm:$0xff] %vm347, %v620
        %685 = vst.msk [vmem:[#allocation3 + $0x1a8] sm:$0xff] %vm347, %v621
        %686 = vst.msk [vmem:[#allocation3 + $0x1b0] sm:$0xff] %vm347, %v622
        %687 = vst.msk [vmem:[#allocation3 + $0x1b8] sm:$0xff] %vm347, %v623
        %688 = vst.msk [vmem:[#allocation3 + $0x1c0] sm:$0xff] %vm347, %v624
        %689 = vst.msk [vmem:[#allocation3 + $0x1c8] sm:$0xff] %vm347, %v625
        %690 = vst.msk [vmem:[#allocation3 + $0x1d0] sm:$0xff] %vm347, %v626
        %691 = vst.msk [vmem:[#allocation3 + $0x1d8] sm:$0xff] %vm347, %v627
        %692 = vst.msk [vmem:[#allocation3 + $0x1e0] sm:$0xff] %vm347, %v628
        %693 = vst.msk [vmem:[#allocation3 + $0x1e8] sm:$0xff] %vm347, %v629
        %694 = vst.msk [vmem:[#allocation3 + $0x1f0] sm:$0xff] %vm347, %v630
        %695 = vst.msk [vmem:[#allocation3 + $0x1f8] sm:$0xff] %vm347, %v631
        %v696 = vld [vmem:[#allocation2 + $0x1] sm:$0xff]
        %v697 = vld [vmem:[#allocation2 + $0x9] sm:$0xff]
        %v698 = vld [vmem:[#allocation2 + $0x11] sm:$0xff]
        %v699 = vld [vmem:[#allocation2 + $0x19] sm:$0xff]
        %v700 = vld [vmem:[#allocation2 + $0x29] sm:$0xff]
        %v701 = vld [vmem:[#allocation2 + $0x31] sm:$0xff]
        %v702 = vld [vmem:[#allocation2 + $0x39] sm:$0xff]
        %v703 = vld [vmem:[#allocation2 + $0x41] sm:$0xff]
        %v704 = vld [vmem:[#allocation2 + $0x51] sm:$0xff]
        %v705 = vld [vmem:[#allocation2 + $0x59] sm:$0xff]
        %v706 = vld [vmem:[#allocation2 + $0x61] sm:$0xff]
        %v707 = vld [vmem:[#allocation2 + $0x69] sm:$0xff]
        %v708 = vld [vmem:[#allocation2 + $0x79] sm:$0xff]
        %v709 = vld [vmem:[#allocation2 + $0x81] sm:$0xff]
        %v710 = vld [vmem:[#allocation2 + $0x89] sm:$0xff]
        %v711 = vld [vmem:[#allocation2 + $0x91] sm:$0xff]
        %v712 = vld [vmem:[#allocation2 + $0xa1] sm:$0xff]
        %v713 = vld [vmem:[#allocation2 + $0xa9] sm:$0xff]
        %v714 = vld [vmem:[#allocation2 + $0xb1] sm:$0xff]
        %v715 = vld [vmem:[#allocation2 + $0xb9] sm:$0xff]
        %v716 = vld [vmem:[#allocation2 + $0xc9] sm:$0xff]
        %v717 = vld [vmem:[#allocation2 + $0xd1] sm:$0xff]
        %v718 = vld [vmem:[#allocation2 + $0xd9] sm:$0xff]
        %v719 = vld [vmem:[#allocation2 + $0xe1] sm:$0xff]
        %v720 = vld [vmem:[#allocation2 + $0xf1] sm:$0xff]
        %v721 = vld [vmem:[#allocation2 + $0xf9] sm:$0xff]
        %v722 = vld [vmem:[#allocation2 + $0x101] sm:$0xff]
        %v723 = vld [vmem:[#allocation2 + $0x109] sm:$0xff]
        %v724 = vld [vmem:[#allocation2 + $0x119] sm:$0xff]
        %v725 = vld [vmem:[#allocation2 + $0x121] sm:$0xff]
        %v726 = vld [vmem:[#allocation2 + $0x129] sm:$0xff]
        %v727 = vld [vmem:[#allocation2 + $0x131] sm:$0xff]
        %v728 = vld [vmem:[#allocation2 + $0x141] sm:$0xff]
        %v729 = vld [vmem:[#allocation2 + $0x149] sm:$0xff]
        %v730 = vld [vmem:[#allocation2 + $0x151] sm:$0xff]
        %v731 = vld [vmem:[#allocation2 + $0x159] sm:$0xff]
        %v732 = vld [vmem:[#allocation2 + $0x169] sm:$0xff]
        %v733 = vld [vmem:[#allocation2 + $0x171] sm:$0xff]
        %v734 = vld [vmem:[#allocation2 + $0x179] sm:$0xff]
        %v735 = vld [vmem:[#allocation2 + $0x181] sm:$0xff]
        %v736 = vld [vmem:[#allocation2 + $0x191] sm:$0xff]
        %v737 = vld [vmem:[#allocation2 + $0x199] sm:$0xff]
        %v738 = vld [vmem:[#allocation2 + $0x1a1] sm:$0xff]
        %v739 = vld [vmem:[#allocation2 + $0x1a9] sm:$0xff]
        %v740 = vld [vmem:[#allocation2 + $0x1b9] sm:$0xff]
        %v741 = vld [vmem:[#allocation2 + $0x1c1] sm:$0xff]
        %v742 = vld [vmem:[#allocation2 + $0x1c9] sm:$0xff]
        %v743 = vld [vmem:[#allocation2 + $0x1d1] sm:$0xff]
        %v744 = vld [vmem:[#allocation2 + $0x1e1] sm:$0xff]
        %v745 = vld [vmem:[#allocation2 + $0x1e9] sm:$0xff]
        %v746 = vld [vmem:[#allocation2 + $0x1f1] sm:$0xff]
        %v747 = vld [vmem:[#allocation2 + $0x1f9] sm:$0xff]
        %v748 = vld [vmem:[#allocation2 + $0x209] sm:$0xff]
        %v749 = vld [vmem:[#allocation2 + $0x211] sm:$0xff]
        %v750 = vld [vmem:[#allocation2 + $0x219] sm:$0xff]
        %v751 = vld [vmem:[#allocation2 + $0x221] sm:$0xff]
        %v752 = vld [vmem:[#allocation2 + $0x231] sm:$0xff]
        %v753 = vld [vmem:[#allocation2 + $0x239] sm:$0xff]
        %v754 = vld [vmem:[#allocation2 + $0x241] sm:$0xff]
        %v755 = vld [vmem:[#allocation2 + $0x249] sm:$0xff]
        %v756 = vld [vmem:[#allocation2 + $0x259] sm:$0xff]
        %v757 = vld [vmem:[#allocation2 + $0x261] sm:$0xff]
        %v758 = vld [vmem:[#allocation2 + $0x269] sm:$0xff]
        %v759 = vld [vmem:[#allocation2 + $0x271] sm:$0xff]
        %824 = vrot.lane.b32.xlu0 %v696, 1
        %v825 = vpop.permute.xlu0 %824
        %826 = vrot.lane.b32.xlu0 %v697, 1
        %v827 = vpop.permute.xlu0 %826
        %828 = vrot.lane.b32.xlu0 %v698, 1
        %v829 = vpop.permute.xlu0 %828
        %830 = vrot.lane.b32.xlu0 %v699, 1
        %v831 = vpop.permute.xlu0 %830
        %832 = vrot.lane.b32.xlu0 %v700, 1
        %v833 = vpop.permute.xlu0 %832
        %834 = vrot.lane.b32.xlu0 %v701, 1
        %v835 = vpop.permute.xlu0 %834
        %836 = vrot.lane.b32.xlu0 %v702, 1
        %v837 = vpop.permute.xlu0 %836
        %838 = vrot.lane.b32.xlu0 %v703, 1
        %v839 = vpop.permute.xlu0 %838
        %840 = vrot.lane.b32.xlu0 %v704, 1
        %v841 = vpop.permute.xlu0 %840
        %842 = vrot.lane.b32.xlu0 %v705, 1
        %v843 = vpop.permute.xlu0 %842
        %844 = vrot.lane.b32.xlu0 %v706, 1
        %v845 = vpop.permute.xlu0 %844
        %846 = vrot.lane.b32.xlu0 %v707, 1
        %v847 = vpop.permute.xlu0 %846
        %848 = vrot.lane.b32.xlu0 %v708, 1
        %v849 = vpop.permute.xlu0 %848
        %850 = vrot.lane.b32.xlu0 %v709, 1
        %v851 = vpop.permute.xlu0 %850
        %852 = vrot.lane.b32.xlu0 %v710, 1
        %v853 = vpop.permute.xlu0 %852
        %854 = vrot.lane.b32.xlu0 %v711, 1
        %v855 = vpop.permute.xlu0 %854
        %856 = vrot.lane.b32.xlu0 %v712, 1
        %v857 = vpop.permute.xlu0 %856
        %858 = vrot.lane.b32.xlu0 %v713, 1
        %v859 = vpop.permute.xlu0 %858
        %860 = vrot.lane.b32.xlu0 %v714, 1
        %v861 = vpop.permute.xlu0 %860
        %862 = vrot.lane.b32.xlu0 %v715, 1
        %v863 = vpop.permute.xlu0 %862
        %864 = vrot.lane.b32.xlu0 %v716, 1
        %v865 = vpop.permute.xlu0 %864
        %866 = vrot.lane.b32.xlu0 %v717, 1
        %v867 = vpop.permute.xlu0 %866
        %868 = vrot.lane.b32.xlu0 %v718, 1
        %v869 = vpop.permute.xlu0 %868
        %870 = vrot.lane.b32.xlu0 %v719, 1
        %v871 = vpop.permute.xlu0 %870
        %872 = vrot.lane.b32.xlu0 %v720, 1
        %v873 = vpop.permute.xlu0 %872
        %874 = vrot.lane.b32.xlu0 %v721, 1
        %v875 = vpop.permute.xlu0 %874
        %876 = vrot.lane.b32.xlu0 %v722, 1
        %v877 = vpop.permute.xlu0 %876
        %878 = vrot.lane.b32.xlu0 %v723, 1
        %v879 = vpop.permute.xlu0 %878
        %880 = vrot.lane.b32.xlu0 %v724, 1
        %v881 = vpop.permute.xlu0 %880
        %882 = vrot.lane.b32.xlu0 %v725, 1
        %v883 = vpop.permute.xlu0 %882
        %884 = vrot.lane.b32.xlu0 %v726, 1
        %v885 = vpop.permute.xlu0 %884
        %886 = vrot.lane.b32.xlu0 %v727, 1
        %v887 = vpop.permute.xlu0 %886
        %888 = vrot.lane.b32.xlu0 %v728, 1
        %v889 = vpop.permute.xlu0 %888
        %890 = vrot.lane.b32.xlu0 %v729, 1
        %v891 = vpop.permute.xlu0 %890
        %892 = vrot.lane.b32.xlu0 %v730, 1
        %v893 = vpop.permute.xlu0 %892
        %894 = vrot.lane.b32.xlu0 %v731, 1
        %v895 = vpop.permute.xlu0 %894
        %896 = vrot.lane.b32.xlu0 %v732, 1
        %v897 = vpop.permute.xlu0 %896
        %898 = vrot.lane.b32.xlu0 %v733, 1
        %v899 = vpop.permute.xlu0 %898
        %900 = vrot.lane.b32.xlu0 %v734, 1
        %v901 = vpop.permute.xlu0 %900
        %902 = vrot.lane.b32.xlu0 %v735, 1
        %v903 = vpop.permute.xlu0 %902
        %904 = vrot.lane.b32.xlu0 %v736, 1
        %v905 = vpop.permute.xlu0 %904
        %906 = vrot.lane.b32.xlu0 %v737, 1
        %v907 = vpop.permute.xlu0 %906
        %908 = vrot.lane.b32.xlu0 %v738, 1
        %v909 = vpop.permute.xlu0 %908
        %910 = vrot.lane.b32.xlu0 %v739, 1
        %v911 = vpop.permute.xlu0 %910
        %912 = vrot.lane.b32.xlu0 %v740, 1
        %v913 = vpop.permute.xlu0 %912
        %914 = vrot.lane.b32.xlu0 %v741, 1
        %v915 = vpop.permute.xlu0 %914
        %916 = vrot.lane.b32.xlu0 %v742, 1
        %v917 = vpop.permute.xlu0 %916
        %918 = vrot.lane.b32.xlu0 %v743, 1
        %v919 = vpop.permute.xlu0 %918
        %920 = vrot.lane.b32.xlu0 %v744, 1
        %v921 = vpop.permute.xlu0 %920
        %922 = vrot.lane.b32.xlu0 %v745, 1
        %v923 = vpop.permute.xlu0 %922
        %924 = vrot.lane.b32.xlu0 %v746, 1
        %v925 = vpop.permute.xlu0 %924
        %926 = vrot.lane.b32.xlu0 %v747, 1
        %v927 = vpop.permute.xlu0 %926
        %928 = vrot.lane.b32.xlu0 %v748, 1
        %v929 = vpop.permute.xlu0 %928
        %930 = vrot.lane.b32.xlu0 %v749, 1
        %v931 = vpop.permute.xlu0 %930
        %932 = vrot.lane.b32.xlu0 %v750, 1
        %v933 = vpop.permute.xlu0 %932
        %934 = vrot.lane.b32.xlu0 %v751, 1
        %v935 = vpop.permute.xlu0 %934
        %936 = vrot.lane.b32.xlu0 %v752, 1
        %v937 = vpop.permute.xlu0 %936
        %938 = vrot.lane.b32.xlu0 %v753, 1
        %v939 = vpop.permute.xlu0 %938
        %940 = vrot.lane.b32.xlu0 %v754, 1
        %v941 = vpop.permute.xlu0 %940
        %942 = vrot.lane.b32.xlu0 %v755, 1
        %v943 = vpop.permute.xlu0 %942
        %944 = vrot.lane.b32.xlu0 %v756, 1
        %v945 = vpop.permute.xlu0 %944
        %946 = vrot.lane.b32.xlu0 %v757, 1
        %v947 = vpop.permute.xlu0 %946
        %948 = vrot.lane.b32.xlu0 %v758, 1
        %v949 = vpop.permute.xlu0 %948
        %950 = vrot.lane.b32.xlu0 %v759, 1
        %v951 = vpop.permute.xlu0 %950
        %vm1016 = vcmask 15368
        %1017 = vst.msk [vmem:[#allocation3] sm:$0xff] %vm1016, %v825
        %1018 = vst.msk [vmem:[#allocation3 + $0x8] sm:$0xff] %vm1016, %v827
        %1019 = vst.msk [vmem:[#allocation3 + $0x10] sm:$0xff] %vm1016, %v829
        %1020 = vst.msk [vmem:[#allocation3 + $0x18] sm:$0xff] %vm1016, %v831
        %1021 = vst.msk [vmem:[#allocation3 + $0x20] sm:$0xff] %vm1016, %v833
        %1022 = vst.msk [vmem:[#allocation3 + $0x28] sm:$0xff] %vm1016, %v835
        %1023 = vst.msk [vmem:[#allocation3 + $0x30] sm:$0xff] %vm1016, %v837
        %1024 = vst.msk [vmem:[#allocation3 + $0x38] sm:$0xff] %vm1016, %v839
        %1025 = vst.msk [vmem:[#allocation3 + $0x40] sm:$0xff] %vm1016, %v841
        %1026 = vst.msk [vmem:[#allocation3 + $0x48] sm:$0xff] %vm1016, %v843
        %1027 = vst.msk [vmem:[#allocation3 + $0x50] sm:$0xff] %vm1016, %v845
        %1028 = vst.msk [vmem:[#allocation3 + $0x58] sm:$0xff] %vm1016, %v847
        %1029 = vst.msk [vmem:[#allocation3 + $0x60] sm:$0xff] %vm1016, %v849
        %1030 = vst.msk [vmem:[#allocation3 + $0x68] sm:$0xff] %vm1016, %v851
        %1031 = vst.msk [vmem:[#allocation3 + $0x70] sm:$0xff] %vm1016, %v853
        %1032 = vst.msk [vmem:[#allocation3 + $0x78] sm:$0xff] %vm1016, %v855
        %1033 = vst.msk [vmem:[#allocation3 + $0x80] sm:$0xff] %vm1016, %v857
        %1034 = vst.msk [vmem:[#allocation3 + $0x88] sm:$0xff] %vm1016, %v859
        %1035 = vst.msk [vmem:[#allocation3 + $0x90] sm:$0xff] %vm1016, %v861
        %1036 = vst.msk [vmem:[#allocation3 + $0x98] sm:$0xff] %vm1016, %v863
        %1037 = vst.msk [vmem:[#allocation3 + $0xa0] sm:$0xff] %vm1016, %v865
        %1038 = vst.msk [vmem:[#allocation3 + $0xa8] sm:$0xff] %vm1016, %v867
        %1039 = vst.msk [vmem:[#allocation3 + $0xb0] sm:$0xff] %vm1016, %v869
        %1040 = vst.msk [vmem:[#allocation3 + $0xb8] sm:$0xff] %vm1016, %v871
        %1041 = vst.msk [vmem:[#allocation3 + $0xc0] sm:$0xff] %vm1016, %v873
        %1042 = vst.msk [vmem:[#allocation3 + $0xc8] sm:$0xff] %vm1016, %v875
        %1043 = vst.msk [vmem:[#allocation3 + $0xd0] sm:$0xff] %vm1016, %v877
        %1044 = vst.msk [vmem:[#allocation3 + $0xd8] sm:$0xff] %vm1016, %v879
        %1045 = vst.msk [vmem:[#allocation3 + $0xe0] sm:$0xff] %vm1016, %v881
        %1046 = vst.msk [vmem:[#allocation3 + $0xe8] sm:$0xff] %vm1016, %v883
        %1047 = vst.msk [vmem:[#allocation3 + $0xf0] sm:$0xff] %vm1016, %v885
        %1048 = vst.msk [vmem:[#allocation3 + $0xf8] sm:$0xff] %vm1016, %v887
        %1049 = vst.msk [vmem:[#allocation3 + $0x100] sm:$0xff] %vm1016, %v889
        %1050 = vst.msk [vmem:[#allocation3 + $0x108] sm:$0xff] %vm1016, %v891
        %1051 = vst.msk [vmem:[#allocation3 + $0x110] sm:$0xff] %vm1016, %v893
        %1052 = vst.msk [vmem:[#allocation3 + $0x118] sm:$0xff] %vm1016, %v895
        %1053 = vst.msk [vmem:[#allocation3 + $0x120] sm:$0xff] %vm1016, %v897
        %1054 = vst.msk [vmem:[#allocation3 + $0x128] sm:$0xff] %vm1016, %v899
        %1055 = vst.msk [vmem:[#allocation3 + $0x130] sm:$0xff] %vm1016, %v901
        %1056 = vst.msk [vmem:[#allocation3 + $0x138] sm:$0xff] %vm1016, %v903
        %1057 = vst.msk [vmem:[#allocation3 + $0x140] sm:$0xff] %vm1016, %v905
        %1058 = vst.msk [vmem:[#allocation3 + $0x148] sm:$0xff] %vm1016, %v907
        %1059 = vst.msk [vmem:[#allocation3 + $0x150] sm:$0xff] %vm1016, %v909
        %1060 = vst.msk [vmem:[#allocation3 + $0x158] sm:$0xff] %vm1016, %v911
        %1061 = vst.msk [vmem:[#allocation3 + $0x160] sm:$0xff] %vm1016, %v913
        %1062 = vst.msk [vmem:[#allocation3 + $0x168] sm:$0xff] %vm1016, %v915
        %1063 = vst.msk [vmem:[#allocation3 + $0x170] sm:$0xff] %vm1016, %v917
        %1064 = vst.msk [vmem:[#allocation3 + $0x178] sm:$0xff] %vm1016, %v919
        %1065 = vst.msk [vmem:[#allocation3 + $0x180] sm:$0xff] %vm1016, %v921
        %1066 = vst.msk [vmem:[#allocation3 + $0x188] sm:$0xff] %vm1016, %v923
        %1067 = vst.msk [vmem:[#allocation3 + $0x190] sm:$0xff] %vm1016, %v925
        %1068 = vst.msk [vmem:[#allocation3 + $0x198] sm:$0xff] %vm1016, %v927
        %1069 = vst.msk [vmem:[#allocation3 + $0x1a0] sm:$0xff] %vm1016, %v929
        %1070 = vst.msk [vmem:[#allocation3 + $0x1a8] sm:$0xff] %vm1016, %v931
        %1071 = vst.msk [vmem:[#allocation3 + $0x1b0] sm:$0xff] %vm1016, %v933
        %1072 = vst.msk [vmem:[#allocation3 + $0x1b8] sm:$0xff] %vm1016, %v935
        %1073 = vst.msk [vmem:[#allocation3 + $0x1c0] sm:$0xff] %vm1016, %v937
        %1074 = vst.msk [vmem:[#allocation3 + $0x1c8] sm:$0xff] %vm1016, %v939
        %1075 = vst.msk [vmem:[#allocation3 + $0x1d0] sm:$0xff] %vm1016, %v941
        %1076 = vst.msk [vmem:[#allocation3 + $0x1d8] sm:$0xff] %vm1016, %v943
        %1077 = vst.msk [vmem:[#allocation3 + $0x1e0] sm:$0xff] %vm1016, %v945
        %1078 = vst.msk [vmem:[#allocation3 + $0x1e8] sm:$0xff] %vm1016, %v947
        %1079 = vst.msk [vmem:[#allocation3 + $0x1f0] sm:$0xff] %vm1016, %v949
        %1080 = vst.msk [vmem:[#allocation3 + $0x1f8] sm:$0xff] %vm1016, %v951
        %v1081 = vld [vmem:[#allocation2 + $0x2] sm:$0xff]
        %v1082 = vld [vmem:[#allocation2 + $0xa] sm:$0xff]
        %v1083 = vld [vmem:[#allocation2 + $0x12] sm:$0xff]
        %v1084 = vld [vmem:[#allocation2 + $0x1a] sm:$0xff]
        %v1085 = vld [vmem:[#allocation2 + $0x2a] sm:$0xff]
        %v1086 = vld [vmem:[#allocation2 + $0x32] sm:$0xff]
        %v1087 = vld [vmem:[#allocation2 + $0x3a] sm:$0xff]
        %v1088 = vld [vmem:[#allocation2 + $0x42] sm:$0xff]
        %v1089 = vld [vmem:[#allocation2 + $0x52] sm:$0xff]
        %v1090 = vld [vmem:[#allocation2 + $0x5a] sm:$0xff]
        %v1091 = vld [vmem:[#allocation2 + $0x62] sm:$0xff]
        %v1092 = vld [vmem:[#allocation2 + $0x6a] sm:$0xff]
        %v1093 = vld [vmem:[#allocation2 + $0x7a] sm:$0xff]
        %v1094 = vld [vmem:[#allocation2 + $0x82] sm:$0xff]
        %v1095 = vld [vmem:[#allocation2 + $0x8a] sm:$0xff]
        %v1096 = vld [vmem:[#allocation2 + $0x92] sm:$0xff]
        %v1097 = vld [vmem:[#allocation2 + $0xa2] sm:$0xff]
        %v1098 = vld [vmem:[#allocation2 + $0xaa] sm:$0xff]
        %v1099 = vld [vmem:[#allocation2 + $0xb2] sm:$0xff]
        %v1100 = vld [vmem:[#allocation2 + $0xba] sm:$0xff]
        %v1101 = vld [vmem:[#allocation2 + $0xca] sm:$0xff]
        %v1102 = vld [vmem:[#allocation2 + $0xd2] sm:$0xff]
        %v1103 = vld [vmem:[#allocation2 + $0xda] sm:$0xff]
        %v1104 = vld [vmem:[#allocation2 + $0xe2] sm:$0xff]
        %v1105 = vld [vmem:[#allocation2 + $0xf2] sm:$0xff]
        %v1106 = vld [vmem:[#allocation2 + $0xfa] sm:$0xff]
        %v1107 = vld [vmem:[#allocation2 + $0x102] sm:$0xff]
        %v1108 = vld [vmem:[#allocation2 + $0x10a] sm:$0xff]
        %v1109 = vld [vmem:[#allocation2 + $0x11a] sm:$0xff]
        %v1110 = vld [vmem:[#allocation2 + $0x122] sm:$0xff]
        %v1111 = vld [vmem:[#allocation2 + $0x12a] sm:$0xff]
        %v1112 = vld [vmem:[#allocation2 + $0x132] sm:$0xff]
        %v1113 = vld [vmem:[#allocation2 + $0x142] sm:$0xff]
        %v1114 = vld [vmem:[#allocation2 + $0x14a] sm:$0xff]
        %v1115 = vld [vmem:[#allocation2 + $0x152] sm:$0xff]
        %v1116 = vld [vmem:[#allocation2 + $0x15a] sm:$0xff]
        %v1117 = vld [vmem:[#allocation2 + $0x16a] sm:$0xff]
        %v1118 = vld [vmem:[#allocation2 + $0x172] sm:$0xff]
        %v1119 = vld [vmem:[#allocation2 + $0x17a] sm:$0xff]
        %v1120 = vld [vmem:[#allocation2 + $0x182] sm:$0xff]
        %v1121 = vld [vmem:[#allocation2 + $0x192] sm:$0xff]
        %v1122 = vld [vmem:[#allocation2 + $0x19a] sm:$0xff]
        %v1123 = vld [vmem:[#allocation2 + $0x1a2] sm:$0xff]
        %v1124 = vld [vmem:[#allocation2 + $0x1aa] sm:$0xff]
        %v1125 = vld [vmem:[#allocation2 + $0x1ba] sm:$0xff]
        %v1126 = vld [vmem:[#allocation2 + $0x1c2] sm:$0xff]
        %v1127 = vld [vmem:[#allocation2 + $0x1ca] sm:$0xff]
        %v1128 = vld [vmem:[#allocation2 + $0x1d2] sm:$0xff]
        %v1129 = vld [vmem:[#allocation2 + $0x1e2] sm:$0xff]
        %v1130 = vld [vmem:[#allocation2 + $0x1ea] sm:$0xff]
        %v1131 = vld [vmem:[#allocation2 + $0x1f2] sm:$0xff]
        %v1132 = vld [vmem:[#allocation2 + $0x1fa] sm:$0xff]
        %v1133 = vld [vmem:[#allocation2 + $0x20a] sm:$0xff]
        %v1134 = vld [vmem:[#allocation2 + $0x212] sm:$0xff]
        %v1135 = vld [vmem:[#allocation2 + $0x21a] sm:$0xff]
        %v1136 = vld [vmem:[#allocation2 + $0x222] sm:$0xff]
        %v1137 = vld [vmem:[#allocation2 + $0x232] sm:$0xff]
        %v1138 = vld [vmem:[#allocation2 + $0x23a] sm:$0xff]
        %v1139 = vld [vmem:[#allocation2 + $0x242] sm:$0xff]
        %v1140 = vld [vmem:[#allocation2 + $0x24a] sm:$0xff]
        %v1141 = vld [vmem:[#allocation2 + $0x25a] sm:$0xff]
        %v1142 = vld [vmem:[#allocation2 + $0x262] sm:$0xff]
        %v1143 = vld [vmem:[#allocation2 + $0x26a] sm:$0xff]
        %v1144 = vld [vmem:[#allocation2 + $0x272] sm:$0xff]
        %1209 = vrot.lane.b32.xlu0 %v1081, 2
        %v1210 = vpop.permute.xlu0 %1209
        %1211 = vrot.lane.b32.xlu0 %v1082, 2
        %v1212 = vpop.permute.xlu0 %1211
        %1213 = vrot.lane.b32.xlu0 %v1083, 2
        %v1214 = vpop.permute.xlu0 %1213
        %1215 = vrot.lane.b32.xlu0 %v1084, 2
        %v1216 = vpop.permute.xlu0 %1215
        %1217 = vrot.lane.b32.xlu0 %v1085, 2
        %v1218 = vpop.permute.xlu0 %1217
        %1219 = vrot.lane.b32.xlu0 %v1086, 2
        %v1220 = vpop.permute.xlu0 %1219
        %1221 = vrot.lane.b32.xlu0 %v1087, 2
        %v1222 = vpop.permute.xlu0 %1221
        %1223 = vrot.lane.b32.xlu0 %v1088, 2
        %v1224 = vpop.permute.xlu0 %1223
        %1225 = vrot.lane.b32.xlu0 %v1089, 2
        %v1226 = vpop.permute.xlu0 %1225
        %1227 = vrot.lane.b32.xlu0 %v1090, 2
        %v1228 = vpop.permute.xlu0 %1227
        %1229 = vrot.lane.b32.xlu0 %v1091, 2
        %v1230 = vpop.permute.xlu0 %1229
        %1231 = vrot.lane.b32.xlu0 %v1092, 2
        %v1232 = vpop.permute.xlu0 %1231
        %1233 = vrot.lane.b32.xlu0 %v1093, 2
        %v1234 = vpop.permute.xlu0 %1233
        %1235 = vrot.lane.b32.xlu0 %v1094, 2
        %v1236 = vpop.permute.xlu0 %1235
        %1237 = vrot.lane.b32.xlu0 %v1095, 2
        %v1238 = vpop.permute.xlu0 %1237
        %1239 = vrot.lane.b32.xlu0 %v1096, 2
        %v1240 = vpop.permute.xlu0 %1239
        %1241 = vrot.lane.b32.xlu0 %v1097, 2
        %v1242 = vpop.permute.xlu0 %1241
        %1243 = vrot.lane.b32.xlu0 %v1098, 2
        %v1244 = vpop.permute.xlu0 %1243
        %1245 = vrot.lane.b32.xlu0 %v1099, 2
        %v1246 = vpop.permute.xlu0 %1245
        %1247 = vrot.lane.b32.xlu0 %v1100, 2
        %v1248 = vpop.permute.xlu0 %1247
        %1249 = vrot.lane.b32.xlu0 %v1101, 2
        %v1250 = vpop.permute.xlu0 %1249
        %1251 = vrot.lane.b32.xlu0 %v1102, 2
        %v1252 = vpop.permute.xlu0 %1251
        %1253 = vrot.lane.b32.xlu0 %v1103, 2
        %v1254 = vpop.permute.xlu0 %1253
        %1255 = vrot.lane.b32.xlu0 %v1104, 2
        %v1256 = vpop.permute.xlu0 %1255
        %1257 = vrot.lane.b32.xlu0 %v1105, 2
        %v1258 = vpop.permute.xlu0 %1257
        %1259 = vrot.lane.b32.xlu0 %v1106, 2
        %v1260 = vpop.permute.xlu0 %1259
        %1261 = vrot.lane.b32.xlu0 %v1107, 2
        %v1262 = vpop.permute.xlu0 %1261
        %1263 = vrot.lane.b32.xlu0 %v1108, 2
        %v1264 = vpop.permute.xlu0 %1263
        %1265 = vrot.lane.b32.xlu0 %v1109, 2
        %v1266 = vpop.permute.xlu0 %1265
        %1267 = vrot.lane.b32.xlu0 %v1110, 2
        %v1268 = vpop.permute.xlu0 %1267
        %1269 = vrot.lane.b32.xlu0 %v1111, 2
        %v1270 = vpop.permute.xlu0 %1269
        %1271 = vrot.lane.b32.xlu0 %v1112, 2
        %v1272 = vpop.permute.xlu0 %1271
        %1273 = vrot.lane.b32.xlu0 %v1113, 2
        %v1274 = vpop.permute.xlu0 %1273
        %1275 = vrot.lane.b32.xlu0 %v1114, 2
        %v1276 = vpop.permute.xlu0 %1275
        %1277 = vrot.lane.b32.xlu0 %v1115, 2
        %v1278 = vpop.permute.xlu0 %1277
        %1279 = vrot.lane.b32.xlu0 %v1116, 2
        %v1280 = vpop.permute.xlu0 %1279
        %1281 = vrot.lane.b32.xlu0 %v1117, 2
        %v1282 = vpop.permute.xlu0 %1281
        %1283 = vrot.lane.b32.xlu0 %v1118, 2
        %v1284 = vpop.permute.xlu0 %1283
        %1285 = vrot.lane.b32.xlu0 %v1119, 2
        %v1286 = vpop.permute.xlu0 %1285
        %1287 = vrot.lane.b32.xlu0 %v1120, 2
        %v1288 = vpop.permute.xlu0 %1287
        %1289 = vrot.lane.b32.xlu0 %v1121, 2
        %v1290 = vpop.permute.xlu0 %1289
        %1291 = vrot.lane.b32.xlu0 %v1122, 2
        %v1292 = vpop.permute.xlu0 %1291
        %1293 = vrot.lane.b32.xlu0 %v1123, 2
        %v1294 = vpop.permute.xlu0 %1293
        %1295 = vrot.lane.b32.xlu0 %v1124, 2
        %v1296 = vpop.permute.xlu0 %1295
        %1297 = vrot.lane.b32.xlu0 %v1125, 2
        %v1298 = vpop.permute.xlu0 %1297
        %1299 = vrot.lane.b32.xlu0 %v1126, 2
        %v1300 = vpop.permute.xlu0 %1299
        %1301 = vrot.lane.b32.xlu0 %v1127, 2
        %v1302 = vpop.permute.xlu0 %1301
        %1303 = vrot.lane.b32.xlu0 %v1128, 2
        %v1304 = vpop.permute.xlu0 %1303
        %1305 = vrot.lane.b32.xlu0 %v1129, 2
        %v1306 = vpop.permute.xlu0 %1305
        %1307 = vrot.lane.b32.xlu0 %v1130, 2
        %v1308 = vpop.permute.xlu0 %1307
        %1309 = vrot.lane.b32.xlu0 %v1131, 2
        %v1310 = vpop.permute.xlu0 %1309
        %1311 = vrot.lane.b32.xlu0 %v1132, 2
        %v1312 = vpop.permute.xlu0 %1311
        %1313 = vrot.lane.b32.xlu0 %v1133, 2
        %v1314 = vpop.permute.xlu0 %1313
        %1315 = vrot.lane.b32.xlu0 %v1134, 2
        %v1316 = vpop.permute.xlu0 %1315
        %1317 = vrot.lane.b32.xlu0 %v1135, 2
        %v1318 = vpop.permute.xlu0 %1317
        %1319 = vrot.lane.b32.xlu0 %v1136, 2
        %v1320 = vpop.permute.xlu0 %1319
        %1321 = vrot.lane.b32.xlu0 %v1137, 2
        %v1322 = vpop.permute.xlu0 %1321
        %1323 = vrot.lane.b32.xlu0 %v1138, 2
        %v1324 = vpop.permute.xlu0 %1323
        %1325 = vrot.lane.b32.xlu0 %v1139, 2
        %v1326 = vpop.permute.xlu0 %1325
        %1327 = vrot.lane.b32.xlu0 %v1140, 2
        %v1328 = vpop.permute.xlu0 %1327
        %1329 = vrot.lane.b32.xlu0 %v1141, 2
        %v1330 = vpop.permute.xlu0 %1329
        %1331 = vrot.lane.b32.xlu0 %v1142, 2
        %v1332 = vpop.permute.xlu0 %1331
        %1333 = vrot.lane.b32.xlu0 %v1143, 2
        %v1334 = vpop.permute.xlu0 %1333
        %1335 = vrot.lane.b32.xlu0 %v1144, 2
        %v1336 = vpop.permute.xlu0 %1335
        %vm1401 = vcmask 23568
        %1402 = vst.msk [vmem:[#allocation3] sm:$0xff] %vm1401, %v1210
        %1403 = vst.msk [vmem:[#allocation3 + $0x8] sm:$0xff] %vm1401, %v1212
        %1404 = vst.msk [vmem:[#allocation3 + $0x10] sm:$0xff] %vm1401, %v1214
        %1405 = vst.msk [vmem:[#allocation3 + $0x18] sm:$0xff] %vm1401, %v1216
        %1406 = vst.msk [vmem:[#allocation3 + $0x20] sm:$0xff] %vm1401, %v1218
        %1407 = vst.msk [vmem:[#allocation3 + $0x28] sm:$0xff] %vm1401, %v1220
        %1408 = vst.msk [vmem:[#allocation3 + $0x30] sm:$0xff] %vm1401, %v1222
        %1409 = vst.msk [vmem:[#allocation3 + $0x38] sm:$0xff] %vm1401, %v1224
        %1410 = vst.msk [vmem:[#allocation3 + $0x40] sm:$0xff] %vm1401, %v1226
        %1411 = vst.msk [vmem:[#allocation3 + $0x48] sm:$0xff] %vm1401, %v1228
        %1412 = vst.msk [vmem:[#allocation3 + $0x50] sm:$0xff] %vm1401, %v1230
        %1413 = vst.msk [vmem:[#allocation3 + $0x58] sm:$0xff] %vm1401, %v1232
        %1414 = vst.msk [vmem:[#allocation3 + $0x60] sm:$0xff] %vm1401, %v1234
        %1415 = vst.msk [vmem:[#allocation3 + $0x68] sm:$0xff] %vm1401, %v1236
        %1416 = vst.msk [vmem:[#allocation3 + $0x70] sm:$0xff] %vm1401, %v1238
        %1417 = vst.msk [vmem:[#allocation3 + $0x78] sm:$0xff] %vm1401, %v1240
        %1418 = vst.msk [vmem:[#allocation3 + $0x80] sm:$0xff] %vm1401, %v1242
        %1419 = vst.msk [vmem:[#allocation3 + $0x88] sm:$0xff] %vm1401, %v1244
        %1420 = vst.msk [vmem:[#allocation3 + $0x90] sm:$0xff] %vm1401, %v1246
        %1421 = vst.msk [vmem:[#allocation3 + $0x98] sm:$0xff] %vm1401, %v1248
        %1422 = vst.msk [vmem:[#allocation3 + $0xa0] sm:$0xff] %vm1401, %v1250
        %1423 = vst.msk [vmem:[#allocation3 + $0xa8] sm:$0xff] %vm1401, %v1252
        %1424 = vst.msk [vmem:[#allocation3 + $0xb0] sm:$0xff] %vm1401, %v1254
        %1425 = vst.msk [vmem:[#allocation3 + $0xb8] sm:$0xff] %vm1401, %v1256
        %1426 = vst.msk [vmem:[#allocation3 + $0xc0] sm:$0xff] %vm1401, %v1258
        %1427 = vst.msk [vmem:[#allocation3 + $0xc8] sm:$0xff] %vm1401, %v1260
        %1428 = vst.msk [vmem:[#allocation3 + $0xd0] sm:$0xff] %vm1401, %v1262
        %1429 = vst.msk [vmem:[#allocation3 + $0xd8] sm:$0xff] %vm1401, %v1264
        %1430 = vst.msk [vmem:[#allocation3 + $0xe0] sm:$0xff] %vm1401, %v1266
        %1431 = vst.msk [vmem:[#allocation3 + $0xe8] sm:$0xff] %vm1401, %v1268
        %1432 = vst.msk [vmem:[#allocation3 + $0xf0] sm:$0xff] %vm1401, %v1270
        %1433 = vst.msk [vmem:[#allocation3 + $0xf8] sm:$0xff] %vm1401, %v1272
        %1434 = vst.msk [vmem:[#allocation3 + $0x100] sm:$0xff] %vm1401, %v1274
        %1435 = vst.msk [vmem:[#allocation3 + $0x108] sm:$0xff] %vm1401, %v1276
        %1436 = vst.msk [vmem:[#allocation3 + $0x110] sm:$0xff] %vm1401, %v1278
        %1437 = vst.msk [vmem:[#allocation3 + $0x118] sm:$0xff] %vm1401, %v1280
        %1438 = vst.msk [vmem:[#allocation3 + $0x120] sm:$0xff] %vm1401, %v1282
        %1439 = vst.msk [vmem:[#allocation3 + $0x128] sm:$0xff] %vm1401, %v1284
        %1440 = vst.msk [vmem:[#allocation3 + $0x130] sm:$0xff] %vm1401, %v1286
        %1441 = vst.msk [vmem:[#allocation3 + $0x138] sm:$0xff] %vm1401, %v1288
        %1442 = vst.msk [vmem:[#allocation3 + $0x140] sm:$0xff] %vm1401, %v1290
        %1443 = vst.msk [vmem:[#allocation3 + $0x148] sm:$0xff] %vm1401, %v1292
        %1444 = vst.msk [vmem:[#allocation3 + $0x150] sm:$0xff] %vm1401, %v1294
        %1445 = vst.msk [vmem:[#allocation3 + $0x158] sm:$0xff] %vm1401, %v1296
        %1446 = vst.msk [vmem:[#allocation3 + $0x160] sm:$0xff] %vm1401, %v1298
        %1447 = vst.msk [vmem:[#allocation3 + $0x168] sm:$0xff] %vm1401, %v1300
        %1448 = vst.msk [vmem:[#allocation3 + $0x170] sm:$0xff] %vm1401, %v1302
        %1449 = vst.msk [vmem:[#allocation3 + $0x178] sm:$0xff] %vm1401, %v1304
        %1450 = vst.msk [vmem:[#allocation3 + $0x180] sm:$0xff] %vm1401, %v1306
        %1451 = vst.msk [vmem:[#allocation3 + $0x188] sm:$0xff] %vm1401, %v1308
        %1452 = vst.msk [vmem:[#allocation3 + $0x190] sm:$0xff] %vm1401, %v1310
        %1453 = vst.msk [vmem:[#allocation3 + $0x198] sm:$0xff] %vm1401, %v1312
        %1454 = vst.msk [vmem:[#allocation3 + $0x1a0] sm:$0xff] %vm1401, %v1314
        %1455 = vst.msk [vmem:[#allocation3 + $0x1a8] sm:$0xff] %vm1401, %v1316
        %1456 = vst.msk [vmem:[#allocation3 + $0x1b0] sm:$0xff] %vm1401, %v1318
        %1457 = vst.msk [vmem:[#allocation3 + $0x1b8] sm:$0xff] %vm1401, %v1320
        %1458 = vst.msk [vmem:[#allocation3 + $0x1c0] sm:$0xff] %vm1401, %v1322
        %1459 = vst.msk [vmem:[#allocation3 + $0x1c8] sm:$0xff] %vm1401, %v1324
        %1460 = vst.msk [vmem:[#allocation3 + $0x1d0] sm:$0xff] %vm1401, %v1326
        %1461 = vst.msk [vmem:[#allocation3 + $0x1d8] sm:$0xff] %vm1401, %v1328
        %1462 = vst.msk [vmem:[#allocation3 + $0x1e0] sm:$0xff] %vm1401, %v1330
        %1463 = vst.msk [vmem:[#allocation3 + $0x1e8] sm:$0xff] %vm1401, %v1332
        %1464 = vst.msk [vmem:[#allocation3 + $0x1f0] sm:$0xff] %vm1401, %v1334
        %1465 = vst.msk [vmem:[#allocation3 + $0x1f8] sm:$0xff] %vm1401, %v1336
        %v1466 = vld [vmem:[%s503] sm:$0xff]
        %v1467 = vld [vmem:[%s503 + $0x8] sm:$0xff]
        %v1468 = vld [vmem:[%s503 + $0x10] sm:$0xff]
        %v1469 = vld [vmem:[%s503 + $0x18] sm:$0xff]
        %v1470 = vld [vmem:[%s503 + $0x28] sm:$0xff]
        %v1471 = vld [vmem:[%s503 + $0x30] sm:$0xff]
        %v1472 = vld [vmem:[%s503 + $0x38] sm:$0xff]
        %v1473 = vld [vmem:[%s503 + $0x40] sm:$0xff]
        %v1474 = vld [vmem:[%s503 + $0x50] sm:$0xff]
        %v1475 = vld [vmem:[%s503 + $0x58] sm:$0xff]
        %v1476 = vld [vmem:[%s503 + $0x60] sm:$0xff]
        %v1477 = vld [vmem:[%s503 + $0x68] sm:$0xff]
        %v1478 = vld [vmem:[%s503 + $0x78] sm:$0xff]
        %v1479 = vld [vmem:[%s503 + $0x80] sm:$0xff]
        %v1480 = vld [vmem:[%s503 + $0x88] sm:$0xff]
        %v1481 = vld [vmem:[%s503 + $0x90] sm:$0xff]
        %v1482 = vld [vmem:[%s503 + $0xa0] sm:$0xff]
        %v1483 = vld [vmem:[%s503 + $0xa8] sm:$0xff]
        %v1484 = vld [vmem:[%s503 + $0xb0] sm:$0xff]
        %v1485 = vld [vmem:[%s503 + $0xb8] sm:$0xff]
        %v1486 = vld [vmem:[%s503 + $0xc8] sm:$0xff]
        %v1487 = vld [vmem:[%s503 + $0xd0] sm:$0xff]
        %v1488 = vld [vmem:[%s503 + $0xd8] sm:$0xff]
        %v1489 = vld [vmem:[%s503 + $0xe0] sm:$0xff]
        %v1490 = vld [vmem:[%s503 + $0xf0] sm:$0xff]
        %v1491 = vld [vmem:[%s503 + $0xf8] sm:$0xff]
        %v1492 = vld [vmem:[%s503 + $0x100] sm:$0xff]
        %v1493 = vld [vmem:[%s503 + $0x108] sm:$0xff]
        %v1494 = vld [vmem:[%s503 + $0x118] sm:$0xff]
        %v1495 = vld [vmem:[%s503 + $0x120] sm:$0xff]
        %v1496 = vld [vmem:[%s503 + $0x128] sm:$0xff]
        %v1497 = vld [vmem:[%s503 + $0x130] sm:$0xff]
        %v1498 = vld [vmem:[%s503 + $0x140] sm:$0xff]
        %v1499 = vld [vmem:[%s503 + $0x148] sm:$0xff]
        %v1500 = vld [vmem:[%s503 + $0x150] sm:$0xff]
        %v1501 = vld [vmem:[%s503 + $0x158] sm:$0xff]
        %v1502 = vld [vmem:[%s503 + $0x168] sm:$0xff]
        %v1503 = vld [vmem:[%s503 + $0x170] sm:$0xff]
        %v1504 = vld [vmem:[%s503 + $0x178] sm:$0xff]
        %v1505 = vld [vmem:[%s503 + $0x180] sm:$0xff]
        %v1506 = vld [vmem:[%s503 + $0x190] sm:$0xff]
        %v1507 = vld [vmem:[%s503 + $0x198] sm:$0xff]
        %v1508 = vld [vmem:[%s503 + $0x1a0] sm:$0xff]
        %v1509 = vld [vmem:[%s503 + $0x1a8] sm:$0xff]
        %v1510 = vld [vmem:[%s503 + $0x1b8] sm:$0xff]
        %v1511 = vld [vmem:[%s503 + $0x1c0] sm:$0xff]
        %v1512 = vld [vmem:[%s503 + $0x1c8] sm:$0xff]
        %v1513 = vld [vmem:[%s503 + $0x1d0] sm:$0xff]
        %v1514 = vld [vmem:[%s503 + $0x1e0] sm:$0xff]
        %v1515 = vld [vmem:[%s503 + $0x1e8] sm:$0xff]
        %v1516 = vld [vmem:[%s503 + $0x1f0] sm:$0xff]
        %v1517 = vld [vmem:[%s503 + $0x1f8] sm:$0xff]
        %v1518 = vld [vmem:[%s503 + $0x208] sm:$0xff]
        %v1519 = vld [vmem:[%s503 + $0x210] sm:$0xff]
        %v1520 = vld [vmem:[%s503 + $0x218] sm:$0xff]
        %v1521 = vld [vmem:[%s503 + $0x220] sm:$0xff]
        %v1522 = vld [vmem:[%s503 + $0x230] sm:$0xff]
        %v1523 = vld [vmem:[%s503 + $0x238] sm:$0xff]
        %v1524 = vld [vmem:[%s503 + $0x240] sm:$0xff]
        %v1525 = vld [vmem:[%s503 + $0x248] sm:$0xff]
        %v1526 = vld [vmem:[%s503 + $0x258] sm:$0xff]
        %v1527 = vld [vmem:[%s503 + $0x260] sm:$0xff]
        %v1528 = vld [vmem:[%s503 + $0x268] sm:$0xff]
        %v1529 = vld [vmem:[%s503 + $0x270] sm:$0xff]
        %1594 = vrot.lane.b32.xlu0 %v1466, 3
        %v1595 = vpop.permute.xlu0 %1594
        %1596 = vrot.lane.b32.xlu0 %v1467, 3
        %v1597 = vpop.permute.xlu0 %1596
        %1598 = vrot.lane.b32.xlu0 %v1468, 3
        %v1599 = vpop.permute.xlu0 %1598
        %1600 = vrot.lane.b32.xlu0 %v1469, 3
        %v1601 = vpop.permute.xlu0 %1600
        %1602 = vrot.lane.b32.xlu0 %v1470, 3
        %v1603 = vpop.permute.xlu0 %1602
        %1604 = vrot.lane.b32.xlu0 %v1471, 3
        %v1605 = vpop.permute.xlu0 %1604
        %1606 = vrot.lane.b32.xlu0 %v1472, 3
        %v1607 = vpop.permute.xlu0 %1606
        %1608 = vrot.lane.b32.xlu0 %v1473, 3
        %v1609 = vpop.permute.xlu0 %1608
        %1610 = vrot.lane.b32.xlu0 %v1474, 3
        %v1611 = vpop.permute.xlu0 %1610
        %1612 = vrot.lane.b32.xlu0 %v1475, 3
        %v1613 = vpop.permute.xlu0 %1612
        %1614 = vrot.lane.b32.xlu0 %v1476, 3
        %v1615 = vpop.permute.xlu0 %1614
        %1616 = vrot.lane.b32.xlu0 %v1477, 3
        %v1617 = vpop.permute.xlu0 %1616
        %1618 = vrot.lane.b32.xlu0 %v1478, 3
        %v1619 = vpop.permute.xlu0 %1618
        %1620 = vrot.lane.b32.xlu0 %v1479, 3
        %v1621 = vpop.permute.xlu0 %1620
        %1622 = vrot.lane.b32.xlu0 %v1480, 3
        %v1623 = vpop.permute.xlu0 %1622
        %1624 = vrot.lane.b32.xlu0 %v1481, 3
        %v1625 = vpop.permute.xlu0 %1624
        %1626 = vrot.lane.b32.xlu0 %v1482, 3
        %v1627 = vpop.permute.xlu0 %1626
        %1628 = vrot.lane.b32.xlu0 %v1483, 3
        %v1629 = vpop.permute.xlu0 %1628
        %1630 = vrot.lane.b32.xlu0 %v1484, 3
        %v1631 = vpop.permute.xlu0 %1630
        %1632 = vrot.lane.b32.xlu0 %v1485, 3
        %v1633 = vpop.permute.xlu0 %1632
        %1634 = vrot.lane.b32.xlu0 %v1486, 3
        %v1635 = vpop.permute.xlu0 %1634
        %1636 = vrot.lane.b32.xlu0 %v1487, 3
        %v1637 = vpop.permute.xlu0 %1636
        %1638 = vrot.lane.b32.xlu0 %v1488, 3
        %v1639 = vpop.permute.xlu0 %1638
        %1640 = vrot.lane.b32.xlu0 %v1489, 3
        %v1641 = vpop.permute.xlu0 %1640
        %1642 = vrot.lane.b32.xlu0 %v1490, 3
        %v1643 = vpop.permute.xlu0 %1642
        %1644 = vrot.lane.b32.xlu0 %v1491, 3
        %v1645 = vpop.permute.xlu0 %1644
        %1646 = vrot.lane.b32.xlu0 %v1492, 3
        %v1647 = vpop.permute.xlu0 %1646
        %1648 = vrot.lane.b32.xlu0 %v1493, 3
        %v1649 = vpop.permute.xlu0 %1648
        %1650 = vrot.lane.b32.xlu0 %v1494, 3
        %v1651 = vpop.permute.xlu0 %1650
        %1652 = vrot.lane.b32.xlu0 %v1495, 3
        %v1653 = vpop.permute.xlu0 %1652
        %1654 = vrot.lane.b32.xlu0 %v1496, 3
        %v1655 = vpop.permute.xlu0 %1654
        %1656 = vrot.lane.b32.xlu0 %v1497, 3
        %v1657 = vpop.permute.xlu0 %1656
        %1658 = vrot.lane.b32.xlu0 %v1498, 3
        %v1659 = vpop.permute.xlu0 %1658
        %1660 = vrot.lane.b32.xlu0 %v1499, 3
        %v1661 = vpop.permute.xlu0 %1660
        %1662 = vrot.lane.b32.xlu0 %v1500, 3
        %v1663 = vpop.permute.xlu0 %1662
        %1664 = vrot.lane.b32.xlu0 %v1501, 3
        %v1665 = vpop.permute.xlu0 %1664
        %1666 = vrot.lane.b32.xlu0 %v1502, 3
        %v1667 = vpop.permute.xlu0 %1666
        %1668 = vrot.lane.b32.xlu0 %v1503, 3
        %v1669 = vpop.permute.xlu0 %1668
        %1670 = vrot.lane.b32.xlu0 %v1504, 3
        %v1671 = vpop.permute.xlu0 %1670
        %1672 = vrot.lane.b32.xlu0 %v1505, 3
        %v1673 = vpop.permute.xlu0 %1672
        %1674 = vrot.lane.b32.xlu0 %v1506, 3
        %v1675 = vpop.permute.xlu0 %1674
        %1676 = vrot.lane.b32.xlu0 %v1507, 3
        %v1677 = vpop.permute.xlu0 %1676
        %1678 = vrot.lane.b32.xlu0 %v1508, 3
        %v1679 = vpop.permute.xlu0 %1678
        %1680 = vrot.lane.b32.xlu0 %v1509, 3
        %v1681 = vpop.permute.xlu0 %1680
        %1682 = vrot.lane.b32.xlu0 %v1510, 3
        %v1683 = vpop.permute.xlu0 %1682
        %1684 = vrot.lane.b32.xlu0 %v1511, 3
        %v1685 = vpop.permute.xlu0 %1684
        %1686 = vrot.lane.b32.xlu0 %v1512, 3
        %v1687 = vpop.permute.xlu0 %1686
        %1688 = vrot.lane.b32.xlu0 %v1513, 3
        %v1689 = vpop.permute.xlu0 %1688
        %1690 = vrot.lane.b32.xlu0 %v1514, 3
        %v1691 = vpop.permute.xlu0 %1690
        %1692 = vrot.lane.b32.xlu0 %v1515, 3
        %v1693 = vpop.permute.xlu0 %1692
        %1694 = vrot.lane.b32.xlu0 %v1516, 3
        %v1695 = vpop.permute.xlu0 %1694
        %1696 = vrot.lane.b32.xlu0 %v1517, 3
        %v1697 = vpop.permute.xlu0 %1696
        %1698 = vrot.lane.b32.xlu0 %v1518, 3
        %v1699 = vpop.permute.xlu0 %1698
        %1700 = vrot.lane.b32.xlu0 %v1519, 3
        %v1701 = vpop.permute.xlu0 %1700
        %1702 = vrot.lane.b32.xlu0 %v1520, 3
        %v1703 = vpop.permute.xlu0 %1702
        %1704 = vrot.lane.b32.xlu0 %v1521, 3
        %v1705 = vpop.permute.xlu0 %1704
        %1706 = vrot.lane.b32.xlu0 %v1522, 3
        %v1707 = vpop.permute.xlu0 %1706
        %1708 = vrot.lane.b32.xlu0 %v1523, 3
        %v1709 = vpop.permute.xlu0 %1708
        %1710 = vrot.lane.b32.xlu0 %v1524, 3
        %v1711 = vpop.permute.xlu0 %1710
        %1712 = vrot.lane.b32.xlu0 %v1525, 3
        %v1713 = vpop.permute.xlu0 %1712
        %1714 = vrot.lane.b32.xlu0 %v1526, 3
        %v1715 = vpop.permute.xlu0 %1714
        %1716 = vrot.lane.b32.xlu0 %v1527, 3
        %v1717 = vpop.permute.xlu0 %1716
        %1718 = vrot.lane.b32.xlu0 %v1528, 3
        %v1719 = vpop.permute.xlu0 %1718
        %1720 = vrot.lane.b32.xlu0 %v1529, 3
        %v1721 = vpop.permute.xlu0 %1720
        %vm1786 = vcmask 31768
        %1787 = vst.msk [vmem:[#allocation3] sm:$0xff] %vm1786, %v1595
        %1788 = vst.msk [vmem:[#allocation3 + $0x8] sm:$0xff] %vm1786, %v1597
        %1789 = vst.msk [vmem:[#allocation3 + $0x10] sm:$0xff] %vm1786, %v1599
        %1790 = vst.msk [vmem:[#allocation3 + $0x18] sm:$0xff] %vm1786, %v1601
        %1791 = vst.msk [vmem:[#allocation3 + $0x20] sm:$0xff] %vm1786, %v1603
        %1792 = vst.msk [vmem:[#allocation3 + $0x28] sm:$0xff] %vm1786, %v1605
        %1793 = vst.msk [vmem:[#allocation3 + $0x30] sm:$0xff] %vm1786, %v1607
        %1794 = vst.msk [vmem:[#allocation3 + $0x38] sm:$0xff] %vm1786, %v1609
        %1795 = vst.msk [vmem:[#allocation3 + $0x40] sm:$0xff] %vm1786, %v1611
        %1796 = vst.msk [vmem:[#allocation3 + $0x48] sm:$0xff] %vm1786, %v1613
        %1797 = vst.msk [vmem:[#allocation3 + $0x50] sm:$0xff] %vm1786, %v1615
        %1798 = vst.msk [vmem:[#allocation3 + $0x58] sm:$0xff] %vm1786, %v1617
        %1799 = vst.msk [vmem:[#allocation3 + $0x60] sm:$0xff] %vm1786, %v1619
        %1800 = vst.msk [vmem:[#allocation3 + $0x68] sm:$0xff] %vm1786, %v1621
        %1801 = vst.msk [vmem:[#allocation3 + $0x70] sm:$0xff] %vm1786, %v1623
        %1802 = vst.msk [vmem:[#allocation3 + $0x78] sm:$0xff] %vm1786, %v1625
        %1803 = vst.msk [vmem:[#allocation3 + $0x80] sm:$0xff] %vm1786, %v1627
        %1804 = vst.msk [vmem:[#allocation3 + $0x88] sm:$0xff] %vm1786, %v1629
        %1805 = vst.msk [vmem:[#allocation3 + $0x90] sm:$0xff] %vm1786, %v1631
        %1806 = vst.msk [vmem:[#allocation3 + $0x98] sm:$0xff] %vm1786, %v1633
        %1807 = vst.msk [vmem:[#allocation3 + $0xa0] sm:$0xff] %vm1786, %v1635
        %1808 = vst.msk [vmem:[#allocation3 + $0xa8] sm:$0xff] %vm1786, %v1637
        %1809 = vst.msk [vmem:[#allocation3 + $0xb0] sm:$0xff] %vm1786, %v1639
        %1810 = vst.msk [vmem:[#allocation3 + $0xb8] sm:$0xff] %vm1786, %v1641
        %1811 = vst.msk [vmem:[#allocation3 + $0xc0] sm:$0xff] %vm1786, %v1643
        %1812 = vst.msk [vmem:[#allocation3 + $0xc8] sm:$0xff] %vm1786, %v1645
        %1813 = vst.msk [vmem:[#allocation3 + $0xd0] sm:$0xff] %vm1786, %v1647
        %1814 = vst.msk [vmem:[#allocation3 + $0xd8] sm:$0xff] %vm1786, %v1649
        %1815 = vst.msk [vmem:[#allocation3 + $0xe0] sm:$0xff] %vm1786, %v1651
        %1816 = vst.msk [vmem:[#allocation3 + $0xe8] sm:$0xff] %vm1786, %v1653
        %1817 = vst.msk [vmem:[#allocation3 + $0xf0] sm:$0xff] %vm1786, %v1655
        %1818 = vst.msk [vmem:[#allocation3 + $0xf8] sm:$0xff] %vm1786, %v1657
        %1819 = vst.msk [vmem:[#allocation3 + $0x100] sm:$0xff] %vm1786, %v1659
        %1820 = vst.msk [vmem:[#allocation3 + $0x108] sm:$0xff] %vm1786, %v1661
        %1821 = vst.msk [vmem:[#allocation3 + $0x110] sm:$0xff] %vm1786, %v1663
        %1822 = vst.msk [vmem:[#allocation3 + $0x118] sm:$0xff] %vm1786, %v1665
        %1823 = vst.msk [vmem:[#allocation3 + $0x120] sm:$0xff] %vm1786, %v1667
        %1824 = vst.msk [vmem:[#allocation3 + $0x128] sm:$0xff] %vm1786, %v1669
        %1825 = vst.msk [vmem:[#allocation3 + $0x130] sm:$0xff] %vm1786, %v1671
        %1826 = vst.msk [vmem:[#allocation3 + $0x138] sm:$0xff] %vm1786, %v1673
        %1827 = vst.msk [vmem:[#allocation3 + $0x140] sm:$0xff] %vm1786, %v1675
        %1828 = vst.msk [vmem:[#allocation3 + $0x148] sm:$0xff] %vm1786, %v1677
        %1829 = vst.msk [vmem:[#allocation3 + $0x150] sm:$0xff] %vm1786, %v1679
        %1830 = vst.msk [vmem:[#allocation3 + $0x158] sm:$0xff] %vm1786, %v1681
        %1831 = vst.msk [vmem:[#allocation3 + $0x160] sm:$0xff] %vm1786, %v1683
        %1832 = vst.msk [vmem:[#allocation3 + $0x168] sm:$0xff] %vm1786, %v1685
        %1833 = vst.msk [vmem:[#allocation3 + $0x170] sm:$0xff] %vm1786, %v1687
        %1834 = vst.msk [vmem:[#allocation3 + $0x178] sm:$0xff] %vm1786, %v1689
        %1835 = vst.msk [vmem:[#allocation3 + $0x180] sm:$0xff] %vm1786, %v1691
        %1836 = vst.msk [vmem:[#allocation3 + $0x188] sm:$0xff] %vm1786, %v1693
        %1837 = vst.msk [vmem:[#allocation3 + $0x190] sm:$0xff] %vm1786, %v1695
        %1838 = vst.msk [vmem:[#allocation3 + $0x198] sm:$0xff] %vm1786, %v1697
        %1839 = vst.msk [vmem:[#allocation3 + $0x1a0] sm:$0xff] %vm1786, %v1699
        %1840 = vst.msk [vmem:[#allocation3 + $0x1a8] sm:$0xff] %vm1786, %v1701
        %1841 = vst.msk [vmem:[#allocation3 + $0x1b0] sm:$0xff] %vm1786, %v1703
        %1842 = vst.msk [vmem:[#allocation3 + $0x1b8] sm:$0xff] %vm1786, %v1705
        %1843 = vst.msk [vmem:[#allocation3 + $0x1c0] sm:$0xff] %vm1786, %v1707
        %1844 = vst.msk [vmem:[#allocation3 + $0x1c8] sm:$0xff] %vm1786, %v1709
        %1845 = vst.msk [vmem:[#allocation3 + $0x1d0] sm:$0xff] %vm1786, %v1711
        %1846 = vst.msk [vmem:[#allocation3 + $0x1d8] sm:$0xff] %vm1786, %v1713
        %1847 = vst.msk [vmem:[#allocation3 + $0x1e0] sm:$0xff] %vm1786, %v1715
        %1848 = vst.msk [vmem:[#allocation3 + $0x1e8] sm:$0xff] %vm1786, %v1717
        %1849 = vst.msk [vmem:[#allocation3 + $0x1f0] sm:$0xff] %vm1786, %v1719
        %1850 = vst.msk [vmem:[#allocation3 + $0x1f8] sm:$0xff] %vm1786, %v1721
        %v1851 = vld [vmem:[%s503 + $0x1] sm:$0xff]
        %v1852 = vld [vmem:[%s503 + $0x9] sm:$0xff]
        %v1853 = vld [vmem:[%s503 + $0x11] sm:$0xff]
        %v1854 = vld [vmem:[%s503 + $0x19] sm:$0xff]
        %v1855 = vld [vmem:[%s503 + $0x29] sm:$0xff]
        %v1856 = vld [vmem:[%s503 + $0x31] sm:$0xff]
        %v1857 = vld [vmem:[%s503 + $0x39] sm:$0xff]
        %v1858 = vld [vmem:[%s503 + $0x41] sm:$0xff]
        %v1859 = vld [vmem:[%s503 + $0x51] sm:$0xff]
        %v1860 = vld [vmem:[%s503 + $0x59] sm:$0xff]
        %v1861 = vld [vmem:[%s503 + $0x61] sm:$0xff]
        %v1862 = vld [vmem:[%s503 + $0x69] sm:$0xff]
        %v1863 = vld [vmem:[%s503 + $0x79] sm:$0xff]
        %v1864 = vld [vmem:[%s503 + $0x81] sm:$0xff]
        %v1865 = vld [vmem:[%s503 + $0x89] sm:$0xff]
        %v1866 = vld [vmem:[%s503 + $0x91] sm:$0xff]
        %v1867 = vld [vmem:[%s503 + $0xa1] sm:$0xff]
        %v1868 = vld [vmem:[%s503 + $0xa9] sm:$0xff]
        %v1869 = vld [vmem:[%s503 + $0xb1] sm:$0xff]
        %v1870 = vld [vmem:[%s503 + $0xb9] sm:$0xff]
        %v1871 = vld [vmem:[%s503 + $0xc9] sm:$0xff]
        %v1872 = vld [vmem:[%s503 + $0xd1] sm:$0xff]
        %v1873 = vld [vmem:[%s503 + $0xd9] sm:$0xff]
        %v1874 = vld [vmem:[%s503 + $0xe1] sm:$0xff]
        %v1875 = vld [vmem:[%s503 + $0xf1] sm:$0xff]
        %v1876 = vld [vmem:[%s503 + $0xf9] sm:$0xff]
        %v1877 = vld [vmem:[%s503 + $0x101] sm:$0xff]
        %v1878 = vld [vmem:[%s503 + $0x109] sm:$0xff]
        %v1879 = vld [vmem:[%s503 + $0x119] sm:$0xff]
        %v1880 = vld [vmem:[%s503 + $0x121] sm:$0xff]
        %v1881 = vld [vmem:[%s503 + $0x129] sm:$0xff]
        %v1882 = vld [vmem:[%s503 + $0x131] sm:$0xff]
        %v1883 = vld [vmem:[%s503 + $0x141] sm:$0xff]
        %v1884 = vld [vmem:[%s503 + $0x149] sm:$0xff]
        %v1885 = vld [vmem:[%s503 + $0x151] sm:$0xff]
        %v1886 = vld [vmem:[%s503 + $0x159] sm:$0xff]
        %v1887 = vld [vmem:[%s503 + $0x169] sm:$0xff]
        %v1888 = vld [vmem:[%s503 + $0x171] sm:$0xff]
        %v1889 = vld [vmem:[%s503 + $0x179] sm:$0xff]
        %v1890 = vld [vmem:[%s503 + $0x181] sm:$0xff]
        %v1891 = vld [vmem:[%s503 + $0x191] sm:$0xff]
        %v1892 = vld [vmem:[%s503 + $0x199] sm:$0xff]
        %v1893 = vld [vmem:[%s503 + $0x1a1] sm:$0xff]
        %v1894 = vld [vmem:[%s503 + $0x1a9] sm:$0xff]
        %v1895 = vld [vmem:[%s503 + $0x1b9] sm:$0xff]
        %v1896 = vld [vmem:[%s503 + $0x1c1] sm:$0xff]
        %v1897 = vld [vmem:[%s503 + $0x1c9] sm:$0xff]
        %v1898 = vld [vmem:[%s503 + $0x1d1] sm:$0xff]
        %v1899 = vld [vmem:[%s503 + $0x1e1] sm:$0xff]
        %v1900 = vld [vmem:[%s503 + $0x1e9] sm:$0xff]
        %v1901 = vld [vmem:[%s503 + $0x1f1] sm:$0xff]
        %v1902 = vld [vmem:[%s503 + $0x1f9] sm:$0xff]
        %v1903 = vld [vmem:[%s503 + $0x209] sm:$0xff]
        %v1904 = vld [vmem:[%s503 + $0x211] sm:$0xff]
        %v1905 = vld [vmem:[%s503 + $0x219] sm:$0xff]
        %v1906 = vld [vmem:[%s503 + $0x221] sm:$0xff]
        %v1907 = vld [vmem:[%s503 + $0x231] sm:$0xff]
        %v1908 = vld [vmem:[%s503 + $0x239] sm:$0xff]
        %v1909 = vld [vmem:[%s503 + $0x241] sm:$0xff]
        %v1910 = vld [vmem:[%s503 + $0x249] sm:$0xff]
        %v1911 = vld [vmem:[%s503 + $0x259] sm:$0xff]
        %v1912 = vld [vmem:[%s503 + $0x261] sm:$0xff]
        %v1913 = vld [vmem:[%s503 + $0x269] sm:$0xff]
        %v1914 = vld [vmem:[%s503 + $0x271] sm:$0xff]
        %1979 = vrot.lane.b32.xlu0 %v1851, 4
        %v1980 = vpop.permute.xlu0 %1979
        %1981 = vrot.lane.b32.xlu0 %v1852, 4
        %v1982 = vpop.permute.xlu0 %1981
        %1983 = vrot.lane.b32.xlu0 %v1853, 4
        %v1984 = vpop.permute.xlu0 %1983
        %1985 = vrot.lane.b32.xlu0 %v1854, 4
        %v1986 = vpop.permute.xlu0 %1985
        %1987 = vrot.lane.b32.xlu0 %v1855, 4
        %v1988 = vpop.permute.xlu0 %1987
        %1989 = vrot.lane.b32.xlu0 %v1856, 4
        %v1990 = vpop.permute.xlu0 %1989
        %1991 = vrot.lane.b32.xlu0 %v1857, 4
        %v1992 = vpop.permute.xlu0 %1991
        %1993 = vrot.lane.b32.xlu0 %v1858, 4
        %v1994 = vpop.permute.xlu0 %1993
        %1995 = vrot.lane.b32.xlu0 %v1859, 4
        %v1996 = vpop.permute.xlu0 %1995
        %1997 = vrot.lane.b32.xlu0 %v1860, 4
        %v1998 = vpop.permute.xlu0 %1997
        %1999 = vrot.lane.b32.xlu0 %v1861, 4
        %v2000 = vpop.permute.xlu0 %1999
        %2001 = vrot.lane.b32.xlu0 %v1862, 4
        %v2002 = vpop.permute.xlu0 %2001
        %2003 = vrot.lane.b32.xlu0 %v1863, 4
        %v2004 = vpop.permute.xlu0 %2003
        %2005 = vrot.lane.b32.xlu0 %v1864, 4
        %v2006 = vpop.permute.xlu0 %2005
        %2007 = vrot.lane.b32.xlu0 %v1865, 4
        %v2008 = vpop.permute.xlu0 %2007
        %2009 = vrot.lane.b32.xlu0 %v1866, 4
        %v2010 = vpop.permute.xlu0 %2009
        %2011 = vrot.lane.b32.xlu0 %v1867, 4
        %v2012 = vpop.permute.xlu0 %2011
        %2013 = vrot.lane.b32.xlu0 %v1868, 4
        %v2014 = vpop.permute.xlu0 %2013
        %2015 = vrot.lane.b32.xlu0 %v1869, 4
        %v2016 = vpop.permute.xlu0 %2015
        %2017 = vrot.lane.b32.xlu0 %v1870, 4
        %v2018 = vpop.permute.xlu0 %2017
        %2019 = vrot.lane.b32.xlu0 %v1871, 4
        %v2020 = vpop.permute.xlu0 %2019
        %2021 = vrot.lane.b32.xlu0 %v1872, 4
        %v2022 = vpop.permute.xlu0 %2021
        %2023 = vrot.lane.b32.xlu0 %v1873, 4
        %v2024 = vpop.permute.xlu0 %2023
        %2025 = vrot.lane.b32.xlu0 %v1874, 4
        %v2026 = vpop.permute.xlu0 %2025
        %2027 = vrot.lane.b32.xlu0 %v1875, 4
        %v2028 = vpop.permute.xlu0 %2027
        %2029 = vrot.lane.b32.xlu0 %v1876, 4
        %v2030 = vpop.permute.xlu0 %2029
        %2031 = vrot.lane.b32.xlu0 %v1877, 4
        %v2032 = vpop.permute.xlu0 %2031
        %2033 = vrot.lane.b32.xlu0 %v1878, 4
        %v2034 = vpop.permute.xlu0 %2033
        %2035 = vrot.lane.b32.xlu0 %v1879, 4
        %v2036 = vpop.permute.xlu0 %2035
        %2037 = vrot.lane.b32.xlu0 %v1880, 4
        %v2038 = vpop.permute.xlu0 %2037
        %2039 = vrot.lane.b32.xlu0 %v1881, 4
        %v2040 = vpop.permute.xlu0 %2039
        %2041 = vrot.lane.b32.xlu0 %v1882, 4
        %v2042 = vpop.permute.xlu0 %2041
        %2043 = vrot.lane.b32.xlu0 %v1883, 4
        %v2044 = vpop.permute.xlu0 %2043
        %2045 = vrot.lane.b32.xlu0 %v1884, 4
        %v2046 = vpop.permute.xlu0 %2045
        %2047 = vrot.lane.b32.xlu0 %v1885, 4
        %v2048 = vpop.permute.xlu0 %2047
        %2049 = vrot.lane.b32.xlu0 %v1886, 4
        %v2050 = vpop.permute.xlu0 %2049
        %2051 = vrot.lane.b32.xlu0 %v1887, 4
        %v2052 = vpop.permute.xlu0 %2051
        %2053 = vrot.lane.b32.xlu0 %v1888, 4
        %v2054 = vpop.permute.xlu0 %2053
        %2055 = vrot.lane.b32.xlu0 %v1889, 4
        %v2056 = vpop.permute.xlu0 %2055
        %2057 = vrot.lane.b32.xlu0 %v1890, 4
        %v2058 = vpop.permute.xlu0 %2057
        %2059 = vrot.lane.b32.xlu0 %v1891, 4
        %v2060 = vpop.permute.xlu0 %2059
        %2061 = vrot.lane.b32.xlu0 %v1892, 4
        %v2062 = vpop.permute.xlu0 %2061
        %2063 = vrot.lane.b32.xlu0 %v1893, 4
        %v2064 = vpop.permute.xlu0 %2063
        %2065 = vrot.lane.b32.xlu0 %v1894, 4
        %v2066 = vpop.permute.xlu0 %2065
        %2067 = vrot.lane.b32.xlu0 %v1895, 4
        %v2068 = vpop.permute.xlu0 %2067
        %2069 = vrot.lane.b32.xlu0 %v1896, 4
        %v2070 = vpop.permute.xlu0 %2069
        %2071 = vrot.lane.b32.xlu0 %v1897, 4
        %v2072 = vpop.permute.xlu0 %2071
        %2073 = vrot.lane.b32.xlu0 %v1898, 4
        %v2074 = vpop.permute.xlu0 %2073
        %2075 = vrot.lane.b32.xlu0 %v1899, 4
        %v2076 = vpop.permute.xlu0 %2075
        %2077 = vrot.lane.b32.xlu0 %v1900, 4
        %v2078 = vpop.permute.xlu0 %2077
        %2079 = vrot.lane.b32.xlu0 %v1901, 4
        %v2080 = vpop.permute.xlu0 %2079
        %2081 = vrot.lane.b32.xlu0 %v1902, 4
        %v2082 = vpop.permute.xlu0 %2081
        %2083 = vrot.lane.b32.xlu0 %v1903, 4
        %v2084 = vpop.permute.xlu0 %2083
        %2085 = vrot.lane.b32.xlu0 %v1904, 4
        %v2086 = vpop.permute.xlu0 %2085
        %2087 = vrot.lane.b32.xlu0 %v1905, 4
        %v2088 = vpop.permute.xlu0 %2087
        %2089 = vrot.lane.b32.xlu0 %v1906, 4
        %v2090 = vpop.permute.xlu0 %2089
        %2091 = vrot.lane.b32.xlu0 %v1907, 4
        %v2092 = vpop.permute.xlu0 %2091
        %2093 = vrot.lane.b32.xlu0 %v1908, 4
        %v2094 = vpop.permute.xlu0 %2093
        %2095 = vrot.lane.b32.xlu0 %v1909, 4
        %v2096 = vpop.permute.xlu0 %2095
        %2097 = vrot.lane.b32.xlu0 %v1910, 4
        %v2098 = vpop.permute.xlu0 %2097
        %2099 = vrot.lane.b32.xlu0 %v1911, 4
        %v2100 = vpop.permute.xlu0 %2099
        %2101 = vrot.lane.b32.xlu0 %v1912, 4
        %v2102 = vpop.permute.xlu0 %2101
        %2103 = vrot.lane.b32.xlu0 %v1913, 4
        %v2104 = vpop.permute.xlu0 %2103
        %2105 = vrot.lane.b32.xlu0 %v1914, 4
        %v2106 = vpop.permute.xlu0 %2105
        %vm2171 = vcmask 39968
        %2172 = vst.msk [vmem:[#allocation3] sm:$0xff] %vm2171, %v1980
        %2173 = vst.msk [vmem:[#allocation3 + $0x8] sm:$0xff] %vm2171, %v1982
        %2174 = vst.msk [vmem:[#allocation3 + $0x10] sm:$0xff] %vm2171, %v1984
        %2175 = vst.msk [vmem:[#allocation3 + $0x18] sm:$0xff] %vm2171, %v1986
        %2176 = vst.msk [vmem:[#allocation3 + $0x20] sm:$0xff] %vm2171, %v1988
        %2177 = vst.msk [vmem:[#allocation3 + $0x28] sm:$0xff] %vm2171, %v1990
        %2178 = vst.msk [vmem:[#allocation3 + $0x30] sm:$0xff] %vm2171, %v1992
        %2179 = vst.msk [vmem:[#allocation3 + $0x38] sm:$0xff] %vm2171, %v1994
        %2180 = vst.msk [vmem:[#allocation3 + $0x40] sm:$0xff] %vm2171, %v1996
        %2181 = vst.msk [vmem:[#allocation3 + $0x48] sm:$0xff] %vm2171, %v1998
        %2182 = vst.msk [vmem:[#allocation3 + $0x50] sm:$0xff] %vm2171, %v2000
        %2183 = vst.msk [vmem:[#allocation3 + $0x58] sm:$0xff] %vm2171, %v2002
        %2184 = vst.msk [vmem:[#allocation3 + $0x60] sm:$0xff] %vm2171, %v2004
        %2185 = vst.msk [vmem:[#allocation3 + $0x68] sm:$0xff] %vm2171, %v2006
        %2186 = vst.msk [vmem:[#allocation3 + $0x70] sm:$0xff] %vm2171, %v2008
        %2187 = vst.msk [vmem:[#allocation3 + $0x78] sm:$0xff] %vm2171, %v2010
        %2188 = vst.msk [vmem:[#allocation3 + $0x80] sm:$0xff] %vm2171, %v2012
        %2189 = vst.msk [vmem:[#allocation3 + $0x88] sm:$0xff] %vm2171, %v2014
        %2190 = vst.msk [vmem:[#allocation3 + $0x90] sm:$0xff] %vm2171, %v2016
        %2191 = vst.msk [vmem:[#allocation3 + $0x98] sm:$0xff] %vm2171, %v2018
        %2192 = vst.msk [vmem:[#allocation3 + $0xa0] sm:$0xff] %vm2171, %v2020
        %2193 = vst.msk [vmem:[#allocation3 + $0xa8] sm:$0xff] %vm2171, %v2022
        %2194 = vst.msk [vmem:[#allocation3 + $0xb0] sm:$0xff] %vm2171, %v2024
        %2195 = vst.msk [vmem:[#allocation3 + $0xb8] sm:$0xff] %vm2171, %v2026
        %2196 = vst.msk [vmem:[#allocation3 + $0xc0] sm:$0xff] %vm2171, %v2028
        %2197 = vst.msk [vmem:[#allocation3 + $0xc8] sm:$0xff] %vm2171, %v2030
        %2198 = vst.msk [vmem:[#allocation3 + $0xd0] sm:$0xff] %vm2171, %v2032
        %2199 = vst.msk [vmem:[#allocation3 + $0xd8] sm:$0xff] %vm2171, %v2034
        %2200 = vst.msk [vmem:[#allocation3 + $0xe0] sm:$0xff] %vm2171, %v2036
        %2201 = vst.msk [vmem:[#allocation3 + $0xe8] sm:$0xff] %vm2171, %v2038
        %2202 = vst.msk [vmem:[#allocation3 + $0xf0] sm:$0xff] %vm2171, %v2040
        %2203 = vst.msk [vmem:[#allocation3 + $0xf8] sm:$0xff] %vm2171, %v2042
        %2204 = vst.msk [vmem:[#allocation3 + $0x100] sm:$0xff] %vm2171, %v2044
        %2205 = vst.msk [vmem:[#allocation3 + $0x108] sm:$0xff] %vm2171, %v2046
        %2206 = vst.msk [vmem:[#allocation3 + $0x110] sm:$0xff] %vm2171, %v2048
        %2207 = vst.msk [vmem:[#allocation3 + $0x118] sm:$0xff] %vm2171, %v2050
        %2208 = vst.msk [vmem:[#allocation3 + $0x120] sm:$0xff] %vm2171, %v2052
        %2209 = vst.msk [vmem:[#allocation3 + $0x128] sm:$0xff] %vm2171, %v2054
        %2210 = vst.msk [vmem:[#allocation3 + $0x130] sm:$0xff] %vm2171, %v2056
        %2211 = vst.msk [vmem:[#allocation3 + $0x138] sm:$0xff] %vm2171, %v2058
        %2212 = vst.msk [vmem:[#allocation3 + $0x140] sm:$0xff] %vm2171, %v2060
        %2213 = vst.msk [vmem:[#allocation3 + $0x148] sm:$0xff] %vm2171, %v2062
        %2214 = vst.msk [vmem:[#allocation3 + $0x150] sm:$0xff] %vm2171, %v2064
        %2215 = vst.msk [vmem:[#allocation3 + $0x158] sm:$0xff] %vm2171, %v2066
        %2216 = vst.msk [vmem:[#allocation3 + $0x160] sm:$0xff] %vm2171, %v2068
        %2217 = vst.msk [vmem:[#allocation3 + $0x168] sm:$0xff] %vm2171, %v2070
        %2218 = vst.msk [vmem:[#allocation3 + $0x170] sm:$0xff] %vm2171, %v2072
        %2219 = vst.msk [vmem:[#allocation3 + $0x178] sm:$0xff] %vm2171, %v2074
        %2220 = vst.msk [vmem:[#allocation3 + $0x180] sm:$0xff] %vm2171, %v2076
        %2221 = vst.msk [vmem:[#allocation3 + $0x188] sm:$0xff] %vm2171, %v2078
        %2222 = vst.msk [vmem:[#allocation3 + $0x190] sm:$0xff] %vm2171, %v2080
        %2223 = vst.msk [vmem:[#allocation3 + $0x198] sm:$0xff] %vm2171, %v2082
        %2224 = vst.msk [vmem:[#allocation3 + $0x1a0] sm:$0xff] %vm2171, %v2084
        %2225 = vst.msk [vmem:[#allocation3 + $0x1a8] sm:$0xff] %vm2171, %v2086
        %2226 = vst.msk [vmem:[#allocation3 + $0x1b0] sm:$0xff] %vm2171, %v2088
        %2227 = vst.msk [vmem:[#allocation3 + $0x1b8] sm:$0xff] %vm2171, %v2090
        %2228 = vst.msk [vmem:[#allocation3 + $0x1c0] sm:$0xff] %vm2171, %v2092
        %2229 = vst.msk [vmem:[#allocation3 + $0x1c8] sm:$0xff] %vm2171, %v2094
        %2230 = vst.msk [vmem:[#allocation3 + $0x1d0] sm:$0xff] %vm2171, %v2096
        %2231 = vst.msk [vmem:[#allocation3 + $0x1d8] sm:$0xff] %vm2171, %v2098
        %2232 = vst.msk [vmem:[#allocation3 + $0x1e0] sm:$0xff] %vm2171, %v2100
        %2233 = vst.msk [vmem:[#allocation3 + $0x1e8] sm:$0xff] %vm2171, %v2102
        %2234 = vst.msk [vmem:[#allocation3 + $0x1f0] sm:$0xff] %vm2171, %v2104
        %2235 = vst.msk [vmem:[#allocation3 + $0x1f8] sm:$0xff] %vm2171, %v2106
        %v2236 = vld [vmem:[%s503 + $0x2] sm:$0xff]
        %v2237 = vld [vmem:[%s503 + $0xa] sm:$0xff]
        %v2238 = vld [vmem:[%s503 + $0x12] sm:$0xff]
        %v2239 = vld [vmem:[%s503 + $0x1a] sm:$0xff]
        %v2240 = vld [vmem:[%s503 + $0x2a] sm:$0xff]
        %v2241 = vld [vmem:[%s503 + $0x32] sm:$0xff]
        %v2242 = vld [vmem:[%s503 + $0x3a] sm:$0xff]
        %v2243 = vld [vmem:[%s503 + $0x42] sm:$0xff]
        %v2244 = vld [vmem:[%s503 + $0x52] sm:$0xff]
        %v2245 = vld [vmem:[%s503 + $0x5a] sm:$0xff]
        %v2246 = vld [vmem:[%s503 + $0x62] sm:$0xff]
        %v2247 = vld [vmem:[%s503 + $0x6a] sm:$0xff]
        %v2248 = vld [vmem:[%s503 + $0x7a] sm:$0xff]
        %v2249 = vld [vmem:[%s503 + $0x82] sm:$0xff]
        %v2250 = vld [vmem:[%s503 + $0x8a] sm:$0xff]
        %v2251 = vld [vmem:[%s503 + $0x92] sm:$0xff]
        %v2252 = vld [vmem:[%s503 + $0xa2] sm:$0xff]
        %v2253 = vld [vmem:[%s503 + $0xaa] sm:$0xff]
        %v2254 = vld [vmem:[%s503 + $0xb2] sm:$0xff]
        %v2255 = vld [vmem:[%s503 + $0xba] sm:$0xff]
        %v2256 = vld [vmem:[%s503 + $0xca] sm:$0xff]
        %v2257 = vld [vmem:[%s503 + $0xd2] sm:$0xff]
        %v2258 = vld [vmem:[%s503 + $0xda] sm:$0xff]
        %v2259 = vld [vmem:[%s503 + $0xe2] sm:$0xff]
        %v2260 = vld [vmem:[%s503 + $0xf2] sm:$0xff]
        %v2261 = vld [vmem:[%s503 + $0xfa] sm:$0xff]
        %v2262 = vld [vmem:[%s503 + $0x102] sm:$0xff]
        %v2263 = vld [vmem:[%s503 + $0x10a] sm:$0xff]
        %v2264 = vld [vmem:[%s503 + $0x11a] sm:$0xff]
        %v2265 = vld [vmem:[%s503 + $0x122] sm:$0xff]
        %v2266 = vld [vmem:[%s503 + $0x12a] sm:$0xff]
        %v2267 = vld [vmem:[%s503 + $0x132] sm:$0xff]
        %v2268 = vld [vmem:[%s503 + $0x142] sm:$0xff]
        %v2269 = vld [vmem:[%s503 + $0x14a] sm:$0xff]
        %v2270 = vld [vmem:[%s503 + $0x152] sm:$0xff]
        %v2271 = vld [vmem:[%s503 + $0x15a] sm:$0xff]
        %v2272 = vld [vmem:[%s503 + $0x16a] sm:$0xff]
        %v2273 = vld [vmem:[%s503 + $0x172] sm:$0xff]
        %v2274 = vld [vmem:[%s503 + $0x17a] sm:$0xff]
        %v2275 = vld [vmem:[%s503 + $0x182] sm:$0xff]
        %v2276 = vld [vmem:[%s503 + $0x192] sm:$0xff]
        %v2277 = vld [vmem:[%s503 + $0x19a] sm:$0xff]
        %v2278 = vld [vmem:[%s503 + $0x1a2] sm:$0xff]
        %v2279 = vld [vmem:[%s503 + $0x1aa] sm:$0xff]
        %v2280 = vld [vmem:[%s503 + $0x1ba] sm:$0xff]
        %v2281 = vld [vmem:[%s503 + $0x1c2] sm:$0xff]
        %v2282 = vld [vmem:[%s503 + $0x1ca] sm:$0xff]
        %v2283 = vld [vmem:[%s503 + $0x1d2] sm:$0xff]
        %v2284 = vld [vmem:[%s503 + $0x1e2] sm:$0xff]
        %v2285 = vld [vmem:[%s503 + $0x1ea] sm:$0xff]
        %v2286 = vld [vmem:[%s503 + $0x1f2] sm:$0xff]
        %v2287 = vld [vmem:[%s503 + $0x1fa] sm:$0xff]
        %v2288 = vld [vmem:[%s503 + $0x20a] sm:$0xff]
        %v2289 = vld [vmem:[%s503 + $0x212] sm:$0xff]
        %v2290 = vld [vmem:[%s503 + $0x21a] sm:$0xff]
        %v2291 = vld [vmem:[%s503 + $0x222] sm:$0xff]
        %v2292 = vld [vmem:[%s503 + $0x232] sm:$0xff]
        %v2293 = vld [vmem:[%s503 + $0x23a] sm:$0xff]
        %v2294 = vld [vmem:[%s503 + $0x242] sm:$0xff]
        %v2295 = vld [vmem:[%s503 + $0x24a] sm:$0xff]
        %v2296 = vld [vmem:[%s503 + $0x25a] sm:$0xff]
        %v2297 = vld [vmem:[%s503 + $0x262] sm:$0xff]
        %v2298 = vld [vmem:[%s503 + $0x26a] sm:$0xff]
        %v2299 = vld [vmem:[%s503 + $0x272] sm:$0xff]
        %2364 = vrot.lane.b32.xlu0 %v2236, 5
        %v2365 = vpop.permute.xlu0 %2364
        %2366 = vrot.lane.b32.xlu0 %v2237, 5
        %v2367 = vpop.permute.xlu0 %2366
        %2368 = vrot.lane.b32.xlu0 %v2238, 5
        %v2369 = vpop.permute.xlu0 %2368
        %2370 = vrot.lane.b32.xlu0 %v2239, 5
        %v2371 = vpop.permute.xlu0 %2370
        %2372 = vrot.lane.b32.xlu0 %v2240, 5
        %v2373 = vpop.permute.xlu0 %2372
        %2374 = vrot.lane.b32.xlu0 %v2241, 5
        %v2375 = vpop.permute.xlu0 %2374
        %2376 = vrot.lane.b32.xlu0 %v2242, 5
        %v2377 = vpop.permute.xlu0 %2376
        %2378 = vrot.lane.b32.xlu0 %v2243, 5
        %v2379 = vpop.permute.xlu0 %2378
        %2380 = vrot.lane.b32.xlu0 %v2244, 5
        %v2381 = vpop.permute.xlu0 %2380
        %2382 = vrot.lane.b32.xlu0 %v2245, 5
        %v2383 = vpop.permute.xlu0 %2382
        %2384 = vrot.lane.b32.xlu0 %v2246, 5
        %v2385 = vpop.permute.xlu0 %2384
        %2386 = vrot.lane.b32.xlu0 %v2247, 5
        %v2387 = vpop.permute.xlu0 %2386
        %2388 = vrot.lane.b32.xlu0 %v2248, 5
        %v2389 = vpop.permute.xlu0 %2388
        %2390 = vrot.lane.b32.xlu0 %v2249, 5
        %v2391 = vpop.permute.xlu0 %2390
        %2392 = vrot.lane.b32.xlu0 %v2250, 5
        %v2393 = vpop.permute.xlu0 %2392
        %2394 = vrot.lane.b32.xlu0 %v2251, 5
        %v2395 = vpop.permute.xlu0 %2394
        %2396 = vrot.lane.b32.xlu0 %v2252, 5
        %v2397 = vpop.permute.xlu0 %2396
        %2398 = vrot.lane.b32.xlu0 %v2253, 5
        %v2399 = vpop.permute.xlu0 %2398
        %2400 = vrot.lane.b32.xlu0 %v2254, 5
        %v2401 = vpop.permute.xlu0 %2400
        %2402 = vrot.lane.b32.xlu0 %v2255, 5
        %v2403 = vpop.permute.xlu0 %2402
        %2404 = vrot.lane.b32.xlu0 %v2256, 5
        %v2405 = vpop.permute.xlu0 %2404
        %2406 = vrot.lane.b32.xlu0 %v2257, 5
        %v2407 = vpop.permute.xlu0 %2406
        %2408 = vrot.lane.b32.xlu0 %v2258, 5
        %v2409 = vpop.permute.xlu0 %2408
        %2410 = vrot.lane.b32.xlu0 %v2259, 5
        %v2411 = vpop.permute.xlu0 %2410
        %2412 = vrot.lane.b32.xlu0 %v2260, 5
        %v2413 = vpop.permute.xlu0 %2412
        %2414 = vrot.lane.b32.xlu0 %v2261, 5
        %v2415 = vpop.permute.xlu0 %2414
        %2416 = vrot.lane.b32.xlu0 %v2262, 5
        %v2417 = vpop.permute.xlu0 %2416
        %2418 = vrot.lane.b32.xlu0 %v2263, 5
        %v2419 = vpop.permute.xlu0 %2418
        %2420 = vrot.lane.b32.xlu0 %v2264, 5
        %v2421 = vpop.permute.xlu0 %2420
        %2422 = vrot.lane.b32.xlu0 %v2265, 5
        %v2423 = vpop.permute.xlu0 %2422
        %2424 = vrot.lane.b32.xlu0 %v2266, 5
        %v2425 = vpop.permute.xlu0 %2424
        %2426 = vrot.lane.b32.xlu0 %v2267, 5
        %v2427 = vpop.permute.xlu0 %2426
        %2428 = vrot.lane.b32.xlu0 %v2268, 5
        %v2429 = vpop.permute.xlu0 %2428
        %2430 = vrot.lane.b32.xlu0 %v2269, 5
        %v2431 = vpop.permute.xlu0 %2430
        %2432 = vrot.lane.b32.xlu0 %v2270, 5
        %v2433 = vpop.permute.xlu0 %2432
        %2434 = vrot.lane.b32.xlu0 %v2271, 5
        %v2435 = vpop.permute.xlu0 %2434
        %2436 = vrot.lane.b32.xlu0 %v2272, 5
        %v2437 = vpop.permute.xlu0 %2436
        %2438 = vrot.lane.b32.xlu0 %v2273, 5
        %v2439 = vpop.permute.xlu0 %2438
        %2440 = vrot.lane.b32.xlu0 %v2274, 5
        %v2441 = vpop.permute.xlu0 %2440
        %2442 = vrot.lane.b32.xlu0 %v2275, 5
        %v2443 = vpop.permute.xlu0 %2442
        %2444 = vrot.lane.b32.xlu0 %v2276, 5
        %v2445 = vpop.permute.xlu0 %2444
        %2446 = vrot.lane.b32.xlu0 %v2277, 5
        %v2447 = vpop.permute.xlu0 %2446
        %2448 = vrot.lane.b32.xlu0 %v2278, 5
        %v2449 = vpop.permute.xlu0 %2448
        %2450 = vrot.lane.b32.xlu0 %v2279, 5
        %v2451 = vpop.permute.xlu0 %2450
        %2452 = vrot.lane.b32.xlu0 %v2280, 5
        %v2453 = vpop.permute.xlu0 %2452
        %2454 = vrot.lane.b32.xlu0 %v2281, 5
        %v2455 = vpop.permute.xlu0 %2454
        %2456 = vrot.lane.b32.xlu0 %v2282, 5
        %v2457 = vpop.permute.xlu0 %2456
        %2458 = vrot.lane.b32.xlu0 %v2283, 5
        %v2459 = vpop.permute.xlu0 %2458
        %2460 = vrot.lane.b32.xlu0 %v2284, 5
        %v2461 = vpop.permute.xlu0 %2460
        %2462 = vrot.lane.b32.xlu0 %v2285, 5
        %v2463 = vpop.permute.xlu0 %2462
        %2464 = vrot.lane.b32.xlu0 %v2286, 5
        %v2465 = vpop.permute.xlu0 %2464
        %2466 = vrot.lane.b32.xlu0 %v2287, 5
        %v2467 = vpop.permute.xlu0 %2466
        %2468 = vrot.lane.b32.xlu0 %v2288, 5
        %v2469 = vpop.permute.xlu0 %2468
        %2470 = vrot.lane.b32.xlu0 %v2289, 5
        %v2471 = vpop.permute.xlu0 %2470
        %2472 = vrot.lane.b32.xlu0 %v2290, 5
        %v2473 = vpop.permute.xlu0 %2472
        %2474 = vrot.lane.b32.xlu0 %v2291, 5
        %v2475 = vpop.permute.xlu0 %2474
        %2476 = vrot.lane.b32.xlu0 %v2292, 5
        %v2477 = vpop.permute.xlu0 %2476
        %2478 = vrot.lane.b32.xlu0 %v2293, 5
        %v2479 = vpop.permute.xlu0 %2478
        %2480 = vrot.lane.b32.xlu0 %v2294, 5
        %v2481 = vpop.permute.xlu0 %2480
        %2482 = vrot.lane.b32.xlu0 %v2295, 5
        %v2483 = vpop.permute.xlu0 %2482
        %2484 = vrot.lane.b32.xlu0 %v2296, 5
        %v2485 = vpop.permute.xlu0 %2484
        %2486 = vrot.lane.b32.xlu0 %v2297, 5
        %v2487 = vpop.permute.xlu0 %2486
        %2488 = vrot.lane.b32.xlu0 %v2298, 5
        %v2489 = vpop.permute.xlu0 %2488
        %2490 = vrot.lane.b32.xlu0 %v2299, 5
        %v2491 = vpop.permute.xlu0 %2490
        %vm2556 = vcmask 48168
        %2557 = vst.msk [vmem:[#allocation3] sm:$0xff] %vm2556, %v2365
        %2558 = vst.msk [vmem:[#allocation3 + $0x8] sm:$0xff] %vm2556, %v2367
        %2559 = vst.msk [vmem:[#allocation3 + $0x10] sm:$0xff] %vm2556, %v2369
        %2560 = vst.msk [vmem:[#allocation3 + $0x18] sm:$0xff] %vm2556, %v2371
        %2561 = vst.msk [vmem:[#allocation3 + $0x20] sm:$0xff] %vm2556, %v2373
        %2562 = vst.msk [vmem:[#allocation3 + $0x28] sm:$0xff] %vm2556, %v2375
        %2563 = vst.msk [vmem:[#allocation3 + $0x30] sm:$0xff] %vm2556, %v2377
        %2564 = vst.msk [vmem:[#allocation3 + $0x38] sm:$0xff] %vm2556, %v2379
        %2565 = vst.msk [vmem:[#allocation3 + $0x40] sm:$0xff] %vm2556, %v2381
        %2566 = vst.msk [vmem:[#allocation3 + $0x48] sm:$0xff] %vm2556, %v2383
        %2567 = vst.msk [vmem:[#allocation3 + $0x50] sm:$0xff] %vm2556, %v2385
        %2568 = vst.msk [vmem:[#allocation3 + $0x58] sm:$0xff] %vm2556, %v2387
        %2569 = vst.msk [vmem:[#allocation3 + $0x60] sm:$0xff] %vm2556, %v2389
        %2570 = vst.msk [vmem:[#allocation3 + $0x68] sm:$0xff] %vm2556, %v2391
        %2571 = vst.msk [vmem:[#allocation3 + $0x70] sm:$0xff] %vm2556, %v2393
        %2572 = vst.msk [vmem:[#allocation3 + $0x78] sm:$0xff] %vm2556, %v2395
        %2573 = vst.msk [vmem:[#allocation3 + $0x80] sm:$0xff] %vm2556, %v2397
        %2574 = vst.msk [vmem:[#allocation3 + $0x88] sm:$0xff] %vm2556, %v2399
        %2575 = vst.msk [vmem:[#allocation3 + $0x90] sm:$0xff] %vm2556, %v2401
        %2576 = vst.msk [vmem:[#allocation3 + $0x98] sm:$0xff] %vm2556, %v2403
        %2577 = vst.msk [vmem:[#allocation3 + $0xa0] sm:$0xff] %vm2556, %v2405
        %2578 = vst.msk [vmem:[#allocation3 + $0xa8] sm:$0xff] %vm2556, %v2407
        %2579 = vst.msk [vmem:[#allocation3 + $0xb0] sm:$0xff] %vm2556, %v2409
        %2580 = vst.msk [vmem:[#allocation3 + $0xb8] sm:$0xff] %vm2556, %v2411
        %2581 = vst.msk [vmem:[#allocation3 + $0xc0] sm:$0xff] %vm2556, %v2413
        %2582 = vst.msk [vmem:[#allocation3 + $0xc8] sm:$0xff] %vm2556, %v2415
        %2583 = vst.msk [vmem:[#allocation3 + $0xd0] sm:$0xff] %vm2556, %v2417
        %2584 = vst.msk [vmem:[#allocation3 + $0xd8] sm:$0xff] %vm2556, %v2419
        %2585 = vst.msk [vmem:[#allocation3 + $0xe0] sm:$0xff] %vm2556, %v2421
        %2586 = vst.msk [vmem:[#allocation3 + $0xe8] sm:$0xff] %vm2556, %v2423
        %2587 = vst.msk [vmem:[#allocation3 + $0xf0] sm:$0xff] %vm2556, %v2425
        %2588 = vst.msk [vmem:[#allocation3 + $0xf8] sm:$0xff] %vm2556, %v2427
        %2589 = vst.msk [vmem:[#allocation3 + $0x100] sm:$0xff] %vm2556, %v2429
        %2590 = vst.msk [vmem:[#allocation3 + $0x108] sm:$0xff] %vm2556, %v2431
        %2591 = vst.msk [vmem:[#allocation3 + $0x110] sm:$0xff] %vm2556, %v2433
        %2592 = vst.msk [vmem:[#allocation3 + $0x118] sm:$0xff] %vm2556, %v2435
        %2593 = vst.msk [vmem:[#allocation3 + $0x120] sm:$0xff] %vm2556, %v2437
        %2594 = vst.msk [vmem:[#allocation3 + $0x128] sm:$0xff] %vm2556, %v2439
        %2595 = vst.msk [vmem:[#allocation3 + $0x130] sm:$0xff] %vm2556, %v2441
        %2596 = vst.msk [vmem:[#allocation3 + $0x138] sm:$0xff] %vm2556, %v2443
        %2597 = vst.msk [vmem:[#allocation3 + $0x140] sm:$0xff] %vm2556, %v2445
        %2598 = vst.msk [vmem:[#allocation3 + $0x148] sm:$0xff] %vm2556, %v2447
        %2599 = vst.msk [vmem:[#allocation3 + $0x150] sm:$0xff] %vm2556, %v2449
        %2600 = vst.msk [vmem:[#allocation3 + $0x158] sm:$0xff] %vm2556, %v2451
        %2601 = vst.msk [vmem:[#allocation3 + $0x160] sm:$0xff] %vm2556, %v2453
        %2602 = vst.msk [vmem:[#allocation3 + $0x168] sm:$0xff] %vm2556, %v2455
        %2603 = vst.msk [vmem:[#allocation3 + $0x170] sm:$0xff] %vm2556, %v2457
        %2604 = vst.msk [vmem:[#allocation3 + $0x178] sm:$0xff] %vm2556, %v2459
        %2605 = vst.msk [vmem:[#allocation3 + $0x180] sm:$0xff] %vm2556, %v2461
        %2606 = vst.msk [vmem:[#allocation3 + $0x188] sm:$0xff] %vm2556, %v2463
        %2607 = vst.msk [vmem:[#allocation3 + $0x190] sm:$0xff] %vm2556, %v2465
        %2608 = vst.msk [vmem:[#allocation3 + $0x198] sm:$0xff] %vm2556, %v2467
        %2609 = vst.msk [vmem:[#allocation3 + $0x1a0] sm:$0xff] %vm2556, %v2469
        %2610 = vst.msk [vmem:[#allocation3 + $0x1a8] sm:$0xff] %vm2556, %v2471
        %2611 = vst.msk [vmem:[#allocation3 + $0x1b0] sm:$0xff] %vm2556, %v2473
        %2612 = vst.msk [vmem:[#allocation3 + $0x1b8] sm:$0xff] %vm2556, %v2475
        %2613 = vst.msk [vmem:[#allocation3 + $0x1c0] sm:$0xff] %vm2556, %v2477
        %2614 = vst.msk [vmem:[#allocation3 + $0x1c8] sm:$0xff] %vm2556, %v2479
        %2615 = vst.msk [vmem:[#allocation3 + $0x1d0] sm:$0xff] %vm2556, %v2481
        %2616 = vst.msk [vmem:[#allocation3 + $0x1d8] sm:$0xff] %vm2556, %v2483
        %2617 = vst.msk [vmem:[#allocation3 + $0x1e0] sm:$0xff] %vm2556, %v2485
        %2618 = vst.msk [vmem:[#allocation3 + $0x1e8] sm:$0xff] %vm2556, %v2487
        %2619 = vst.msk [vmem:[#allocation3 + $0x1f0] sm:$0xff] %vm2556, %v2489
        %2620 = vst.msk [vmem:[#allocation3 + $0x1f8] sm:$0xff] %vm2556, %v2491
        %s2621 = scalar_lea.vmem [#allocation2], 80
        %v2622 = vld [vmem:[%s2621] sm:$0xff]
        %v2623 = vld [vmem:[%s2621 + $0x8] sm:$0xff]
        %v2624 = vld [vmem:[%s2621 + $0x10] sm:$0xff]
        %v2625 = vld [vmem:[%s2621 + $0x18] sm:$0xff]
        %v2626 = vld [vmem:[%s2621 + $0x28] sm:$0xff]
        %v2627 = vld [vmem:[%s2621 + $0x30] sm:$0xff]
        %v2628 = vld [vmem:[%s2621 + $0x38] sm:$0xff]
        %v2629 = vld [vmem:[%s2621 + $0x40] sm:$0xff]
        %v2630 = vld [vmem:[%s2621 + $0x50] sm:$0xff]
        %v2631 = vld [vmem:[%s2621 + $0x58] sm:$0xff]
        %v2632 = vld [vmem:[%s2621 + $0x60] sm:$0xff]
        %v2633 = vld [vmem:[%s2621 + $0x68] sm:$0xff]
        %v2634 = vld [vmem:[%s2621 + $0x78] sm:$0xff]
        %v2635 = vld [vmem:[%s2621 + $0x80] sm:$0xff]
        %v2636 = vld [vmem:[%s2621 + $0x88] sm:$0xff]
        %v2637 = vld [vmem:[%s2621 + $0x90] sm:$0xff]
        %v2638 = vld [vmem:[%s2621 + $0xa0] sm:$0xff]
        %v2639 = vld [vmem:[%s2621 + $0xa8] sm:$0xff]
        %v2640 = vld [vmem:[%s2621 + $0xb0] sm:$0xff]
        %v2641 = vld [vmem:[%s2621 + $0xb8] sm:$0xff]
        %v2642 = vld [vmem:[%s2621 + $0xc8] sm:$0xff]
        %v2643 = vld [vmem:[%s2621 + $0xd0] sm:$0xff]
        %v2644 = vld [vmem:[%s2621 + $0xd8] sm:$0xff]
        %v2645 = vld [vmem:[%s2621 + $0xe0] sm:$0xff]
        %v2646 = vld [vmem:[%s2621 + $0xf0] sm:$0xff]
        %v2647 = vld [vmem:[%s2621 + $0xf8] sm:$0xff]
        %v2648 = vld [vmem:[%s2621 + $0x100] sm:$0xff]
        %v2649 = vld [vmem:[%s2621 + $0x108] sm:$0xff]
        %v2650 = vld [vmem:[%s2621 + $0x118] sm:$0xff]
        %v2651 = vld [vmem:[%s2621 + $0x120] sm:$0xff]
        %v2652 = vld [vmem:[%s2621 + $0x128] sm:$0xff]
        %v2653 = vld [vmem:[%s2621 + $0x130] sm:$0xff]
        %v2654 = vld [vmem:[%s2621 + $0x140] sm:$0xff]
        %v2655 = vld [vmem:[%s2621 + $0x148] sm:$0xff]
        %v2656 = vld [vmem:[%s2621 + $0x150] sm:$0xff]
        %v2657 = vld [vmem:[%s2621 + $0x158] sm:$0xff]
        %v2658 = vld [vmem:[%s2621 + $0x168] sm:$0xff]
        %v2659 = vld [vmem:[%s2621 + $0x170] sm:$0xff]
        %v2660 = vld [vmem:[%s2621 + $0x178] sm:$0xff]
        %v2661 = vld [vmem:[%s2621 + $0x180] sm:$0xff]
        %v2662 = vld [vmem:[%s2621 + $0x190] sm:$0xff]
        %v2663 = vld [vmem:[%s2621 + $0x198] sm:$0xff]
        %v2664 = vld [vmem:[%s2621 + $0x1a0] sm:$0xff]
        %v2665 = vld [vmem:[%s2621 + $0x1a8] sm:$0xff]
        %v2666 = vld [vmem:[%s2621 + $0x1b8] sm:$0xff]
        %v2667 = vld [vmem:[%s2621 + $0x1c0] sm:$0xff]
        %v2668 = vld [vmem:[%s2621 + $0x1c8] sm:$0xff]
        %v2669 = vld [vmem:[%s2621 + $0x1d0] sm:$0xff]
        %v2670 = vld [vmem:[%s2621 + $0x1e0] sm:$0xff]
        %v2671 = vld [vmem:[%s2621 + $0x1e8] sm:$0xff]
        %v2672 = vld [vmem:[%s2621 + $0x1f0] sm:$0xff]
        %v2673 = vld [vmem:[%s2621 + $0x1f8] sm:$0xff]
        %v2674 = vld [vmem:[%s2621 + $0x208] sm:$0xff]
        %v2675 = vld [vmem:[%s2621 + $0x210] sm:$0xff]
        %v2676 = vld [vmem:[%s2621 + $0x218] sm:$0xff]
        %v2677 = vld [vmem:[%s2621 + $0x220] sm:$0xff]
        %v2678 = vld [vmem:[%s2621 + $0x230] sm:$0xff]
        %v2679 = vld [vmem:[%s2621 + $0x238] sm:$0xff]
        %v2680 = vld [vmem:[%s2621 + $0x240] sm:$0xff]
        %v2681 = vld [vmem:[%s2621 + $0x248] sm:$0xff]
        %v2682 = vld [vmem:[%s2621 + $0x258] sm:$0xff]
        %v2683 = vld [vmem:[%s2621 + $0x260] sm:$0xff]
        %v2684 = vld [vmem:[%s2621 + $0x268] sm:$0xff]
        %v2685 = vld [vmem:[%s2621 + $0x270] sm:$0xff]
        %2750 = vrot.lane.b32.xlu0 %v2622, 6
        %v2751 = vpop.permute.xlu0 %2750
        %2752 = vrot.lane.b32.xlu0 %v2623, 6
        %v2753 = vpop.permute.xlu0 %2752
        %2754 = vrot.lane.b32.xlu0 %v2624, 6
        %v2755 = vpop.permute.xlu0 %2754
        %2756 = vrot.lane.b32.xlu0 %v2625, 6
        %v2757 = vpop.permute.xlu0 %2756
        %2758 = vrot.lane.b32.xlu0 %v2626, 6
        %v2759 = vpop.permute.xlu0 %2758
        %2760 = vrot.lane.b32.xlu0 %v2627, 6
        %v2761 = vpop.permute.xlu0 %2760
        %2762 = vrot.lane.b32.xlu0 %v2628, 6
        %v2763 = vpop.permute.xlu0 %2762
        %2764 = vrot.lane.b32.xlu0 %v2629, 6
        %v2765 = vpop.permute.xlu0 %2764
        %2766 = vrot.lane.b32.xlu0 %v2630, 6
        %v2767 = vpop.permute.xlu0 %2766
        %2768 = vrot.lane.b32.xlu0 %v2631, 6
        %v2769 = vpop.permute.xlu0 %2768
        %2770 = vrot.lane.b32.xlu0 %v2632, 6
        %v2771 = vpop.permute.xlu0 %2770
        %2772 = vrot.lane.b32.xlu0 %v2633, 6
        %v2773 = vpop.permute.xlu0 %2772
        %2774 = vrot.lane.b32.xlu0 %v2634, 6
        %v2775 = vpop.permute.xlu0 %2774
        %2776 = vrot.lane.b32.xlu0 %v2635, 6
        %v2777 = vpop.permute.xlu0 %2776
        %2778 = vrot.lane.b32.xlu0 %v2636, 6
        %v2779 = vpop.permute.xlu0 %2778
        %2780 = vrot.lane.b32.xlu0 %v2637, 6
        %v2781 = vpop.permute.xlu0 %2780
        %2782 = vrot.lane.b32.xlu0 %v2638, 6
        %v2783 = vpop.permute.xlu0 %2782
        %2784 = vrot.lane.b32.xlu0 %v2639, 6
        %v2785 = vpop.permute.xlu0 %2784
        %2786 = vrot.lane.b32.xlu0 %v2640, 6
        %v2787 = vpop.permute.xlu0 %2786
        %2788 = vrot.lane.b32.xlu0 %v2641, 6
        %v2789 = vpop.permute.xlu0 %2788
        %2790 = vrot.lane.b32.xlu0 %v2642, 6
        %v2791 = vpop.permute.xlu0 %2790
        %2792 = vrot.lane.b32.xlu0 %v2643, 6
        %v2793 = vpop.permute.xlu0 %2792
        %2794 = vrot.lane.b32.xlu0 %v2644, 6
        %v2795 = vpop.permute.xlu0 %2794
        %2796 = vrot.lane.b32.xlu0 %v2645, 6
        %v2797 = vpop.permute.xlu0 %2796
        %2798 = vrot.lane.b32.xlu0 %v2646, 6
        %v2799 = vpop.permute.xlu0 %2798
        %2800 = vrot.lane.b32.xlu0 %v2647, 6
        %v2801 = vpop.permute.xlu0 %2800
        %2802 = vrot.lane.b32.xlu0 %v2648, 6
        %v2803 = vpop.permute.xlu0 %2802
        %2804 = vrot.lane.b32.xlu0 %v2649, 6
        %v2805 = vpop.permute.xlu0 %2804
        %2806 = vrot.lane.b32.xlu0 %v2650, 6
        %v2807 = vpop.permute.xlu0 %2806
        %2808 = vrot.lane.b32.xlu0 %v2651, 6
        %v2809 = vpop.permute.xlu0 %2808
        %2810 = vrot.lane.b32.xlu0 %v2652, 6
        %v2811 = vpop.permute.xlu0 %2810
        %2812 = vrot.lane.b32.xlu0 %v2653, 6
        %v2813 = vpop.permute.xlu0 %2812
        %2814 = vrot.lane.b32.xlu0 %v2654, 6
        %v2815 = vpop.permute.xlu0 %2814
        %2816 = vrot.lane.b32.xlu0 %v2655, 6
        %v2817 = vpop.permute.xlu0 %2816
        %2818 = vrot.lane.b32.xlu0 %v2656, 6
        %v2819 = vpop.permute.xlu0 %2818
        %2820 = vrot.lane.b32.xlu0 %v2657, 6
        %v2821 = vpop.permute.xlu0 %2820
        %2822 = vrot.lane.b32.xlu0 %v2658, 6
        %v2823 = vpop.permute.xlu0 %2822
        %2824 = vrot.lane.b32.xlu0 %v2659, 6
        %v2825 = vpop.permute.xlu0 %2824
        %2826 = vrot.lane.b32.xlu0 %v2660, 6
        %v2827 = vpop.permute.xlu0 %2826
        %2828 = vrot.lane.b32.xlu0 %v2661, 6
        %v2829 = vpop.permute.xlu0 %2828
        %2830 = vrot.lane.b32.xlu0 %v2662, 6
        %v2831 = vpop.permute.xlu0 %2830
        %2832 = vrot.lane.b32.xlu0 %v2663, 6
        %v2833 = vpop.permute.xlu0 %2832
        %2834 = vrot.lane.b32.xlu0 %v2664, 6
        %v2835 = vpop.permute.xlu0 %2834
        %2836 = vrot.lane.b32.xlu0 %v2665, 6
        %v2837 = vpop.permute.xlu0 %2836
        %2838 = vrot.lane.b32.xlu0 %v2666, 6
        %v2839 = vpop.permute.xlu0 %2838
        %2840 = vrot.lane.b32.xlu0 %v2667, 6
        %v2841 = vpop.permute.xlu0 %2840
        %2842 = vrot.lane.b32.xlu0 %v2668, 6
        %v2843 = vpop.permute.xlu0 %2842
        %2844 = vrot.lane.b32.xlu0 %v2669, 6
        %v2845 = vpop.permute.xlu0 %2844
        %2846 = vrot.lane.b32.xlu0 %v2670, 6
        %v2847 = vpop.permute.xlu0 %2846
        %2848 = vrot.lane.b32.xlu0 %v2671, 6
        %v2849 = vpop.permute.xlu0 %2848
        %2850 = vrot.lane.b32.xlu0 %v2672, 6
        %v2851 = vpop.permute.xlu0 %2850
        %2852 = vrot.lane.b32.xlu0 %v2673, 6
        %v2853 = vpop.permute.xlu0 %2852
        %2854 = vrot.lane.b32.xlu0 %v2674, 6
        %v2855 = vpop.permute.xlu0 %2854
        %2856 = vrot.lane.b32.xlu0 %v2675, 6
        %v2857 = vpop.permute.xlu0 %2856
        %2858 = vrot.lane.b32.xlu0 %v2676, 6
        %v2859 = vpop.permute.xlu0 %2858
        %2860 = vrot.lane.b32.xlu0 %v2677, 6
        %v2861 = vpop.permute.xlu0 %2860
        %2862 = vrot.lane.b32.xlu0 %v2678, 6
        %v2863 = vpop.permute.xlu0 %2862
        %2864 = vrot.lane.b32.xlu0 %v2679, 6
        %v2865 = vpop.permute.xlu0 %2864
        %2866 = vrot.lane.b32.xlu0 %v2680, 6
        %v2867 = vpop.permute.xlu0 %2866
        %2868 = vrot.lane.b32.xlu0 %v2681, 6
        %v2869 = vpop.permute.xlu0 %2868
        %2870 = vrot.lane.b32.xlu0 %v2682, 6
        %v2871 = vpop.permute.xlu0 %2870
        %2872 = vrot.lane.b32.xlu0 %v2683, 6
        %v2873 = vpop.permute.xlu0 %2872
        %2874 = vrot.lane.b32.xlu0 %v2684, 6
        %v2875 = vpop.permute.xlu0 %2874
        %2876 = vrot.lane.b32.xlu0 %v2685, 6
        %v2877 = vpop.permute.xlu0 %2876
        %vm2942 = vcmask 56368
        %2943 = vst.msk [vmem:[#allocation3] sm:$0xff] %vm2942, %v2751
        %2944 = vst.msk [vmem:[#allocation3 + $0x8] sm:$0xff] %vm2942, %v2753
        %2945 = vst.msk [vmem:[#allocation3 + $0x10] sm:$0xff] %vm2942, %v2755
        %2946 = vst.msk [vmem:[#allocation3 + $0x18] sm:$0xff] %vm2942, %v2757
        %2947 = vst.msk [vmem:[#allocation3 + $0x20] sm:$0xff] %vm2942, %v2759
        %2948 = vst.msk [vmem:[#allocation3 + $0x28] sm:$0xff] %vm2942, %v2761
        %2949 = vst.msk [vmem:[#allocation3 + $0x30] sm:$0xff] %vm2942, %v2763
        %2950 = vst.msk [vmem:[#allocation3 + $0x38] sm:$0xff] %vm2942, %v2765
        %2951 = vst.msk [vmem:[#allocation3 + $0x40] sm:$0xff] %vm2942, %v2767
        %2952 = vst.msk [vmem:[#allocation3 + $0x48] sm:$0xff] %vm2942, %v2769
        %2953 = vst.msk [vmem:[#allocation3 + $0x50] sm:$0xff] %vm2942, %v2771
        %2954 = vst.msk [vmem:[#allocation3 + $0x58] sm:$0xff] %vm2942, %v2773
        %2955 = vst.msk [vmem:[#allocation3 + $0x60] sm:$0xff] %vm2942, %v2775
        %2956 = vst.msk [vmem:[#allocation3 + $0x68] sm:$0xff] %vm2942, %v2777
        %2957 = vst.msk [vmem:[#allocation3 + $0x70] sm:$0xff] %vm2942, %v2779
        %2958 = vst.msk [vmem:[#allocation3 + $0x78] sm:$0xff] %vm2942, %v2781
        %2959 = vst.msk [vmem:[#allocation3 + $0x80] sm:$0xff] %vm2942, %v2783
        %2960 = vst.msk [vmem:[#allocation3 + $0x88] sm:$0xff] %vm2942, %v2785
        %2961 = vst.msk [vmem:[#allocation3 + $0x90] sm:$0xff] %vm2942, %v2787
        %2962 = vst.msk [vmem:[#allocation3 + $0x98] sm:$0xff] %vm2942, %v2789
        %2963 = vst.msk [vmem:[#allocation3 + $0xa0] sm:$0xff] %vm2942, %v2791
        %2964 = vst.msk [vmem:[#allocation3 + $0xa8] sm:$0xff] %vm2942, %v2793
        %2965 = vst.msk [vmem:[#allocation3 + $0xb0] sm:$0xff] %vm2942, %v2795
        %2966 = vst.msk [vmem:[#allocation3 + $0xb8] sm:$0xff] %vm2942, %v2797
        %2967 = vst.msk [vmem:[#allocation3 + $0xc0] sm:$0xff] %vm2942, %v2799
        %2968 = vst.msk [vmem:[#allocation3 + $0xc8] sm:$0xff] %vm2942, %v2801
        %2969 = vst.msk [vmem:[#allocation3 + $0xd0] sm:$0xff] %vm2942, %v2803
        %2970 = vst.msk [vmem:[#allocation3 + $0xd8] sm:$0xff] %vm2942, %v2805
        %2971 = vst.msk [vmem:[#allocation3 + $0xe0] sm:$0xff] %vm2942, %v2807
        %2972 = vst.msk [vmem:[#allocation3 + $0xe8] sm:$0xff] %vm2942, %v2809
        %2973 = vst.msk [vmem:[#allocation3 + $0xf0] sm:$0xff] %vm2942, %v2811
        %2974 = vst.msk [vmem:[#allocation3 + $0xf8] sm:$0xff] %vm2942, %v2813
        %2975 = vst.msk [vmem:[#allocation3 + $0x100] sm:$0xff] %vm2942, %v2815
        %2976 = vst.msk [vmem:[#allocation3 + $0x108] sm:$0xff] %vm2942, %v2817
        %2977 = vst.msk [vmem:[#allocation3 + $0x110] sm:$0xff] %vm2942, %v2819
        %2978 = vst.msk [vmem:[#allocation3 + $0x118] sm:$0xff] %vm2942, %v2821
        %2979 = vst.msk [vmem:[#allocation3 + $0x120] sm:$0xff] %vm2942, %v2823
        %2980 = vst.msk [vmem:[#allocation3 + $0x128] sm:$0xff] %vm2942, %v2825
        %2981 = vst.msk [vmem:[#allocation3 + $0x130] sm:$0xff] %vm2942, %v2827
        %2982 = vst.msk [vmem:[#allocation3 + $0x138] sm:$0xff] %vm2942, %v2829
        %2983 = vst.msk [vmem:[#allocation3 + $0x140] sm:$0xff] %vm2942, %v2831
        %2984 = vst.msk [vmem:[#allocation3 + $0x148] sm:$0xff] %vm2942, %v2833
        %2985 = vst.msk [vmem:[#allocation3 + $0x150] sm:$0xff] %vm2942, %v2835
        %2986 = vst.msk [vmem:[#allocation3 + $0x158] sm:$0xff] %vm2942, %v2837
        %2987 = vst.msk [vmem:[#allocation3 + $0x160] sm:$0xff] %vm2942, %v2839
        %2988 = vst.msk [vmem:[#allocation3 + $0x168] sm:$0xff] %vm2942, %v2841
        %2989 = vst.msk [vmem:[#allocation3 + $0x170] sm:$0xff] %vm2942, %v2843
        %2990 = vst.msk [vmem:[#allocation3 + $0x178] sm:$0xff] %vm2942, %v2845
        %2991 = vst.msk [vmem:[#allocation3 + $0x180] sm:$0xff] %vm2942, %v2847
        %2992 = vst.msk [vmem:[#allocation3 + $0x188] sm:$0xff] %vm2942, %v2849
        %2993 = vst.msk [vmem:[#allocation3 + $0x190] sm:$0xff] %vm2942, %v2851
        %2994 = vst.msk [vmem:[#allocation3 + $0x198] sm:$0xff] %vm2942, %v2853
        %2995 = vst.msk [vmem:[#allocation3 + $0x1a0] sm:$0xff] %vm2942, %v2855
        %2996 = vst.msk [vmem:[#allocation3 + $0x1a8] sm:$0xff] %vm2942, %v2857
        %2997 = vst.msk [vmem:[#allocation3 + $0x1b0] sm:$0xff] %vm2942, %v2859
        %2998 = vst.msk [vmem:[#allocation3 + $0x1b8] sm:$0xff] %vm2942, %v2861
        %2999 = vst.msk [vmem:[#allocation3 + $0x1c0] sm:$0xff] %vm2942, %v2863
        %3000 = vst.msk [vmem:[#allocation3 + $0x1c8] sm:$0xff] %vm2942, %v2865
        %3001 = vst.msk [vmem:[#allocation3 + $0x1d0] sm:$0xff] %vm2942, %v2867
        %3002 = vst.msk [vmem:[#allocation3 + $0x1d8] sm:$0xff] %vm2942, %v2869
        %3003 = vst.msk [vmem:[#allocation3 + $0x1e0] sm:$0xff] %vm2942, %v2871
        %3004 = vst.msk [vmem:[#allocation3 + $0x1e8] sm:$0xff] %vm2942, %v2873
        %3005 = vst.msk [vmem:[#allocation3 + $0x1f0] sm:$0xff] %vm2942, %v2875
        %3006 = vst.msk [vmem:[#allocation3 + $0x1f8] sm:$0xff] %vm2942, %v2877
        %v3007 = vld [vmem:[%s2621 + $0x1] sm:$0xff]
        %v3008 = vld [vmem:[%s2621 + $0x9] sm:$0xff]
        %v3009 = vld [vmem:[%s2621 + $0x11] sm:$0xff]
        %v3010 = vld [vmem:[%s2621 + $0x19] sm:$0xff]
        %v3011 = vld [vmem:[%s2621 + $0x29] sm:$0xff]
        %v3012 = vld [vmem:[%s2621 + $0x31] sm:$0xff]
        %v3013 = vld [vmem:[%s2621 + $0x39] sm:$0xff]
        %v3014 = vld [vmem:[%s2621 + $0x41] sm:$0xff]
        %v3015 = vld [vmem:[%s2621 + $0x51] sm:$0xff]
        %v3016 = vld [vmem:[%s2621 + $0x59] sm:$0xff]
        %v3017 = vld [vmem:[%s2621 + $0x61] sm:$0xff]
        %v3018 = vld [vmem:[%s2621 + $0x69] sm:$0xff]
        %v3019 = vld [vmem:[%s2621 + $0x79] sm:$0xff]
        %v3020 = vld [vmem:[%s2621 + $0x81] sm:$0xff]
        %v3021 = vld [vmem:[%s2621 + $0x89] sm:$0xff]
        %v3022 = vld [vmem:[%s2621 + $0x91] sm:$0xff]
        %v3023 = vld [vmem:[%s2621 + $0xa1] sm:$0xff]
        %v3024 = vld [vmem:[%s2621 + $0xa9] sm:$0xff]
        %v3025 = vld [vmem:[%s2621 + $0xb1] sm:$0xff]
        %v3026 = vld [vmem:[%s2621 + $0xb9] sm:$0xff]
        %v3027 = vld [vmem:[%s2621 + $0xc9] sm:$0xff]
        %v3028 = vld [vmem:[%s2621 + $0xd1] sm:$0xff]
        %v3029 = vld [vmem:[%s2621 + $0xd9] sm:$0xff]
        %v3030 = vld [vmem:[%s2621 + $0xe1] sm:$0xff]
        %v3031 = vld [vmem:[%s2621 + $0xf1] sm:$0xff]
        %v3032 = vld [vmem:[%s2621 + $0xf9] sm:$0xff]
        %v3033 = vld [vmem:[%s2621 + $0x101] sm:$0xff]
        %v3034 = vld [vmem:[%s2621 + $0x109] sm:$0xff]
        %v3035 = vld [vmem:[%s2621 + $0x119] sm:$0xff]
        %v3036 = vld [vmem:[%s2621 + $0x121] sm:$0xff]
        %v3037 = vld [vmem:[%s2621 + $0x129] sm:$0xff]
        %v3038 = vld [vmem:[%s2621 + $0x131] sm:$0xff]
        %v3039 = vld [vmem:[%s2621 + $0x141] sm:$0xff]
        %v3040 = vld [vmem:[%s2621 + $0x149] sm:$0xff]
        %v3041 = vld [vmem:[%s2621 + $0x151] sm:$0xff]
        %v3042 = vld [vmem:[%s2621 + $0x159] sm:$0xff]
        %v3043 = vld [vmem:[%s2621 + $0x169] sm:$0xff]
        %v3044 = vld [vmem:[%s2621 + $0x171] sm:$0xff]
        %v3045 = vld [vmem:[%s2621 + $0x179] sm:$0xff]
        %v3046 = vld [vmem:[%s2621 + $0x181] sm:$0xff]
        %v3047 = vld [vmem:[%s2621 + $0x191] sm:$0xff]
        %v3048 = vld [vmem:[%s2621 + $0x199] sm:$0xff]
        %v3049 = vld [vmem:[%s2621 + $0x1a1] sm:$0xff]
        %v3050 = vld [vmem:[%s2621 + $0x1a9] sm:$0xff]
        %v3051 = vld [vmem:[%s2621 + $0x1b9] sm:$0xff]
        %v3052 = vld [vmem:[%s2621 + $0x1c1] sm:$0xff]
        %v3053 = vld [vmem:[%s2621 + $0x1c9] sm:$0xff]
        %v3054 = vld [vmem:[%s2621 + $0x1d1] sm:$0xff]
        %v3055 = vld [vmem:[%s2621 + $0x1e1] sm:$0xff]
        %v3056 = vld [vmem:[%s2621 + $0x1e9] sm:$0xff]
        %v3057 = vld [vmem:[%s2621 + $0x1f1] sm:$0xff]
        %v3058 = vld [vmem:[%s2621 + $0x1f9] sm:$0xff]
        %v3059 = vld [vmem:[%s2621 + $0x209] sm:$0xff]
        %v3060 = vld [vmem:[%s2621 + $0x211] sm:$0xff]
        %v3061 = vld [vmem:[%s2621 + $0x219] sm:$0xff]
        %v3062 = vld [vmem:[%s2621 + $0x221] sm:$0xff]
        %v3063 = vld [vmem:[%s2621 + $0x231] sm:$0xff]
        %v3064 = vld [vmem:[%s2621 + $0x239] sm:$0xff]
        %v3065 = vld [vmem:[%s2621 + $0x241] sm:$0xff]
        %v3066 = vld [vmem:[%s2621 + $0x249] sm:$0xff]
        %v3067 = vld [vmem:[%s2621 + $0x259] sm:$0xff]
        %v3068 = vld [vmem:[%s2621 + $0x261] sm:$0xff]
        %v3069 = vld [vmem:[%s2621 + $0x269] sm:$0xff]
        %v3070 = vld [vmem:[%s2621 + $0x271] sm:$0xff]
        %3135 = vrot.lane.b32.xlu0 %v3007, 7
        %v3136 = vpop.permute.xlu0 %3135
        %3137 = vrot.lane.b32.xlu0 %v3008, 7
        %v3138 = vpop.permute.xlu0 %3137
        %3139 = vrot.lane.b32.xlu0 %v3009, 7
        %v3140 = vpop.permute.xlu0 %3139
        %3141 = vrot.lane.b32.xlu0 %v3010, 7
        %v3142 = vpop.permute.xlu0 %3141
        %3143 = vrot.lane.b32.xlu0 %v3011, 7
        %v3144 = vpop.permute.xlu0 %3143
        %3145 = vrot.lane.b32.xlu0 %v3012, 7
        %v3146 = vpop.permute.xlu0 %3145
        %3147 = vrot.lane.b32.xlu0 %v3013, 7
        %v3148 = vpop.permute.xlu0 %3147
        %3149 = vrot.lane.b32.xlu0 %v3014, 7
        %v3150 = vpop.permute.xlu0 %3149
        %3151 = vrot.lane.b32.xlu0 %v3015, 7
        %v3152 = vpop.permute.xlu0 %3151
        %3153 = vrot.lane.b32.xlu0 %v3016, 7
        %v3154 = vpop.permute.xlu0 %3153
        %3155 = vrot.lane.b32.xlu0 %v3017, 7
        %v3156 = vpop.permute.xlu0 %3155
        %3157 = vrot.lane.b32.xlu0 %v3018, 7
        %v3158 = vpop.permute.xlu0 %3157
        %3159 = vrot.lane.b32.xlu0 %v3019, 7
        %v3160 = vpop.permute.xlu0 %3159
        %3161 = vrot.lane.b32.xlu0 %v3020, 7
        %v3162 = vpop.permute.xlu0 %3161
        %3163 = vrot.lane.b32.xlu0 %v3021, 7
        %v3164 = vpop.permute.xlu0 %3163
        %3165 = vrot.lane.b32.xlu0 %v3022, 7
        %v3166 = vpop.permute.xlu0 %3165
        %3167 = vrot.lane.b32.xlu0 %v3023, 7
        %v3168 = vpop.permute.xlu0 %3167
        %3169 = vrot.lane.b32.xlu0 %v3024, 7
        %v3170 = vpop.permute.xlu0 %3169
        %3171 = vrot.lane.b32.xlu0 %v3025, 7
        %v3172 = vpop.permute.xlu0 %3171
        %3173 = vrot.lane.b32.xlu0 %v3026, 7
        %v3174 = vpop.permute.xlu0 %3173
        %3175 = vrot.lane.b32.xlu0 %v3027, 7
        %v3176 = vpop.permute.xlu0 %3175
        %3177 = vrot.lane.b32.xlu0 %v3028, 7
        %v3178 = vpop.permute.xlu0 %3177
        %3179 = vrot.lane.b32.xlu0 %v3029, 7
        %v3180 = vpop.permute.xlu0 %3179
        %3181 = vrot.lane.b32.xlu0 %v3030, 7
        %v3182 = vpop.permute.xlu0 %3181
        %3183 = vrot.lane.b32.xlu0 %v3031, 7
        %v3184 = vpop.permute.xlu0 %3183
        %3185 = vrot.lane.b32.xlu0 %v3032, 7
        %v3186 = vpop.permute.xlu0 %3185
        %3187 = vrot.lane.b32.xlu0 %v3033, 7
        %v3188 = vpop.permute.xlu0 %3187
        %3189 = vrot.lane.b32.xlu0 %v3034, 7
        %v3190 = vpop.permute.xlu0 %3189
        %3191 = vrot.lane.b32.xlu0 %v3035, 7
        %v3192 = vpop.permute.xlu0 %3191
        %3193 = vrot.lane.b32.xlu0 %v3036, 7
        %v3194 = vpop.permute.xlu0 %3193
        %3195 = vrot.lane.b32.xlu0 %v3037, 7
        %v3196 = vpop.permute.xlu0 %3195
        %3197 = vrot.lane.b32.xlu0 %v3038, 7
        %v3198 = vpop.permute.xlu0 %3197
        %3199 = vrot.lane.b32.xlu0 %v3039, 7
        %v3200 = vpop.permute.xlu0 %3199
        %3201 = vrot.lane.b32.xlu0 %v3040, 7
        %v3202 = vpop.permute.xlu0 %3201
        %3203 = vrot.lane.b32.xlu0 %v3041, 7
        %v3204 = vpop.permute.xlu0 %3203
        %3205 = vrot.lane.b32.xlu0 %v3042, 7
        %v3206 = vpop.permute.xlu0 %3205
        %3207 = vrot.lane.b32.xlu0 %v3043, 7
        %v3208 = vpop.permute.xlu0 %3207
        %3209 = vrot.lane.b32.xlu0 %v3044, 7
        %v3210 = vpop.permute.xlu0 %3209
        %3211 = vrot.lane.b32.xlu0 %v3045, 7
        %v3212 = vpop.permute.xlu0 %3211
        %3213 = vrot.lane.b32.xlu0 %v3046, 7
        %v3214 = vpop.permute.xlu0 %3213
        %3215 = vrot.lane.b32.xlu0 %v3047, 7
        %v3216 = vpop.permute.xlu0 %3215
        %3217 = vrot.lane.b32.xlu0 %v3048, 7
        %v3218 = vpop.permute.xlu0 %3217
        %3219 = vrot.lane.b32.xlu0 %v3049, 7
        %v3220 = vpop.permute.xlu0 %3219
        %3221 = vrot.lane.b32.xlu0 %v3050, 7
        %v3222 = vpop.permute.xlu0 %3221
        %3223 = vrot.lane.b32.xlu0 %v3051, 7
        %v3224 = vpop.permute.xlu0 %3223
        %3225 = vrot.lane.b32.xlu0 %v3052, 7
        %v3226 = vpop.permute.xlu0 %3225
        %3227 = vrot.lane.b32.xlu0 %v3053, 7
        %v3228 = vpop.permute.xlu0 %3227
        %3229 = vrot.lane.b32.xlu0 %v3054, 7
        %v3230 = vpop.permute.xlu0 %3229
        %3231 = vrot.lane.b32.xlu0 %v3055, 7
        %v3232 = vpop.permute.xlu0 %3231
        %3233 = vrot.lane.b32.xlu0 %v3056, 7
        %v3234 = vpop.permute.xlu0 %3233
        %3235 = vrot.lane.b32.xlu0 %v3057, 7
        %v3236 = vpop.permute.xlu0 %3235
        %3237 = vrot.lane.b32.xlu0 %v3058, 7
        %v3238 = vpop.permute.xlu0 %3237
        %3239 = vrot.lane.b32.xlu0 %v3059, 7
        %v3240 = vpop.permute.xlu0 %3239
        %3241 = vrot.lane.b32.xlu0 %v3060, 7
        %v3242 = vpop.permute.xlu0 %3241
        %3243 = vrot.lane.b32.xlu0 %v3061, 7
        %v3244 = vpop.permute.xlu0 %3243
        %3245 = vrot.lane.b32.xlu0 %v3062, 7
        %v3246 = vpop.permute.xlu0 %3245
        %3247 = vrot.lane.b32.xlu0 %v3063, 7
        %v3248 = vpop.permute.xlu0 %3247
        %3249 = vrot.lane.b32.xlu0 %v3064, 7
        %v3250 = vpop.permute.xlu0 %3249
        %3251 = vrot.lane.b32.xlu0 %v3065, 7
        %v3252 = vpop.permute.xlu0 %3251
        %3253 = vrot.lane.b32.xlu0 %v3066, 7
        %v3254 = vpop.permute.xlu0 %3253
        %3255 = vrot.lane.b32.xlu0 %v3067, 7
        %v3256 = vpop.permute.xlu0 %3255
        %3257 = vrot.lane.b32.xlu0 %v3068, 7
        %v3258 = vpop.permute.xlu0 %3257
        %3259 = vrot.lane.b32.xlu0 %v3069, 7
        %v3260 = vpop.permute.xlu0 %3259
        %3261 = vrot.lane.b32.xlu0 %v3070, 7
        %v3262 = vpop.permute.xlu0 %3261
        %vm3327 = vcmask 64568
        %3328 = vst.msk [vmem:[#allocation3] sm:$0xff] %vm3327, %v3136
        %3329 = vst.msk [vmem:[#allocation3 + $0x8] sm:$0xff] %vm3327, %v3138
        %3330 = vst.msk [vmem:[#allocation3 + $0x10] sm:$0xff] %vm3327, %v3140
        %3331 = vst.msk [vmem:[#allocation3 + $0x18] sm:$0xff] %vm3327, %v3142
        %3332 = vst.msk [vmem:[#allocation3 + $0x20] sm:$0xff] %vm3327, %v3144
        %3333 = vst.msk [vmem:[#allocation3 + $0x28] sm:$0xff] %vm3327, %v3146
        %3334 = vst.msk [vmem:[#allocation3 + $0x30] sm:$0xff] %vm3327, %v3148
        %3335 = vst.msk [vmem:[#allocation3 + $0x38] sm:$0xff] %vm3327, %v3150
        %3336 = vst.msk [vmem:[#allocation3 + $0x40] sm:$0xff] %vm3327, %v3152
        %3337 = vst.msk [vmem:[#allocation3 + $0x48] sm:$0xff] %vm3327, %v3154
        %3338 = vst.msk [vmem:[#allocation3 + $0x50] sm:$0xff] %vm3327, %v3156
        %3339 = vst.msk [vmem:[#allocation3 + $0x58] sm:$0xff] %vm3327, %v3158
        %3340 = vst.msk [vmem:[#allocation3 + $0x60] sm:$0xff] %vm3327, %v3160
        %3341 = vst.msk [vmem:[#allocation3 + $0x68] sm:$0xff] %vm3327, %v3162
        %3342 = vst.msk [vmem:[#allocation3 + $0x70] sm:$0xff] %vm3327, %v3164
        %3343 = vst.msk [vmem:[#allocation3 + $0x78] sm:$0xff] %vm3327, %v3166
        %3344 = vst.msk [vmem:[#allocation3 + $0x80] sm:$0xff] %vm3327, %v3168
        %3345 = vst.msk [vmem:[#allocation3 + $0x88] sm:$0xff] %vm3327, %v3170
        %3346 = vst.msk [vmem:[#allocation3 + $0x90] sm:$0xff] %vm3327, %v3172
        %3347 = vst.msk [vmem:[#allocation3 + $0x98] sm:$0xff] %vm3327, %v3174
        %3348 = vst.msk [vmem:[#allocation3 + $0xa0] sm:$0xff] %vm3327, %v3176
        %3349 = vst.msk [vmem:[#allocation3 + $0xa8] sm:$0xff] %vm3327, %v3178
        %3350 = vst.msk [vmem:[#allocation3 + $0xb0] sm:$0xff] %vm3327, %v3180
        %3351 = vst.msk [vmem:[#allocation3 + $0xb8] sm:$0xff] %vm3327, %v3182
        %3352 = vst.msk [vmem:[#allocation3 + $0xc0] sm:$0xff] %vm3327, %v3184
        %3353 = vst.msk [vmem:[#allocation3 + $0xc8] sm:$0xff] %vm3327, %v3186
        %3354 = vst.msk [vmem:[#allocation3 + $0xd0] sm:$0xff] %vm3327, %v3188
        %3355 = vst.msk [vmem:[#allocation3 + $0xd8] sm:$0xff] %vm3327, %v3190
        %3356 = vst.msk [vmem:[#allocation3 + $0xe0] sm:$0xff] %vm3327, %v3192
        %3357 = vst.msk [vmem:[#allocation3 + $0xe8] sm:$0xff] %vm3327, %v3194
        %3358 = vst.msk [vmem:[#allocation3 + $0xf0] sm:$0xff] %vm3327, %v3196
        %3359 = vst.msk [vmem:[#allocation3 + $0xf8] sm:$0xff] %vm3327, %v3198
        %3360 = vst.msk [vmem:[#allocation3 + $0x100] sm:$0xff] %vm3327, %v3200
        %3361 = vst.msk [vmem:[#allocation3 + $0x108] sm:$0xff] %vm3327, %v3202
        %3362 = vst.msk [vmem:[#allocation3 + $0x110] sm:$0xff] %vm3327, %v3204
        %3363 = vst.msk [vmem:[#allocation3 + $0x118] sm:$0xff] %vm3327, %v3206
        %3364 = vst.msk [vmem:[#allocation3 + $0x120] sm:$0xff] %vm3327, %v3208
        %3365 = vst.msk [vmem:[#allocation3 + $0x128] sm:$0xff] %vm3327, %v3210
        %3366 = vst.msk [vmem:[#allocation3 + $0x130] sm:$0xff] %vm3327, %v3212
        %3367 = vst.msk [vmem:[#allocation3 + $0x138] sm:$0xff] %vm3327, %v3214
        %3368 = vst.msk [vmem:[#allocation3 + $0x140] sm:$0xff] %vm3327, %v3216
        %3369 = vst.msk [vmem:[#allocation3 + $0x148] sm:$0xff] %vm3327, %v3218
        %3370 = vst.msk [vmem:[#allocation3 + $0x150] sm:$0xff] %vm3327, %v3220
        %3371 = vst.msk [vmem:[#allocation3 + $0x158] sm:$0xff] %vm3327, %v3222
        %3372 = vst.msk [vmem:[#allocation3 + $0x160] sm:$0xff] %vm3327, %v3224
        %3373 = vst.msk [vmem:[#allocation3 + $0x168] sm:$0xff] %vm3327, %v3226
        %3374 = vst.msk [vmem:[#allocation3 + $0x170] sm:$0xff] %vm3327, %v3228
        %3375 = vst.msk [vmem:[#allocation3 + $0x178] sm:$0xff] %vm3327, %v3230
        %3376 = vst.msk [vmem:[#allocation3 + $0x180] sm:$0xff] %vm3327, %v3232
        %3377 = vst.msk [vmem:[#allocation3 + $0x188] sm:$0xff] %vm3327, %v3234
        %3378 = vst.msk [vmem:[#allocation3 + $0x190] sm:$0xff] %vm3327, %v3236
        %3379 = vst.msk [vmem:[#allocation3 + $0x198] sm:$0xff] %vm3327, %v3238
        %3380 = vst.msk [vmem:[#allocation3 + $0x1a0] sm:$0xff] %vm3327, %v3240
        %3381 = vst.msk [vmem:[#allocation3 + $0x1a8] sm:$0xff] %vm3327, %v3242
        %3382 = vst.msk [vmem:[#allocation3 + $0x1b0] sm:$0xff] %vm3327, %v3244
        %3383 = vst.msk [vmem:[#allocation3 + $0x1b8] sm:$0xff] %vm3327, %v3246
        %3384 = vst.msk [vmem:[#allocation3 + $0x1c0] sm:$0xff] %vm3327, %v3248
        %3385 = vst.msk [vmem:[#allocation3 + $0x1c8] sm:$0xff] %vm3327, %v3250
        %3386 = vst.msk [vmem:[#allocation3 + $0x1d0] sm:$0xff] %vm3327, %v3252
        %3387 = vst.msk [vmem:[#allocation3 + $0x1d8] sm:$0xff] %vm3327, %v3254
        %3388 = vst.msk [vmem:[#allocation3 + $0x1e0] sm:$0xff] %vm3327, %v3256
        %3389 = vst.msk [vmem:[#allocation3 + $0x1e8] sm:$0xff] %vm3327, %v3258
        %3390 = vst.msk [vmem:[#allocation3 + $0x1f0] sm:$0xff] %vm3327, %v3260
        %3391 = vst.msk [vmem:[#allocation3 + $0x1f8] sm:$0xff] %vm3327, %v3262
        %v3392 = vld [vmem:[%s2621 + $0x2] sm:$0xff]
        %v3393 = vld [vmem:[%s2621 + $0xa] sm:$0xff]
        %v3394 = vld [vmem:[%s2621 + $0x12] sm:$0xff]
        %v3395 = vld [vmem:[%s2621 + $0x1a] sm:$0xff]
        %v3396 = vld [vmem:[%s2621 + $0x2a] sm:$0xff]
        %v3397 = vld [vmem:[%s2621 + $0x32] sm:$0xff]
        %v3398 = vld [vmem:[%s2621 + $0x3a] sm:$0xff]
        %v3399 = vld [vmem:[%s2621 + $0x42] sm:$0xff]
        %v3400 = vld [vmem:[%s2621 + $0x52] sm:$0xff]
        %v3401 = vld [vmem:[%s2621 + $0x5a] sm:$0xff]
        %v3402 = vld [vmem:[%s2621 + $0x62] sm:$0xff]
        %v3403 = vld [vmem:[%s2621 + $0x6a] sm:$0xff]
        %v3404 = vld [vmem:[%s2621 + $0x7a] sm:$0xff]
        %v3405 = vld [vmem:[%s2621 + $0x82] sm:$0xff]
        %v3406 = vld [vmem:[%s2621 + $0x8a] sm:$0xff]
        %v3407 = vld [vmem:[%s2621 + $0x92] sm:$0xff]
        %v3408 = vld [vmem:[%s2621 + $0xa2] sm:$0xff]
        %v3409 = vld [vmem:[%s2621 + $0xaa] sm:$0xff]
        %v3410 = vld [vmem:[%s2621 + $0xb2] sm:$0xff]
        %v3411 = vld [vmem:[%s2621 + $0xba] sm:$0xff]
        %v3412 = vld [vmem:[%s2621 + $0xca] sm:$0xff]
        %v3413 = vld [vmem:[%s2621 + $0xd2] sm:$0xff]
        %v3414 = vld [vmem:[%s2621 + $0xda] sm:$0xff]
        %v3415 = vld [vmem:[%s2621 + $0xe2] sm:$0xff]
        %v3416 = vld [vmem:[%s2621 + $0xf2] sm:$0xff]
        %v3417 = vld [vmem:[%s2621 + $0xfa] sm:$0xff]
        %v3418 = vld [vmem:[%s2621 + $0x102] sm:$0xff]
        %v3419 = vld [vmem:[%s2621 + $0x10a] sm:$0xff]
        %v3420 = vld [vmem:[%s2621 + $0x11a] sm:$0xff]
        %v3421 = vld [vmem:[%s2621 + $0x122] sm:$0xff]
        %v3422 = vld [vmem:[%s2621 + $0x12a] sm:$0xff]
        %v3423 = vld [vmem:[%s2621 + $0x132] sm:$0xff]
        %v3424 = vld [vmem:[%s2621 + $0x142] sm:$0xff]
        %v3425 = vld [vmem:[%s2621 + $0x14a] sm:$0xff]
        %v3426 = vld [vmem:[%s2621 + $0x152] sm:$0xff]
        %v3427 = vld [vmem:[%s2621 + $0x15a] sm:$0xff]
        %v3428 = vld [vmem:[%s2621 + $0x16a] sm:$0xff]
        %v3429 = vld [vmem:[%s2621 + $0x172] sm:$0xff]
        %v3430 = vld [vmem:[%s2621 + $0x17a] sm:$0xff]
        %v3431 = vld [vmem:[%s2621 + $0x182] sm:$0xff]
        %v3432 = vld [vmem:[%s2621 + $0x192] sm:$0xff]
        %v3433 = vld [vmem:[%s2621 + $0x19a] sm:$0xff]
        %v3434 = vld [vmem:[%s2621 + $0x1a2] sm:$0xff]
        %v3435 = vld [vmem:[%s2621 + $0x1aa] sm:$0xff]
        %v3436 = vld [vmem:[%s2621 + $0x1ba] sm:$0xff]
        %v3437 = vld [vmem:[%s2621 + $0x1c2] sm:$0xff]
        %v3438 = vld [vmem:[%s2621 + $0x1ca] sm:$0xff]
        %v3439 = vld [vmem:[%s2621 + $0x1d2] sm:$0xff]
        %v3440 = vld [vmem:[%s2621 + $0x1e2] sm:$0xff]
        %v3441 = vld [vmem:[%s2621 + $0x1ea] sm:$0xff]
        %v3442 = vld [vmem:[%s2621 + $0x1f2] sm:$0xff]
        %v3443 = vld [vmem:[%s2621 + $0x1fa] sm:$0xff]
        %v3444 = vld [vmem:[%s2621 + $0x20a] sm:$0xff]
        %v3445 = vld [vmem:[%s2621 + $0x212] sm:$0xff]
        %v3446 = vld [vmem:[%s2621 + $0x21a] sm:$0xff]
        %v3447 = vld [vmem:[%s2621 + $0x222] sm:$0xff]
        %v3448 = vld [vmem:[%s2621 + $0x232] sm:$0xff]
        %v3449 = vld [vmem:[%s2621 + $0x23a] sm:$0xff]
        %v3450 = vld [vmem:[%s2621 + $0x242] sm:$0xff]
        %v3451 = vld [vmem:[%s2621 + $0x24a] sm:$0xff]
        %v3452 = vld [vmem:[%s2621 + $0x25a] sm:$0xff]
        %v3453 = vld [vmem:[%s2621 + $0x262] sm:$0xff]
        %v3454 = vld [vmem:[%s2621 + $0x26a] sm:$0xff]
        %v3455 = vld [vmem:[%s2621 + $0x272] sm:$0xff]
        %3520 = vrot.lane.b32.xlu0 %v3392, 8
        %v3521 = vpop.permute.xlu0 %3520
        %3522 = vrot.lane.b32.xlu0 %v3393, 8
        %v3523 = vpop.permute.xlu0 %3522
        %3524 = vrot.lane.b32.xlu0 %v3394, 8
        %v3525 = vpop.permute.xlu0 %3524
        %3526 = vrot.lane.b32.xlu0 %v3395, 8
        %v3527 = vpop.permute.xlu0 %3526
        %3528 = vrot.lane.b32.xlu0 %v3396, 8
        %v3529 = vpop.permute.xlu0 %3528
        %3530 = vrot.lane.b32.xlu0 %v3397, 8
        %v3531 = vpop.permute.xlu0 %3530
        %3532 = vrot.lane.b32.xlu0 %v3398, 8
        %v3533 = vpop.permute.xlu0 %3532
        %3534 = vrot.lane.b32.xlu0 %v3399, 8
        %v3535 = vpop.permute.xlu0 %3534
        %3536 = vrot.lane.b32.xlu0 %v3400, 8
        %v3537 = vpop.permute.xlu0 %3536
        %3538 = vrot.lane.b32.xlu0 %v3401, 8
        %v3539 = vpop.permute.xlu0 %3538
        %3540 = vrot.lane.b32.xlu0 %v3402, 8
        %v3541 = vpop.permute.xlu0 %3540
        %3542 = vrot.lane.b32.xlu0 %v3403, 8
        %v3543 = vpop.permute.xlu0 %3542
        %3544 = vrot.lane.b32.xlu0 %v3404, 8
        %v3545 = vpop.permute.xlu0 %3544
        %3546 = vrot.lane.b32.xlu0 %v3405, 8
        %v3547 = vpop.permute.xlu0 %3546
        %3548 = vrot.lane.b32.xlu0 %v3406, 8
        %v3549 = vpop.permute.xlu0 %3548
        %3550 = vrot.lane.b32.xlu0 %v3407, 8
        %v3551 = vpop.permute.xlu0 %3550
        %3552 = vrot.lane.b32.xlu0 %v3408, 8
        %v3553 = vpop.permute.xlu0 %3552
        %3554 = vrot.lane.b32.xlu0 %v3409, 8
        %v3555 = vpop.permute.xlu0 %3554
        %3556 = vrot.lane.b32.xlu0 %v3410, 8
        %v3557 = vpop.permute.xlu0 %3556
        %3558 = vrot.lane.b32.xlu0 %v3411, 8
        %v3559 = vpop.permute.xlu0 %3558
        %3560 = vrot.lane.b32.xlu0 %v3412, 8
        %v3561 = vpop.permute.xlu0 %3560
        %3562 = vrot.lane.b32.xlu0 %v3413, 8
        %v3563 = vpop.permute.xlu0 %3562
        %3564 = vrot.lane.b32.xlu0 %v3414, 8
        %v3565 = vpop.permute.xlu0 %3564
        %3566 = vrot.lane.b32.xlu0 %v3415, 8
        %v3567 = vpop.permute.xlu0 %3566
        %3568 = vrot.lane.b32.xlu0 %v3416, 8
        %v3569 = vpop.permute.xlu0 %3568
        %3570 = vrot.lane.b32.xlu0 %v3417, 8
        %v3571 = vpop.permute.xlu0 %3570
        %3572 = vrot.lane.b32.xlu0 %v3418, 8
        %v3573 = vpop.permute.xlu0 %3572
        %3574 = vrot.lane.b32.xlu0 %v3419, 8
        %v3575 = vpop.permute.xlu0 %3574
        %3576 = vrot.lane.b32.xlu0 %v3420, 8
        %v3577 = vpop.permute.xlu0 %3576
        %3578 = vrot.lane.b32.xlu0 %v3421, 8
        %v3579 = vpop.permute.xlu0 %3578
        %3580 = vrot.lane.b32.xlu0 %v3422, 8
        %v3581 = vpop.permute.xlu0 %3580
        %3582 = vrot.lane.b32.xlu0 %v3423, 8
        %v3583 = vpop.permute.xlu0 %3582
        %3584 = vrot.lane.b32.xlu0 %v3424, 8
        %v3585 = vpop.permute.xlu0 %3584
        %3586 = vrot.lane.b32.xlu0 %v3425, 8
        %v3587 = vpop.permute.xlu0 %3586
        %3588 = vrot.lane.b32.xlu0 %v3426, 8
        %v3589 = vpop.permute.xlu0 %3588
        %3590 = vrot.lane.b32.xlu0 %v3427, 8
        %v3591 = vpop.permute.xlu0 %3590
        %3592 = vrot.lane.b32.xlu0 %v3428, 8
        %v3593 = vpop.permute.xlu0 %3592
        %3594 = vrot.lane.b32.xlu0 %v3429, 8
        %v3595 = vpop.permute.xlu0 %3594
        %3596 = vrot.lane.b32.xlu0 %v3430, 8
        %v3597 = vpop.permute.xlu0 %3596
        %3598 = vrot.lane.b32.xlu0 %v3431, 8
        %v3599 = vpop.permute.xlu0 %3598
        %3600 = vrot.lane.b32.xlu0 %v3432, 8
        %v3601 = vpop.permute.xlu0 %3600
        %3602 = vrot.lane.b32.xlu0 %v3433, 8
        %v3603 = vpop.permute.xlu0 %3602
        %3604 = vrot.lane.b32.xlu0 %v3434, 8
        %v3605 = vpop.permute.xlu0 %3604
        %3606 = vrot.lane.b32.xlu0 %v3435, 8
        %v3607 = vpop.permute.xlu0 %3606
        %3608 = vrot.lane.b32.xlu0 %v3436, 8
        %v3609 = vpop.permute.xlu0 %3608
        %3610 = vrot.lane.b32.xlu0 %v3437, 8
        %v3611 = vpop.permute.xlu0 %3610
        %3612 = vrot.lane.b32.xlu0 %v3438, 8
        %v3613 = vpop.permute.xlu0 %3612
        %3614 = vrot.lane.b32.xlu0 %v3439, 8
        %v3615 = vpop.permute.xlu0 %3614
        %3616 = vrot.lane.b32.xlu0 %v3440, 8
        %v3617 = vpop.permute.xlu0 %3616
        %3618 = vrot.lane.b32.xlu0 %v3441, 8
        %v3619 = vpop.permute.xlu0 %3618
        %3620 = vrot.lane.b32.xlu0 %v3442, 8
        %v3621 = vpop.permute.xlu0 %3620
        %3622 = vrot.lane.b32.xlu0 %v3443, 8
        %v3623 = vpop.permute.xlu0 %3622
        %3624 = vrot.lane.b32.xlu0 %v3444, 8
        %v3625 = vpop.permute.xlu0 %3624
        %3626 = vrot.lane.b32.xlu0 %v3445, 8
        %v3627 = vpop.permute.xlu0 %3626
        %3628 = vrot.lane.b32.xlu0 %v3446, 8
        %v3629 = vpop.permute.xlu0 %3628
        %3630 = vrot.lane.b32.xlu0 %v3447, 8
        %v3631 = vpop.permute.xlu0 %3630
        %3632 = vrot.lane.b32.xlu0 %v3448, 8
        %v3633 = vpop.permute.xlu0 %3632
        %3634 = vrot.lane.b32.xlu0 %v3449, 8
        %v3635 = vpop.permute.xlu0 %3634
        %3636 = vrot.lane.b32.xlu0 %v3450, 8
        %v3637 = vpop.permute.xlu0 %3636
        %3638 = vrot.lane.b32.xlu0 %v3451, 8
        %v3639 = vpop.permute.xlu0 %3638
        %3640 = vrot.lane.b32.xlu0 %v3452, 8
        %v3641 = vpop.permute.xlu0 %3640
        %3642 = vrot.lane.b32.xlu0 %v3453, 8
        %v3643 = vpop.permute.xlu0 %3642
        %3644 = vrot.lane.b32.xlu0 %v3454, 8
        %v3645 = vpop.permute.xlu0 %3644
        %3646 = vrot.lane.b32.xlu0 %v3455, 8
        %v3647 = vpop.permute.xlu0 %3646
        %vm3712 = vcmask 72768
        %3713 = vst.msk [vmem:[#allocation3] sm:$0xff] %vm3712, %v3521
        %3714 = vst.msk [vmem:[#allocation3 + $0x8] sm:$0xff] %vm3712, %v3523
        %3715 = vst.msk [vmem:[#allocation3 + $0x10] sm:$0xff] %vm3712, %v3525
        %3716 = vst.msk [vmem:[#allocation3 + $0x18] sm:$0xff] %vm3712, %v3527
        %3717 = vst.msk [vmem:[#allocation3 + $0x20] sm:$0xff] %vm3712, %v3529
        %3718 = vst.msk [vmem:[#allocation3 + $0x28] sm:$0xff] %vm3712, %v3531
        %3719 = vst.msk [vmem:[#allocation3 + $0x30] sm:$0xff] %vm3712, %v3533
        %3720 = vst.msk [vmem:[#allocation3 + $0x38] sm:$0xff] %vm3712, %v3535
        %3721 = vst.msk [vmem:[#allocation3 + $0x40] sm:$0xff] %vm3712, %v3537
        %3722 = vst.msk [vmem:[#allocation3 + $0x48] sm:$0xff] %vm3712, %v3539
        %3723 = vst.msk [vmem:[#allocation3 + $0x50] sm:$0xff] %vm3712, %v3541
        %3724 = vst.msk [vmem:[#allocation3 + $0x58] sm:$0xff] %vm3712, %v3543
        %3725 = vst.msk [vmem:[#allocation3 + $0x60] sm:$0xff] %vm3712, %v3545
        %3726 = vst.msk [vmem:[#allocation3 + $0x68] sm:$0xff] %vm3712, %v3547
        %3727 = vst.msk [vmem:[#allocation3 + $0x70] sm:$0xff] %vm3712, %v3549
        %3728 = vst.msk [vmem:[#allocation3 + $0x78] sm:$0xff] %vm3712, %v3551
        %3729 = vst.msk [vmem:[#allocation3 + $0x80] sm:$0xff] %vm3712, %v3553
        %3730 = vst.msk [vmem:[#allocation3 + $0x88] sm:$0xff] %vm3712, %v3555
        %3731 = vst.msk [vmem:[#allocation3 + $0x90] sm:$0xff] %vm3712, %v3557
        %3732 = vst.msk [vmem:[#allocation3 + $0x98] sm:$0xff] %vm3712, %v3559
        %3733 = vst.msk [vmem:[#allocation3 + $0xa0] sm:$0xff] %vm3712, %v3561
        %3734 = vst.msk [vmem:[#allocation3 + $0xa8] sm:$0xff] %vm3712, %v3563
        %3735 = vst.msk [vmem:[#allocation3 + $0xb0] sm:$0xff] %vm3712, %v3565
        %3736 = vst.msk [vmem:[#allocation3 + $0xb8] sm:$0xff] %vm3712, %v3567
        %3737 = vst.msk [vmem:[#allocation3 + $0xc0] sm:$0xff] %vm3712, %v3569
        %3738 = vst.msk [vmem:[#allocation3 + $0xc8] sm:$0xff] %vm3712, %v3571
        %3739 = vst.msk [vmem:[#allocation3 + $0xd0] sm:$0xff] %vm3712, %v3573
        %3740 = vst.msk [vmem:[#allocation3 + $0xd8] sm:$0xff] %vm3712, %v3575
        %3741 = vst.msk [vmem:[#allocation3 + $0xe0] sm:$0xff] %vm3712, %v3577
        %3742 = vst.msk [vmem:[#allocation3 + $0xe8] sm:$0xff] %vm3712, %v3579
        %3743 = vst.msk [vmem:[#allocation3 + $0xf0] sm:$0xff] %vm3712, %v3581
        %3744 = vst.msk [vmem:[#allocation3 + $0xf8] sm:$0xff] %vm3712, %v3583
        %3745 = vst.msk [vmem:[#allocation3 + $0x100] sm:$0xff] %vm3712, %v3585
        %3746 = vst.msk [vmem:[#allocation3 + $0x108] sm:$0xff] %vm3712, %v3587
        %3747 = vst.msk [vmem:[#allocation3 + $0x110] sm:$0xff] %vm3712, %v3589
        %3748 = vst.msk [vmem:[#allocation3 + $0x118] sm:$0xff] %vm3712, %v3591
        %3749 = vst.msk [vmem:[#allocation3 + $0x120] sm:$0xff] %vm3712, %v3593
        %3750 = vst.msk [vmem:[#allocation3 + $0x128] sm:$0xff] %vm3712, %v3595
        %3751 = vst.msk [vmem:[#allocation3 + $0x130] sm:$0xff] %vm3712, %v3597
        %3752 = vst.msk [vmem:[#allocation3 + $0x138] sm:$0xff] %vm3712, %v3599
        %3753 = vst.msk [vmem:[#allocation3 + $0x140] sm:$0xff] %vm3712, %v3601
        %3754 = vst.msk [vmem:[#allocation3 + $0x148] sm:$0xff] %vm3712, %v3603
        %3755 = vst.msk [vmem:[#allocation3 + $0x150] sm:$0xff] %vm3712, %v3605
        %3756 = vst.msk [vmem:[#allocation3 + $0x158] sm:$0xff] %vm3712, %v3607
        %3757 = vst.msk [vmem:[#allocation3 + $0x160] sm:$0xff] %vm3712, %v3609
        %3758 = vst.msk [vmem:[#allocation3 + $0x168] sm:$0xff] %vm3712, %v3611
        %3759 = vst.msk [vmem:[#allocation3 + $0x170] sm:$0xff] %vm3712, %v3613
        %3760 = vst.msk [vmem:[#allocation3 + $0x178] sm:$0xff] %vm3712, %v3615
        %3761 = vst.msk [vmem:[#allocation3 + $0x180] sm:$0xff] %vm3712, %v3617
        %3762 = vst.msk [vmem:[#allocation3 + $0x188] sm:$0xff] %vm3712, %v3619
        %3763 = vst.msk [vmem:[#allocation3 + $0x190] sm:$0xff] %vm3712, %v3621
        %3764 = vst.msk [vmem:[#allocation3 + $0x198] sm:$0xff] %vm3712, %v3623
        %3765 = vst.msk [vmem:[#allocation3 + $0x1a0] sm:$0xff] %vm3712, %v3625
        %3766 = vst.msk [vmem:[#allocation3 + $0x1a8] sm:$0xff] %vm3712, %v3627
        %3767 = vst.msk [vmem:[#allocation3 + $0x1b0] sm:$0xff] %vm3712, %v3629
        %3768 = vst.msk [vmem:[#allocation3 + $0x1b8] sm:$0xff] %vm3712, %v3631
        %3769 = vst.msk [vmem:[#allocation3 + $0x1c0] sm:$0xff] %vm3712, %v3633
        %3770 = vst.msk [vmem:[#allocation3 + $0x1c8] sm:$0xff] %vm3712, %v3635
        %3771 = vst.msk [vmem:[#allocation3 + $0x1d0] sm:$0xff] %vm3712, %v3637
        %3772 = vst.msk [vmem:[#allocation3 + $0x1d8] sm:$0xff] %vm3712, %v3639
        %3773 = vst.msk [vmem:[#allocation3 + $0x1e0] sm:$0xff] %vm3712, %v3641
        %3774 = vst.msk [vmem:[#allocation3 + $0x1e8] sm:$0xff] %vm3712, %v3643
        %3775 = vst.msk [vmem:[#allocation3 + $0x1f0] sm:$0xff] %vm3712, %v3645
        %3776 = vst.msk [vmem:[#allocation3 + $0x1f8] sm:$0xff] %vm3712, %v3647
        %v3777 = vld [vmem:[#allocation3] sm:$0xff]
        %v3778 = vld [vmem:[#allocation3 + $0x8] sm:$0xff]
        %v3779 = vld [vmem:[#allocation3 + $0x10] sm:$0xff]
        %v3780 = vld [vmem:[#allocation3 + $0x18] sm:$0xff]
        %v3781 = vld [vmem:[#allocation3 + $0x20] sm:$0xff]
        %v3782 = vld [vmem:[#allocation3 + $0x28] sm:$0xff]
        %v3783 = vld [vmem:[#allocation3 + $0x30] sm:$0xff]
        %v3784 = vld [vmem:[#allocation3 + $0x38] sm:$0xff]
        %v3785 = vld [vmem:[#allocation3 + $0x40] sm:$0xff]
        %v3786 = vld [vmem:[#allocation3 + $0x48] sm:$0xff]
        %v3787 = vld [vmem:[#allocation3 + $0x50] sm:$0xff]
        %v3788 = vld [vmem:[#allocation3 + $0x58] sm:$0xff]
        %v3789 = vld [vmem:[#allocation3 + $0x60] sm:$0xff]
        %v3790 = vld [vmem:[#allocation3 + $0x68] sm:$0xff]
        %v3791 = vld [vmem:[#allocation3 + $0x70] sm:$0xff]
        %v3792 = vld [vmem:[#allocation3 + $0x78] sm:$0xff]
        %v3793 = vld [vmem:[#allocation3 + $0x80] sm:$0xff]
        %v3794 = vld [vmem:[#allocation3 + $0x88] sm:$0xff]
        %v3795 = vld [vmem:[#allocation3 + $0x90] sm:$0xff]
        %v3796 = vld [vmem:[#allocation3 + $0x98] sm:$0xff]
        %v3797 = vld [vmem:[#allocation3 + $0xa0] sm:$0xff]
        %v3798 = vld [vmem:[#allocation3 + $0xa8] sm:$0xff]
        %v3799 = vld [vmem:[#allocation3 + $0xb0] sm:$0xff]
        %v3800 = vld [vmem:[#allocation3 + $0xb8] sm:$0xff]
        %v3801 = vld [vmem:[#allocation3 + $0xc0] sm:$0xff]
        %v3802 = vld [vmem:[#allocation3 + $0xc8] sm:$0xff]
        %v3803 = vld [vmem:[#allocation3 + $0xd0] sm:$0xff]
        %v3804 = vld [vmem:[#allocation3 + $0xd8] sm:$0xff]
        %v3805 = vld [vmem:[#allocation3 + $0xe0] sm:$0xff]
        %v3806 = vld [vmem:[#allocation3 + $0xe8] sm:$0xff]
        %v3807 = vld [vmem:[#allocation3 + $0xf0] sm:$0xff]
        %v3808 = vld [vmem:[#allocation3 + $0xf8] sm:$0xff]
        %v3809 = vld [vmem:[#allocation3 + $0x100] sm:$0xff]
        %v3810 = vld [vmem:[#allocation3 + $0x108] sm:$0xff]
        %v3811 = vld [vmem:[#allocation3 + $0x110] sm:$0xff]
        %v3812 = vld [vmem:[#allocation3 + $0x118] sm:$0xff]
        %v3813 = vld [vmem:[#allocation3 + $0x120] sm:$0xff]
        %v3814 = vld [vmem:[#allocation3 + $0x128] sm:$0xff]
        %v3815 = vld [vmem:[#allocation3 + $0x130] sm:$0xff]
        %v3816 = vld [vmem:[#allocation3 + $0x138] sm:$0xff]
        %v3817 = vld [vmem:[#allocation3 + $0x140] sm:$0xff]
        %v3818 = vld [vmem:[#allocation3 + $0x148] sm:$0xff]
        %v3819 = vld [vmem:[#allocation3 + $0x150] sm:$0xff]
        %v3820 = vld [vmem:[#allocation3 + $0x158] sm:$0xff]
        %v3821 = vld [vmem:[#allocation3 + $0x160] sm:$0xff]
        %v3822 = vld [vmem:[#allocation3 + $0x168] sm:$0xff]
        %v3823 = vld [vmem:[#allocation3 + $0x170] sm:$0xff]
        %v3824 = vld [vmem:[#allocation3 + $0x178] sm:$0xff]
        %v3825 = vld [vmem:[#allocation3 + $0x180] sm:$0xff]
        %v3826 = vld [vmem:[#allocation3 + $0x188] sm:$0xff]
        %v3827 = vld [vmem:[#allocation3 + $0x190] sm:$0xff]
        %v3828 = vld [vmem:[#allocation3 + $0x198] sm:$0xff]
        %v3829 = vld [vmem:[#allocation3 + $0x1a0] sm:$0xff]
        %v3830 = vld [vmem:[#allocation3 + $0x1a8] sm:$0xff]
        %v3831 = vld [vmem:[#allocation3 + $0x1b0] sm:$0xff]
        %v3832 = vld [vmem:[#allocation3 + $0x1b8] sm:$0xff]
        %v3833 = vld [vmem:[#allocation3 + $0x1c0] sm:$0xff]
        %v3834 = vld [vmem:[#allocation3 + $0x1c8] sm:$0xff]
        %v3835 = vld [vmem:[#allocation3 + $0x1d0] sm:$0xff]
        %v3836 = vld [vmem:[#allocation3 + $0x1d8] sm:$0xff]
        %v3837 = vld [vmem:[#allocation3 + $0x1e0] sm:$0xff]
        %v3838 = vld [vmem:[#allocation3 + $0x1e8] sm:$0xff]
        %v3839 = vld [vmem:[#allocation3 + $0x1f0] sm:$0xff]
        %v3840 = vld [vmem:[#allocation3 + $0x1f8] sm:$0xff]
        %v3841 = vld [vmem:[%s1] sm:$0xff]
        %v3842 = vld [vmem:[%s1 + $0x8] sm:$0x1]
        %v3843 = vld [vmem:[%s2] sm:$0x1]
        %v3845 = vperm.slane %v3843, 0
        %vm3847 = vcmask 72704
        %v3849 = vsel %vm3847, %v3777, 0
        %v3852 = vsel %vm3847, %v3778, 0
        %v3855 = vsel %vm3847, %v3779, 0
        %v3858 = vsel %vm3847, %v3780, 0
        %v3861 = vsel %vm3847, %v3781, 0
        %v3864 = vsel %vm3847, %v3782, 0
        %v3867 = vsel %vm3847, %v3783, 0
        %v3870 = vsel %vm3847, %v3784, 0
        %v3873 = vsel %vm3847, %v3785, 0
        %v3876 = vsel %vm3847, %v3786, 0
        %v3879 = vsel %vm3847, %v3787, 0
        %v3882 = vsel %vm3847, %v3788, 0
        %v3885 = vsel %vm3847, %v3789, 0
        %v3888 = vsel %vm3847, %v3790, 0
        %v3891 = vsel %vm3847, %v3791, 0
        %v3894 = vsel %vm3847, %v3792, 0
        %v3897 = vsel %vm3847, %v3793, 0
        %v3900 = vsel %vm3847, %v3794, 0
        %v3903 = vsel %vm3847, %v3795, 0
        %v3906 = vsel %vm3847, %v3796, 0
        %v3909 = vsel %vm3847, %v3797, 0
        %v3912 = vsel %vm3847, %v3798, 0
        %v3915 = vsel %vm3847, %v3799, 0
        %v3918 = vsel %vm3847, %v3800, 0
        %v3921 = vsel %vm3847, %v3801, 0
        %v3924 = vsel %vm3847, %v3802, 0
        %v3927 = vsel %vm3847, %v3803, 0
        %v3930 = vsel %vm3847, %v3804, 0
        %v3933 = vsel %vm3847, %v3805, 0
        %v3936 = vsel %vm3847, %v3806, 0
        %v3939 = vsel %vm3847, %v3807, 0
        %v3942 = vsel %vm3847, %v3808, 0
        %v3945 = vsel %vm3847, %v3809, 0
        %v3948 = vsel %vm3847, %v3810, 0
        %v3951 = vsel %vm3847, %v3811, 0
        %v3954 = vsel %vm3847, %v3812, 0
        %v3957 = vsel %vm3847, %v3813, 0
        %v3960 = vsel %vm3847, %v3814, 0
        %v3963 = vsel %vm3847, %v3815, 0
        %v3966 = vsel %vm3847, %v3816, 0
        %v3969 = vsel %vm3847, %v3817, 0
        %v3972 = vsel %vm3847, %v3818, 0
        %v3975 = vsel %vm3847, %v3819, 0
        %v3978 = vsel %vm3847, %v3820, 0
        %v3981 = vsel %vm3847, %v3821, 0
        %v3984 = vsel %vm3847, %v3822, 0
        %v3987 = vsel %vm3847, %v3823, 0
        %v3990 = vsel %vm3847, %v3824, 0
        %v3993 = vsel %vm3847, %v3825, 0
        %v3996 = vsel %vm3847, %v3826, 0
        %v3999 = vsel %vm3847, %v3827, 0
        %v4002 = vsel %vm3847, %v3828, 0
        %v4005 = vsel %vm3847, %v3829, 0
        %v4008 = vsel %vm3847, %v3830, 0
        %v4011 = vsel %vm3847, %v3831, 0
        %v4014 = vsel %vm3847, %v3832, 0
        %v4017 = vsel %vm3847, %v3833, 0
        %v4020 = vsel %vm3847, %v3834, 0
        %v4023 = vsel %vm3847, %v3835, 0
        %v4026 = vsel %vm3847, %v3836, 0
        %v4029 = vsel %vm3847, %v3837, 0
        %v4032 = vsel %vm3847, %v3838, 0
        %v4035 = vsel %vm3847, %v3839, 0
        %v4038 = vsel %vm3847, %v3840, 0
        %vm4040 = vcmask 1040384
        %v4042 = vsel %vm4040, %v3842, 0
        %4044 = vmatpush.msra.mxu0 0.0
        %4045 = vmatpush.msra.mxu0 0.0
        %4046 = vmatpush.msra.mxu0 0.0
        %4047 = vmatpush.msra.mxu0 0.0
        %4048 = vmatpush.msra.mxu0 0.0
        %4049 = vmatpush.msra.mxu0 0.0
        %4050 = vmatpush.msra.mxu0 0.0
        %4051 = vmatpush.msra.mxu0 0.0
        %4052 = vmatpush.msra.mxu0 0.0
        %4053 = vmatpush.msra.mxu0 0.0
        %4054 = vmatpush.msra.mxu0 0.0
        %4055 = vmatpush.msra.mxu0 0.0
        %4056 = vmatpush.msra.mxu0 0.0
        %4057 = vmatpush.msra.mxu0 0.0
        %4058 = vmatpush.msra.mxu0 %v4042
        %4059 = vmatpush.msra.mxu0 %v3841
        %4060 = vmatmul.f32.gmra.mxu0 %v3849
        %v4061 = vpop.f32.mrf.mxu0
        %v4062 = vadd.f32 %v3845, %v4061
        %4063 = vmatmul.f32.gmra.mxu0 %v3852
        %v4064 = vpop.f32.mrf.mxu0
        %v4065 = vadd.f32 %v3845, %v4064
        %4066 = vmatmul.f32.gmra.mxu0 %v3855
        %v4067 = vpop.f32.mrf.mxu0
        %v4068 = vadd.f32 %v3845, %v4067
        %4069 = vmatmul.f32.gmra.mxu0 %v3858
        %v4070 = vpop.f32.mrf.mxu0
        %v4071 = vadd.f32 %v3845, %v4070
        %4072 = vmatmul.f32.gmra.mxu0 %v3861
        %v4073 = vpop.f32.mrf.mxu0
        %v4074 = vadd.f32 %v3845, %v4073
        %4075 = vmatmul.f32.gmra.mxu0 %v3864
        %v4076 = vpop.f32.mrf.mxu0
        %v4077 = vadd.f32 %v3845, %v4076
        %4078 = vmatmul.f32.gmra.mxu0 %v3867
        %v4079 = vpop.f32.mrf.mxu0
        %v4080 = vadd.f32 %v3845, %v4079
        %4081 = vmatmul.f32.gmra.mxu0 %v3870
        %v4082 = vpop.f32.mrf.mxu0
        %v4083 = vadd.f32 %v3845, %v4082
        %4084 = vmatmul.f32.gmra.mxu0 %v3873
        %v4085 = vpop.f32.mrf.mxu0
        %v4086 = vadd.f32 %v3845, %v4085
        %4087 = vmatmul.f32.gmra.mxu0 %v3876
        %v4088 = vpop.f32.mrf.mxu0
        %v4089 = vadd.f32 %v3845, %v4088
        %4090 = vmatmul.f32.gmra.mxu0 %v3879
        %v4091 = vpop.f32.mrf.mxu0
        %v4092 = vadd.f32 %v3845, %v4091
        %4093 = vmatmul.f32.gmra.mxu0 %v3882
        %v4094 = vpop.f32.mrf.mxu0
        %v4095 = vadd.f32 %v3845, %v4094
        %4096 = vmatmul.f32.gmra.mxu0 %v3885
        %v4097 = vpop.f32.mrf.mxu0
        %v4098 = vadd.f32 %v3845, %v4097
        %4099 = vmatmul.f32.gmra.mxu0 %v3888
        %v4100 = vpop.f32.mrf.mxu0
        %v4101 = vadd.f32 %v3845, %v4100
        %4102 = vmatmul.f32.gmra.mxu0 %v3891
        %v4103 = vpop.f32.mrf.mxu0
        %v4104 = vadd.f32 %v3845, %v4103
        %4105 = vmatmul.f32.gmra.mxu0 %v3894
        %v4106 = vpop.f32.mrf.mxu0
        %v4107 = vadd.f32 %v3845, %v4106
        %4108 = vmatmul.f32.gmra.mxu0 %v3897
        %v4109 = vpop.f32.mrf.mxu0
        %v4110 = vadd.f32 %v3845, %v4109
        %4111 = vmatmul.f32.gmra.mxu0 %v3900
        %v4112 = vpop.f32.mrf.mxu0
        %v4113 = vadd.f32 %v3845, %v4112
        %4114 = vmatmul.f32.gmra.mxu0 %v3903
        %v4115 = vpop.f32.mrf.mxu0
        %v4116 = vadd.f32 %v3845, %v4115
        %4117 = vmatmul.f32.gmra.mxu0 %v3906
        %v4118 = vpop.f32.mrf.mxu0
        %v4119 = vadd.f32 %v3845, %v4118
        %4120 = vmatmul.f32.gmra.mxu0 %v3909
        %v4121 = vpop.f32.mrf.mxu0
        %v4122 = vadd.f32 %v3845, %v4121
        %4123 = vmatmul.f32.gmra.mxu0 %v3912
        %v4124 = vpop.f32.mrf.mxu0
        %v4125 = vadd.f32 %v3845, %v4124
        %4126 = vmatmul.f32.gmra.mxu0 %v3915
        %v4127 = vpop.f32.mrf.mxu0
        %v4128 = vadd.f32 %v3845, %v4127
        %4129 = vmatmul.f32.gmra.mxu0 %v3918
        %v4130 = vpop.f32.mrf.mxu0
        %v4131 = vadd.f32 %v3845, %v4130
        %4132 = vmatmul.f32.gmra.mxu0 %v3921
        %v4133 = vpop.f32.mrf.mxu0
        %v4134 = vadd.f32 %v3845, %v4133
        %4135 = vmatmul.f32.gmra.mxu0 %v3924
        %v4136 = vpop.f32.mrf.mxu0
        %v4137 = vadd.f32 %v3845, %v4136
        %4138 = vmatmul.f32.gmra.mxu0 %v3927
        %v4139 = vpop.f32.mrf.mxu0
        %v4140 = vadd.f32 %v3845, %v4139
        %4141 = vmatmul.f32.gmra.mxu0 %v3930
        %v4142 = vpop.f32.mrf.mxu0
        %v4143 = vadd.f32 %v3845, %v4142
        %4144 = vmatmul.f32.gmra.mxu0 %v3933
        %v4145 = vpop.f32.mrf.mxu0
        %v4146 = vadd.f32 %v3845, %v4145
        %4147 = vmatmul.f32.gmra.mxu0 %v3936
        %v4148 = vpop.f32.mrf.mxu0
        %v4149 = vadd.f32 %v3845, %v4148
        %4150 = vmatmul.f32.gmra.mxu0 %v3939
        %v4151 = vpop.f32.mrf.mxu0
        %v4152 = vadd.f32 %v3845, %v4151
        %4153 = vmatmul.f32.gmra.mxu0 %v3942
        %v4154 = vpop.f32.mrf.mxu0
        %v4155 = vadd.f32 %v3845, %v4154
        %4156 = vmatmul.f32.gmra.mxu0 %v3945
        %v4157 = vpop.f32.mrf.mxu0
        %v4158 = vadd.f32 %v3845, %v4157
        %4159 = vmatmul.f32.gmra.mxu0 %v3948
        %v4160 = vpop.f32.mrf.mxu0
        %v4161 = vadd.f32 %v3845, %v4160
        %4162 = vmatmul.f32.gmra.mxu0 %v3951
        %v4163 = vpop.f32.mrf.mxu0
        %v4164 = vadd.f32 %v3845, %v4163
        %4165 = vmatmul.f32.gmra.mxu0 %v3954
        %v4166 = vpop.f32.mrf.mxu0
        %v4167 = vadd.f32 %v3845, %v4166
        %4168 = vmatmul.f32.gmra.mxu0 %v3957
        %v4169 = vpop.f32.mrf.mxu0
        %v4170 = vadd.f32 %v3845, %v4169
        %4171 = vmatmul.f32.gmra.mxu0 %v3960
        %v4172 = vpop.f32.mrf.mxu0
        %v4173 = vadd.f32 %v3845, %v4172
        %4174 = vmatmul.f32.gmra.mxu0 %v3963
        %v4175 = vpop.f32.mrf.mxu0
        %v4176 = vadd.f32 %v3845, %v4175
        %4177 = vmatmul.f32.gmra.mxu0 %v3966
        %v4178 = vpop.f32.mrf.mxu0
        %v4179 = vadd.f32 %v3845, %v4178
        %4180 = vmatmul.f32.gmra.mxu0 %v3969
        %v4181 = vpop.f32.mrf.mxu0
        %v4182 = vadd.f32 %v3845, %v4181
        %4183 = vmatmul.f32.gmra.mxu0 %v3972
        %v4184 = vpop.f32.mrf.mxu0
        %v4185 = vadd.f32 %v3845, %v4184
        %4186 = vmatmul.f32.gmra.mxu0 %v3975
        %v4187 = vpop.f32.mrf.mxu0
        %v4188 = vadd.f32 %v3845, %v4187
        %4189 = vmatmul.f32.gmra.mxu0 %v3978
        %v4190 = vpop.f32.mrf.mxu0
        %v4191 = vadd.f32 %v3845, %v4190
        %4192 = vmatmul.f32.gmra.mxu0 %v3981
        %v4193 = vpop.f32.mrf.mxu0
        %v4194 = vadd.f32 %v3845, %v4193
        %4195 = vmatmul.f32.gmra.mxu0 %v3984
        %v4196 = vpop.f32.mrf.mxu0
        %v4197 = vadd.f32 %v3845, %v4196
        %4198 = vmatmul.f32.gmra.mxu0 %v3987
        %v4199 = vpop.f32.mrf.mxu0
        %v4200 = vadd.f32 %v3845, %v4199
        %4201 = vmatmul.f32.gmra.mxu0 %v3990
        %v4202 = vpop.f32.mrf.mxu0
        %v4203 = vadd.f32 %v3845, %v4202
        %4204 = vmatmul.f32.gmra.mxu0 %v3993
        %v4205 = vpop.f32.mrf.mxu0
        %v4206 = vadd.f32 %v3845, %v4205
        %4207 = vmatmul.f32.gmra.mxu0 %v3996
        %v4208 = vpop.f32.mrf.mxu0
        %v4209 = vadd.f32 %v3845, %v4208
        %4210 = vmatmul.f32.gmra.mxu0 %v3999
        %v4211 = vpop.f32.mrf.mxu0
        %v4212 = vadd.f32 %v3845, %v4211
        %4213 = vmatmul.f32.gmra.mxu0 %v4002
        %v4214 = vpop.f32.mrf.mxu0
        %v4215 = vadd.f32 %v3845, %v4214
        %4216 = vmatmul.f32.gmra.mxu0 %v4005
        %v4217 = vpop.f32.mrf.mxu0
        %v4218 = vadd.f32 %v3845, %v4217
        %4219 = vmatmul.f32.gmra.mxu0 %v4008
        %v4220 = vpop.f32.mrf.mxu0
        %v4221 = vadd.f32 %v3845, %v4220
        %4222 = vmatmul.f32.gmra.mxu0 %v4011
        %v4223 = vpop.f32.mrf.mxu0
        %v4224 = vadd.f32 %v3845, %v4223
        %4225 = vmatmul.f32.gmra.mxu0 %v4014
        %v4226 = vpop.f32.mrf.mxu0
        %v4227 = vadd.f32 %v3845, %v4226
        %4228 = vmatmul.f32.gmra.mxu0 %v4017
        %v4229 = vpop.f32.mrf.mxu0
        %v4230 = vadd.f32 %v3845, %v4229
        %4231 = vmatmul.f32.gmra.mxu0 %v4020
        %v4232 = vpop.f32.mrf.mxu0
        %v4233 = vadd.f32 %v3845, %v4232
        %4234 = vmatmul.f32.gmra.mxu0 %v4023
        %v4235 = vpop.f32.mrf.mxu0
        %v4236 = vadd.f32 %v3845, %v4235
        %4237 = vmatmul.f32.gmra.mxu0 %v4026
        %v4238 = vpop.f32.mrf.mxu0
        %v4239 = vadd.f32 %v3845, %v4238
        %4240 = vmatmul.f32.gmra.mxu0 %v4029
        %v4241 = vpop.f32.mrf.mxu0
        %v4242 = vadd.f32 %v3845, %v4241
        %4243 = vmatmul.f32.gmra.mxu0 %v4032
        %v4244 = vpop.f32.mrf.mxu0
        %v4245 = vadd.f32 %v3845, %v4244
        %4246 = vmatmul.f32.gmra.mxu0 %v4035
        %v4247 = vpop.f32.mrf.mxu0
        %v4248 = vadd.f32 %v3845, %v4247
        %4249 = vmatmul.f32.gmra.mxu0 %v4038
        %v4250 = vpop.f32.mrf.mxu0
        %v4251 = vadd.f32 %v3845, %v4250
        %4252 = vdwg.mxu0
        %v4253 = vmax.f32 %v4062, 0.0
        %v4254 = vmax.f32 %v4065, 0.0
        %v4255 = vmax.f32 %v4068, 0.0
        %v4256 = vmax.f32 %v4071, 0.0
        %v4257 = vmax.f32 %v4074, 0.0
        %v4258 = vmax.f32 %v4077, 0.0
        %v4259 = vmax.f32 %v4080, 0.0
        %v4260 = vmax.f32 %v4083, 0.0
        %v4261 = vmax.f32 %v4086, 0.0
        %v4262 = vmax.f32 %v4089, 0.0
        %v4263 = vmax.f32 %v4092, 0.0
        %v4264 = vmax.f32 %v4095, 0.0
        %v4265 = vmax.f32 %v4098, 0.0
        %v4266 = vmax.f32 %v4101, 0.0
        %v4267 = vmax.f32 %v4104, 0.0
        %v4268 = vmax.f32 %v4107, 0.0
        %v4269 = vmax.f32 %v4110, 0.0
        %v4270 = vmax.f32 %v4113, 0.0
        %v4271 = vmax.f32 %v4116, 0.0
        %v4272 = vmax.f32 %v4119, 0.0
        %v4273 = vmax.f32 %v4122, 0.0
        %v4274 = vmax.f32 %v4125, 0.0
        %v4275 = vmax.f32 %v4128, 0.0
        %v4276 = vmax.f32 %v4131, 0.0
        %v4277 = vmax.f32 %v4134, 0.0
        %v4278 = vmax.f32 %v4137, 0.0
        %v4279 = vmax.f32 %v4140, 0.0
        %v4280 = vmax.f32 %v4143, 0.0
        %v4281 = vmax.f32 %v4146, 0.0
        %v4282 = vmax.f32 %v4149, 0.0
        %v4283 = vmax.f32 %v4152, 0.0
        %v4284 = vmax.f32 %v4155, 0.0
        %v4285 = vmax.f32 %v4158, 0.0
        %v4286 = vmax.f32 %v4161, 0.0
        %v4287 = vmax.f32 %v4164, 0.0
        %v4288 = vmax.f32 %v4167, 0.0
        %v4289 = vmax.f32 %v4170, 0.0
        %v4290 = vmax.f32 %v4173, 0.0
        %v4291 = vmax.f32 %v4176, 0.0
        %v4292 = vmax.f32 %v4179, 0.0
        %v4293 = vmax.f32 %v4182, 0.0
        %v4294 = vmax.f32 %v4185, 0.0
        %v4295 = vmax.f32 %v4188, 0.0
        %v4296 = vmax.f32 %v4191, 0.0
        %v4297 = vmax.f32 %v4194, 0.0
        %v4298 = vmax.f32 %v4197, 0.0
        %v4299 = vmax.f32 %v4200, 0.0
        %v4300 = vmax.f32 %v4203, 0.0
        %v4301 = vmax.f32 %v4206, 0.0
        %v4302 = vmax.f32 %v4209, 0.0
        %v4303 = vmax.f32 %v4212, 0.0
        %v4304 = vmax.f32 %v4215, 0.0
        %v4305 = vmax.f32 %v4218, 0.0
        %v4306 = vmax.f32 %v4221, 0.0
        %v4307 = vmax.f32 %v4224, 0.0
        %v4308 = vmax.f32 %v4227, 0.0
        %v4309 = vmax.f32 %v4230, 0.0
        %v4310 = vmax.f32 %v4233, 0.0
        %v4311 = vmax.f32 %v4236, 0.0
        %v4312 = vmax.f32 %v4239, 0.0
        %v4313 = vmax.f32 %v4242, 0.0
        %v4314 = vmax.f32 %v4245, 0.0
        %v4315 = vmax.f32 %v4248, 0.0
        %v4316 = vmax.f32 %v4251, 0.0
        %vm4317 = vcmask 261120
        %v4318 = vsel %vm4317, %v4253, -inf
        %v4319 = vsel %vm4317, %v4257, -inf
        %v4320 = vmax.f32 %v4318, %v4319
        %v4321 = vsel %vm4317, %v4254, -inf
        %v4322 = vsel %vm4317, %v4258, -inf
        %v4323 = vmax.f32 %v4321, %v4322
        %v4324 = vsel %vm4317, %v4255, -inf
        %v4325 = vsel %vm4317, %v4259, -inf
        %v4326 = vmax.f32 %v4324, %v4325
        %v4327 = vsel %vm4317, %v4256, -inf
        %v4328 = vsel %vm4317, %v4260, -inf
        %v4329 = vmax.f32 %v4327, %v4328
        %v4330 = vsel %vm4317, %v4261, -inf
        %v4331 = vsel %vm4317, %v4265, -inf
        %v4332 = vmax.f32 %v4330, %v4331
        %v4333 = vsel %vm4317, %v4262, -inf
        %v4334 = vsel %vm4317, %v4266, -inf
        %v4335 = vmax.f32 %v4333, %v4334
        %v4336 = vsel %vm4317, %v4263, -inf
        %v4337 = vsel %vm4317, %v4267, -inf
        %v4338 = vmax.f32 %v4336, %v4337
        %v4339 = vsel %vm4317, %v4264, -inf
        %v4340 = vsel %vm4317, %v4268, -inf
        %v4341 = vmax.f32 %v4339, %v4340
        %v4342 = vsel %vm4317, %v4269, -inf
        %v4343 = vsel %vm4317, %v4273, -inf
        %v4344 = vmax.f32 %v4342, %v4343
        %v4345 = vsel %vm4317, %v4270, -inf
        %v4346 = vsel %vm4317, %v4274, -inf
        %v4347 = vmax.f32 %v4345, %v4346
        %v4348 = vsel %vm4317, %v4271, -inf
        %v4349 = vsel %vm4317, %v4275, -inf
        %v4350 = vmax.f32 %v4348, %v4349
        %v4351 = vsel %vm4317, %v4272, -inf
        %v4352 = vsel %vm4317, %v4276, -inf
        %v4353 = vmax.f32 %v4351, %v4352
        %v4354 = vsel %vm4317, %v4277, -inf
        %v4355 = vsel %vm4317, %v4281, -inf
        %v4356 = vmax.f32 %v4354, %v4355
        %v4357 = vsel %vm4317, %v4278, -inf
        %v4358 = vsel %vm4317, %v4282, -inf
        %v4359 = vmax.f32 %v4357, %v4358
        %v4360 = vsel %vm4317, %v4279, -inf
        %v4361 = vsel %vm4317, %v4283, -inf
        %v4362 = vmax.f32 %v4360, %v4361
        %v4363 = vsel %vm4317, %v4280, -inf
        %v4364 = vsel %vm4317, %v4284, -inf
        %v4365 = vmax.f32 %v4363, %v4364
        %v4366 = vsel %vm4317, %v4285, -inf
        %v4367 = vsel %vm4317, %v4289, -inf
        %v4368 = vmax.f32 %v4366, %v4367
        %v4369 = vsel %vm4317, %v4286, -inf
        %v4370 = vsel %vm4317, %v4290, -inf
        %v4371 = vmax.f32 %v4369, %v4370
        %v4372 = vsel %vm4317, %v4287, -inf
        %v4373 = vsel %vm4317, %v4291, -inf
        %v4374 = vmax.f32 %v4372, %v4373
        %v4375 = vsel %vm4317, %v4288, -inf
        %v4376 = vsel %vm4317, %v4292, -inf
        %v4377 = vmax.f32 %v4375, %v4376
        %v4378 = vsel %vm4317, %v4293, -inf
        %v4379 = vsel %vm4317, %v4297, -inf
        %v4380 = vmax.f32 %v4378, %v4379
        %v4381 = vsel %vm4317, %v4294, -inf
        %v4382 = vsel %vm4317, %v4298, -inf
        %v4383 = vmax.f32 %v4381, %v4382
        %v4384 = vsel %vm4317, %v4295, -inf
        %v4385 = vsel %vm4317, %v4299, -inf
        %v4386 = vmax.f32 %v4384, %v4385
        %v4387 = vsel %vm4317, %v4296, -inf
        %v4388 = vsel %vm4317, %v4300, -inf
        %v4389 = vmax.f32 %v4387, %v4388
        %v4390 = vsel %vm4317, %v4301, -inf
        %v4391 = vsel %vm4317, %v4305, -inf
        %v4392 = vmax.f32 %v4390, %v4391
        %v4393 = vsel %vm4317, %v4302, -inf
        %v4394 = vsel %vm4317, %v4306, -inf
        %v4395 = vmax.f32 %v4393, %v4394
        %v4396 = vsel %vm4317, %v4303, -inf
        %v4397 = vsel %vm4317, %v4307, -inf
        %v4398 = vmax.f32 %v4396, %v4397
        %v4399 = vsel %vm4317, %v4304, -inf
        %v4400 = vsel %vm4317, %v4308, -inf
        %v4401 = vmax.f32 %v4399, %v4400
        %v4402 = vsel %vm4317, %v4309, -inf
        %v4403 = vsel %vm4317, %v4313, -inf
        %v4404 = vmax.f32 %v4402, %v4403
        %v4405 = vsel %vm4317, %v4310, -inf
        %v4406 = vsel %vm4317, %v4314, -inf
        %v4407 = vmax.f32 %v4405, %v4406
        %v4408 = vsel %vm4317, %v4311, -inf
        %v4409 = vsel %vm4317, %v4315, -inf
        %v4410 = vmax.f32 %v4408, %v4409
        %v4411 = vsel %vm4317, %v4312, -inf
        %v4412 = vsel %vm4317, %v4316, -inf
        %v4413 = vmax.f32 %v4411, %v4412
        %v4446 = vrot.slane %v4320, 2
        %v4447 = vrot.slane %v4320, 4
        %v4448 = vrot.slane %v4320, 6
        %v4449 = vrot.slane %v4323, 2
        %v4450 = vrot.slane %v4323, 4
        %v4451 = vrot.slane %v4323, 6
        %v4452 = vrot.slane %v4326, 2
        %v4453 = vrot.slane %v4326, 4
        %v4454 = vrot.slane %v4326, 6
        %v4455 = vrot.slane %v4329, 2
        %v4456 = vrot.slane %v4329, 4
        %v4457 = vrot.slane %v4329, 6
        %v4458 = vrot.slane %v4332, 2
        %v4459 = vrot.slane %v4332, 4
        %v4460 = vrot.slane %v4332, 6
        %v4461 = vrot.slane %v4335, 2
        %v4462 = vrot.slane %v4335, 4
        %v4463 = vrot.slane %v4335, 6
        %v4464 = vrot.slane %v4338, 2
        %v4465 = vrot.slane %v4338, 4
        %v4466 = vrot.slane %v4338, 6
        %v4467 = vrot.slane %v4341, 2
        %v4468 = vrot.slane %v4341, 4
        %v4469 = vrot.slane %v4341, 6
        %v4470 = vrot.slane %v4344, 2
        %v4471 = vrot.slane %v4344, 4
        %v4472 = vrot.slane %v4344, 6
        %v4473 = vrot.slane %v4347, 2
        %v4474 = vrot.slane %v4347, 4
        %v4475 = vrot.slane %v4347, 6
        %v4476 = vrot.slane %v4350, 2
        %v4477 = vrot.slane %v4350, 4
        %v4478 = vrot.slane %v4350, 6
        %v4479 = vrot.slane %v4353, 2
        %v4480 = vrot.slane %v4353, 4
        %v4481 = vrot.slane %v4353, 6
        %v4482 = vrot.slane %v4356, 2
        %v4483 = vrot.slane %v4356, 4
        %v4484 = vrot.slane %v4356, 6
        %v4485 = vrot.slane %v4359, 2
        %v4486 = vrot.slane %v4359, 4
        %v4487 = vrot.slane %v4359, 6
        %v4488 = vrot.slane %v4362, 2
        %v4489 = vrot.slane %v4362, 4
        %v4490 = vrot.slane %v4362, 6
        %v4491 = vrot.slane %v4365, 2
        %v4492 = vrot.slane %v4365, 4
        %v4493 = vrot.slane %v4365, 6
        %v4494 = vrot.slane %v4368, 2
        %v4495 = vrot.slane %v4368, 4
        %v4496 = vrot.slane %v4368, 6
        %v4497 = vrot.slane %v4371, 2
        %v4498 = vrot.slane %v4371, 4
        %v4499 = vrot.slane %v4371, 6
        %v4500 = vrot.slane %v4374, 2
        %v4501 = vrot.slane %v4374, 4
        %v4502 = vrot.slane %v4374, 6
        %v4503 = vrot.slane %v4377, 2
        %v4504 = vrot.slane %v4377, 4
        %v4505 = vrot.slane %v4377, 6
        %v4506 = vrot.slane %v4380, 2
        %v4507 = vrot.slane %v4380, 4
        %v4508 = vrot.slane %v4380, 6
        %v4509 = vrot.slane %v4383, 2
        %v4510 = vrot.slane %v4383, 4
        %v4511 = vrot.slane %v4383, 6
        %v4512 = vrot.slane %v4386, 2
        %v4513 = vrot.slane %v4386, 4
        %v4514 = vrot.slane %v4386, 6
        %v4515 = vrot.slane %v4389, 2
        %v4516 = vrot.slane %v4389, 4
        %v4517 = vrot.slane %v4389, 6
        %v4518 = vrot.slane %v4392, 2
        %v4519 = vrot.slane %v4392, 4
        %v4520 = vrot.slane %v4392, 6
        %v4521 = vrot.slane %v4395, 2
        %v4522 = vrot.slane %v4395, 4
        %v4523 = vrot.slane %v4395, 6
        %v4524 = vrot.slane %v4398, 2
        %v4525 = vrot.slane %v4398, 4
        %v4526 = vrot.slane %v4398, 6
        %v4527 = vrot.slane %v4401, 2
        %v4528 = vrot.slane %v4401, 4
        %v4529 = vrot.slane %v4401, 6
        %v4530 = vrot.slane %v4404, 2
        %v4531 = vrot.slane %v4404, 4
        %v4532 = vrot.slane %v4404, 6
        %v4533 = vrot.slane %v4407, 2
        %v4534 = vrot.slane %v4407, 4
        %v4535 = vrot.slane %v4407, 6
        %v4536 = vrot.slane %v4410, 2
        %v4537 = vrot.slane %v4410, 4
        %v4538 = vrot.slane %v4410, 6
        %v4539 = vrot.slane %v4413, 2
        %v4540 = vrot.slane %v4413, 4
        %v4541 = vrot.slane %v4413, 6
        %vm4638 = vcmask 254976
        %v4639 = vsel %vm4638, %v4320, -inf
        %v4640 = vrot.slane %v4639, 4
        %v4641 = vmax.f32 %v4639, %v4640
        %v4642 = vrot.slane %v4641, 2
        %v4643 = vmax.f32 %v4641, %v4642
        %v4644 = vrot.slane %v4643, 1
        %v4645 = vmax.f32 %v4643, %v4644
        %v4646 = vsel %vm4638, %v4446, -inf
        %v4647 = vrot.slane %v4646, 4
        %v4648 = vmax.f32 %v4646, %v4647
        %v4649 = vrot.slane %v4648, 2
        %v4650 = vmax.f32 %v4648, %v4649
        %v4651 = vrot.slane %v4650, 1
        %v4652 = vmax.f32 %v4650, %v4651
        %v4653 = vsel %vm4638, %v4447, -inf
        %v4654 = vrot.slane %v4653, 4
        %v4655 = vmax.f32 %v4653, %v4654
        %v4656 = vrot.slane %v4655, 2
        %v4657 = vmax.f32 %v4655, %v4656
        %v4658 = vrot.slane %v4657, 1
        %v4659 = vmax.f32 %v4657, %v4658
        %v4660 = vsel %vm4638, %v4448, -inf
        %v4661 = vrot.slane %v4660, 4
        %v4662 = vmax.f32 %v4660, %v4661
        %v4663 = vrot.slane %v4662, 2
        %v4664 = vmax.f32 %v4662, %v4663
        %v4665 = vrot.slane %v4664, 1
        %v4666 = vmax.f32 %v4664, %v4665
        %v4667 = vsel %vm4638, %v4323, -inf
        %v4668 = vrot.slane %v4667, 4
        %v4669 = vmax.f32 %v4667, %v4668
        %v4670 = vrot.slane %v4669, 2
        %v4671 = vmax.f32 %v4669, %v4670
        %v4672 = vrot.slane %v4671, 1
        %v4673 = vmax.f32 %v4671, %v4672
        %v4674 = vsel %vm4638, %v4449, -inf
        %v4675 = vrot.slane %v4674, 4
        %v4676 = vmax.f32 %v4674, %v4675
        %v4677 = vrot.slane %v4676, 2
        %v4678 = vmax.f32 %v4676, %v4677
        %v4679 = vrot.slane %v4678, 1
        %v4680 = vmax.f32 %v4678, %v4679
        %v4681 = vsel %vm4638, %v4450, -inf
        %v4682 = vrot.slane %v4681, 4
        %v4683 = vmax.f32 %v4681, %v4682
        %v4684 = vrot.slane %v4683, 2
        %v4685 = vmax.f32 %v4683, %v4684
        %v4686 = vrot.slane %v4685, 1
        %v4687 = vmax.f32 %v4685, %v4686
        %v4688 = vsel %vm4638, %v4451, -inf
        %v4689 = vrot.slane %v4688, 4
        %v4690 = vmax.f32 %v4688, %v4689
        %v4691 = vrot.slane %v4690, 2
        %v4692 = vmax.f32 %v4690, %v4691
        %v4693 = vrot.slane %v4692, 1
        %v4694 = vmax.f32 %v4692, %v4693
        %v4695 = vsel %vm4638, %v4326, -inf
        %v4696 = vrot.slane %v4695, 4
        %v4697 = vmax.f32 %v4695, %v4696
        %v4698 = vrot.slane %v4697, 2
        %v4699 = vmax.f32 %v4697, %v4698
        %v4700 = vrot.slane %v4699, 1
        %v4701 = vmax.f32 %v4699, %v4700
        %v4702 = vsel %vm4638, %v4452, -inf
        %v4703 = vrot.slane %v4702, 4
        %v4704 = vmax.f32 %v4702, %v4703
        %v4705 = vrot.slane %v4704, 2
        %v4706 = vmax.f32 %v4704, %v4705
        %v4707 = vrot.slane %v4706, 1
        %v4708 = vmax.f32 %v4706, %v4707
        %v4709 = vsel %vm4638, %v4453, -inf
        %v4710 = vrot.slane %v4709, 4
        %v4711 = vmax.f32 %v4709, %v4710
        %v4712 = vrot.slane %v4711, 2
        %v4713 = vmax.f32 %v4711, %v4712
        %v4714 = vrot.slane %v4713, 1
        %v4715 = vmax.f32 %v4713, %v4714
        %v4716 = vsel %vm4638, %v4454, -inf
        %v4717 = vrot.slane %v4716, 4
        %v4718 = vmax.f32 %v4716, %v4717
        %v4719 = vrot.slane %v4718, 2
        %v4720 = vmax.f32 %v4718, %v4719
        %v4721 = vrot.slane %v4720, 1
        %v4722 = vmax.f32 %v4720, %v4721
        %v4723 = vsel %vm4638, %v4329, -inf
        %v4724 = vrot.slane %v4723, 4
        %v4725 = vmax.f32 %v4723, %v4724
        %v4726 = vrot.slane %v4725, 2
        %v4727 = vmax.f32 %v4725, %v4726
        %v4728 = vrot.slane %v4727, 1
        %v4729 = vmax.f32 %v4727, %v4728
        %v4730 = vsel %vm4638, %v4455, -inf
        %v4731 = vrot.slane %v4730, 4
        %v4732 = vmax.f32 %v4730, %v4731
        %v4733 = vrot.slane %v4732, 2
        %v4734 = vmax.f32 %v4732, %v4733
        %v4735 = vrot.slane %v4734, 1
        %v4736 = vmax.f32 %v4734, %v4735
        %v4737 = vsel %vm4638, %v4456, -inf
        %v4738 = vrot.slane %v4737, 4
        %v4739 = vmax.f32 %v4737, %v4738
        %v4740 = vrot.slane %v4739, 2
        %v4741 = vmax.f32 %v4739, %v4740
        %v4742 = vrot.slane %v4741, 1
        %v4743 = vmax.f32 %v4741, %v4742
        %v4744 = vsel %vm4638, %v4457, -inf
        %v4745 = vrot.slane %v4744, 4
        %v4746 = vmax.f32 %v4744, %v4745
        %v4747 = vrot.slane %v4746, 2
        %v4748 = vmax.f32 %v4746, %v4747
        %v4749 = vrot.slane %v4748, 1
        %v4750 = vmax.f32 %v4748, %v4749
        %v4751 = vsel %vm4638, %v4332, -inf
        %v4752 = vrot.slane %v4751, 4
        %v4753 = vmax.f32 %v4751, %v4752
        %v4754 = vrot.slane %v4753, 2
        %v4755 = vmax.f32 %v4753, %v4754
        %v4756 = vrot.slane %v4755, 1
        %v4757 = vmax.f32 %v4755, %v4756
        %v4758 = vsel %vm4638, %v4458, -inf
        %v4759 = vrot.slane %v4758, 4
        %v4760 = vmax.f32 %v4758, %v4759
        %v4761 = vrot.slane %v4760, 2
        %v4762 = vmax.f32 %v4760, %v4761
        %v4763 = vrot.slane %v4762, 1
        %v4764 = vmax.f32 %v4762, %v4763
        %v4765 = vsel %vm4638, %v4459, -inf
        %v4766 = vrot.slane %v4765, 4
        %v4767 = vmax.f32 %v4765, %v4766
        %v4768 = vrot.slane %v4767, 2
        %v4769 = vmax.f32 %v4767, %v4768
        %v4770 = vrot.slane %v4769, 1
        %v4771 = vmax.f32 %v4769, %v4770
        %v4772 = vsel %vm4638, %v4460, -inf
        %v4773 = vrot.slane %v4772, 4
        %v4774 = vmax.f32 %v4772, %v4773
        %v4775 = vrot.slane %v4774, 2
        %v4776 = vmax.f32 %v4774, %v4775
        %v4777 = vrot.slane %v4776, 1
        %v4778 = vmax.f32 %v4776, %v4777
        %v4779 = vsel %vm4638, %v4335, -inf
        %v4780 = vrot.slane %v4779, 4
        %v4781 = vmax.f32 %v4779, %v4780
        %v4782 = vrot.slane %v4781, 2
        %v4783 = vmax.f32 %v4781, %v4782
        %v4784 = vrot.slane %v4783, 1
        %v4785 = vmax.f32 %v4783, %v4784
        %v4786 = vsel %vm4638, %v4461, -inf
        %v4787 = vrot.slane %v4786, 4
        %v4788 = vmax.f32 %v4786, %v4787
        %v4789 = vrot.slane %v4788, 2
        %v4790 = vmax.f32 %v4788, %v4789
        %v4791 = vrot.slane %v4790, 1
        %v4792 = vmax.f32 %v4790, %v4791
        %v4793 = vsel %vm4638, %v4462, -inf
        %v4794 = vrot.slane %v4793, 4
        %v4795 = vmax.f32 %v4793, %v4794
        %v4796 = vrot.slane %v4795, 2
        %v4797 = vmax.f32 %v4795, %v4796
        %v4798 = vrot.slane %v4797, 1
        %v4799 = vmax.f32 %v4797, %v4798
        %v4800 = vsel %vm4638, %v4463, -inf
        %v4801 = vrot.slane %v4800, 4
        %v4802 = vmax.f32 %v4800, %v4801
        %v4803 = vrot.slane %v4802, 2
        %v4804 = vmax.f32 %v4802, %v4803
        %v4805 = vrot.slane %v4804, 1
        %v4806 = vmax.f32 %v4804, %v4805
        %v4807 = vsel %vm4638, %v4338, -inf
        %v4808 = vrot.slane %v4807, 4
        %v4809 = vmax.f32 %v4807, %v4808
        %v4810 = vrot.slane %v4809, 2
        %v4811 = vmax.f32 %v4809, %v4810
        %v4812 = vrot.slane %v4811, 1
        %v4813 = vmax.f32 %v4811, %v4812
        %v4814 = vsel %vm4638, %v4464, -inf
        %v4815 = vrot.slane %v4814, 4
        %v4816 = vmax.f32 %v4814, %v4815
        %v4817 = vrot.slane %v4816, 2
        %v4818 = vmax.f32 %v4816, %v4817
        %v4819 = vrot.slane %v4818, 1
        %v4820 = vmax.f32 %v4818, %v4819
        %v4821 = vsel %vm4638, %v4465, -inf
        %v4822 = vrot.slane %v4821, 4
        %v4823 = vmax.f32 %v4821, %v4822
        %v4824 = vrot.slane %v4823, 2
        %v4825 = vmax.f32 %v4823, %v4824
        %v4826 = vrot.slane %v4825, 1
        %v4827 = vmax.f32 %v4825, %v4826
        %v4828 = vsel %vm4638, %v4466, -inf
        %v4829 = vrot.slane %v4828, 4
        %v4830 = vmax.f32 %v4828, %v4829
        %v4831 = vrot.slane %v4830, 2
        %v4832 = vmax.f32 %v4830, %v4831
        %v4833 = vrot.slane %v4832, 1
        %v4834 = vmax.f32 %v4832, %v4833
        %v4835 = vsel %vm4638, %v4341, -inf
        %v4836 = vrot.slane %v4835, 4
        %v4837 = vmax.f32 %v4835, %v4836
        %v4838 = vrot.slane %v4837, 2
        %v4839 = vmax.f32 %v4837, %v4838
        %v4840 = vrot.slane %v4839, 1
        %v4841 = vmax.f32 %v4839, %v4840
        %v4842 = vsel %vm4638, %v4467, -inf
        %v4843 = vrot.slane %v4842, 4
        %v4844 = vmax.f32 %v4842, %v4843
        %v4845 = vrot.slane %v4844, 2
        %v4846 = vmax.f32 %v4844, %v4845
        %v4847 = vrot.slane %v4846, 1
        %v4848 = vmax.f32 %v4846, %v4847
        %v4849 = vsel %vm4638, %v4468, -inf
        %v4850 = vrot.slane %v4849, 4
        %v4851 = vmax.f32 %v4849, %v4850
        %v4852 = vrot.slane %v4851, 2
        %v4853 = vmax.f32 %v4851, %v4852
        %v4854 = vrot.slane %v4853, 1
        %v4855 = vmax.f32 %v4853, %v4854
        %v4856 = vsel %vm4638, %v4469, -inf
        %v4857 = vrot.slane %v4856, 4
        %v4858 = vmax.f32 %v4856, %v4857
        %v4859 = vrot.slane %v4858, 2
        %v4860 = vmax.f32 %v4858, %v4859
        %v4861 = vrot.slane %v4860, 1
        %v4862 = vmax.f32 %v4860, %v4861
        %v4863 = vsel %vm4638, %v4344, -inf
        %v4864 = vrot.slane %v4863, 4
        %v4865 = vmax.f32 %v4863, %v4864
        %v4866 = vrot.slane %v4865, 2
        %v4867 = vmax.f32 %v4865, %v4866
        %v4868 = vrot.slane %v4867, 1
        %v4869 = vmax.f32 %v4867, %v4868
        %v4870 = vsel %vm4638, %v4470, -inf
        %v4871 = vrot.slane %v4870, 4
        %v4872 = vmax.f32 %v4870, %v4871
        %v4873 = vrot.slane %v4872, 2
        %v4874 = vmax.f32 %v4872, %v4873
        %v4875 = vrot.slane %v4874, 1
        %v4876 = vmax.f32 %v4874, %v4875
        %v4877 = vsel %vm4638, %v4471, -inf
        %v4878 = vrot.slane %v4877, 4
        %v4879 = vmax.f32 %v4877, %v4878
        %v4880 = vrot.slane %v4879, 2
        %v4881 = vmax.f32 %v4879, %v4880
        %v4882 = vrot.slane %v4881, 1
        %v4883 = vmax.f32 %v4881, %v4882
        %v4884 = vsel %vm4638, %v4472, -inf
        %v4885 = vrot.slane %v4884, 4
        %v4886 = vmax.f32 %v4884, %v4885
        %v4887 = vrot.slane %v4886, 2
        %v4888 = vmax.f32 %v4886, %v4887
        %v4889 = vrot.slane %v4888, 1
        %v4890 = vmax.f32 %v4888, %v4889
        %v4891 = vsel %vm4638, %v4347, -inf
        %v4892 = vrot.slane %v4891, 4
        %v4893 = vmax.f32 %v4891, %v4892
        %v4894 = vrot.slane %v4893, 2
        %v4895 = vmax.f32 %v4893, %v4894
        %v4896 = vrot.slane %v4895, 1
        %v4897 = vmax.f32 %v4895, %v4896
        %v4898 = vsel %vm4638, %v4473, -inf
        %v4899 = vrot.slane %v4898, 4
        %v4900 = vmax.f32 %v4898, %v4899
        %v4901 = vrot.slane %v4900, 2
        %v4902 = vmax.f32 %v4900, %v4901
        %v4903 = vrot.slane %v4902, 1
        %v4904 = vmax.f32 %v4902, %v4903
        %v4905 = vsel %vm4638, %v4474, -inf
        %v4906 = vrot.slane %v4905, 4
        %v4907 = vmax.f32 %v4905, %v4906
        %v4908 = vrot.slane %v4907, 2
        %v4909 = vmax.f32 %v4907, %v4908
        %v4910 = vrot.slane %v4909, 1
        %v4911 = vmax.f32 %v4909, %v4910
        %v4912 = vsel %vm4638, %v4475, -inf
        %v4913 = vrot.slane %v4912, 4
        %v4914 = vmax.f32 %v4912, %v4913
        %v4915 = vrot.slane %v4914, 2
        %v4916 = vmax.f32 %v4914, %v4915
        %v4917 = vrot.slane %v4916, 1
        %v4918 = vmax.f32 %v4916, %v4917
        %v4919 = vsel %vm4638, %v4350, -inf
        %v4920 = vrot.slane %v4919, 4
        %v4921 = vmax.f32 %v4919, %v4920
        %v4922 = vrot.slane %v4921, 2
        %v4923 = vmax.f32 %v4921, %v4922
        %v4924 = vrot.slane %v4923, 1
        %v4925 = vmax.f32 %v4923, %v4924
        %v4926 = vsel %vm4638, %v4476, -inf
        %v4927 = vrot.slane %v4926, 4
        %v4928 = vmax.f32 %v4926, %v4927
        %v4929 = vrot.slane %v4928, 2
        %v4930 = vmax.f32 %v4928, %v4929
        %v4931 = vrot.slane %v4930, 1
        %v4932 = vmax.f32 %v4930, %v4931
        %v4933 = vsel %vm4638, %v4477, -inf
        %v4934 = vrot.slane %v4933, 4
        %v4935 = vmax.f32 %v4933, %v4934
        %v4936 = vrot.slane %v4935, 2
        %v4937 = vmax.f32 %v4935, %v4936
        %v4938 = vrot.slane %v4937, 1
        %v4939 = vmax.f32 %v4937, %v4938
        %v4940 = vsel %vm4638, %v4478, -inf
        %v4941 = vrot.slane %v4940, 4
        %v4942 = vmax.f32 %v4940, %v4941
        %v4943 = vrot.slane %v4942, 2
        %v4944 = vmax.f32 %v4942, %v4943
        %v4945 = vrot.slane %v4944, 1
        %v4946 = vmax.f32 %v4944, %v4945
        %v4947 = vsel %vm4638, %v4353, -inf
        %v4948 = vrot.slane %v4947, 4
        %v4949 = vmax.f32 %v4947, %v4948
        %v4950 = vrot.slane %v4949, 2
        %v4951 = vmax.f32 %v4949, %v4950
        %v4952 = vrot.slane %v4951, 1
        %v4953 = vmax.f32 %v4951, %v4952
        %v4954 = vsel %vm4638, %v4479, -inf
        %v4955 = vrot.slane %v4954, 4
        %v4956 = vmax.f32 %v4954, %v4955
        %v4957 = vrot.slane %v4956, 2
        %v4958 = vmax.f32 %v4956, %v4957
        %v4959 = vrot.slane %v4958, 1
        %v4960 = vmax.f32 %v4958, %v4959
        %v4961 = vsel %vm4638, %v4480, -inf
        %v4962 = vrot.slane %v4961, 4
        %v4963 = vmax.f32 %v4961, %v4962
        %v4964 = vrot.slane %v4963, 2
        %v4965 = vmax.f32 %v4963, %v4964
        %v4966 = vrot.slane %v4965, 1
        %v4967 = vmax.f32 %v4965, %v4966
        %v4968 = vsel %vm4638, %v4481, -inf
        %v4969 = vrot.slane %v4968, 4
        %v4970 = vmax.f32 %v4968, %v4969
        %v4971 = vrot.slane %v4970, 2
        %v4972 = vmax.f32 %v4970, %v4971
        %v4973 = vrot.slane %v4972, 1
        %v4974 = vmax.f32 %v4972, %v4973
        %v4975 = vsel %vm4638, %v4356, -inf
        %v4976 = vrot.slane %v4975, 4
        %v4977 = vmax.f32 %v4975, %v4976
        %v4978 = vrot.slane %v4977, 2
        %v4979 = vmax.f32 %v4977, %v4978
        %v4980 = vrot.slane %v4979, 1
        %v4981 = vmax.f32 %v4979, %v4980
        %v4982 = vsel %vm4638, %v4482, -inf
        %v4983 = vrot.slane %v4982, 4
        %v4984 = vmax.f32 %v4982, %v4983
        %v4985 = vrot.slane %v4984, 2
        %v4986 = vmax.f32 %v4984, %v4985
        %v4987 = vrot.slane %v4986, 1
        %v4988 = vmax.f32 %v4986, %v4987
        %v4989 = vsel %vm4638, %v4483, -inf
        %v4990 = vrot.slane %v4989, 4
        %v4991 = vmax.f32 %v4989, %v4990
        %v4992 = vrot.slane %v4991, 2
        %v4993 = vmax.f32 %v4991, %v4992
        %v4994 = vrot.slane %v4993, 1
        %v4995 = vmax.f32 %v4993, %v4994
        %v4996 = vsel %vm4638, %v4484, -inf
        %v4997 = vrot.slane %v4996, 4
        %v4998 = vmax.f32 %v4996, %v4997
        %v4999 = vrot.slane %v4998, 2
        %v5000 = vmax.f32 %v4998, %v4999
        %v5001 = vrot.slane %v5000, 1
        %v5002 = vmax.f32 %v5000, %v5001
        %v5003 = vsel %vm4638, %v4359, -inf
        %v5004 = vrot.slane %v5003, 4
        %v5005 = vmax.f32 %v5003, %v5004
        %v5006 = vrot.slane %v5005, 2
        %v5007 = vmax.f32 %v5005, %v5006
        %v5008 = vrot.slane %v5007, 1
        %v5009 = vmax.f32 %v5007, %v5008
        %v5010 = vsel %vm4638, %v4485, -inf
        %v5011 = vrot.slane %v5010, 4
        %v5012 = vmax.f32 %v5010, %v5011
        %v5013 = vrot.slane %v5012, 2
        %v5014 = vmax.f32 %v5012, %v5013
        %v5015 = vrot.slane %v5014, 1
        %v5016 = vmax.f32 %v5014, %v5015
        %v5017 = vsel %vm4638, %v4486, -inf
        %v5018 = vrot.slane %v5017, 4
        %v5019 = vmax.f32 %v5017, %v5018
        %v5020 = vrot.slane %v5019, 2
        %v5021 = vmax.f32 %v5019, %v5020
        %v5022 = vrot.slane %v5021, 1
        %v5023 = vmax.f32 %v5021, %v5022
        %v5024 = vsel %vm4638, %v4487, -inf
        %v5025 = vrot.slane %v5024, 4
        %v5026 = vmax.f32 %v5024, %v5025
        %v5027 = vrot.slane %v5026, 2
        %v5028 = vmax.f32 %v5026, %v5027
        %v5029 = vrot.slane %v5028, 1
        %v5030 = vmax.f32 %v5028, %v5029
        %v5031 = vsel %vm4638, %v4362, -inf
        %v5032 = vrot.slane %v5031, 4
        %v5033 = vmax.f32 %v5031, %v5032
        %v5034 = vrot.slane %v5033, 2
        %v5035 = vmax.f32 %v5033, %v5034
        %v5036 = vrot.slane %v5035, 1
        %v5037 = vmax.f32 %v5035, %v5036
        %v5038 = vsel %vm4638, %v4488, -inf
        %v5039 = vrot.slane %v5038, 4
        %v5040 = vmax.f32 %v5038, %v5039
        %v5041 = vrot.slane %v5040, 2
        %v5042 = vmax.f32 %v5040, %v5041
        %v5043 = vrot.slane %v5042, 1
        %v5044 = vmax.f32 %v5042, %v5043
        %v5045 = vsel %vm4638, %v4489, -inf
        %v5046 = vrot.slane %v5045, 4
        %v5047 = vmax.f32 %v5045, %v5046
        %v5048 = vrot.slane %v5047, 2
        %v5049 = vmax.f32 %v5047, %v5048
        %v5050 = vrot.slane %v5049, 1
        %v5051 = vmax.f32 %v5049, %v5050
        %v5052 = vsel %vm4638, %v4490, -inf
        %v5053 = vrot.slane %v5052, 4
        %v5054 = vmax.f32 %v5052, %v5053
        %v5055 = vrot.slane %v5054, 2
        %v5056 = vmax.f32 %v5054, %v5055
        %v5057 = vrot.slane %v5056, 1
        %v5058 = vmax.f32 %v5056, %v5057
        %v5059 = vsel %vm4638, %v4365, -inf
        %v5060 = vrot.slane %v5059, 4
        %v5061 = vmax.f32 %v5059, %v5060
        %v5062 = vrot.slane %v5061, 2
        %v5063 = vmax.f32 %v5061, %v5062
        %v5064 = vrot.slane %v5063, 1
        %v5065 = vmax.f32 %v5063, %v5064
        %v5066 = vsel %vm4638, %v4491, -inf
        %v5067 = vrot.slane %v5066, 4
        %v5068 = vmax.f32 %v5066, %v5067
        %v5069 = vrot.slane %v5068, 2
        %v5070 = vmax.f32 %v5068, %v5069
        %v5071 = vrot.slane %v5070, 1
        %v5072 = vmax.f32 %v5070, %v5071
        %v5073 = vsel %vm4638, %v4492, -inf
        %v5074 = vrot.slane %v5073, 4
        %v5075 = vmax.f32 %v5073, %v5074
        %v5076 = vrot.slane %v5075, 2
        %v5077 = vmax.f32 %v5075, %v5076
        %v5078 = vrot.slane %v5077, 1
        %v5079 = vmax.f32 %v5077, %v5078
        %v5080 = vsel %vm4638, %v4493, -inf
        %v5081 = vrot.slane %v5080, 4
        %v5082 = vmax.f32 %v5080, %v5081
        %v5083 = vrot.slane %v5082, 2
        %v5084 = vmax.f32 %v5082, %v5083
        %v5085 = vrot.slane %v5084, 1
        %v5086 = vmax.f32 %v5084, %v5085
        %v5087 = vsel %vm4638, %v4368, -inf
        %v5088 = vrot.slane %v5087, 4
        %v5089 = vmax.f32 %v5087, %v5088
        %v5090 = vrot.slane %v5089, 2
        %v5091 = vmax.f32 %v5089, %v5090
        %v5092 = vrot.slane %v5091, 1
        %v5093 = vmax.f32 %v5091, %v5092
        %v5094 = vsel %vm4638, %v4494, -inf
        %v5095 = vrot.slane %v5094, 4
        %v5096 = vmax.f32 %v5094, %v5095
        %v5097 = vrot.slane %v5096, 2
        %v5098 = vmax.f32 %v5096, %v5097
        %v5099 = vrot.slane %v5098, 1
        %v5100 = vmax.f32 %v5098, %v5099
        %v5101 = vsel %vm4638, %v4495, -inf
        %v5102 = vrot.slane %v5101, 4
        %v5103 = vmax.f32 %v5101, %v5102
        %v5104 = vrot.slane %v5103, 2
        %v5105 = vmax.f32 %v5103, %v5104
        %v5106 = vrot.slane %v5105, 1
        %v5107 = vmax.f32 %v5105, %v5106
        %v5108 = vsel %vm4638, %v4496, -inf
        %v5109 = vrot.slane %v5108, 4
        %v5110 = vmax.f32 %v5108, %v5109
        %v5111 = vrot.slane %v5110, 2
        %v5112 = vmax.f32 %v5110, %v5111
        %v5113 = vrot.slane %v5112, 1
        %v5114 = vmax.f32 %v5112, %v5113
        %v5115 = vsel %vm4638, %v4371, -inf
        %v5116 = vrot.slane %v5115, 4
        %v5117 = vmax.f32 %v5115, %v5116
        %v5118 = vrot.slane %v5117, 2
        %v5119 = vmax.f32 %v5117, %v5118
        %v5120 = vrot.slane %v5119, 1
        %v5121 = vmax.f32 %v5119, %v5120
        %v5122 = vsel %vm4638, %v4497, -inf
        %v5123 = vrot.slane %v5122, 4
        %v5124 = vmax.f32 %v5122, %v5123
        %v5125 = vrot.slane %v5124, 2
        %v5126 = vmax.f32 %v5124, %v5125
        %v5127 = vrot.slane %v5126, 1
        %v5128 = vmax.f32 %v5126, %v5127
        %v5129 = vsel %vm4638, %v4498, -inf
        %v5130 = vrot.slane %v5129, 4
        %v5131 = vmax.f32 %v5129, %v5130
        %v5132 = vrot.slane %v5131, 2
        %v5133 = vmax.f32 %v5131, %v5132
        %v5134 = vrot.slane %v5133, 1
        %v5135 = vmax.f32 %v5133, %v5134
        %v5136 = vsel %vm4638, %v4499, -inf
        %v5137 = vrot.slane %v5136, 4
        %v5138 = vmax.f32 %v5136, %v5137
        %v5139 = vrot.slane %v5138, 2
        %v5140 = vmax.f32 %v5138, %v5139
        %v5141 = vrot.slane %v5140, 1
        %v5142 = vmax.f32 %v5140, %v5141
        %v5143 = vsel %vm4638, %v4374, -inf
        %v5144 = vrot.slane %v5143, 4
        %v5145 = vmax.f32 %v5143, %v5144
        %v5146 = vrot.slane %v5145, 2
        %v5147 = vmax.f32 %v5145, %v5146
        %v5148 = vrot.slane %v5147, 1
        %v5149 = vmax.f32 %v5147, %v5148
        %v5150 = vsel %vm4638, %v4500, -inf
        %v5151 = vrot.slane %v5150, 4
        %v5152 = vmax.f32 %v5150, %v5151
        %v5153 = vrot.slane %v5152, 2
        %v5154 = vmax.f32 %v5152, %v5153
        %v5155 = vrot.slane %v5154, 1
        %v5156 = vmax.f32 %v5154, %v5155
        %v5157 = vsel %vm4638, %v4501, -inf
        %v5158 = vrot.slane %v5157, 4
        %v5159 = vmax.f32 %v5157, %v5158
        %v5160 = vrot.slane %v5159, 2
        %v5161 = vmax.f32 %v5159, %v5160
        %v5162 = vrot.slane %v5161, 1
        %v5163 = vmax.f32 %v5161, %v5162
        %v5164 = vsel %vm4638, %v4502, -inf
        %v5165 = vrot.slane %v5164, 4
        %v5166 = vmax.f32 %v5164, %v5165
        %v5167 = vrot.slane %v5166, 2
        %v5168 = vmax.f32 %v5166, %v5167
        %v5169 = vrot.slane %v5168, 1
        %v5170 = vmax.f32 %v5168, %v5169
        %v5171 = vsel %vm4638, %v4377, -inf
        %v5172 = vrot.slane %v5171, 4
        %v5173 = vmax.f32 %v5171, %v5172
        %v5174 = vrot.slane %v5173, 2
        %v5175 = vmax.f32 %v5173, %v5174
        %v5176 = vrot.slane %v5175, 1
        %v5177 = vmax.f32 %v5175, %v5176
        %v5178 = vsel %vm4638, %v4503, -inf
        %v5179 = vrot.slane %v5178, 4
        %v5180 = vmax.f32 %v5178, %v5179
        %v5181 = vrot.slane %v5180, 2
        %v5182 = vmax.f32 %v5180, %v5181
        %v5183 = vrot.slane %v5182, 1
        %v5184 = vmax.f32 %v5182, %v5183
        %v5185 = vsel %vm4638, %v4504, -inf
        %v5186 = vrot.slane %v5185, 4
        %v5187 = vmax.f32 %v5185, %v5186
        %v5188 = vrot.slane %v5187, 2
        %v5189 = vmax.f32 %v5187, %v5188
        %v5190 = vrot.slane %v5189, 1
        %v5191 = vmax.f32 %v5189, %v5190
        %v5192 = vsel %vm4638, %v4505, -inf
        %v5193 = vrot.slane %v5192, 4
        %v5194 = vmax.f32 %v5192, %v5193
        %v5195 = vrot.slane %v5194, 2
        %v5196 = vmax.f32 %v5194, %v5195
        %v5197 = vrot.slane %v5196, 1
        %v5198 = vmax.f32 %v5196, %v5197
        %v5199 = vsel %vm4638, %v4380, -inf
        %v5200 = vrot.slane %v5199, 4
        %v5201 = vmax.f32 %v5199, %v5200
        %v5202 = vrot.slane %v5201, 2
        %v5203 = vmax.f32 %v5201, %v5202
        %v5204 = vrot.slane %v5203, 1
        %v5205 = vmax.f32 %v5203, %v5204
        %v5206 = vsel %vm4638, %v4506, -inf
        %v5207 = vrot.slane %v5206, 4
        %v5208 = vmax.f32 %v5206, %v5207
        %v5209 = vrot.slane %v5208, 2
        %v5210 = vmax.f32 %v5208, %v5209
        %v5211 = vrot.slane %v5210, 1
        %v5212 = vmax.f32 %v5210, %v5211
        %v5213 = vsel %vm4638, %v4507, -inf
        %v5214 = vrot.slane %v5213, 4
        %v5215 = vmax.f32 %v5213, %v5214
        %v5216 = vrot.slane %v5215, 2
        %v5217 = vmax.f32 %v5215, %v5216
        %v5218 = vrot.slane %v5217, 1
        %v5219 = vmax.f32 %v5217, %v5218
        %v5220 = vsel %vm4638, %v4508, -inf
        %v5221 = vrot.slane %v5220, 4
        %v5222 = vmax.f32 %v5220, %v5221
        %v5223 = vrot.slane %v5222, 2
        %v5224 = vmax.f32 %v5222, %v5223
        %v5225 = vrot.slane %v5224, 1
        %v5226 = vmax.f32 %v5224, %v5225
        %v5227 = vsel %vm4638, %v4383, -inf
        %v5228 = vrot.slane %v5227, 4
        %v5229 = vmax.f32 %v5227, %v5228
        %v5230 = vrot.slane %v5229, 2
        %v5231 = vmax.f32 %v5229, %v5230
        %v5232 = vrot.slane %v5231, 1
        %v5233 = vmax.f32 %v5231, %v5232
        %v5234 = vsel %vm4638, %v4509, -inf
        %v5235 = vrot.slane %v5234, 4
        %v5236 = vmax.f32 %v5234, %v5235
        %v5237 = vrot.slane %v5236, 2
        %v5238 = vmax.f32 %v5236, %v5237
        %v5239 = vrot.slane %v5238, 1
        %v5240 = vmax.f32 %v5238, %v5239
        %v5241 = vsel %vm4638, %v4510, -inf
        %v5242 = vrot.slane %v5241, 4
        %v5243 = vmax.f32 %v5241, %v5242
        %v5244 = vrot.slane %v5243, 2
        %v5245 = vmax.f32 %v5243, %v5244
        %v5246 = vrot.slane %v5245, 1
        %v5247 = vmax.f32 %v5245, %v5246
        %v5248 = vsel %vm4638, %v4511, -inf
        %v5249 = vrot.slane %v5248, 4
        %v5250 = vmax.f32 %v5248, %v5249
        %v5251 = vrot.slane %v5250, 2
        %v5252 = vmax.f32 %v5250, %v5251
        %v5253 = vrot.slane %v5252, 1
        %v5254 = vmax.f32 %v5252, %v5253
        %v5255 = vsel %vm4638, %v4386, -inf
        %v5256 = vrot.slane %v5255, 4
        %v5257 = vmax.f32 %v5255, %v5256
        %v5258 = vrot.slane %v5257, 2
        %v5259 = vmax.f32 %v5257, %v5258
        %v5260 = vrot.slane %v5259, 1
        %v5261 = vmax.f32 %v5259, %v5260
        %v5262 = vsel %vm4638, %v4512, -inf
        %v5263 = vrot.slane %v5262, 4
        %v5264 = vmax.f32 %v5262, %v5263
        %v5265 = vrot.slane %v5264, 2
        %v5266 = vmax.f32 %v5264, %v5265
        %v5267 = vrot.slane %v5266, 1
        %v5268 = vmax.f32 %v5266, %v5267
        %v5269 = vsel %vm4638, %v4513, -inf
        %v5270 = vrot.slane %v5269, 4
        %v5271 = vmax.f32 %v5269, %v5270
        %v5272 = vrot.slane %v5271, 2
        %v5273 = vmax.f32 %v5271, %v5272
        %v5274 = vrot.slane %v5273, 1
        %v5275 = vmax.f32 %v5273, %v5274
        %v5276 = vsel %vm4638, %v4514, -inf
        %v5277 = vrot.slane %v5276, 4
        %v5278 = vmax.f32 %v5276, %v5277
        %v5279 = vrot.slane %v5278, 2
        %v5280 = vmax.f32 %v5278, %v5279
        %v5281 = vrot.slane %v5280, 1
        %v5282 = vmax.f32 %v5280, %v5281
        %v5283 = vsel %vm4638, %v4389, -inf
        %v5284 = vrot.slane %v5283, 4
        %v5285 = vmax.f32 %v5283, %v5284
        %v5286 = vrot.slane %v5285, 2
        %v5287 = vmax.f32 %v5285, %v5286
        %v5288 = vrot.slane %v5287, 1
        %v5289 = vmax.f32 %v5287, %v5288
        %v5290 = vsel %vm4638, %v4515, -inf
        %v5291 = vrot.slane %v5290, 4
        %v5292 = vmax.f32 %v5290, %v5291
        %v5293 = vrot.slane %v5292, 2
        %v5294 = vmax.f32 %v5292, %v5293
        %v5295 = vrot.slane %v5294, 1
        %v5296 = vmax.f32 %v5294, %v5295
        %v5297 = vsel %vm4638, %v4516, -inf
        %v5298 = vrot.slane %v5297, 4
        %v5299 = vmax.f32 %v5297, %v5298
        %v5300 = vrot.slane %v5299, 2
        %v5301 = vmax.f32 %v5299, %v5300
        %v5302 = vrot.slane %v5301, 1
        %v5303 = vmax.f32 %v5301, %v5302
        %v5304 = vsel %vm4638, %v4517, -inf
        %v5305 = vrot.slane %v5304, 4
        %v5306 = vmax.f32 %v5304, %v5305
        %v5307 = vrot.slane %v5306, 2
        %v5308 = vmax.f32 %v5306, %v5307
        %v5309 = vrot.slane %v5308, 1
        %v5310 = vmax.f32 %v5308, %v5309
        %v5311 = vsel %vm4638, %v4392, -inf
        %v5312 = vrot.slane %v5311, 4
        %v5313 = vmax.f32 %v5311, %v5312
        %v5314 = vrot.slane %v5313, 2
        %v5315 = vmax.f32 %v5313, %v5314
        %v5316 = vrot.slane %v5315, 1
        %v5317 = vmax.f32 %v5315, %v5316
        %v5318 = vsel %vm4638, %v4518, -inf
        %v5319 = vrot.slane %v5318, 4
        %v5320 = vmax.f32 %v5318, %v5319
        %v5321 = vrot.slane %v5320, 2
        %v5322 = vmax.f32 %v5320, %v5321
        %v5323 = vrot.slane %v5322, 1
        %v5324 = vmax.f32 %v5322, %v5323
        %v5325 = vsel %vm4638, %v4519, -inf
        %v5326 = vrot.slane %v5325, 4
        %v5327 = vmax.f32 %v5325, %v5326
        %v5328 = vrot.slane %v5327, 2
        %v5329 = vmax.f32 %v5327, %v5328
        %v5330 = vrot.slane %v5329, 1
        %v5331 = vmax.f32 %v5329, %v5330
        %v5332 = vsel %vm4638, %v4520, -inf
        %v5333 = vrot.slane %v5332, 4
        %v5334 = vmax.f32 %v5332, %v5333
        %v5335 = vrot.slane %v5334, 2
        %v5336 = vmax.f32 %v5334, %v5335
        %v5337 = vrot.slane %v5336, 1
        %v5338 = vmax.f32 %v5336, %v5337
        %v5339 = vsel %vm4638, %v4395, -inf
        %v5340 = vrot.slane %v5339, 4
        %v5341 = vmax.f32 %v5339, %v5340
        %v5342 = vrot.slane %v5341, 2
        %v5343 = vmax.f32 %v5341, %v5342
        %v5344 = vrot.slane %v5343, 1
        %v5345 = vmax.f32 %v5343, %v5344
        %v5346 = vsel %vm4638, %v4521, -inf
        %v5347 = vrot.slane %v5346, 4
        %v5348 = vmax.f32 %v5346, %v5347
        %v5349 = vrot.slane %v5348, 2
        %v5350 = vmax.f32 %v5348, %v5349
        %v5351 = vrot.slane %v5350, 1
        %v5352 = vmax.f32 %v5350, %v5351
        %v5353 = vsel %vm4638, %v4522, -inf
        %v5354 = vrot.slane %v5353, 4
        %v5355 = vmax.f32 %v5353, %v5354
        %v5356 = vrot.slane %v5355, 2
        %v5357 = vmax.f32 %v5355, %v5356
        %v5358 = vrot.slane %v5357, 1
        %v5359 = vmax.f32 %v5357, %v5358
        %v5360 = vsel %vm4638, %v4523, -inf
        %v5361 = vrot.slane %v5360, 4
        %v5362 = vmax.f32 %v5360, %v5361
        %v5363 = vrot.slane %v5362, 2
        %v5364 = vmax.f32 %v5362, %v5363
        %v5365 = vrot.slane %v5364, 1
        %v5366 = vmax.f32 %v5364, %v5365
        %v5367 = vsel %vm4638, %v4398, -inf
        %v5368 = vrot.slane %v5367, 4
        %v5369 = vmax.f32 %v5367, %v5368
        %v5370 = vrot.slane %v5369, 2
        %v5371 = vmax.f32 %v5369, %v5370
        %v5372 = vrot.slane %v5371, 1
        %v5373 = vmax.f32 %v5371, %v5372
        %v5374 = vsel %vm4638, %v4524, -inf
        %v5375 = vrot.slane %v5374, 4
        %v5376 = vmax.f32 %v5374, %v5375
        %v5377 = vrot.slane %v5376, 2
        %v5378 = vmax.f32 %v5376, %v5377
        %v5379 = vrot.slane %v5378, 1
        %v5380 = vmax.f32 %v5378, %v5379
        %v5381 = vsel %vm4638, %v4525, -inf
        %v5382 = vrot.slane %v5381, 4
        %v5383 = vmax.f32 %v5381, %v5382
        %v5384 = vrot.slane %v5383, 2
        %v5385 = vmax.f32 %v5383, %v5384
        %v5386 = vrot.slane %v5385, 1
        %v5387 = vmax.f32 %v5385, %v5386
        %v5388 = vsel %vm4638, %v4526, -inf
        %v5389 = vrot.slane %v5388, 4
        %v5390 = vmax.f32 %v5388, %v5389
        %v5391 = vrot.slane %v5390, 2
        %v5392 = vmax.f32 %v5390, %v5391
        %v5393 = vrot.slane %v5392, 1
        %v5394 = vmax.f32 %v5392, %v5393
        %v5395 = vsel %vm4638, %v4401, -inf
        %v5396 = vrot.slane %v5395, 4
        %v5397 = vmax.f32 %v5395, %v5396
        %v5398 = vrot.slane %v5397, 2
        %v5399 = vmax.f32 %v5397, %v5398
        %v5400 = vrot.slane %v5399, 1
        %v5401 = vmax.f32 %v5399, %v5400
        %v5402 = vsel %vm4638, %v4527, -inf
        %v5403 = vrot.slane %v5402, 4
        %v5404 = vmax.f32 %v5402, %v5403
        %v5405 = vrot.slane %v5404, 2
        %v5406 = vmax.f32 %v5404, %v5405
        %v5407 = vrot.slane %v5406, 1
        %v5408 = vmax.f32 %v5406, %v5407
        %v5409 = vsel %vm4638, %v4528, -inf
        %v5410 = vrot.slane %v5409, 4
        %v5411 = vmax.f32 %v5409, %v5410
        %v5412 = vrot.slane %v5411, 2
        %v5413 = vmax.f32 %v5411, %v5412
        %v5414 = vrot.slane %v5413, 1
        %v5415 = vmax.f32 %v5413, %v5414
        %v5416 = vsel %vm4638, %v4529, -inf
        %v5417 = vrot.slane %v5416, 4
        %v5418 = vmax.f32 %v5416, %v5417
        %v5419 = vrot.slane %v5418, 2
        %v5420 = vmax.f32 %v5418, %v5419
        %v5421 = vrot.slane %v5420, 1
        %v5422 = vmax.f32 %v5420, %v5421
        %v5423 = vsel %vm4638, %v4404, -inf
        %v5424 = vrot.slane %v5423, 4
        %v5425 = vmax.f32 %v5423, %v5424
        %v5426 = vrot.slane %v5425, 2
        %v5427 = vmax.f32 %v5425, %v5426
        %v5428 = vrot.slane %v5427, 1
        %v5429 = vmax.f32 %v5427, %v5428
        %v5430 = vsel %vm4638, %v4530, -inf
        %v5431 = vrot.slane %v5430, 4
        %v5432 = vmax.f32 %v5430, %v5431
        %v5433 = vrot.slane %v5432, 2
        %v5434 = vmax.f32 %v5432, %v5433
        %v5435 = vrot.slane %v5434, 1
        %v5436 = vmax.f32 %v5434, %v5435
        %v5437 = vsel %vm4638, %v4531, -inf
        %v5438 = vrot.slane %v5437, 4
        %v5439 = vmax.f32 %v5437, %v5438
        %v5440 = vrot.slane %v5439, 2
        %v5441 = vmax.f32 %v5439, %v5440
        %v5442 = vrot.slane %v5441, 1
        %v5443 = vmax.f32 %v5441, %v5442
        %v5444 = vsel %vm4638, %v4532, -inf
        %v5445 = vrot.slane %v5444, 4
        %v5446 = vmax.f32 %v5444, %v5445
        %v5447 = vrot.slane %v5446, 2
        %v5448 = vmax.f32 %v5446, %v5447
        %v5449 = vrot.slane %v5448, 1
        %v5450 = vmax.f32 %v5448, %v5449
        %v5451 = vsel %vm4638, %v4407, -inf
        %v5452 = vrot.slane %v5451, 4
        %v5453 = vmax.f32 %v5451, %v5452
        %v5454 = vrot.slane %v5453, 2
        %v5455 = vmax.f32 %v5453, %v5454
        %v5456 = vrot.slane %v5455, 1
        %v5457 = vmax.f32 %v5455, %v5456
        %v5458 = vsel %vm4638, %v4533, -inf
        %v5459 = vrot.slane %v5458, 4
        %v5460 = vmax.f32 %v5458, %v5459
        %v5461 = vrot.slane %v5460, 2
        %v5462 = vmax.f32 %v5460, %v5461
        %v5463 = vrot.slane %v5462, 1
        %v5464 = vmax.f32 %v5462, %v5463
        %v5465 = vsel %vm4638, %v4534, -inf
        %v5466 = vrot.slane %v5465, 4
        %v5467 = vmax.f32 %v5465, %v5466
        %v5468 = vrot.slane %v5467, 2
        %v5469 = vmax.f32 %v5467, %v5468
        %v5470 = vrot.slane %v5469, 1
        %v5471 = vmax.f32 %v5469, %v5470
        %v5472 = vsel %vm4638, %v4535, -inf
        %v5473 = vrot.slane %v5472, 4
        %v5474 = vmax.f32 %v5472, %v5473
        %v5475 = vrot.slane %v5474, 2
        %v5476 = vmax.f32 %v5474, %v5475
        %v5477 = vrot.slane %v5476, 1
        %v5478 = vmax.f32 %v5476, %v5477
        %v5479 = vsel %vm4638, %v4410, -inf
        %v5480 = vrot.slane %v5479, 4
        %v5481 = vmax.f32 %v5479, %v5480
        %v5482 = vrot.slane %v5481, 2
        %v5483 = vmax.f32 %v5481, %v5482
        %v5484 = vrot.slane %v5483, 1
        %v5485 = vmax.f32 %v5483, %v5484
        %v5486 = vsel %vm4638, %v4536, -inf
        %v5487 = vrot.slane %v5486, 4
        %v5488 = vmax.f32 %v5486, %v5487
        %v5489 = vrot.slane %v5488, 2
        %v5490 = vmax.f32 %v5488, %v5489
        %v5491 = vrot.slane %v5490, 1
        %v5492 = vmax.f32 %v5490, %v5491
        %v5493 = vsel %vm4638, %v4537, -inf
        %v5494 = vrot.slane %v5493, 4
        %v5495 = vmax.f32 %v5493, %v5494
        %v5496 = vrot.slane %v5495, 2
        %v5497 = vmax.f32 %v5495, %v5496
        %v5498 = vrot.slane %v5497, 1
        %v5499 = vmax.f32 %v5497, %v5498
        %v5500 = vsel %vm4638, %v4538, -inf
        %v5501 = vrot.slane %v5500, 4
        %v5502 = vmax.f32 %v5500, %v5501
        %v5503 = vrot.slane %v5502, 2
        %v5504 = vmax.f32 %v5502, %v5503
        %v5505 = vrot.slane %v5504, 1
        %v5506 = vmax.f32 %v5504, %v5505
        %v5507 = vsel %vm4638, %v4413, -inf
        %v5508 = vrot.slane %v5507, 4
        %v5509 = vmax.f32 %v5507, %v5508
        %v5510 = vrot.slane %v5509, 2
        %v5511 = vmax.f32 %v5509, %v5510
        %v5512 = vrot.slane %v5511, 1
        %v5513 = vmax.f32 %v5511, %v5512
        %v5514 = vsel %vm4638, %v4539, -inf
        %v5515 = vrot.slane %v5514, 4
        %v5516 = vmax.f32 %v5514, %v5515
        %v5517 = vrot.slane %v5516, 2
        %v5518 = vmax.f32 %v5516, %v5517
        %v5519 = vrot.slane %v5518, 1
        %v5520 = vmax.f32 %v5518, %v5519
        %v5521 = vsel %vm4638, %v4540, -inf
        %v5522 = vrot.slane %v5521, 4
        %v5523 = vmax.f32 %v5521, %v5522
        %v5524 = vrot.slane %v5523, 2
        %v5525 = vmax.f32 %v5523, %v5524
        %v5526 = vrot.slane %v5525, 1
        %v5527 = vmax.f32 %v5525, %v5526
        %v5528 = vsel %vm4638, %v4541, -inf
        %v5529 = vrot.slane %v5528, 4
        %v5530 = vmax.f32 %v5528, %v5529
        %v5531 = vrot.slane %v5530, 2
        %v5532 = vmax.f32 %v5530, %v5531
        %v5533 = vrot.slane %v5532, 1
        %v5534 = vmax.f32 %v5532, %v5533
        %5535 = vst.msk [vmem:[#allocation4] sm:$0xff] %vm4317, 0.0
        %5536 = vst.msk [vmem:[#allocation4 + $0x8] sm:$0xff] %vm4317, 0.0
        %5537 = vst.msk [vmem:[#allocation4 + $0x10] sm:$0x3] %vm4638, 0.0
        %5538 = vst.msk [vmem:[#allocation4 + $0x18] sm:$0xff] %vm4317, 0.0
        %5539 = vst.msk [vmem:[#allocation4 + $0x20] sm:$0xff] %vm4317, 0.0
        %5540 = vst.msk [vmem:[#allocation4 + $0x28] sm:$0x3] %vm4638, 0.0
        %5541 = vst.msk [vmem:[#allocation4 + $0x30] sm:$0xff] %vm4317, 0.0
        %5542 = vst.msk [vmem:[#allocation4 + $0x38] sm:$0xff] %vm4317, 0.0
        %5543 = vst.msk [vmem:[#allocation4 + $0x40] sm:$0x3] %vm4638, 0.0
        %5544 = vst.msk [vmem:[#allocation4 + $0x48] sm:$0xff] %vm4317, 0.0
        %5545 = vst.msk [vmem:[#allocation4 + $0x50] sm:$0xff] %vm4317, 0.0
        %5546 = vst.msk [vmem:[#allocation4 + $0x58] sm:$0x3] %vm4638, 0.0
        %5547 = vst.msk [vmem:[#allocation4 + $0x60] sm:$0xff] %vm4317, 0.0
        %5548 = vst.msk [vmem:[#allocation4 + $0x68] sm:$0xff] %vm4317, 0.0
        %5549 = vst.msk [vmem:[#allocation4 + $0x70] sm:$0x3] %vm4638, 0.0
        %5550 = vst.msk [vmem:[#allocation4 + $0x78] sm:$0xff] %vm4317, 0.0
        %5551 = vst.msk [vmem:[#allocation4 + $0x80] sm:$0xff] %vm4317, 0.0
        %5552 = vst.msk [vmem:[#allocation4 + $0x88] sm:$0x3] %vm4638, 0.0
        %5553 = vst.msk [vmem:[#allocation4 + $0x90] sm:$0xff] %vm4317, 0.0
        %5554 = vst.msk [vmem:[#allocation4 + $0x98] sm:$0xff] %vm4317, 0.0
        %5555 = vst.msk [vmem:[#allocation4 + $0xa0] sm:$0x3] %vm4638, 0.0
        %5556 = vst.msk [vmem:[#allocation4 + $0xa8] sm:$0xff] %vm4317, 0.0
        %5557 = vst.msk [vmem:[#allocation4 + $0xb0] sm:$0xff] %vm4317, 0.0
        %5558 = vst.msk [vmem:[#allocation4 + $0xb8] sm:$0x3] %vm4638, 0.0
        %5559 = vst.msk [vmem:[#allocation4 + $0xc0] sm:$0xff] %vm4317, 0.0
        %5560 = vst.msk [vmem:[#allocation4 + $0xc8] sm:$0xff] %vm4317, 0.0
        %5561 = vst.msk [vmem:[#allocation4 + $0xd0] sm:$0x3] %vm4638, 0.0
        %5562 = vst.msk [vmem:[#allocation4 + $0xd8] sm:$0xff] %vm4317, 0.0
        %5563 = vst.msk [vmem:[#allocation4 + $0xe0] sm:$0xff] %vm4317, 0.0
        %5564 = vst.msk [vmem:[#allocation4 + $0xe8] sm:$0x3] %vm4638, 0.0
        %vm5693 = vcmask 1041409
        %v5694 = vsel %vm5693, %v4652, %v4645
        %vm5695 = vcmask 1042434
        %v5696 = vsel %vm5695, %v4659, %v5694
        %vm5697 = vcmask 1043459
        %v5698 = vsel %vm5697, %v4666, %v5696
        %vm5699 = vcmask 1044484
        %v5700 = vsel %vm5699, %v4673, %v5698
        %vm5701 = vcmask 1045509
        %v5702 = vsel %vm5701, %v4680, %v5700
        %vm5703 = vcmask 1046534
        %v5704 = vsel %vm5703, %v4687, %v5702
        %vm5705 = vcmask 1047559
        %v5706 = vsel %vm5705, %v4694, %v5704
        %v5707 = vsel %vm5693, %v4708, %v4701
        %v5708 = vsel %vm5695, %v4715, %v5707
        %v5709 = vsel %vm5697, %v4722, %v5708
        %v5710 = vsel %vm5699, %v4729, %v5709
        %v5711 = vsel %vm5701, %v4736, %v5710
        %v5712 = vsel %vm5703, %v4743, %v5711
        %v5713 = vsel %vm5705, %v4750, %v5712
        %v5714 = vsel %vm5693, %v4764, %v4757
        %v5715 = vsel %vm5695, %v4771, %v5714
        %v5716 = vsel %vm5697, %v4778, %v5715
        %v5717 = vsel %vm5699, %v4785, %v5716
        %v5718 = vsel %vm5701, %v4792, %v5717
        %v5719 = vsel %vm5703, %v4799, %v5718
        %v5720 = vsel %vm5705, %v4806, %v5719
        %v5721 = vsel %vm5693, %v4820, %v4813
        %v5722 = vsel %vm5695, %v4827, %v5721
        %v5723 = vsel %vm5697, %v4834, %v5722
        %v5724 = vsel %vm5699, %v4841, %v5723
        %v5725 = vsel %vm5701, %v4848, %v5724
        %v5726 = vsel %vm5703, %v4855, %v5725
        %v5727 = vsel %vm5705, %v4862, %v5726
        %v5728 = vsel %vm5693, %v4876, %v4869
        %v5729 = vsel %vm5695, %v4883, %v5728
        %v5730 = vsel %vm5697, %v4890, %v5729
        %v5731 = vsel %vm5699, %v4897, %v5730
        %v5732 = vsel %vm5701, %v4904, %v5731
        %v5733 = vsel %vm5703, %v4911, %v5732
        %v5734 = vsel %vm5705, %v4918, %v5733
        %v5735 = vsel %vm5693, %v4932, %v4925
        %v5736 = vsel %vm5695, %v4939, %v5735
        %v5737 = vsel %vm5697, %v4946, %v5736
        %v5738 = vsel %vm5699, %v4953, %v5737
        %v5739 = vsel %vm5701, %v4960, %v5738
        %v5740 = vsel %vm5703, %v4967, %v5739
        %v5741 = vsel %vm5705, %v4974, %v5740
        %v5742 = vsel %vm5693, %v4988, %v4981
        %v5743 = vsel %vm5695, %v4995, %v5742
        %v5744 = vsel %vm5697, %v5002, %v5743
        %v5745 = vsel %vm5699, %v5009, %v5744
        %v5746 = vsel %vm5701, %v5016, %v5745
        %v5747 = vsel %vm5703, %v5023, %v5746
        %v5748 = vsel %vm5705, %v5030, %v5747
        %v5749 = vsel %vm5693, %v5044, %v5037
        %v5750 = vsel %vm5695, %v5051, %v5749
        %v5751 = vsel %vm5697, %v5058, %v5750
        %v5752 = vsel %vm5699, %v5065, %v5751
        %v5753 = vsel %vm5701, %v5072, %v5752
        %v5754 = vsel %vm5703, %v5079, %v5753
        %v5755 = vsel %vm5705, %v5086, %v5754
        %v5756 = vsel %vm5693, %v5100, %v5093
        %v5757 = vsel %vm5695, %v5107, %v5756
        %v5758 = vsel %vm5697, %v5114, %v5757
        %v5759 = vsel %vm5699, %v5121, %v5758
        %v5760 = vsel %vm5701, %v5128, %v5759
        %v5761 = vsel %vm5703, %v5135, %v5760
        %v5762 = vsel %vm5705, %v5142, %v5761
        %v5763 = vsel %vm5693, %v5156, %v5149
        %v5764 = vsel %vm5695, %v5163, %v5763
        %v5765 = vsel %vm5697, %v5170, %v5764
        %v5766 = vsel %vm5699, %v5177, %v5765
        %v5767 = vsel %vm5701, %v5184, %v5766
        %v5768 = vsel %vm5703, %v5191, %v5767
        %v5769 = vsel %vm5705, %v5198, %v5768
        %v5770 = vsel %vm5693, %v5212, %v5205
        %v5771 = vsel %vm5695, %v5219, %v5770
        %v5772 = vsel %vm5697, %v5226, %v5771
        %v5773 = vsel %vm5699, %v5233, %v5772
        %v5774 = vsel %vm5701, %v5240, %v5773
        %v5775 = vsel %vm5703, %v5247, %v5774
        %v5776 = vsel %vm5705, %v5254, %v5775
        %v5777 = vsel %vm5693, %v5268, %v5261
        %v5778 = vsel %vm5695, %v5275, %v5777
        %v5779 = vsel %vm5697, %v5282, %v5778
        %v5780 = vsel %vm5699, %v5289, %v5779
        %v5781 = vsel %vm5701, %v5296, %v5780
        %v5782 = vsel %vm5703, %v5303, %v5781
        %v5783 = vsel %vm5705, %v5310, %v5782
        %v5784 = vsel %vm5693, %v5324, %v5317
        %v5785 = vsel %vm5695, %v5331, %v5784
        %v5786 = vsel %vm5697, %v5338, %v5785
        %v5787 = vsel %vm5699, %v5345, %v5786
        %v5788 = vsel %vm5701, %v5352, %v5787
        %v5789 = vsel %vm5703, %v5359, %v5788
        %v5790 = vsel %vm5705, %v5366, %v5789
        %v5791 = vsel %vm5693, %v5380, %v5373
        %v5792 = vsel %vm5695, %v5387, %v5791
        %v5793 = vsel %vm5697, %v5394, %v5792
        %v5794 = vsel %vm5699, %v5401, %v5793
        %v5795 = vsel %vm5701, %v5408, %v5794
        %v5796 = vsel %vm5703, %v5415, %v5795
        %v5797 = vsel %vm5705, %v5422, %v5796
        %v5798 = vsel %vm5693, %v5436, %v5429
        %v5799 = vsel %vm5695, %v5443, %v5798
        %v5800 = vsel %vm5697, %v5450, %v5799
        %v5801 = vsel %vm5699, %v5457, %v5800
        %v5802 = vsel %vm5701, %v5464, %v5801
        %v5803 = vsel %vm5703, %v5471, %v5802
        %v5804 = vsel %vm5705, %v5478, %v5803
        %v5805 = vsel %vm5693, %v5492, %v5485
        %v5806 = vsel %vm5695, %v5499, %v5805
        %v5807 = vsel %vm5697, %v5506, %v5806
        %v5808 = vsel %vm5699, %v5513, %v5807
        %v5809 = vsel %vm5701, %v5520, %v5808
        %v5810 = vsel %vm5703, %v5527, %v5809
        %v5811 = vsel %vm5705, %v5534, %v5810
        %s5828 = scalar_lea.vmem [#allocation4], 24
        %5829 = vst.msk [vmem:[%s5828 + $0x1] sm:$0xff] %vm4317, %v5706
        %5830 = vst.msk [vmem:[%s5828 + $0x9] sm:$0xff] %vm4317, %v5713
        %5831 = vst.msk [vmem:[%s5828 + $0x19] sm:$0xff] %vm4317, %v5720
        %5832 = vst.msk [vmem:[%s5828 + $0x21] sm:$0xff] %vm4317, %v5727
        %5833 = vst.msk [vmem:[%s5828 + $0x31] sm:$0xff] %vm4317, %v5734
        %5834 = vst.msk [vmem:[%s5828 + $0x39] sm:$0xff] %vm4317, %v5741
        %5835 = vst.msk [vmem:[%s5828 + $0x49] sm:$0xff] %vm4317, %v5748
        %5836 = vst.msk [vmem:[%s5828 + $0x51] sm:$0xff] %vm4317, %v5755
        %5837 = vst.msk [vmem:[%s5828 + $0x61] sm:$0xff] %vm4317, %v5762
        %5838 = vst.msk [vmem:[%s5828 + $0x69] sm:$0xff] %vm4317, %v5769
        %5839 = vst.msk [vmem:[%s5828 + $0x79] sm:$0xff] %vm4317, %v5776
        %5840 = vst.msk [vmem:[%s5828 + $0x81] sm:$0xff] %vm4317, %v5783
        %5841 = vst.msk [vmem:[%s5828 + $0x91] sm:$0xff] %vm4317, %v5790
        %5842 = vst.msk [vmem:[%s5828 + $0x99] sm:$0xff] %vm4317, %v5797
        %5843 = vst.msk [vmem:[%s5828 + $0xa9] sm:$0xff] %vm4317, %v5804
        %5844 = vst.msk [vmem:[%s5828 + $0xb1] sm:$0xff] %vm4317, %v5811
        %v5845 = vld [vmem:[#allocation4] sm:$0xff]
        %v5846 = vld [vmem:[#allocation4 + $0x8] sm:$0xff]
        %v5847 = vld [vmem:[#allocation4 + $0x18] sm:$0xff]
        %v5848 = vld [vmem:[#allocation4 + $0x20] sm:$0xff]
        %v5849 = vld [vmem:[#allocation4 + $0x30] sm:$0xff]
        %v5850 = vld [vmem:[#allocation4 + $0x38] sm:$0xff]
        %v5851 = vld [vmem:[#allocation4 + $0x48] sm:$0xff]
        %v5852 = vld [vmem:[#allocation4 + $0x50] sm:$0xff]
        %v5853 = vld [vmem:[#allocation4 + $0x60] sm:$0xff]
        %v5854 = vld [vmem:[#allocation4 + $0x68] sm:$0xff]
        %v5855 = vld [vmem:[#allocation4 + $0x78] sm:$0xff]
        %v5856 = vld [vmem:[#allocation4 + $0x80] sm:$0xff]
        %v5857 = vld [vmem:[#allocation4 + $0x90] sm:$0xff]
        %v5858 = vld [vmem:[#allocation4 + $0x98] sm:$0xff]
        %v5859 = vld [vmem:[#allocation4 + $0xa8] sm:$0xff]
        %v5860 = vld [vmem:[#allocation4 + $0xb0] sm:$0xff]
        %5861 = vst.msk [vmem:[#allocation5] sm:$0xff] %vm4317, %v5845
        %5862 = vst.msk [vmem:[#allocation5 + $0x18] sm:$0xff] %vm4317, %v5846
        %5863 = vst.msk [vmem:[#allocation5 + $0x30] sm:$0xff] %vm4317, %v5847
        %5864 = vst.msk [vmem:[#allocation5 + $0x48] sm:$0xff] %vm4317, %v5848
        %5865 = vst.msk [vmem:[#allocation5 + $0x60] sm:$0xff] %vm4317, %v5849
        %5866 = vst.msk [vmem:[#allocation5 + $0x78] sm:$0xff] %vm4317, %v5850
        %5867 = vst.msk [vmem:[#allocation5 + $0x90] sm:$0xff] %vm4317, %v5851
        %5868 = vst.msk [vmem:[#allocation5 + $0xa8] sm:$0xff] %vm4317, %v5852
        %5869 = vst.msk [vmem:[#allocation5 + $0xc0] sm:$0xff] %vm4317, %v5853
        %5870 = vst.msk [vmem:[#allocation5 + $0xd8] sm:$0xff] %vm4317, %v5854
        %5871 = vst.msk [vmem:[#allocation5 + $0xf0] sm:$0xff] %vm4317, %v5855
        %5872 = vst.msk [vmem:[#allocation5 + $0x108] sm:$0xff] %vm4317, %v5856
        %5873 = vst.msk [vmem:[#allocation5 + $0x120] sm:$0xff] %vm4317, %v5857
        %5874 = vst.msk [vmem:[#allocation5 + $0x138] sm:$0xff] %vm4317, %v5858
        %5875 = vst.msk [vmem:[#allocation5 + $0x150] sm:$0xff] %vm4317, %v5859
        %5876 = vst.msk [vmem:[#allocation5 + $0x168] sm:$0xff] %vm4317, %v5860
        %v5877 = vld [vmem:[#allocation4 + $0x1] sm:$0xff]
        %v5878 = vld [vmem:[#allocation4 + $0x9] sm:$0xff]
        %v5879 = vld [vmem:[#allocation4 + $0x19] sm:$0xff]
        %v5880 = vld [vmem:[#allocation4 + $0x21] sm:$0xff]
        %v5881 = vld [vmem:[#allocation4 + $0x31] sm:$0xff]
        %v5882 = vld [vmem:[#allocation4 + $0x39] sm:$0xff]
        %v5883 = vld [vmem:[#allocation4 + $0x49] sm:$0xff]
        %v5884 = vld [vmem:[#allocation4 + $0x51] sm:$0xff]
        %v5885 = vld [vmem:[#allocation4 + $0x61] sm:$0xff]
        %v5886 = vld [vmem:[#allocation4 + $0x69] sm:$0xff]
        %v5887 = vld [vmem:[#allocation4 + $0x79] sm:$0xff]
        %v5888 = vld [vmem:[#allocation4 + $0x81] sm:$0xff]
        %v5889 = vld [vmem:[#allocation4 + $0x91] sm:$0xff]
        %v5890 = vld [vmem:[#allocation4 + $0x99] sm:$0xff]
        %v5891 = vld [vmem:[#allocation4 + $0xa9] sm:$0xff]
        %v5892 = vld [vmem:[#allocation4 + $0xb1] sm:$0xff]
        %5909 = vrot.lane.b32.xlu0 %v5877, 32
        %v5910 = vpop.permute.xlu0 %5909
        %5911 = vrot.lane.b32.xlu0 %v5878, 32
        %v5912 = vpop.permute.xlu0 %5911
        %5913 = vrot.lane.b32.xlu0 %v5879, 32
        %v5914 = vpop.permute.xlu0 %5913
        %5915 = vrot.lane.b32.xlu0 %v5880, 32
        %v5916 = vpop.permute.xlu0 %5915
        %5917 = vrot.lane.b32.xlu0 %v5881, 32
        %v5918 = vpop.permute.xlu0 %5917
        %5919 = vrot.lane.b32.xlu0 %v5882, 32
        %v5920 = vpop.permute.xlu0 %5919
        %5921 = vrot.lane.b32.xlu0 %v5883, 32
        %v5922 = vpop.permute.xlu0 %5921
        %5923 = vrot.lane.b32.xlu0 %v5884, 32
        %v5924 = vpop.permute.xlu0 %5923
        %5925 = vrot.lane.b32.xlu0 %v5885, 32
        %v5926 = vpop.permute.xlu0 %5925
        %5927 = vrot.lane.b32.xlu0 %v5886, 32
        %v5928 = vpop.permute.xlu0 %5927
        %5929 = vrot.lane.b32.xlu0 %v5887, 32
        %v5930 = vpop.permute.xlu0 %5929
        %5931 = vrot.lane.b32.xlu0 %v5888, 32
        %v5932 = vpop.permute.xlu0 %5931
        %5933 = vrot.lane.b32.xlu0 %v5889, 32
        %v5934 = vpop.permute.xlu0 %5933
        %5935 = vrot.lane.b32.xlu0 %v5890, 32
        %v5936 = vpop.permute.xlu0 %5935
        %5937 = vrot.lane.b32.xlu0 %v5891, 32
        %v5938 = vpop.permute.xlu0 %5937
        %5939 = vrot.lane.b32.xlu0 %v5892, 32
        %v5940 = vpop.permute.xlu0 %5939
        %vm5957 = vcmask 523520
        %5958 = vst.msk [vmem:[#allocation5] sm:$0xff] %vm5957, %v5910
        %5959 = vst.msk [vmem:[#allocation5 + $0x18] sm:$0xff] %vm5957, %v5912
        %5960 = vst.msk [vmem:[#allocation5 + $0x30] sm:$0xff] %vm5957, %v5914
        %5961 = vst.msk [vmem:[#allocation5 + $0x48] sm:$0xff] %vm5957, %v5916
        %5962 = vst.msk [vmem:[#allocation5 + $0x60] sm:$0xff] %vm5957, %v5918
        %5963 = vst.msk [vmem:[#allocation5 + $0x78] sm:$0xff] %vm5957, %v5920
        %5964 = vst.msk [vmem:[#allocation5 + $0x90] sm:$0xff] %vm5957, %v5922
        %5965 = vst.msk [vmem:[#allocation5 + $0xa8] sm:$0xff] %vm5957, %v5924
        %5966 = vst.msk [vmem:[#allocation5 + $0xc0] sm:$0xff] %vm5957, %v5926
        %5967 = vst.msk [vmem:[#allocation5 + $0xd8] sm:$0xff] %vm5957, %v5928
        %5968 = vst.msk [vmem:[#allocation5 + $0xf0] sm:$0xff] %vm5957, %v5930
        %5969 = vst.msk [vmem:[#allocation5 + $0x108] sm:$0xff] %vm5957, %v5932
        %5970 = vst.msk [vmem:[#allocation5 + $0x120] sm:$0xff] %vm5957, %v5934
        %5971 = vst.msk [vmem:[#allocation5 + $0x138] sm:$0xff] %vm5957, %v5936
        %5972 = vst.msk [vmem:[#allocation5 + $0x150] sm:$0xff] %vm5957, %v5938
        %5973 = vst.msk [vmem:[#allocation5 + $0x168] sm:$0xff] %vm5957, %v5940
        %v5974 = vld [vmem:[#allocation4 + $0x2] sm:$0xff]
        %v5975 = vld [vmem:[#allocation4 + $0xa] sm:$0xff]
        %v5976 = vld [vmem:[#allocation4 + $0x1a] sm:$0xff]
        %v5977 = vld [vmem:[#allocation4 + $0x22] sm:$0xff]
        %v5978 = vld [vmem:[#allocation4 + $0x32] sm:$0xff]
        %v5979 = vld [vmem:[#allocation4 + $0x3a] sm:$0xff]
        %v5980 = vld [vmem:[#allocation4 + $0x4a] sm:$0xff]
        %v5981 = vld [vmem:[#allocation4 + $0x52] sm:$0xff]
        %v5982 = vld [vmem:[#allocation4 + $0x62] sm:$0xff]
        %v5983 = vld [vmem:[#allocation4 + $0x6a] sm:$0xff]
        %v5984 = vld [vmem:[#allocation4 + $0x7a] sm:$0xff]
        %v5985 = vld [vmem:[#allocation4 + $0x82] sm:$0xff]
        %v5986 = vld [vmem:[#allocation4 + $0x92] sm:$0xff]
        %v5987 = vld [vmem:[#allocation4 + $0x9a] sm:$0xff]
        %v5988 = vld [vmem:[#allocation4 + $0xaa] sm:$0xff]
        %v5989 = vld [vmem:[#allocation4 + $0xb2] sm:$0xff]
        %6006 = vrot.lane.b32.xlu0 %v5974, 64
        %v6007 = vpop.permute.xlu0 %6006
        %6008 = vrot.lane.b32.xlu0 %v5975, 64
        %v6009 = vpop.permute.xlu0 %6008
        %6010 = vrot.lane.b32.xlu0 %v5976, 64
        %v6011 = vpop.permute.xlu0 %6010
        %6012 = vrot.lane.b32.xlu0 %v5977, 64
        %v6013 = vpop.permute.xlu0 %6012
        %6014 = vrot.lane.b32.xlu0 %v5978, 64
        %v6015 = vpop.permute.xlu0 %6014
        %6016 = vrot.lane.b32.xlu0 %v5979, 64
        %v6017 = vpop.permute.xlu0 %6016
        %6018 = vrot.lane.b32.xlu0 %v5980, 64
        %v6019 = vpop.permute.xlu0 %6018
        %6020 = vrot.lane.b32.xlu0 %v5981, 64
        %v6021 = vpop.permute.xlu0 %6020
        %6022 = vrot.lane.b32.xlu0 %v5982, 64
        %v6023 = vpop.permute.xlu0 %6022
        %6024 = vrot.lane.b32.xlu0 %v5983, 64
        %v6025 = vpop.permute.xlu0 %6024
        %6026 = vrot.lane.b32.xlu0 %v5984, 64
        %v6027 = vpop.permute.xlu0 %6026
        %6028 = vrot.lane.b32.xlu0 %v5985, 64
        %v6029 = vpop.permute.xlu0 %6028
        %6030 = vrot.lane.b32.xlu0 %v5986, 64
        %v6031 = vpop.permute.xlu0 %6030
        %6032 = vrot.lane.b32.xlu0 %v5987, 64
        %v6033 = vpop.permute.xlu0 %6032
        %6034 = vrot.lane.b32.xlu0 %v5988, 64
        %v6035 = vpop.permute.xlu0 %6034
        %6036 = vrot.lane.b32.xlu0 %v5989, 64
        %v6037 = vpop.permute.xlu0 %6036
        %vm6054 = vcmask 785920
        %6055 = vst.msk [vmem:[#allocation5] sm:$0xff] %vm6054, %v6007
        %6056 = vst.msk [vmem:[#allocation5 + $0x18] sm:$0xff] %vm6054, %v6009
        %6057 = vst.msk [vmem:[#allocation5 + $0x30] sm:$0xff] %vm6054, %v6011
        %6058 = vst.msk [vmem:[#allocation5 + $0x48] sm:$0xff] %vm6054, %v6013
        %6059 = vst.msk [vmem:[#allocation5 + $0x60] sm:$0xff] %vm6054, %v6015
        %6060 = vst.msk [vmem:[#allocation5 + $0x78] sm:$0xff] %vm6054, %v6017
        %6061 = vst.msk [vmem:[#allocation5 + $0x90] sm:$0xff] %vm6054, %v6019
        %6062 = vst.msk [vmem:[#allocation5 + $0xa8] sm:$0xff] %vm6054, %v6021
        %6063 = vst.msk [vmem:[#allocation5 + $0xc0] sm:$0xff] %vm6054, %v6023
        %6064 = vst.msk [vmem:[#allocation5 + $0xd8] sm:$0xff] %vm6054, %v6025
        %6065 = vst.msk [vmem:[#allocation5 + $0xf0] sm:$0xff] %vm6054, %v6027
        %6066 = vst.msk [vmem:[#allocation5 + $0x108] sm:$0xff] %vm6054, %v6029
        %6067 = vst.msk [vmem:[#allocation5 + $0x120] sm:$0xff] %vm6054, %v6031
        %6068 = vst.msk [vmem:[#allocation5 + $0x138] sm:$0xff] %vm6054, %v6033
        %6069 = vst.msk [vmem:[#allocation5 + $0x150] sm:$0xff] %vm6054, %v6035
        %6070 = vst.msk [vmem:[#allocation5 + $0x168] sm:$0xff] %vm6054, %v6037
        %v6071 = vld [vmem:[%s5828] sm:$0xff]
        %v6072 = vld [vmem:[%s5828 + $0x8] sm:$0xff]
        %v6073 = vld [vmem:[%s5828 + $0x18] sm:$0xff]
        %v6074 = vld [vmem:[%s5828 + $0x20] sm:$0xff]
        %v6075 = vld [vmem:[%s5828 + $0x30] sm:$0xff]
        %v6076 = vld [vmem:[%s5828 + $0x38] sm:$0xff]
        %v6077 = vld [vmem:[%s5828 + $0x48] sm:$0xff]
        %v6078 = vld [vmem:[%s5828 + $0x50] sm:$0xff]
        %v6079 = vld [vmem:[%s5828 + $0x60] sm:$0xff]
        %v6080 = vld [vmem:[%s5828 + $0x68] sm:$0xff]
        %v6081 = vld [vmem:[%s5828 + $0x78] sm:$0xff]
        %v6082 = vld [vmem:[%s5828 + $0x80] sm:$0xff]
        %v6083 = vld [vmem:[%s5828 + $0x90] sm:$0xff]
        %v6084 = vld [vmem:[%s5828 + $0x98] sm:$0xff]
        %v6085 = vld [vmem:[%s5828 + $0xa8] sm:$0xff]
        %v6086 = vld [vmem:[%s5828 + $0xb0] sm:$0xff]
        %6103 = vrot.lane.b32.xlu0 %v6071, 96
        %v6104 = vpop.permute.xlu0 %6103
        %6105 = vrot.lane.b32.xlu0 %v6072, 96
        %v6106 = vpop.permute.xlu0 %6105
        %6107 = vrot.lane.b32.xlu0 %v6073, 96
        %v6108 = vpop.permute.xlu0 %6107
        %6109 = vrot.lane.b32.xlu0 %v6074, 96
        %v6110 = vpop.permute.xlu0 %6109
        %6111 = vrot.lane.b32.xlu0 %v6075, 96
        %v6112 = vpop.permute.xlu0 %6111
        %6113 = vrot.lane.b32.xlu0 %v6076, 96
        %v6114 = vpop.permute.xlu0 %6113
        %6115 = vrot.lane.b32.xlu0 %v6077, 96
        %v6116 = vpop.permute.xlu0 %6115
        %6117 = vrot.lane.b32.xlu0 %v6078, 96
        %v6118 = vpop.permute.xlu0 %6117
        %6119 = vrot.lane.b32.xlu0 %v6079, 96
        %v6120 = vpop.permute.xlu0 %6119
        %6121 = vrot.lane.b32.xlu0 %v6080, 96
        %v6122 = vpop.permute.xlu0 %6121
        %6123 = vrot.lane.b32.xlu0 %v6081, 96
        %v6124 = vpop.permute.xlu0 %6123
        %6125 = vrot.lane.b32.xlu0 %v6082, 96
        %v6126 = vpop.permute.xlu0 %6125
        %6127 = vrot.lane.b32.xlu0 %v6083, 96
        %v6128 = vpop.permute.xlu0 %6127
        %6129 = vrot.lane.b32.xlu0 %v6084, 96
        %v6130 = vpop.permute.xlu0 %6129
        %6131 = vrot.lane.b32.xlu0 %v6085, 96
        %v6132 = vpop.permute.xlu0 %6131
        %6133 = vrot.lane.b32.xlu0 %v6086, 96
        %v6134 = vpop.permute.xlu0 %6133
        %vm6151 = vcmask 1048320
        %6152 = vst.msk [vmem:[#allocation5] sm:$0xff] %vm6151, %v6104
        %6153 = vst.msk [vmem:[#allocation5 + $0x18] sm:$0xff] %vm6151, %v6106
        %6154 = vst.msk [vmem:[#allocation5 + $0x30] sm:$0xff] %vm6151, %v6108
        %6155 = vst.msk [vmem:[#allocation5 + $0x48] sm:$0xff] %vm6151, %v6110
        %6156 = vst.msk [vmem:[#allocation5 + $0x60] sm:$0xff] %vm6151, %v6112
        %6157 = vst.msk [vmem:[#allocation5 + $0x78] sm:$0xff] %vm6151, %v6114
        %6158 = vst.msk [vmem:[#allocation5 + $0x90] sm:$0xff] %vm6151, %v6116
        %6159 = vst.msk [vmem:[#allocation5 + $0xa8] sm:$0xff] %vm6151, %v6118
        %6160 = vst.msk [vmem:[#allocation5 + $0xc0] sm:$0xff] %vm6151, %v6120
        %6161 = vst.msk [vmem:[#allocation5 + $0xd8] sm:$0xff] %vm6151, %v6122
        %6162 = vst.msk [vmem:[#allocation5 + $0xf0] sm:$0xff] %vm6151, %v6124
        %6163 = vst.msk [vmem:[#allocation5 + $0x108] sm:$0xff] %vm6151, %v6126
        %6164 = vst.msk [vmem:[#allocation5 + $0x120] sm:$0xff] %vm6151, %v6128
        %6165 = vst.msk [vmem:[#allocation5 + $0x138] sm:$0xff] %vm6151, %v6130
        %6166 = vst.msk [vmem:[#allocation5 + $0x150] sm:$0xff] %vm6151, %v6132
        %6167 = vst.msk [vmem:[#allocation5 + $0x168] sm:$0xff] %vm6151, %v6134
        %v6168 = vld [vmem:[%s5828 + $0x1] sm:$0xff]
        %v6169 = vld [vmem:[%s5828 + $0x9] sm:$0xff]
        %v6170 = vld [vmem:[%s5828 + $0x19] sm:$0xff]
        %v6171 = vld [vmem:[%s5828 + $0x21] sm:$0xff]
        %v6172 = vld [vmem:[%s5828 + $0x31] sm:$0xff]
        %v6173 = vld [vmem:[%s5828 + $0x39] sm:$0xff]
        %v6174 = vld [vmem:[%s5828 + $0x49] sm:$0xff]
        %v6175 = vld [vmem:[%s5828 + $0x51] sm:$0xff]
        %v6176 = vld [vmem:[%s5828 + $0x61] sm:$0xff]
        %v6177 = vld [vmem:[%s5828 + $0x69] sm:$0xff]
        %v6178 = vld [vmem:[%s5828 + $0x79] sm:$0xff]
        %v6179 = vld [vmem:[%s5828 + $0x81] sm:$0xff]
        %v6180 = vld [vmem:[%s5828 + $0x91] sm:$0xff]
        %v6181 = vld [vmem:[%s5828 + $0x99] sm:$0xff]
        %v6182 = vld [vmem:[%s5828 + $0xa9] sm:$0xff]
        %v6183 = vld [vmem:[%s5828 + $0xb1] sm:$0xff]
        %6184 = vst.msk [vmem:[#allocation5 + $0x8] sm:$0xff] %vm4317, %v6168
        %6185 = vst.msk [vmem:[#allocation5 + $0x20] sm:$0xff] %vm4317, %v6169
        %6186 = vst.msk [vmem:[#allocation5 + $0x38] sm:$0xff] %vm4317, %v6170
        %6187 = vst.msk [vmem:[#allocation5 + $0x50] sm:$0xff] %vm4317, %v6171
        %6188 = vst.msk [vmem:[#allocation5 + $0x68] sm:$0xff] %vm4317, %v6172
        %6189 = vst.msk [vmem:[#allocation5 + $0x80] sm:$0xff] %vm4317, %v6173
        %6190 = vst.msk [vmem:[#allocation5 + $0x98] sm:$0xff] %vm4317, %v6174
        %6191 = vst.msk [vmem:[#allocation5 + $0xb0] sm:$0xff] %vm4317, %v6175
        %6192 = vst.msk [vmem:[#allocation5 + $0xc8] sm:$0xff] %vm4317, %v6176
        %6193 = vst.msk [vmem:[#allocation5 + $0xe0] sm:$0xff] %vm4317, %v6177
        %6194 = vst.msk [vmem:[#allocation5 + $0xf8] sm:$0xff] %vm4317, %v6178
        %6195 = vst.msk [vmem:[#allocation5 + $0x110] sm:$0xff] %vm4317, %v6179
        %6196 = vst.msk [vmem:[#allocation5 + $0x128] sm:$0xff] %vm4317, %v6180
        %6197 = vst.msk [vmem:[#allocation5 + $0x140] sm:$0xff] %vm4317, %v6181
        %6198 = vst.msk [vmem:[#allocation5 + $0x158] sm:$0xff] %vm4317, %v6182
        %6199 = vst.msk [vmem:[#allocation5 + $0x170] sm:$0xff] %vm4317, %v6183
        %v6200 = vld [vmem:[%s5828 + $0x2] sm:$0xff]
        %v6201 = vld [vmem:[%s5828 + $0xa] sm:$0xff]
        %v6202 = vld [vmem:[%s5828 + $0x1a] sm:$0xff]
        %v6203 = vld [vmem:[%s5828 + $0x22] sm:$0xff]
        %v6204 = vld [vmem:[%s5828 + $0x32] sm:$0xff]
        %v6205 = vld [vmem:[%s5828 + $0x3a] sm:$0xff]
        %v6206 = vld [vmem:[%s5828 + $0x4a] sm:$0xff]
        %v6207 = vld [vmem:[%s5828 + $0x52] sm:$0xff]
        %v6208 = vld [vmem:[%s5828 + $0x62] sm:$0xff]
        %v6209 = vld [vmem:[%s5828 + $0x6a] sm:$0xff]
        %v6210 = vld [vmem:[%s5828 + $0x7a] sm:$0xff]
        %v6211 = vld [vmem:[%s5828 + $0x82] sm:$0xff]
        %v6212 = vld [vmem:[%s5828 + $0x92] sm:$0xff]
        %v6213 = vld [vmem:[%s5828 + $0x9a] sm:$0xff]
        %v6214 = vld [vmem:[%s5828 + $0xaa] sm:$0xff]
        %v6215 = vld [vmem:[%s5828 + $0xb2] sm:$0xff]
        %6232 = vrot.lane.b32.xlu0 %v6200, 32
        %v6233 = vpop.permute.xlu0 %6232
        %6234 = vrot.lane.b32.xlu0 %v6201, 32
        %v6235 = vpop.permute.xlu0 %6234
        %6236 = vrot.lane.b32.xlu0 %v6202, 32
        %v6237 = vpop.permute.xlu0 %6236
        %6238 = vrot.lane.b32.xlu0 %v6203, 32
        %v6239 = vpop.permute.xlu0 %6238
        %6240 = vrot.lane.b32.xlu0 %v6204, 32
        %v6241 = vpop.permute.xlu0 %6240
        %6242 = vrot.lane.b32.xlu0 %v6205, 32
        %v6243 = vpop.permute.xlu0 %6242
        %6244 = vrot.lane.b32.xlu0 %v6206, 32
        %v6245 = vpop.permute.xlu0 %6244
        %6246 = vrot.lane.b32.xlu0 %v6207, 32
        %v6247 = vpop.permute.xlu0 %6246
        %6248 = vrot.lane.b32.xlu0 %v6208, 32
        %v6249 = vpop.permute.xlu0 %6248
        %6250 = vrot.lane.b32.xlu0 %v6209, 32
        %v6251 = vpop.permute.xlu0 %6250
        %6252 = vrot.lane.b32.xlu0 %v6210, 32
        %v6253 = vpop.permute.xlu0 %6252
        %6254 = vrot.lane.b32.xlu0 %v6211, 32
        %v6255 = vpop.permute.xlu0 %6254
        %6256 = vrot.lane.b32.xlu0 %v6212, 32
        %v6257 = vpop.permute.xlu0 %6256
        %6258 = vrot.lane.b32.xlu0 %v6213, 32
        %v6259 = vpop.permute.xlu0 %6258
        %6260 = vrot.lane.b32.xlu0 %v6214, 32
        %v6261 = vpop.permute.xlu0 %6260
        %6262 = vrot.lane.b32.xlu0 %v6215, 32
        %v6263 = vpop.permute.xlu0 %6262
        %6280 = vst.msk [vmem:[#allocation5 + $0x8] sm:$0xff] %vm5957, %v6233
        %6281 = vst.msk [vmem:[#allocation5 + $0x20] sm:$0xff] %vm5957, %v6235
        %6282 = vst.msk [vmem:[#allocation5 + $0x38] sm:$0xff] %vm5957, %v6237
        %6283 = vst.msk [vmem:[#allocation5 + $0x50] sm:$0xff] %vm5957, %v6239
        %6284 = vst.msk [vmem:[#allocation5 + $0x68] sm:$0xff] %vm5957, %v6241
        %6285 = vst.msk [vmem:[#allocation5 + $0x80] sm:$0xff] %vm5957, %v6243
        %6286 = vst.msk [vmem:[#allocation5 + $0x98] sm:$0xff] %vm5957, %v6245
        %6287 = vst.msk [vmem:[#allocation5 + $0xb0] sm:$0xff] %vm5957, %v6247
        %6288 = vst.msk [vmem:[#allocation5 + $0xc8] sm:$0xff] %vm5957, %v6249
        %6289 = vst.msk [vmem:[#allocation5 + $0xe0] sm:$0xff] %vm5957, %v6251
        %6290 = vst.msk [vmem:[#allocation5 + $0xf8] sm:$0xff] %vm5957, %v6253
        %6291 = vst.msk [vmem:[#allocation5 + $0x110] sm:$0xff] %vm5957, %v6255
        %6292 = vst.msk [vmem:[#allocation5 + $0x128] sm:$0xff] %vm5957, %v6257
        %6293 = vst.msk [vmem:[#allocation5 + $0x140] sm:$0xff] %vm5957, %v6259
        %6294 = vst.msk [vmem:[#allocation5 + $0x158] sm:$0xff] %vm5957, %v6261
        %6295 = vst.msk [vmem:[#allocation5 + $0x170] sm:$0xff] %vm5957, %v6263
        %s6296 = scalar_lea.vmem [#allocation4], 48
        %v6297 = vld [vmem:[%s6296] sm:$0xff]
        %v6298 = vld [vmem:[%s6296 + $0x8] sm:$0xff]
        %v6299 = vld [vmem:[%s6296 + $0x18] sm:$0xff]
        %v6300 = vld [vmem:[%s6296 + $0x20] sm:$0xff]
        %v6301 = vld [vmem:[%s6296 + $0x30] sm:$0xff]
        %v6302 = vld [vmem:[%s6296 + $0x38] sm:$0xff]
        %v6303 = vld [vmem:[%s6296 + $0x48] sm:$0xff]
        %v6304 = vld [vmem:[%s6296 + $0x50] sm:$0xff]
        %v6305 = vld [vmem:[%s6296 + $0x60] sm:$0xff]
        %v6306 = vld [vmem:[%s6296 + $0x68] sm:$0xff]
        %v6307 = vld [vmem:[%s6296 + $0x78] sm:$0xff]
        %v6308 = vld [vmem:[%s6296 + $0x80] sm:$0xff]
        %v6309 = vld [vmem:[%s6296 + $0x90] sm:$0xff]
        %v6310 = vld [vmem:[%s6296 + $0x98] sm:$0xff]
        %v6311 = vld [vmem:[%s6296 + $0xa8] sm:$0xff]
        %v6312 = vld [vmem:[%s6296 + $0xb0] sm:$0xff]
        %6329 = vrot.lane.b32.xlu0 %v6297, 64
        %v6330 = vpop.permute.xlu0 %6329
        %6331 = vrot.lane.b32.xlu0 %v6298, 64
        %v6332 = vpop.permute.xlu0 %6331
        %6333 = vrot.lane.b32.xlu0 %v6299, 64
        %v6334 = vpop.permute.xlu0 %6333
        %6335 = vrot.lane.b32.xlu0 %v6300, 64
        %v6336 = vpop.permute.xlu0 %6335
        %6337 = vrot.lane.b32.xlu0 %v6301, 64
        %v6338 = vpop.permute.xlu0 %6337
        %6339 = vrot.lane.b32.xlu0 %v6302, 64
        %v6340 = vpop.permute.xlu0 %6339
        %6341 = vrot.lane.b32.xlu0 %v6303, 64
        %v6342 = vpop.permute.xlu0 %6341
        %6343 = vrot.lane.b32.xlu0 %v6304, 64
        %v6344 = vpop.permute.xlu0 %6343
        %6345 = vrot.lane.b32.xlu0 %v6305, 64
        %v6346 = vpop.permute.xlu0 %6345
        %6347 = vrot.lane.b32.xlu0 %v6306, 64
        %v6348 = vpop.permute.xlu0 %6347
        %6349 = vrot.lane.b32.xlu0 %v6307, 64
        %v6350 = vpop.permute.xlu0 %6349
        %6351 = vrot.lane.b32.xlu0 %v6308, 64
        %v6352 = vpop.permute.xlu0 %6351
        %6353 = vrot.lane.b32.xlu0 %v6309, 64
        %v6354 = vpop.permute.xlu0 %6353
        %6355 = vrot.lane.b32.xlu0 %v6310, 64
        %v6356 = vpop.permute.xlu0 %6355
        %6357 = vrot.lane.b32.xlu0 %v6311, 64
        %v6358 = vpop.permute.xlu0 %6357
        %6359 = vrot.lane.b32.xlu0 %v6312, 64
        %v6360 = vpop.permute.xlu0 %6359
        %6377 = vst.msk [vmem:[#allocation5 + $0x8] sm:$0xff] %vm6054, %v6330
        %6378 = vst.msk [vmem:[#allocation5 + $0x20] sm:$0xff] %vm6054, %v6332
        %6379 = vst.msk [vmem:[#allocation5 + $0x38] sm:$0xff] %vm6054, %v6334
        %6380 = vst.msk [vmem:[#allocation5 + $0x50] sm:$0xff] %vm6054, %v6336
        %6381 = vst.msk [vmem:[#allocation5 + $0x68] sm:$0xff] %vm6054, %v6338
        %6382 = vst.msk [vmem:[#allocation5 + $0x80] sm:$0xff] %vm6054, %v6340
        %6383 = vst.msk [vmem:[#allocation5 + $0x98] sm:$0xff] %vm6054, %v6342
        %6384 = vst.msk [vmem:[#allocation5 + $0xb0] sm:$0xff] %vm6054, %v6344
        %6385 = vst.msk [vmem:[#allocation5 + $0xc8] sm:$0xff] %vm6054, %v6346
        %6386 = vst.msk [vmem:[#allocation5 + $0xe0] sm:$0xff] %vm6054, %v6348
        %6387 = vst.msk [vmem:[#allocation5 + $0xf8] sm:$0xff] %vm6054, %v6350
        %6388 = vst.msk [vmem:[#allocation5 + $0x110] sm:$0xff] %vm6054, %v6352
        %6389 = vst.msk [vmem:[#allocation5 + $0x128] sm:$0xff] %vm6054, %v6354
        %6390 = vst.msk [vmem:[#allocation5 + $0x140] sm:$0xff] %vm6054, %v6356
        %6391 = vst.msk [vmem:[#allocation5 + $0x158] sm:$0xff] %vm6054, %v6358
        %6392 = vst.msk [vmem:[#allocation5 + $0x170] sm:$0xff] %vm6054, %v6360
        %v6393 = vld [vmem:[%s6296 + $0x1] sm:$0xff]
        %v6394 = vld [vmem:[%s6296 + $0x9] sm:$0xff]
        %v6395 = vld [vmem:[%s6296 + $0x19] sm:$0xff]
        %v6396 = vld [vmem:[%s6296 + $0x21] sm:$0xff]
        %v6397 = vld [vmem:[%s6296 + $0x31] sm:$0xff]
        %v6398 = vld [vmem:[%s6296 + $0x39] sm:$0xff]
        %v6399 = vld [vmem:[%s6296 + $0x49] sm:$0xff]
        %v6400 = vld [vmem:[%s6296 + $0x51] sm:$0xff]
        %v6401 = vld [vmem:[%s6296 + $0x61] sm:$0xff]
        %v6402 = vld [vmem:[%s6296 + $0x69] sm:$0xff]
        %v6403 = vld [vmem:[%s6296 + $0x79] sm:$0xff]
        %v6404 = vld [vmem:[%s6296 + $0x81] sm:$0xff]
        %v6405 = vld [vmem:[%s6296 + $0x91] sm:$0xff]
        %v6406 = vld [vmem:[%s6296 + $0x99] sm:$0xff]
        %v6407 = vld [vmem:[%s6296 + $0xa9] sm:$0xff]
        %v6408 = vld [vmem:[%s6296 + $0xb1] sm:$0xff]
        %6425 = vrot.lane.b32.xlu0 %v6393, 96
        %v6426 = vpop.permute.xlu0 %6425
        %6427 = vrot.lane.b32.xlu0 %v6394, 96
        %v6428 = vpop.permute.xlu0 %6427
        %6429 = vrot.lane.b32.xlu0 %v6395, 96
        %v6430 = vpop.permute.xlu0 %6429
        %6431 = vrot.lane.b32.xlu0 %v6396, 96
        %v6432 = vpop.permute.xlu0 %6431
        %6433 = vrot.lane.b32.xlu0 %v6397, 96
        %v6434 = vpop.permute.xlu0 %6433
        %6435 = vrot.lane.b32.xlu0 %v6398, 96
        %v6436 = vpop.permute.xlu0 %6435
        %6437 = vrot.lane.b32.xlu0 %v6399, 96
        %v6438 = vpop.permute.xlu0 %6437
        %6439 = vrot.lane.b32.xlu0 %v6400, 96
        %v6440 = vpop.permute.xlu0 %6439
        %6441 = vrot.lane.b32.xlu0 %v6401, 96
        %v6442 = vpop.permute.xlu0 %6441
        %6443 = vrot.lane.b32.xlu0 %v6402, 96
        %v6444 = vpop.permute.xlu0 %6443
        %6445 = vrot.lane.b32.xlu0 %v6403, 96
        %v6446 = vpop.permute.xlu0 %6445
        %6447 = vrot.lane.b32.xlu0 %v6404, 96
        %v6448 = vpop.permute.xlu0 %6447
        %6449 = vrot.lane.b32.xlu0 %v6405, 96
        %v6450 = vpop.permute.xlu0 %6449
        %6451 = vrot.lane.b32.xlu0 %v6406, 96
        %v6452 = vpop.permute.xlu0 %6451
        %6453 = vrot.lane.b32.xlu0 %v6407, 96
        %v6454 = vpop.permute.xlu0 %6453
        %6455 = vrot.lane.b32.xlu0 %v6408, 96
        %v6456 = vpop.permute.xlu0 %6455
        %6473 = vst.msk [vmem:[#allocation5 + $0x8] sm:$0xff] %vm6151, %v6426
        %6474 = vst.msk [vmem:[#allocation5 + $0x20] sm:$0xff] %vm6151, %v6428
        %6475 = vst.msk [vmem:[#allocation5 + $0x38] sm:$0xff] %vm6151, %v6430
        %6476 = vst.msk [vmem:[#allocation5 + $0x50] sm:$0xff] %vm6151, %v6432
        %6477 = vst.msk [vmem:[#allocation5 + $0x68] sm:$0xff] %vm6151, %v6434
        %6478 = vst.msk [vmem:[#allocation5 + $0x80] sm:$0xff] %vm6151, %v6436
        %6479 = vst.msk [vmem:[#allocation5 + $0x98] sm:$0xff] %vm6151, %v6438
        %6480 = vst.msk [vmem:[#allocation5 + $0xb0] sm:$0xff] %vm6151, %v6440
        %6481 = vst.msk [vmem:[#allocation5 + $0xc8] sm:$0xff] %vm6151, %v6442
        %6482 = vst.msk [vmem:[#allocation5 + $0xe0] sm:$0xff] %vm6151, %v6444
        %6483 = vst.msk [vmem:[#allocation5 + $0xf8] sm:$0xff] %vm6151, %v6446
        %6484 = vst.msk [vmem:[#allocation5 + $0x110] sm:$0xff] %vm6151, %v6448
        %6485 = vst.msk [vmem:[#allocation5 + $0x128] sm:$0xff] %vm6151, %v6450
        %6486 = vst.msk [vmem:[#allocation5 + $0x140] sm:$0xff] %vm6151, %v6452
        %6487 = vst.msk [vmem:[#allocation5 + $0x158] sm:$0xff] %vm6151, %v6454
        %6488 = vst.msk [vmem:[#allocation5 + $0x170] sm:$0xff] %vm6151, %v6456
        %v6489 = vld [vmem:[%s6296 + $0x2] sm:$0xff]
        %v6490 = vld [vmem:[%s6296 + $0xa] sm:$0xff]
        %v6491 = vld [vmem:[%s6296 + $0x1a] sm:$0xff]
        %v6492 = vld [vmem:[%s6296 + $0x22] sm:$0xff]
        %v6493 = vld [vmem:[%s6296 + $0x32] sm:$0xff]
        %v6494 = vld [vmem:[%s6296 + $0x3a] sm:$0xff]
        %v6495 = vld [vmem:[%s6296 + $0x4a] sm:$0xff]
        %v6496 = vld [vmem:[%s6296 + $0x52] sm:$0xff]
        %v6497 = vld [vmem:[%s6296 + $0x62] sm:$0xff]
        %v6498 = vld [vmem:[%s6296 + $0x6a] sm:$0xff]
        %v6499 = vld [vmem:[%s6296 + $0x7a] sm:$0xff]
        %v6500 = vld [vmem:[%s6296 + $0x82] sm:$0xff]
        %v6501 = vld [vmem:[%s6296 + $0x92] sm:$0xff]
        %v6502 = vld [vmem:[%s6296 + $0x9a] sm:$0xff]
        %v6503 = vld [vmem:[%s6296 + $0xaa] sm:$0xff]
        %v6504 = vld [vmem:[%s6296 + $0xb2] sm:$0xff]
        %6505 = vst.msk [vmem:[#allocation5 + $0x10] sm:$0xff] %vm4317, %v6489
        %6506 = vst.msk [vmem:[#allocation5 + $0x28] sm:$0xff] %vm4317, %v6490
        %6507 = vst.msk [vmem:[#allocation5 + $0x40] sm:$0xff] %vm4317, %v6491
        %6508 = vst.msk [vmem:[#allocation5 + $0x58] sm:$0xff] %vm4317, %v6492
        %6509 = vst.msk [vmem:[#allocation5 + $0x70] sm:$0xff] %vm4317, %v6493
        %6510 = vst.msk [vmem:[#allocation5 + $0x88] sm:$0xff] %vm4317, %v6494
        %6511 = vst.msk [vmem:[#allocation5 + $0xa0] sm:$0xff] %vm4317, %v6495
        %6512 = vst.msk [vmem:[#allocation5 + $0xb8] sm:$0xff] %vm4317, %v6496
        %6513 = vst.msk [vmem:[#allocation5 + $0xd0] sm:$0xff] %vm4317, %v6497
        %6514 = vst.msk [vmem:[#allocation5 + $0xe8] sm:$0xff] %vm4317, %v6498
        %6515 = vst.msk [vmem:[#allocation5 + $0x100] sm:$0xff] %vm4317, %v6499
        %6516 = vst.msk [vmem:[#allocation5 + $0x118] sm:$0xff] %vm4317, %v6500
        %6517 = vst.msk [vmem:[#allocation5 + $0x130] sm:$0xff] %vm4317, %v6501
        %6518 = vst.msk [vmem:[#allocation5 + $0x148] sm:$0xff] %vm4317, %v6502
        %6519 = vst.msk [vmem:[#allocation5 + $0x160] sm:$0xff] %vm4317, %v6503
        %6520 = vst.msk [vmem:[#allocation5 + $0x178] sm:$0xff] %vm4317, %v6504
        %v6521 = vld [vmem:[#allocation5] sm:$0xff]
        %v6522 = vld [vmem:[#allocation5 + $0x8] sm:$0xff]
        %v6523 = vld [vmem:[#allocation5 + $0x10] sm:$0xff]
        %v6524 = vld [vmem:[#allocation5 + $0x18] sm:$0xff]
        %v6525 = vld [vmem:[#allocation5 + $0x20] sm:$0xff]
        %v6526 = vld [vmem:[#allocation5 + $0x28] sm:$0xff]
        %v6527 = vld [vmem:[#allocation5 + $0x30] sm:$0xff]
        %v6528 = vld [vmem:[#allocation5 + $0x38] sm:$0xff]
        %v6529 = vld [vmem:[#allocation5 + $0x40] sm:$0xff]
        %v6530 = vld [vmem:[#allocation5 + $0x48] sm:$0xff]
        %v6531 = vld [vmem:[#allocation5 + $0x50] sm:$0xff]
        %v6532 = vld [vmem:[#allocation5 + $0x58] sm:$0xff]
        %v6533 = vld [vmem:[#allocation5 + $0x60] sm:$0xff]
        %v6534 = vld [vmem:[#allocation5 + $0x68] sm:$0xff]
        %v6535 = vld [vmem:[#allocation5 + $0x70] sm:$0xff]
        %v6536 = vld [vmem:[#allocation5 + $0x78] sm:$0xff]
        %v6537 = vld [vmem:[#allocation5 + $0x80] sm:$0xff]
        %v6538 = vld [vmem:[#allocation5 + $0x88] sm:$0xff]
        %v6539 = vld [vmem:[#allocation5 + $0x90] sm:$0xff]
        %v6540 = vld [vmem:[#allocation5 + $0x98] sm:$0xff]
        %v6541 = vld [vmem:[#allocation5 + $0xa0] sm:$0xff]
        %v6542 = vld [vmem:[#allocation5 + $0xa8] sm:$0xff]
        %v6543 = vld [vmem:[#allocation5 + $0xb0] sm:$0xff]
        %v6544 = vld [vmem:[#allocation5 + $0xb8] sm:$0xff]
        %v6545 = vld [vmem:[#allocation5 + $0xc0] sm:$0xff]
        %v6546 = vld [vmem:[#allocation5 + $0xc8] sm:$0xff]
        %v6547 = vld [vmem:[#allocation5 + $0xd0] sm:$0xff]
        %v6548 = vld [vmem:[#allocation5 + $0xd8] sm:$0xff]
        %v6549 = vld [vmem:[#allocation5 + $0xe0] sm:$0xff]
        %v6550 = vld [vmem:[#allocation5 + $0xe8] sm:$0xff]
        %v6551 = vld [vmem:[#allocation5 + $0xf0] sm:$0xff]
        %v6552 = vld [vmem:[#allocation5 + $0xf8] sm:$0xff]
        %v6553 = vld [vmem:[#allocation5 + $0x100] sm:$0xff]
        %v6554 = vld [vmem:[#allocation5 + $0x108] sm:$0xff]
        %v6555 = vld [vmem:[#allocation5 + $0x110] sm:$0xff]
        %v6556 = vld [vmem:[#allocation5 + $0x118] sm:$0xff]
        %v6557 = vld [vmem:[#allocation5 + $0x120] sm:$0xff]
        %v6558 = vld [vmem:[#allocation5 + $0x128] sm:$0xff]
        %v6559 = vld [vmem:[#allocation5 + $0x130] sm:$0xff]
        %v6560 = vld [vmem:[#allocation5 + $0x138] sm:$0xff]
        %v6561 = vld [vmem:[#allocation5 + $0x140] sm:$0xff]
        %v6562 = vld [vmem:[#allocation5 + $0x148] sm:$0xff]
        %v6563 = vld [vmem:[#allocation5 + $0x150] sm:$0xff]
        %v6564 = vld [vmem:[#allocation5 + $0x158] sm:$0xff]
        %v6565 = vld [vmem:[#allocation5 + $0x160] sm:$0xff]
        %v6566 = vld [vmem:[#allocation5 + $0x168] sm:$0xff]
        %v6567 = vld [vmem:[#allocation5 + $0x170] sm:$0xff]
        %v6568 = vld [vmem:[#allocation5 + $0x178] sm:$0xff]
        %v6569 = vld [vmem:[%s3] sm:$0xff]
        %v6570 = vld [vmem:[%s3 + $0x8] sm:$0xff]
        %v6571 = vld [vmem:[%s3 + $0x10] sm:$0xff]
        %v6572 = vld [vmem:[%s3 + $0x18] sm:$0xff]
        %v6573 = vld [vmem:[%s3 + $0x20] sm:$0xff]
        %v6574 = vld [vmem:[%s3 + $0x28] sm:$0xff]
        %v6575 = vld [vmem:[%s3 + $0x30] sm:$0xff]
        %v6576 = vld [vmem:[%s3 + $0x38] sm:$0xff]
        %v6577 = vld [vmem:[%s3 + $0x40] sm:$0xff]
        %v6578 = vld [vmem:[%s3 + $0x48] sm:$0xff]
        %v6579 = vld [vmem:[%s3 + $0x50] sm:$0xff]
        %v6580 = vld [vmem:[%s3 + $0x58] sm:$0xff]
        %v6581 = vld [vmem:[%s3 + $0x60] sm:$0xff]
        %v6582 = vld [vmem:[%s3 + $0x68] sm:$0xff]
        %v6583 = vld [vmem:[%s3 + $0x70] sm:$0xff]
        %v6584 = vld [vmem:[%s3 + $0x78] sm:$0xff]
        %v6585 = vld [vmem:[%s3 + $0x80] sm:$0xff]
        %v6586 = vld [vmem:[%s3 + $0x88] sm:$0xff]
        %v6587 = vld [vmem:[%s3 + $0x90] sm:$0xff]
        %v6588 = vld [vmem:[%s3 + $0x98] sm:$0xff]
        %v6589 = vld [vmem:[%s3 + $0xa0] sm:$0xff]
        %v6590 = vld [vmem:[%s3 + $0xa8] sm:$0xff]
        %v6591 = vld [vmem:[%s3 + $0xb0] sm:$0xff]
        %v6592 = vld [vmem:[%s3 + $0xb8] sm:$0xff]
        %v6593 = vld [vmem:[%s3 + $0xc0] sm:$0xff]
        %v6594 = vld [vmem:[%s3 + $0xc8] sm:$0xff]
        %v6595 = vld [vmem:[%s3 + $0xd0] sm:$0xff]
        %v6596 = vld [vmem:[%s3 + $0xd8] sm:$0xff]
        %v6597 = vld [vmem:[%s3 + $0xe0] sm:$0xff]
        %v6598 = vld [vmem:[%s3 + $0xe8] sm:$0xff]
        %v6599 = vld [vmem:[%s3 + $0xf0] sm:$0xff]
        %v6600 = vld [vmem:[%s3 + $0xf8] sm:$0xff]
        %v6601 = vld [vmem:[%s3 + $0x100] sm:$0xff]
        %v6602 = vld [vmem:[%s3 + $0x108] sm:$0xff]
        %v6603 = vld [vmem:[%s3 + $0x110] sm:$0xff]
        %v6604 = vld [vmem:[%s3 + $0x118] sm:$0xff]
        %v6605 = vld [vmem:[%s4] sm:$0x1]
        %v6607 = vperm.slane %v6605, 0
        %v6610 = vsel %vm4317, %v6523, 0
        %v6613 = vsel %vm4317, %v6526, 0
        %v6616 = vsel %vm4317, %v6529, 0
        %v6619 = vsel %vm4317, %v6532, 0
        %v6622 = vsel %vm4317, %v6535, 0
        %v6625 = vsel %vm4317, %v6538, 0
        %v6628 = vsel %vm4317, %v6541, 0
        %v6631 = vsel %vm4317, %v6544, 0
        %v6634 = vsel %vm4317, %v6547, 0
        %v6637 = vsel %vm4317, %v6550, 0
        %v6640 = vsel %vm4317, %v6553, 0
        %v6643 = vsel %vm4317, %v6556, 0
        %v6646 = vsel %vm4317, %v6559, 0
        %v6649 = vsel %vm4317, %v6562, 0
        %v6652 = vsel %vm4317, %v6565, 0
        %v6655 = vsel %vm4317, %v6568, 0
        %6657 = vmatpush.msra.mxu0 %v6584
        %6658 = vmatpush.msra.mxu0 %v6583
        %6659 = vmatpush.msra.mxu0 %v6582
        %6660 = vmatpush.msra.mxu0 %v6581
        %6661 = vmatpush.msra.mxu0 %v6580
        %6662 = vmatpush.msra.mxu0 %v6579
        %6663 = vmatpush.msra.mxu0 %v6578
        %6664 = vmatpush.msra.mxu0 %v6577
        %6665 = vmatpush.msra.mxu0 %v6576
        %6666 = vmatpush.msra.mxu0 %v6575
        %6667 = vmatpush.msra.mxu0 %v6574
        %6668 = vmatpush.msra.mxu0 %v6573
        %6669 = vmatpush.msra.mxu0 %v6572
        %6670 = vmatpush.msra.mxu0 %v6571
        %6671 = vmatpush.msra.mxu0 %v6570
        %6672 = vmatpush.msra.mxu0 %v6569
        %6673 = vmatmul.f32.gmra.mxu0 %v6521
        %v6674 = vpop.f32.mrf.mxu0
        %v6675 = vadd.f32 %v6607, %v6674
        %6676 = vmatmul.f32.gmra.mxu0 %v6524
        %v6677 = vpop.f32.mrf.mxu0
        %v6678 = vadd.f32 %v6607, %v6677
        %6679 = vmatmul.f32.gmra.mxu0 %v6527
        %v6680 = vpop.f32.mrf.mxu0
        %v6681 = vadd.f32 %v6607, %v6680
        %6682 = vmatmul.f32.gmra.mxu0 %v6530
        %v6683 = vpop.f32.mrf.mxu0
        %v6684 = vadd.f32 %v6607, %v6683
        %6685 = vmatmul.f32.gmra.mxu0 %v6533
        %v6686 = vpop.f32.mrf.mxu0
        %v6687 = vadd.f32 %v6607, %v6686
        %6688 = vmatmul.f32.gmra.mxu0 %v6536
        %v6689 = vpop.f32.mrf.mxu0
        %v6690 = vadd.f32 %v6607, %v6689
        %6691 = vmatmul.f32.gmra.mxu0 %v6539
        %v6692 = vpop.f32.mrf.mxu0
        %v6693 = vadd.f32 %v6607, %v6692
        %6694 = vmatmul.f32.gmra.mxu0 %v6542
        %v6695 = vpop.f32.mrf.mxu0
        %v6696 = vadd.f32 %v6607, %v6695
        %6697 = vmatmul.f32.gmra.mxu0 %v6545
        %v6698 = vpop.f32.mrf.mxu0
        %v6699 = vadd.f32 %v6607, %v6698
        %6700 = vmatmul.f32.gmra.mxu0 %v6548
        %v6701 = vpop.f32.mrf.mxu0
        %v6702 = vadd.f32 %v6607, %v6701
        %6703 = vmatmul.f32.gmra.mxu0 %v6551
        %v6704 = vpop.f32.mrf.mxu0
        %v6705 = vadd.f32 %v6607, %v6704
        %6706 = vmatmul.f32.gmra.mxu0 %v6554
        %v6707 = vpop.f32.mrf.mxu0
        %v6708 = vadd.f32 %v6607, %v6707
        %6709 = vmatmul.f32.gmra.mxu0 %v6557
        %v6710 = vpop.f32.mrf.mxu0
        %v6711 = vadd.f32 %v6607, %v6710
        %6712 = vmatmul.f32.gmra.mxu0 %v6560
        %v6713 = vpop.f32.mrf.mxu0
        %v6714 = vadd.f32 %v6607, %v6713
        %6715 = vmatmul.f32.gmra.mxu0 %v6563
        %v6716 = vpop.f32.mrf.mxu0
        %v6717 = vadd.f32 %v6607, %v6716
        %6718 = vmatmul.f32.gmra.mxu0 %v6566
        %v6719 = vpop.f32.mrf.mxu0
        %v6720 = vadd.f32 %v6607, %v6719
        %6721 = vdwg.mxu0
        %6722 = vmatpush.msra.mxu0 %v6600
        %6723 = vmatpush.msra.mxu0 %v6599
        %6724 = vmatpush.msra.mxu0 %v6598
        %6725 = vmatpush.msra.mxu0 %v6597
        %6726 = vmatpush.msra.mxu0 %v6596
        %6727 = vmatpush.msra.mxu0 %v6595
        %6728 = vmatpush.msra.mxu0 %v6594
        %6729 = vmatpush.msra.mxu0 %v6593
        %6730 = vmatpush.msra.mxu0 %v6592
        %6731 = vmatpush.msra.mxu0 %v6591
        %6732 = vmatpush.msra.mxu0 %v6590
        %6733 = vmatpush.msra.mxu0 %v6589
        %6734 = vmatpush.msra.mxu0 %v6588
        %6735 = vmatpush.msra.mxu0 %v6587
        %6736 = vmatpush.msra.mxu0 %v6586
        %6737 = vmatpush.msra.mxu0 %v6585
        %6738 = vmatmul.f32.gmra.mxu0 %v6522
        %v6739 = vpop.f32.mrf.mxu0
        %v6740 = vadd.f32 %v6675, %v6739
        %6741 = vmatmul.f32.gmra.mxu0 %v6525
        %v6742 = vpop.f32.mrf.mxu0
        %v6743 = vadd.f32 %v6678, %v6742
        %6744 = vmatmul.f32.gmra.mxu0 %v6528
        %v6745 = vpop.f32.mrf.mxu0
        %v6746 = vadd.f32 %v6681, %v6745
        %6747 = vmatmul.f32.gmra.mxu0 %v6531
        %v6748 = vpop.f32.mrf.mxu0
        %v6749 = vadd.f32 %v6684, %v6748
        %6750 = vmatmul.f32.gmra.mxu0 %v6534
        %v6751 = vpop.f32.mrf.mxu0
        %v6752 = vadd.f32 %v6687, %v6751
        %6753 = vmatmul.f32.gmra.mxu0 %v6537
        %v6754 = vpop.f32.mrf.mxu0
        %v6755 = vadd.f32 %v6690, %v6754
        %6756 = vmatmul.f32.gmra.mxu0 %v6540
        %v6757 = vpop.f32.mrf.mxu0
        %v6758 = vadd.f32 %v6693, %v6757
        %6759 = vmatmul.f32.gmra.mxu0 %v6543
        %v6760 = vpop.f32.mrf.mxu0
        %v6761 = vadd.f32 %v6696, %v6760
        %6762 = vmatmul.f32.gmra.mxu0 %v6546
        %v6763 = vpop.f32.mrf.mxu0
        %v6764 = vadd.f32 %v6699, %v6763
        %6765 = vmatmul.f32.gmra.mxu0 %v6549
        %v6766 = vpop.f32.mrf.mxu0
        %v6767 = vadd.f32 %v6702, %v6766
        %6768 = vmatmul.f32.gmra.mxu0 %v6552
        %v6769 = vpop.f32.mrf.mxu0
        %v6770 = vadd.f32 %v6705, %v6769
        %6771 = vmatmul.f32.gmra.mxu0 %v6555
        %v6772 = vpop.f32.mrf.mxu0
        %v6773 = vadd.f32 %v6708, %v6772
        %6774 = vmatmul.f32.gmra.mxu0 %v6558
        %v6775 = vpop.f32.mrf.mxu0
        %v6776 = vadd.f32 %v6711, %v6775
        %6777 = vmatmul.f32.gmra.mxu0 %v6561
        %v6778 = vpop.f32.mrf.mxu0
        %v6779 = vadd.f32 %v6714, %v6778
        %6780 = vmatmul.f32.gmra.mxu0 %v6564
        %v6781 = vpop.f32.mrf.mxu0
        %v6782 = vadd.f32 %v6717, %v6781
        %6783 = vmatmul.f32.gmra.mxu0 %v6567
        %v6784 = vpop.f32.mrf.mxu0
        %v6785 = vadd.f32 %v6720, %v6784
        %6786 = vdwg.mxu0
        %6787 = vmatpush.msra.mxu0 0.0
        %6788 = vmatpush.msra.mxu0 0.0
        %6789 = vmatpush.msra.mxu0 0.0
        %6790 = vmatpush.msra.mxu0 0.0
        %6791 = vmatpush.msra.mxu0 0.0
        %6792 = vmatpush.msra.mxu0 0.0
        %6793 = vmatpush.msra.mxu0 0.0
        %6794 = vmatpush.msra.mxu0 0.0
        %6795 = vmatpush.msra.mxu0 0.0
        %6796 = vmatpush.msra.mxu0 0.0
        %6797 = vmatpush.msra.mxu0 0.0
        %6798 = vmatpush.msra.mxu0 0.0
        %6799 = vmatpush.msra.mxu0 %v6604
        %6800 = vmatpush.msra.mxu0 %v6603
        %6801 = vmatpush.msra.mxu0 %v6602
        %6802 = vmatpush.msra.mxu0 %v6601
        %6803 = vmatmul.f32.gmra.mxu0 %v6610
        %v6804 = vpop.f32.mrf.mxu0
        %v6805 = vadd.f32 %v6740, %v6804
        %6806 = vmatmul.f32.gmra.mxu0 %v6613
        %v6807 = vpop.f32.mrf.mxu0
        %v6808 = vadd.f32 %v6743, %v6807
        %6809 = vmatmul.f32.gmra.mxu0 %v6616
        %v6810 = vpop.f32.mrf.mxu0
        %v6811 = vadd.f32 %v6746, %v6810
        %6812 = vmatmul.f32.gmra.mxu0 %v6619
        %v6813 = vpop.f32.mrf.mxu0
        %v6814 = vadd.f32 %v6749, %v6813
        %6815 = vmatmul.f32.gmra.mxu0 %v6622
        %v6816 = vpop.f32.mrf.mxu0
        %v6817 = vadd.f32 %v6752, %v6816
        %6818 = vmatmul.f32.gmra.mxu0 %v6625
        %v6819 = vpop.f32.mrf.mxu0
        %v6820 = vadd.f32 %v6755, %v6819
        %6821 = vmatmul.f32.gmra.mxu0 %v6628
        %v6822 = vpop.f32.mrf.mxu0
        %v6823 = vadd.f32 %v6758, %v6822
        %6824 = vmatmul.f32.gmra.mxu0 %v6631
        %v6825 = vpop.f32.mrf.mxu0
        %v6826 = vadd.f32 %v6761, %v6825
        %6827 = vmatmul.f32.gmra.mxu0 %v6634
        %v6828 = vpop.f32.mrf.mxu0
        %v6829 = vadd.f32 %v6764, %v6828
        %6830 = vmatmul.f32.gmra.mxu0 %v6637
        %v6831 = vpop.f32.mrf.mxu0
        %v6832 = vadd.f32 %v6767, %v6831
        %6833 = vmatmul.f32.gmra.mxu0 %v6640
        %v6834 = vpop.f32.mrf.mxu0
        %v6835 = vadd.f32 %v6770, %v6834
        %6836 = vmatmul.f32.gmra.mxu0 %v6643
        %v6837 = vpop.f32.mrf.mxu0
        %v6838 = vadd.f32 %v6773, %v6837
        %6839 = vmatmul.f32.gmra.mxu0 %v6646
        %v6840 = vpop.f32.mrf.mxu0
        %v6841 = vadd.f32 %v6776, %v6840
        %6842 = vmatmul.f32.gmra.mxu0 %v6649
        %v6843 = vpop.f32.mrf.mxu0
        %v6844 = vadd.f32 %v6779, %v6843
        %6845 = vmatmul.f32.gmra.mxu0 %v6652
        %v6846 = vpop.f32.mrf.mxu0
        %v6847 = vadd.f32 %v6782, %v6846
        %6848 = vmatmul.f32.gmra.mxu0 %v6655
        %v6849 = vpop.f32.mrf.mxu0
        %v6850 = vadd.f32 %v6785, %v6849
        %6851 = vdwg.mxu0
        %v6852 = vmax.f32 %v6805, 0.0
        %v6853 = vmax.f32 %v6808, 0.0
        %v6854 = vmax.f32 %v6811, 0.0
        %v6855 = vmax.f32 %v6814, 0.0
        %v6856 = vmax.f32 %v6817, 0.0
        %v6857 = vmax.f32 %v6820, 0.0
        %v6858 = vmax.f32 %v6823, 0.0
        %v6859 = vmax.f32 %v6826, 0.0
        %v6860 = vmax.f32 %v6829, 0.0
        %v6861 = vmax.f32 %v6832, 0.0
        %v6862 = vmax.f32 %v6835, 0.0
        %v6863 = vmax.f32 %v6838, 0.0
        %v6864 = vmax.f32 %v6841, 0.0
        %v6865 = vmax.f32 %v6844, 0.0
        %v6866 = vmax.f32 %v6847, 0.0
        %v6867 = vmax.f32 %v6850, 0.0
        %vm6868 = vcmask 523264
        %v6869 = vsel %vm6868, %v6852, -inf
        %v6870 = vsel %vm6868, %v6854, -inf
        %v6871 = vmax.f32 %v6869, %v6870
        %v6872 = vsel %vm6868, %v6853, -inf
        %v6873 = vsel %vm6868, %v6855, -inf
        %v6874 = vmax.f32 %v6872, %v6873
        %v6875 = vsel %vm6868, %v6856, -inf
        %v6876 = vsel %vm6868, %v6858, -inf
        %v6877 = vmax.f32 %v6875, %v6876
        %v6878 = vsel %vm6868, %v6857, -inf
        %v6879 = vsel %vm6868, %v6859, -inf
        %v6880 = vmax.f32 %v6878, %v6879
        %v6881 = vsel %vm6868, %v6860, -inf
        %v6882 = vsel %vm6868, %v6862, -inf
        %v6883 = vmax.f32 %v6881, %v6882
        %v6884 = vsel %vm6868, %v6861, -inf
        %v6885 = vsel %vm6868, %v6863, -inf
        %v6886 = vmax.f32 %v6884, %v6885
        %v6887 = vsel %vm6868, %v6864, -inf
        %v6888 = vsel %vm6868, %v6866, -inf
        %v6889 = vmax.f32 %v6887, %v6888
        %v6890 = vsel %vm6868, %v6865, -inf
        %v6891 = vsel %vm6868, %v6867, -inf
        %v6892 = vmax.f32 %v6890, %v6891
        %v6901 = vrot.slane %v6871, 2
        %v6902 = vrot.slane %v6871, 4
        %v6903 = vrot.slane %v6871, 6
        %v6904 = vrot.slane %v6874, 2
        %v6905 = vrot.slane %v6874, 4
        %v6906 = vrot.slane %v6874, 6
        %v6907 = vrot.slane %v6877, 2
        %v6908 = vrot.slane %v6877, 4
        %v6909 = vrot.slane %v6877, 6
        %v6910 = vrot.slane %v6880, 2
        %v6911 = vrot.slane %v6880, 4
        %v6912 = vrot.slane %v6880, 6
        %v6913 = vrot.slane %v6883, 2
        %v6914 = vrot.slane %v6883, 4
        %v6915 = vrot.slane %v6883, 6
        %v6916 = vrot.slane %v6886, 2
        %v6917 = vrot.slane %v6886, 4
        %v6918 = vrot.slane %v6886, 6
        %v6919 = vrot.slane %v6889, 2
        %v6920 = vrot.slane %v6889, 4
        %v6921 = vrot.slane %v6889, 6
        %v6922 = vrot.slane %v6892, 2
        %v6923 = vrot.slane %v6892, 4
        %v6924 = vrot.slane %v6892, 6
        %vm6949 = vcmask 517120
        %v6950 = vsel %vm6949, %v6871, -inf
        %v6951 = vrot.slane %v6950, 4
        %v6952 = vmax.f32 %v6950, %v6951
        %v6953 = vrot.slane %v6952, 2
        %v6954 = vmax.f32 %v6952, %v6953
        %v6955 = vrot.slane %v6954, 1
        %v6956 = vmax.f32 %v6954, %v6955
        %v6957 = vsel %vm6949, %v6901, -inf
        %v6958 = vrot.slane %v6957, 4
        %v6959 = vmax.f32 %v6957, %v6958
        %v6960 = vrot.slane %v6959, 2
        %v6961 = vmax.f32 %v6959, %v6960
        %v6962 = vrot.slane %v6961, 1
        %v6963 = vmax.f32 %v6961, %v6962
        %v6964 = vsel %vm6949, %v6902, -inf
        %v6965 = vrot.slane %v6964, 4
        %v6966 = vmax.f32 %v6964, %v6965
        %v6967 = vrot.slane %v6966, 2
        %v6968 = vmax.f32 %v6966, %v6967
        %v6969 = vrot.slane %v6968, 1
        %v6970 = vmax.f32 %v6968, %v6969
        %v6971 = vsel %vm6949, %v6903, -inf
        %v6972 = vrot.slane %v6971, 4
        %v6973 = vmax.f32 %v6971, %v6972
        %v6974 = vrot.slane %v6973, 2
        %v6975 = vmax.f32 %v6973, %v6974
        %v6976 = vrot.slane %v6975, 1
        %v6977 = vmax.f32 %v6975, %v6976
        %v6978 = vsel %vm6949, %v6874, -inf
        %v6979 = vrot.slane %v6978, 4
        %v6980 = vmax.f32 %v6978, %v6979
        %v6981 = vrot.slane %v6980, 2
        %v6982 = vmax.f32 %v6980, %v6981
        %v6983 = vrot.slane %v6982, 1
        %v6984 = vmax.f32 %v6982, %v6983
        %v6985 = vsel %vm6949, %v6904, -inf
        %v6986 = vrot.slane %v6985, 4
        %v6987 = vmax.f32 %v6985, %v6986
        %v6988 = vrot.slane %v6987, 2
        %v6989 = vmax.f32 %v6987, %v6988
        %v6990 = vrot.slane %v6989, 1
        %v6991 = vmax.f32 %v6989, %v6990
        %v6992 = vsel %vm6949, %v6905, -inf
        %v6993 = vrot.slane %v6992, 4
        %v6994 = vmax.f32 %v6992, %v6993
        %v6995 = vrot.slane %v6994, 2
        %v6996 = vmax.f32 %v6994, %v6995
        %v6997 = vrot.slane %v6996, 1
        %v6998 = vmax.f32 %v6996, %v6997
        %v6999 = vsel %vm6949, %v6906, -inf
        %v7000 = vrot.slane %v6999, 4
        %v7001 = vmax.f32 %v6999, %v7000
        %v7002 = vrot.slane %v7001, 2
        %v7003 = vmax.f32 %v7001, %v7002
        %v7004 = vrot.slane %v7003, 1
        %v7005 = vmax.f32 %v7003, %v7004
        %v7006 = vsel %vm6949, %v6877, -inf
        %v7007 = vrot.slane %v7006, 4
        %v7008 = vmax.f32 %v7006, %v7007
        %v7009 = vrot.slane %v7008, 2
        %v7010 = vmax.f32 %v7008, %v7009
        %v7011 = vrot.slane %v7010, 1
        %v7012 = vmax.f32 %v7010, %v7011
        %v7013 = vsel %vm6949, %v6907, -inf
        %v7014 = vrot.slane %v7013, 4
        %v7015 = vmax.f32 %v7013, %v7014
        %v7016 = vrot.slane %v7015, 2
        %v7017 = vmax.f32 %v7015, %v7016
        %v7018 = vrot.slane %v7017, 1
        %v7019 = vmax.f32 %v7017, %v7018
        %v7020 = vsel %vm6949, %v6908, -inf
        %v7021 = vrot.slane %v7020, 4
        %v7022 = vmax.f32 %v7020, %v7021
        %v7023 = vrot.slane %v7022, 2
        %v7024 = vmax.f32 %v7022, %v7023
        %v7025 = vrot.slane %v7024, 1
        %v7026 = vmax.f32 %v7024, %v7025
        %v7027 = vsel %vm6949, %v6909, -inf
        %v7028 = vrot.slane %v7027, 4
        %v7029 = vmax.f32 %v7027, %v7028
        %v7030 = vrot.slane %v7029, 2
        %v7031 = vmax.f32 %v7029, %v7030
        %v7032 = vrot.slane %v7031, 1
        %v7033 = vmax.f32 %v7031, %v7032
        %v7034 = vsel %vm6949, %v6880, -inf
        %v7035 = vrot.slane %v7034, 4
        %v7036 = vmax.f32 %v7034, %v7035
        %v7037 = vrot.slane %v7036, 2
        %v7038 = vmax.f32 %v7036, %v7037
        %v7039 = vrot.slane %v7038, 1
        %v7040 = vmax.f32 %v7038, %v7039
        %v7041 = vsel %vm6949, %v6910, -inf
        %v7042 = vrot.slane %v7041, 4
        %v7043 = vmax.f32 %v7041, %v7042
        %v7044 = vrot.slane %v7043, 2
        %v7045 = vmax.f32 %v7043, %v7044
        %v7046 = vrot.slane %v7045, 1
        %v7047 = vmax.f32 %v7045, %v7046
        %v7048 = vsel %vm6949, %v6911, -inf
        %v7049 = vrot.slane %v7048, 4
        %v7050 = vmax.f32 %v7048, %v7049
        %v7051 = vrot.slane %v7050, 2
        %v7052 = vmax.f32 %v7050, %v7051
        %v7053 = vrot.slane %v7052, 1
        %v7054 = vmax.f32 %v7052, %v7053
        %v7055 = vsel %vm6949, %v6912, -inf
        %v7056 = vrot.slane %v7055, 4
        %v7057 = vmax.f32 %v7055, %v7056
        %v7058 = vrot.slane %v7057, 2
        %v7059 = vmax.f32 %v7057, %v7058
        %v7060 = vrot.slane %v7059, 1
        %v7061 = vmax.f32 %v7059, %v7060
        %v7062 = vsel %vm6949, %v6883, -inf
        %v7063 = vrot.slane %v7062, 4
        %v7064 = vmax.f32 %v7062, %v7063
        %v7065 = vrot.slane %v7064, 2
        %v7066 = vmax.f32 %v7064, %v7065
        %v7067 = vrot.slane %v7066, 1
        %v7068 = vmax.f32 %v7066, %v7067
        %v7069 = vsel %vm6949, %v6913, -inf
        %v7070 = vrot.slane %v7069, 4
        %v7071 = vmax.f32 %v7069, %v7070
        %v7072 = vrot.slane %v7071, 2
        %v7073 = vmax.f32 %v7071, %v7072
        %v7074 = vrot.slane %v7073, 1
        %v7075 = vmax.f32 %v7073, %v7074
        %v7076 = vsel %vm6949, %v6914, -inf
        %v7077 = vrot.slane %v7076, 4
        %v7078 = vmax.f32 %v7076, %v7077
        %v7079 = vrot.slane %v7078, 2
        %v7080 = vmax.f32 %v7078, %v7079
        %v7081 = vrot.slane %v7080, 1
        %v7082 = vmax.f32 %v7080, %v7081
        %v7083 = vsel %vm6949, %v6915, -inf
        %v7084 = vrot.slane %v7083, 4
        %v7085 = vmax.f32 %v7083, %v7084
        %v7086 = vrot.slane %v7085, 2
        %v7087 = vmax.f32 %v7085, %v7086
        %v7088 = vrot.slane %v7087, 1
        %v7089 = vmax.f32 %v7087, %v7088
        %v7090 = vsel %vm6949, %v6886, -inf
        %v7091 = vrot.slane %v7090, 4
        %v7092 = vmax.f32 %v7090, %v7091
        %v7093 = vrot.slane %v7092, 2
        %v7094 = vmax.f32 %v7092, %v7093
        %v7095 = vrot.slane %v7094, 1
        %v7096 = vmax.f32 %v7094, %v7095
        %v7097 = vsel %vm6949, %v6916, -inf
        %v7098 = vrot.slane %v7097, 4
        %v7099 = vmax.f32 %v7097, %v7098
        %v7100 = vrot.slane %v7099, 2
        %v7101 = vmax.f32 %v7099, %v7100
        %v7102 = vrot.slane %v7101, 1
        %v7103 = vmax.f32 %v7101, %v7102
        %v7104 = vsel %vm6949, %v6917, -inf
        %v7105 = vrot.slane %v7104, 4
        %v7106 = vmax.f32 %v7104, %v7105
        %v7107 = vrot.slane %v7106, 2
        %v7108 = vmax.f32 %v7106, %v7107
        %v7109 = vrot.slane %v7108, 1
        %v7110 = vmax.f32 %v7108, %v7109
        %v7111 = vsel %vm6949, %v6918, -inf
        %v7112 = vrot.slane %v7111, 4
        %v7113 = vmax.f32 %v7111, %v7112
        %v7114 = vrot.slane %v7113, 2
        %v7115 = vmax.f32 %v7113, %v7114
        %v7116 = vrot.slane %v7115, 1
        %v7117 = vmax.f32 %v7115, %v7116
        %v7118 = vsel %vm6949, %v6889, -inf
        %v7119 = vrot.slane %v7118, 4
        %v7120 = vmax.f32 %v7118, %v7119
        %v7121 = vrot.slane %v7120, 2
        %v7122 = vmax.f32 %v7120, %v7121
        %v7123 = vrot.slane %v7122, 1
        %v7124 = vmax.f32 %v7122, %v7123
        %v7125 = vsel %vm6949, %v6919, -inf
        %v7126 = vrot.slane %v7125, 4
        %v7127 = vmax.f32 %v7125, %v7126
        %v7128 = vrot.slane %v7127, 2
        %v7129 = vmax.f32 %v7127, %v7128
        %v7130 = vrot.slane %v7129, 1
        %v7131 = vmax.f32 %v7129, %v7130
        %v7132 = vsel %vm6949, %v6920, -inf
        %v7133 = vrot.slane %v7132, 4
        %v7134 = vmax.f32 %v7132, %v7133
        %v7135 = vrot.slane %v7134, 2
        %v7136 = vmax.f32 %v7134, %v7135
        %v7137 = vrot.slane %v7136, 1
        %v7138 = vmax.f32 %v7136, %v7137
        %v7139 = vsel %vm6949, %v6921, -inf
        %v7140 = vrot.slane %v7139, 4
        %v7141 = vmax.f32 %v7139, %v7140
        %v7142 = vrot.slane %v7141, 2
        %v7143 = vmax.f32 %v7141, %v7142
        %v7144 = vrot.slane %v7143, 1
        %v7145 = vmax.f32 %v7143, %v7144
        %v7146 = vsel %vm6949, %v6892, -inf
        %v7147 = vrot.slane %v7146, 4
        %v7148 = vmax.f32 %v7146, %v7147
        %v7149 = vrot.slane %v7148, 2
        %v7150 = vmax.f32 %v7148, %v7149
        %v7151 = vrot.slane %v7150, 1
        %v7152 = vmax.f32 %v7150, %v7151
        %v7153 = vsel %vm6949, %v6922, -inf
        %v7154 = vrot.slane %v7153, 4
        %v7155 = vmax.f32 %v7153, %v7154
        %v7156 = vrot.slane %v7155, 2
        %v7157 = vmax.f32 %v7155, %v7156
        %v7158 = vrot.slane %v7157, 1
        %v7159 = vmax.f32 %v7157, %v7158
        %v7160 = vsel %vm6949, %v6923, -inf
        %v7161 = vrot.slane %v7160, 4
        %v7162 = vmax.f32 %v7160, %v7161
        %v7163 = vrot.slane %v7162, 2
        %v7164 = vmax.f32 %v7162, %v7163
        %v7165 = vrot.slane %v7164, 1
        %v7166 = vmax.f32 %v7164, %v7165
        %v7167 = vsel %vm6949, %v6924, -inf
        %v7168 = vrot.slane %v7167, 4
        %v7169 = vmax.f32 %v7167, %v7168
        %v7170 = vrot.slane %v7169, 2
        %v7171 = vmax.f32 %v7169, %v7170
        %v7172 = vrot.slane %v7171, 1
        %v7173 = vmax.f32 %v7171, %v7172
        %v7174 = vld [vmem:[%s6] sm:$0x1]
        %v7175 = vld [vmem:[#allocation6] sm:$0xff]
        %v7176 = vld [vmem:[#allocation6 + $0x8] sm:$0xff]
        %v7177 = vld [vmem:[#allocation6 + $0x10] sm:$0xff]
        %v7178 = vld [vmem:[#allocation6 + $0x18] sm:$0xff]
        %v7179 = vld [vmem:[#allocation6 + $0x20] sm:$0xff]
        %v7180 = vld [vmem:[#allocation6 + $0x28] sm:$0xff]
        %v7181 = vld [vmem:[#allocation6 + $0x30] sm:$0xff]
        %v7182 = vld [vmem:[#allocation6 + $0x38] sm:$0xff]
        %v7184 = vsel %vm6868, %v6956, 0
        %7186 = vmatpush.msra.mxu0 0.0
        %7187 = vmatpush.msra.mxu0 0.0
        %7188 = vmatpush.msra.mxu0 0.0
        %7189 = vmatpush.msra.mxu0 0.0
        %7190 = vmatpush.msra.mxu0 0.0
        %7191 = vmatpush.msra.mxu0 0.0
        %7192 = vmatpush.msra.mxu0 0.0
        %7193 = vmatpush.msra.mxu0 0.0
        %7194 = vmatpush.msra.mxu0 %v7182
        %7195 = vmatpush.msra.mxu0 %v7181
        %7196 = vmatpush.msra.mxu0 %v7180
        %7197 = vmatpush.msra.mxu0 %v7179
        %7198 = vmatpush.msra.mxu0 %v7178
        %7199 = vmatpush.msra.mxu0 %v7177
        %7200 = vmatpush.msra.mxu0 %v7176
        %7201 = vmatpush.msra.mxu0 %v7175
        %7202 = vmatmul.f32.gmra.mxu0 %v7184
        %v7203 = vpop.f32.mrf.mxu0
        %v7204 = vadd.f32 0.0, %v7203
        %7205 = vdwg.mxu0
        %v7206 = vadd.f32 %v7174, %v7204
        %s7207 = scalar_lea.vmem [#allocation6], 64
        %v7208 = vld [vmem:[%s7207] sm:$0xff]
        %v7209 = vld [vmem:[%s7207 + $0x8] sm:$0xff]
        %v7210 = vld [vmem:[%s7207 + $0x10] sm:$0xff]
        %v7211 = vld [vmem:[%s7207 + $0x18] sm:$0xff]
        %v7212 = vld [vmem:[%s7207 + $0x20] sm:$0xff]
        %v7213 = vld [vmem:[%s7207 + $0x28] sm:$0xff]
        %v7214 = vld [vmem:[%s7207 + $0x30] sm:$0xff]
        %v7215 = vld [vmem:[%s7207 + $0x38] sm:$0xff]
        %v7217 = vsel %vm6868, %v6963, 0
        %7219 = vmatpush.msra.mxu0 0.0
        %7220 = vmatpush.msra.mxu0 0.0
        %7221 = vmatpush.msra.mxu0 0.0
        %7222 = vmatpush.msra.mxu0 0.0
        %7223 = vmatpush.msra.mxu0 0.0
        %7224 = vmatpush.msra.mxu0 0.0
        %7225 = vmatpush.msra.mxu0 0.0
        %7226 = vmatpush.msra.mxu0 0.0
        %7227 = vmatpush.msra.mxu0 %v7215
        %7228 = vmatpush.msra.mxu0 %v7214
        %7229 = vmatpush.msra.mxu0 %v7213
        %7230 = vmatpush.msra.mxu0 %v7212
        %7231 = vmatpush.msra.mxu0 %v7211
        %7232 = vmatpush.msra.mxu0 %v7210
        %7233 = vmatpush.msra.mxu0 %v7209
        %7234 = vmatpush.msra.mxu0 %v7208
        %7235 = vmatmul.f32.gmra.mxu0 %v7217
        %v7236 = vpop.f32.mrf.mxu0
        %v7237 = vadd.f32 0.0, %v7236
        %7238 = vdwg.mxu0
        %v7239 = vadd.f32 %v7206, %v7237
        %s7240 = scalar_lea.vmem [#allocation6], 128
        %v7241 = vld [vmem:[%s7240] sm:$0xff]
        %v7242 = vld [vmem:[%s7240 + $0x8] sm:$0xff]
        %v7243 = vld [vmem:[%s7240 + $0x10] sm:$0xff]
        %v7244 = vld [vmem:[%s7240 + $0x18] sm:$0xff]
        %v7245 = vld [vmem:[%s7240 + $0x20] sm:$0xff]
        %v7246 = vld [vmem:[%s7240 + $0x28] sm:$0xff]
        %v7247 = vld [vmem:[%s7240 + $0x30] sm:$0xff]
        %v7248 = vld [vmem:[%s7240 + $0x38] sm:$0xff]
        %v7250 = vsel %vm6868, %v6970, 0
        %7252 = vmatpush.msra.mxu0 0.0
        %7253 = vmatpush.msra.mxu0 0.0
        %7254 = vmatpush.msra.mxu0 0.0
        %7255 = vmatpush.msra.mxu0 0.0
        %7256 = vmatpush.msra.mxu0 0.0
        %7257 = vmatpush.msra.mxu0 0.0
        %7258 = vmatpush.msra.mxu0 0.0
        %7259 = vmatpush.msra.mxu0 0.0
        %7260 = vmatpush.msra.mxu0 %v7248
        %7261 = vmatpush.msra.mxu0 %v7247
        %7262 = vmatpush.msra.mxu0 %v7246
        %7263 = vmatpush.msra.mxu0 %v7245
        %7264 = vmatpush.msra.mxu0 %v7244
        %7265 = vmatpush.msra.mxu0 %v7243
        %7266 = vmatpush.msra.mxu0 %v7242
        %7267 = vmatpush.msra.mxu0 %v7241
        %7268 = vmatmul.f32.gmra.mxu0 %v7250
        %v7269 = vpop.f32.mrf.mxu0
        %v7270 = vadd.f32 0.0, %v7269
        %7271 = vdwg.mxu0
        %v7272 = vadd.f32 %v7239, %v7270
        %s7273 = scalar_lea.vmem [#allocation6], 192
        %v7274 = vld [vmem:[%s7273] sm:$0xff]
        %v7275 = vld [vmem:[%s7273 + $0x8] sm:$0xff]
        %v7276 = vld [vmem:[%s7273 + $0x10] sm:$0xff]
        %v7277 = vld [vmem:[%s7273 + $0x18] sm:$0xff]
        %v7278 = vld [vmem:[%s7273 + $0x20] sm:$0xff]
        %v7279 = vld [vmem:[%s7273 + $0x28] sm:$0xff]
        %v7280 = vld [vmem:[%s7273 + $0x30] sm:$0xff]
        %v7281 = vld [vmem:[%s7273 + $0x38] sm:$0xff]
        %v7283 = vsel %vm6868, %v6977, 0
        %7285 = vmatpush.msra.mxu0 0.0
        %7286 = vmatpush.msra.mxu0 0.0
        %7287 = vmatpush.msra.mxu0 0.0
        %7288 = vmatpush.msra.mxu0 0.0
        %7289 = vmatpush.msra.mxu0 0.0
        %7290 = vmatpush.msra.mxu0 0.0
        %7291 = vmatpush.msra.mxu0 0.0
        %7292 = vmatpush.msra.mxu0 0.0
        %7293 = vmatpush.msra.mxu0 %v7281
        %7294 = vmatpush.msra.mxu0 %v7280
        %7295 = vmatpush.msra.mxu0 %v7279
        %7296 = vmatpush.msra.mxu0 %v7278
        %7297 = vmatpush.msra.mxu0 %v7277
        %7298 = vmatpush.msra.mxu0 %v7276
        %7299 = vmatpush.msra.mxu0 %v7275
        %7300 = vmatpush.msra.mxu0 %v7274
        %7301 = vmatmul.f32.gmra.mxu0 %v7283
        %v7302 = vpop.f32.mrf.mxu0
        %v7303 = vadd.f32 0.0, %v7302
        %7304 = vdwg.mxu0
        %v7305 = vadd.f32 %v7272, %v7303
        %s7306 = scalar_lea.vmem [#allocation6], 256
        %v7307 = vld [vmem:[%s7306] sm:$0xff]
        %v7308 = vld [vmem:[%s7306 + $0x8] sm:$0xff]
        %v7309 = vld [vmem:[%s7306 + $0x10] sm:$0xff]
        %v7310 = vld [vmem:[%s7306 + $0x18] sm:$0xff]
        %v7311 = vld [vmem:[%s7306 + $0x20] sm:$0xff]
        %v7312 = vld [vmem:[%s7306 + $0x28] sm:$0xff]
        %v7313 = vld [vmem:[%s7306 + $0x30] sm:$0xff]
        %v7314 = vld [vmem:[%s7306 + $0x38] sm:$0xff]
        %v7316 = vsel %vm6868, %v6984, 0
        %7318 = vmatpush.msra.mxu0 0.0
        %7319 = vmatpush.msra.mxu0 0.0
        %7320 = vmatpush.msra.mxu0 0.0
        %7321 = vmatpush.msra.mxu0 0.0
        %7322 = vmatpush.msra.mxu0 0.0
        %7323 = vmatpush.msra.mxu0 0.0
        %7324 = vmatpush.msra.mxu0 0.0
        %7325 = vmatpush.msra.mxu0 0.0
        %7326 = vmatpush.msra.mxu0 %v7314
        %7327 = vmatpush.msra.mxu0 %v7313
        %7328 = vmatpush.msra.mxu0 %v7312
        %7329 = vmatpush.msra.mxu0 %v7311
        %7330 = vmatpush.msra.mxu0 %v7310
        %7331 = vmatpush.msra.mxu0 %v7309
        %7332 = vmatpush.msra.mxu0 %v7308
        %7333 = vmatpush.msra.mxu0 %v7307
        %7334 = vmatmul.f32.gmra.mxu0 %v7316
        %v7335 = vpop.f32.mrf.mxu0
        %v7336 = vadd.f32 0.0, %v7335
        %7337 = vdwg.mxu0
        %v7338 = vadd.f32 %v7305, %v7336
        %s7339 = scalar_lea.vmem [#allocation6], 320
        %v7340 = vld [vmem:[%s7339] sm:$0xff]
        %v7341 = vld [vmem:[%s7339 + $0x8] sm:$0xff]
        %v7342 = vld [vmem:[%s7339 + $0x10] sm:$0xff]
        %v7343 = vld [vmem:[%s7339 + $0x18] sm:$0xff]
        %v7344 = vld [vmem:[%s7339 + $0x20] sm:$0xff]
        %v7345 = vld [vmem:[%s7339 + $0x28] sm:$0xff]
        %v7346 = vld [vmem:[%s7339 + $0x30] sm:$0xff]
        %v7347 = vld [vmem:[%s7339 + $0x38] sm:$0xff]
        %v7349 = vsel %vm6868, %v6991, 0
        %7351 = vmatpush.msra.mxu0 0.0
        %7352 = vmatpush.msra.mxu0 0.0
        %7353 = vmatpush.msra.mxu0 0.0
        %7354 = vmatpush.msra.mxu0 0.0
        %7355 = vmatpush.msra.mxu0 0.0
        %7356 = vmatpush.msra.mxu0 0.0
        %7357 = vmatpush.msra.mxu0 0.0
        %7358 = vmatpush.msra.mxu0 0.0
        %7359 = vmatpush.msra.mxu0 %v7347
        %7360 = vmatpush.msra.mxu0 %v7346
        %7361 = vmatpush.msra.mxu0 %v7345
        %7362 = vmatpush.msra.mxu0 %v7344
        %7363 = vmatpush.msra.mxu0 %v7343
        %7364 = vmatpush.msra.mxu0 %v7342
        %7365 = vmatpush.msra.mxu0 %v7341
        %7366 = vmatpush.msra.mxu0 %v7340
        %7367 = vmatmul.f32.gmra.mxu0 %v7349
        %v7368 = vpop.f32.mrf.mxu0
        %v7369 = vadd.f32 0.0, %v7368
        %7370 = vdwg.mxu0
        %v7371 = vadd.f32 %v7338, %v7369
        %s7372 = scalar_lea.vmem [#allocation6], 384
        %v7373 = vld [vmem:[%s7372] sm:$0xff]
        %v7374 = vld [vmem:[%s7372 + $0x8] sm:$0xff]
        %v7375 = vld [vmem:[%s7372 + $0x10] sm:$0xff]
        %v7376 = vld [vmem:[%s7372 + $0x18] sm:$0xff]
        %v7377 = vld [vmem:[%s7372 + $0x20] sm:$0xff]
        %v7378 = vld [vmem:[%s7372 + $0x28] sm:$0xff]
        %v7379 = vld [vmem:[%s7372 + $0x30] sm:$0xff]
        %v7380 = vld [vmem:[%s7372 + $0x38] sm:$0xff]
        %v7382 = vsel %vm6868, %v6998, 0
        %7384 = vmatpush.msra.mxu0 0.0
        %7385 = vmatpush.msra.mxu0 0.0
        %7386 = vmatpush.msra.mxu0 0.0
        %7387 = vmatpush.msra.mxu0 0.0
        %7388 = vmatpush.msra.mxu0 0.0
        %7389 = vmatpush.msra.mxu0 0.0
        %7390 = vmatpush.msra.mxu0 0.0
        %7391 = vmatpush.msra.mxu0 0.0
        %7392 = vmatpush.msra.mxu0 %v7380
        %7393 = vmatpush.msra.mxu0 %v7379
        %7394 = vmatpush.msra.mxu0 %v7378
        %7395 = vmatpush.msra.mxu0 %v7377
        %7396 = vmatpush.msra.mxu0 %v7376
        %7397 = vmatpush.msra.mxu0 %v7375
        %7398 = vmatpush.msra.mxu0 %v7374
        %7399 = vmatpush.msra.mxu0 %v7373
        %7400 = vmatmul.f32.gmra.mxu0 %v7382
        %v7401 = vpop.f32.mrf.mxu0
        %v7402 = vadd.f32 0.0, %v7401
        %7403 = vdwg.mxu0
        %v7404 = vadd.f32 %v7371, %v7402
        %s7405 = scalar_lea.vmem [#allocation6], 448
        %v7406 = vld [vmem:[%s7405] sm:$0xff]
        %v7407 = vld [vmem:[%s7405 + $0x8] sm:$0xff]
        %v7408 = vld [vmem:[%s7405 + $0x10] sm:$0xff]
        %v7409 = vld [vmem:[%s7405 + $0x18] sm:$0xff]
        %v7410 = vld [vmem:[%s7405 + $0x20] sm:$0xff]
        %v7411 = vld [vmem:[%s7405 + $0x28] sm:$0xff]
        %v7412 = vld [vmem:[%s7405 + $0x30] sm:$0xff]
        %v7413 = vld [vmem:[%s7405 + $0x38] sm:$0xff]
        %v7415 = vsel %vm6868, %v7005, 0
        %7417 = vmatpush.msra.mxu0 0.0
        %7418 = vmatpush.msra.mxu0 0.0
        %7419 = vmatpush.msra.mxu0 0.0
        %7420 = vmatpush.msra.mxu0 0.0
        %7421 = vmatpush.msra.mxu0 0.0
        %7422 = vmatpush.msra.mxu0 0.0
        %7423 = vmatpush.msra.mxu0 0.0
        %7424 = vmatpush.msra.mxu0 0.0
        %7425 = vmatpush.msra.mxu0 %v7413
        %7426 = vmatpush.msra.mxu0 %v7412
        %7427 = vmatpush.msra.mxu0 %v7411
        %7428 = vmatpush.msra.mxu0 %v7410
        %7429 = vmatpush.msra.mxu0 %v7409
        %7430 = vmatpush.msra.mxu0 %v7408
        %7431 = vmatpush.msra.mxu0 %v7407
        %7432 = vmatpush.msra.mxu0 %v7406
        %7433 = vmatmul.f32.gmra.mxu0 %v7415
        %v7434 = vpop.f32.mrf.mxu0
        %v7435 = vadd.f32 0.0, %v7434
        %7436 = vdwg.mxu0
        %v7437 = vadd.f32 %v7404, %v7435
        %s7438 = scalar_lea.vmem [#allocation6], 512
        %v7439 = vld [vmem:[%s7438] sm:$0xff]
        %v7440 = vld [vmem:[%s7438 + $0x8] sm:$0xff]
        %v7441 = vld [vmem:[%s7438 + $0x10] sm:$0xff]
        %v7442 = vld [vmem:[%s7438 + $0x18] sm:$0xff]
        %v7443 = vld [vmem:[%s7438 + $0x20] sm:$0xff]
        %v7444 = vld [vmem:[%s7438 + $0x28] sm:$0xff]
        %v7445 = vld [vmem:[%s7438 + $0x30] sm:$0xff]
        %v7446 = vld [vmem:[%s7438 + $0x38] sm:$0xff]
        %v7448 = vsel %vm6868, %v7012, 0
        %7450 = vmatpush.msra.mxu0 0.0
        %7451 = vmatpush.msra.mxu0 0.0
        %7452 = vmatpush.msra.mxu0 0.0
        %7453 = vmatpush.msra.mxu0 0.0
        %7454 = vmatpush.msra.mxu0 0.0
        %7455 = vmatpush.msra.mxu0 0.0
        %7456 = vmatpush.msra.mxu0 0.0
        %7457 = vmatpush.msra.mxu0 0.0
        %7458 = vmatpush.msra.mxu0 %v7446
        %7459 = vmatpush.msra.mxu0 %v7445
        %7460 = vmatpush.msra.mxu0 %v7444
        %7461 = vmatpush.msra.mxu0 %v7443
        %7462 = vmatpush.msra.mxu0 %v7442
        %7463 = vmatpush.msra.mxu0 %v7441
        %7464 = vmatpush.msra.mxu0 %v7440
        %7465 = vmatpush.msra.mxu0 %v7439
        %7466 = vmatmul.f32.gmra.mxu0 %v7448
        %v7467 = vpop.f32.mrf.mxu0
        %v7468 = vadd.f32 0.0, %v7467
        %7469 = vdwg.mxu0
        %v7470 = vadd.f32 %v7437, %v7468
        %s7471 = scalar_lea.vmem [#allocation6], 576
        %v7472 = vld [vmem:[%s7471] sm:$0xff]
        %v7473 = vld [vmem:[%s7471 + $0x8] sm:$0xff]
        %v7474 = vld [vmem:[%s7471 + $0x10] sm:$0xff]
        %v7475 = vld [vmem:[%s7471 + $0x18] sm:$0xff]
        %v7476 = vld [vmem:[%s7471 + $0x20] sm:$0xff]
        %v7477 = vld [vmem:[%s7471 + $0x28] sm:$0xff]
        %v7478 = vld [vmem:[%s7471 + $0x30] sm:$0xff]
        %v7479 = vld [vmem:[%s7471 + $0x38] sm:$0xff]
        %v7481 = vsel %vm6868, %v7019, 0
        %7483 = vmatpush.msra.mxu0 0.0
        %7484 = vmatpush.msra.mxu0 0.0
        %7485 = vmatpush.msra.mxu0 0.0
        %7486 = vmatpush.msra.mxu0 0.0
        %7487 = vmatpush.msra.mxu0 0.0
        %7488 = vmatpush.msra.mxu0 0.0
        %7489 = vmatpush.msra.mxu0 0.0
        %7490 = vmatpush.msra.mxu0 0.0
        %7491 = vmatpush.msra.mxu0 %v7479
        %7492 = vmatpush.msra.mxu0 %v7478
        %7493 = vmatpush.msra.mxu0 %v7477
        %7494 = vmatpush.msra.mxu0 %v7476
        %7495 = vmatpush.msra.mxu0 %v7475
        %7496 = vmatpush.msra.mxu0 %v7474
        %7497 = vmatpush.msra.mxu0 %v7473
        %7498 = vmatpush.msra.mxu0 %v7472
        %7499 = vmatmul.f32.gmra.mxu0 %v7481
        %v7500 = vpop.f32.mrf.mxu0
        %v7501 = vadd.f32 0.0, %v7500
        %7502 = vdwg.mxu0
        %v7503 = vadd.f32 %v7470, %v7501
        %s7504 = scalar_lea.vmem [#allocation6], 640
        %v7505 = vld [vmem:[%s7504] sm:$0xff]
        %v7506 = vld [vmem:[%s7504 + $0x8] sm:$0xff]
        %v7507 = vld [vmem:[%s7504 + $0x10] sm:$0xff]
        %v7508 = vld [vmem:[%s7504 + $0x18] sm:$0xff]
        %v7509 = vld [vmem:[%s7504 + $0x20] sm:$0xff]
        %v7510 = vld [vmem:[%s7504 + $0x28] sm:$0xff]
        %v7511 = vld [vmem:[%s7504 + $0x30] sm:$0xff]
        %v7512 = vld [vmem:[%s7504 + $0x38] sm:$0xff]
        %v7514 = vsel %vm6868, %v7026, 0
        %7516 = vmatpush.msra.mxu0 0.0
        %7517 = vmatpush.msra.mxu0 0.0
        %7518 = vmatpush.msra.mxu0 0.0
        %7519 = vmatpush.msra.mxu0 0.0
        %7520 = vmatpush.msra.mxu0 0.0
        %7521 = vmatpush.msra.mxu0 0.0
        %7522 = vmatpush.msra.mxu0 0.0
        %7523 = vmatpush.msra.mxu0 0.0
        %7524 = vmatpush.msra.mxu0 %v7512
        %7525 = vmatpush.msra.mxu0 %v7511
        %7526 = vmatpush.msra.mxu0 %v7510
        %7527 = vmatpush.msra.mxu0 %v7509
        %7528 = vmatpush.msra.mxu0 %v7508
        %7529 = vmatpush.msra.mxu0 %v7507
        %7530 = vmatpush.msra.mxu0 %v7506
        %7531 = vmatpush.msra.mxu0 %v7505
        %7532 = vmatmul.f32.gmra.mxu0 %v7514
        %v7533 = vpop.f32.mrf.mxu0
        %v7534 = vadd.f32 0.0, %v7533
        %7535 = vdwg.mxu0
        %v7536 = vadd.f32 %v7503, %v7534
        %s7537 = scalar_lea.vmem [#allocation6], 704
        %v7538 = vld [vmem:[%s7537] sm:$0xff]
        %v7539 = vld [vmem:[%s7537 + $0x8] sm:$0xff]
        %v7540 = vld [vmem:[%s7537 + $0x10] sm:$0xff]
        %v7541 = vld [vmem:[%s7537 + $0x18] sm:$0xff]
        %v7542 = vld [vmem:[%s7537 + $0x20] sm:$0xff]
        %v7543 = vld [vmem:[%s7537 + $0x28] sm:$0xff]
        %v7544 = vld [vmem:[%s7537 + $0x30] sm:$0xff]
        %v7545 = vld [vmem:[%s7537 + $0x38] sm:$0xff]
        %v7547 = vsel %vm6868, %v7033, 0
        %7549 = vmatpush.msra.mxu0 0.0
        %7550 = vmatpush.msra.mxu0 0.0
        %7551 = vmatpush.msra.mxu0 0.0
        %7552 = vmatpush.msra.mxu0 0.0
        %7553 = vmatpush.msra.mxu0 0.0
        %7554 = vmatpush.msra.mxu0 0.0
        %7555 = vmatpush.msra.mxu0 0.0
        %7556 = vmatpush.msra.mxu0 0.0
        %7557 = vmatpush.msra.mxu0 %v7545
        %7558 = vmatpush.msra.mxu0 %v7544
        %7559 = vmatpush.msra.mxu0 %v7543
        %7560 = vmatpush.msra.mxu0 %v7542
        %7561 = vmatpush.msra.mxu0 %v7541
        %7562 = vmatpush.msra.mxu0 %v7540
        %7563 = vmatpush.msra.mxu0 %v7539
        %7564 = vmatpush.msra.mxu0 %v7538
        %7565 = vmatmul.f32.gmra.mxu0 %v7547
        %v7566 = vpop.f32.mrf.mxu0
        %v7567 = vadd.f32 0.0, %v7566
        %7568 = vdwg.mxu0
        %v7569 = vadd.f32 %v7536, %v7567
        %s7570 = scalar_lea.vmem [#allocation6], 768
        %v7571 = vld [vmem:[%s7570] sm:$0xff]
        %v7572 = vld [vmem:[%s7570 + $0x8] sm:$0xff]
        %v7573 = vld [vmem:[%s7570 + $0x10] sm:$0xff]
        %v7574 = vld [vmem:[%s7570 + $0x18] sm:$0xff]
        %v7575 = vld [vmem:[%s7570 + $0x20] sm:$0xff]
        %v7576 = vld [vmem:[%s7570 + $0x28] sm:$0xff]
        %v7577 = vld [vmem:[%s7570 + $0x30] sm:$0xff]
        %v7578 = vld [vmem:[%s7570 + $0x38] sm:$0xff]
        %v7580 = vsel %vm6868, %v7040, 0
        %7582 = vmatpush.msra.mxu0 0.0
        %7583 = vmatpush.msra.mxu0 0.0
        %7584 = vmatpush.msra.mxu0 0.0
        %7585 = vmatpush.msra.mxu0 0.0
        %7586 = vmatpush.msra.mxu0 0.0
        %7587 = vmatpush.msra.mxu0 0.0
        %7588 = vmatpush.msra.mxu0 0.0
        %7589 = vmatpush.msra.mxu0 0.0
        %7590 = vmatpush.msra.mxu0 %v7578
        %7591 = vmatpush.msra.mxu0 %v7577
        %7592 = vmatpush.msra.mxu0 %v7576
        %7593 = vmatpush.msra.mxu0 %v7575
        %7594 = vmatpush.msra.mxu0 %v7574
        %7595 = vmatpush.msra.mxu0 %v7573
        %7596 = vmatpush.msra.mxu0 %v7572
        %7597 = vmatpush.msra.mxu0 %v7571
        %7598 = vmatmul.f32.gmra.mxu0 %v7580
        %v7599 = vpop.f32.mrf.mxu0
        %v7600 = vadd.f32 0.0, %v7599
        %7601 = vdwg.mxu0
        %v7602 = vadd.f32 %v7569, %v7600
        %s7603 = scalar_lea.vmem [#allocation6], 832
        %v7604 = vld [vmem:[%s7603] sm:$0xff]
        %v7605 = vld [vmem:[%s7603 + $0x8] sm:$0xff]
        %v7606 = vld [vmem:[%s7603 + $0x10] sm:$0xff]
        %v7607 = vld [vmem:[%s7603 + $0x18] sm:$0xff]
        %v7608 = vld [vmem:[%s7603 + $0x20] sm:$0xff]
        %v7609 = vld [vmem:[%s7603 + $0x28] sm:$0xff]
        %v7610 = vld [vmem:[%s7603 + $0x30] sm:$0xff]
        %v7611 = vld [vmem:[%s7603 + $0x38] sm:$0xff]
        %v7613 = vsel %vm6868, %v7047, 0
        %7615 = vmatpush.msra.mxu0 0.0
        %7616 = vmatpush.msra.mxu0 0.0
        %7617 = vmatpush.msra.mxu0 0.0
        %7618 = vmatpush.msra.mxu0 0.0
        %7619 = vmatpush.msra.mxu0 0.0
        %7620 = vmatpush.msra.mxu0 0.0
        %7621 = vmatpush.msra.mxu0 0.0
        %7622 = vmatpush.msra.mxu0 0.0
        %7623 = vmatpush.msra.mxu0 %v7611
        %7624 = vmatpush.msra.mxu0 %v7610
        %7625 = vmatpush.msra.mxu0 %v7609
        %7626 = vmatpush.msra.mxu0 %v7608
        %7627 = vmatpush.msra.mxu0 %v7607
        %7628 = vmatpush.msra.mxu0 %v7606
        %7629 = vmatpush.msra.mxu0 %v7605
        %7630 = vmatpush.msra.mxu0 %v7604
        %7631 = vmatmul.f32.gmra.mxu0 %v7613
        %v7632 = vpop.f32.mrf.mxu0
        %v7633 = vadd.f32 0.0, %v7632
        %7634 = vdwg.mxu0
        %v7635 = vadd.f32 %v7602, %v7633
        %s7636 = scalar_lea.vmem [#allocation6], 896
        %v7637 = vld [vmem:[%s7636] sm:$0xff]
        %v7638 = vld [vmem:[%s7636 + $0x8] sm:$0xff]
        %v7639 = vld [vmem:[%s7636 + $0x10] sm:$0xff]
        %v7640 = vld [vmem:[%s7636 + $0x18] sm:$0xff]
        %v7641 = vld [vmem:[%s7636 + $0x20] sm:$0xff]
        %v7642 = vld [vmem:[%s7636 + $0x28] sm:$0xff]
        %v7643 = vld [vmem:[%s7636 + $0x30] sm:$0xff]
        %v7644 = vld [vmem:[%s7636 + $0x38] sm:$0xff]
        %v7646 = vsel %vm6868, %v7054, 0
        %7648 = vmatpush.msra.mxu0 0.0
        %7649 = vmatpush.msra.mxu0 0.0
        %7650 = vmatpush.msra.mxu0 0.0
        %7651 = vmatpush.msra.mxu0 0.0
        %7652 = vmatpush.msra.mxu0 0.0
        %7653 = vmatpush.msra.mxu0 0.0
        %7654 = vmatpush.msra.mxu0 0.0
        %7655 = vmatpush.msra.mxu0 0.0
        %7656 = vmatpush.msra.mxu0 %v7644
        %7657 = vmatpush.msra.mxu0 %v7643
        %7658 = vmatpush.msra.mxu0 %v7642
        %7659 = vmatpush.msra.mxu0 %v7641
        %7660 = vmatpush.msra.mxu0 %v7640
        %7661 = vmatpush.msra.mxu0 %v7639
        %7662 = vmatpush.msra.mxu0 %v7638
        %7663 = vmatpush.msra.mxu0 %v7637
        %7664 = vmatmul.f32.gmra.mxu0 %v7646
        %v7665 = vpop.f32.mrf.mxu0
        %v7666 = vadd.f32 0.0, %v7665
        %7667 = vdwg.mxu0
        %v7668 = vadd.f32 %v7635, %v7666
        %s7669 = scalar_lea.vmem [#allocation6], 960
        %v7670 = vld [vmem:[%s7669] sm:$0xff]
        %v7671 = vld [vmem:[%s7669 + $0x8] sm:$0xff]
        %v7672 = vld [vmem:[%s7669 + $0x10] sm:$0xff]
        %v7673 = vld [vmem:[%s7669 + $0x18] sm:$0xff]
        %v7674 = vld [vmem:[%s7669 + $0x20] sm:$0xff]
        %v7675 = vld [vmem:[%s7669 + $0x28] sm:$0xff]
        %v7676 = vld [vmem:[%s7669 + $0x30] sm:$0xff]
        %v7677 = vld [vmem:[%s7669 + $0x38] sm:$0xff]
        %v7679 = vsel %vm6868, %v7061, 0
        %7681 = vmatpush.msra.mxu0 0.0
        %7682 = vmatpush.msra.mxu0 0.0
        %7683 = vmatpush.msra.mxu0 0.0
        %7684 = vmatpush.msra.mxu0 0.0
        %7685 = vmatpush.msra.mxu0 0.0
        %7686 = vmatpush.msra.mxu0 0.0
        %7687 = vmatpush.msra.mxu0 0.0
        %7688 = vmatpush.msra.mxu0 0.0
        %7689 = vmatpush.msra.mxu0 %v7677
        %7690 = vmatpush.msra.mxu0 %v7676
        %7691 = vmatpush.msra.mxu0 %v7675
        %7692 = vmatpush.msra.mxu0 %v7674
        %7693 = vmatpush.msra.mxu0 %v7673
        %7694 = vmatpush.msra.mxu0 %v7672
        %7695 = vmatpush.msra.mxu0 %v7671
        %7696 = vmatpush.msra.mxu0 %v7670
        %7697 = vmatmul.f32.gmra.mxu0 %v7679
        %v7698 = vpop.f32.mrf.mxu0
        %v7699 = vadd.f32 0.0, %v7698
        %7700 = vdwg.mxu0
        %v7701 = vadd.f32 %v7668, %v7699
        %s7702 = scalar_lea.vmem [#allocation6], 1024
        %v7703 = vld [vmem:[%s7702] sm:$0xff]
        %v7704 = vld [vmem:[%s7702 + $0x8] sm:$0xff]
        %v7705 = vld [vmem:[%s7702 + $0x10] sm:$0xff]
        %v7706 = vld [vmem:[%s7702 + $0x18] sm:$0xff]
        %v7707 = vld [vmem:[%s7702 + $0x20] sm:$0xff]
        %v7708 = vld [vmem:[%s7702 + $0x28] sm:$0xff]
        %v7709 = vld [vmem:[%s7702 + $0x30] sm:$0xff]
        %v7710 = vld [vmem:[%s7702 + $0x38] sm:$0xff]
        %v7712 = vsel %vm6868, %v7068, 0
        %7714 = vmatpush.msra.mxu0 0.0
        %7715 = vmatpush.msra.mxu0 0.0
        %7716 = vmatpush.msra.mxu0 0.0
        %7717 = vmatpush.msra.mxu0 0.0
        %7718 = vmatpush.msra.mxu0 0.0
        %7719 = vmatpush.msra.mxu0 0.0
        %7720 = vmatpush.msra.mxu0 0.0
        %7721 = vmatpush.msra.mxu0 0.0
        %7722 = vmatpush.msra.mxu0 %v7710
        %7723 = vmatpush.msra.mxu0 %v7709
        %7724 = vmatpush.msra.mxu0 %v7708
        %7725 = vmatpush.msra.mxu0 %v7707
        %7726 = vmatpush.msra.mxu0 %v7706
        %7727 = vmatpush.msra.mxu0 %v7705
        %7728 = vmatpush.msra.mxu0 %v7704
        %7729 = vmatpush.msra.mxu0 %v7703
        %7730 = vmatmul.f32.gmra.mxu0 %v7712
        %v7731 = vpop.f32.mrf.mxu0
        %v7732 = vadd.f32 0.0, %v7731
        %7733 = vdwg.mxu0
        %v7734 = vadd.f32 %v7701, %v7732
        %s7735 = scalar_lea.vmem [#allocation6], 1088
        %v7736 = vld [vmem:[%s7735] sm:$0xff]
        %v7737 = vld [vmem:[%s7735 + $0x8] sm:$0xff]
        %v7738 = vld [vmem:[%s7735 + $0x10] sm:$0xff]
        %v7739 = vld [vmem:[%s7735 + $0x18] sm:$0xff]
        %v7740 = vld [vmem:[%s7735 + $0x20] sm:$0xff]
        %v7741 = vld [vmem:[%s7735 + $0x28] sm:$0xff]
        %v7742 = vld [vmem:[%s7735 + $0x30] sm:$0xff]
        %v7743 = vld [vmem:[%s7735 + $0x38] sm:$0xff]
        %v7745 = vsel %vm6868, %v7075, 0
        %7747 = vmatpush.msra.mxu0 0.0
        %7748 = vmatpush.msra.mxu0 0.0
        %7749 = vmatpush.msra.mxu0 0.0
        %7750 = vmatpush.msra.mxu0 0.0
        %7751 = vmatpush.msra.mxu0 0.0
        %7752 = vmatpush.msra.mxu0 0.0
        %7753 = vmatpush.msra.mxu0 0.0
        %7754 = vmatpush.msra.mxu0 0.0
        %7755 = vmatpush.msra.mxu0 %v7743
        %7756 = vmatpush.msra.mxu0 %v7742
        %7757 = vmatpush.msra.mxu0 %v7741
        %7758 = vmatpush.msra.mxu0 %v7740
        %7759 = vmatpush.msra.mxu0 %v7739
        %7760 = vmatpush.msra.mxu0 %v7738
        %7761 = vmatpush.msra.mxu0 %v7737
        %7762 = vmatpush.msra.mxu0 %v7736
        %7763 = vmatmul.f32.gmra.mxu0 %v7745
        %v7764 = vpop.f32.mrf.mxu0
        %v7765 = vadd.f32 0.0, %v7764
        %7766 = vdwg.mxu0
        %v7767 = vadd.f32 %v7734, %v7765
        %s7768 = scalar_lea.vmem [#allocation6], 1152
        %v7769 = vld [vmem:[%s7768] sm:$0xff]
        %v7770 = vld [vmem:[%s7768 + $0x8] sm:$0xff]
        %v7771 = vld [vmem:[%s7768 + $0x10] sm:$0xff]
        %v7772 = vld [vmem:[%s7768 + $0x18] sm:$0xff]
        %v7773 = vld [vmem:[%s7768 + $0x20] sm:$0xff]
        %v7774 = vld [vmem:[%s7768 + $0x28] sm:$0xff]
        %v7775 = vld [vmem:[%s7768 + $0x30] sm:$0xff]
        %v7776 = vld [vmem:[%s7768 + $0x38] sm:$0xff]
        %v7778 = vsel %vm6868, %v7082, 0
        %7780 = vmatpush.msra.mxu0 0.0
        %7781 = vmatpush.msra.mxu0 0.0
        %7782 = vmatpush.msra.mxu0 0.0
        %7783 = vmatpush.msra.mxu0 0.0
        %7784 = vmatpush.msra.mxu0 0.0
        %7785 = vmatpush.msra.mxu0 0.0
        %7786 = vmatpush.msra.mxu0 0.0
        %7787 = vmatpush.msra.mxu0 0.0
        %7788 = vmatpush.msra.mxu0 %v7776
        %7789 = vmatpush.msra.mxu0 %v7775
        %7790 = vmatpush.msra.mxu0 %v7774
        %7791 = vmatpush.msra.mxu0 %v7773
        %7792 = vmatpush.msra.mxu0 %v7772
        %7793 = vmatpush.msra.mxu0 %v7771
        %7794 = vmatpush.msra.mxu0 %v7770
        %7795 = vmatpush.msra.mxu0 %v7769
        %7796 = vmatmul.f32.gmra.mxu0 %v7778
        %v7797 = vpop.f32.mrf.mxu0
        %v7798 = vadd.f32 0.0, %v7797
        %7799 = vdwg.mxu0
        %v7800 = vadd.f32 %v7767, %v7798
        %s7801 = scalar_lea.vmem [#allocation6], 1216
        %v7802 = vld [vmem:[%s7801] sm:$0xff]
        %v7803 = vld [vmem:[%s7801 + $0x8] sm:$0xff]
        %v7804 = vld [vmem:[%s7801 + $0x10] sm:$0xff]
        %v7805 = vld [vmem:[%s7801 + $0x18] sm:$0xff]
        %v7806 = vld [vmem:[%s7801 + $0x20] sm:$0xff]
        %v7807 = vld [vmem:[%s7801 + $0x28] sm:$0xff]
        %v7808 = vld [vmem:[%s7801 + $0x30] sm:$0xff]
        %v7809 = vld [vmem:[%s7801 + $0x38] sm:$0xff]
        %v7811 = vsel %vm6868, %v7089, 0
        %7813 = vmatpush.msra.mxu0 0.0
        %7814 = vmatpush.msra.mxu0 0.0
        %7815 = vmatpush.msra.mxu0 0.0
        %7816 = vmatpush.msra.mxu0 0.0
        %7817 = vmatpush.msra.mxu0 0.0
        %7818 = vmatpush.msra.mxu0 0.0
        %7819 = vmatpush.msra.mxu0 0.0
        %7820 = vmatpush.msra.mxu0 0.0
        %7821 = vmatpush.msra.mxu0 %v7809
        %7822 = vmatpush.msra.mxu0 %v7808
        %7823 = vmatpush.msra.mxu0 %v7807
        %7824 = vmatpush.msra.mxu0 %v7806
        %7825 = vmatpush.msra.mxu0 %v7805
        %7826 = vmatpush.msra.mxu0 %v7804
        %7827 = vmatpush.msra.mxu0 %v7803
        %7828 = vmatpush.msra.mxu0 %v7802
        %7829 = vmatmul.f32.gmra.mxu0 %v7811
        %v7830 = vpop.f32.mrf.mxu0
        %v7831 = vadd.f32 0.0, %v7830
        %7832 = vdwg.mxu0
        %v7833 = vadd.f32 %v7800, %v7831
        %s7834 = scalar_lea.vmem [#allocation6], 1280
        %v7835 = vld [vmem:[%s7834] sm:$0xff]
        %v7836 = vld [vmem:[%s7834 + $0x8] sm:$0xff]
        %v7837 = vld [vmem:[%s7834 + $0x10] sm:$0xff]
        %v7838 = vld [vmem:[%s7834 + $0x18] sm:$0xff]
        %v7839 = vld [vmem:[%s7834 + $0x20] sm:$0xff]
        %v7840 = vld [vmem:[%s7834 + $0x28] sm:$0xff]
        %v7841 = vld [vmem:[%s7834 + $0x30] sm:$0xff]
        %v7842 = vld [vmem:[%s7834 + $0x38] sm:$0xff]
        %v7844 = vsel %vm6868, %v7096, 0
        %7846 = vmatpush.msra.mxu0 0.0
        %7847 = vmatpush.msra.mxu0 0.0
        %7848 = vmatpush.msra.mxu0 0.0
        %7849 = vmatpush.msra.mxu0 0.0
        %7850 = vmatpush.msra.mxu0 0.0
        %7851 = vmatpush.msra.mxu0 0.0
        %7852 = vmatpush.msra.mxu0 0.0
        %7853 = vmatpush.msra.mxu0 0.0
        %7854 = vmatpush.msra.mxu0 %v7842
        %7855 = vmatpush.msra.mxu0 %v7841
        %7856 = vmatpush.msra.mxu0 %v7840
        %7857 = vmatpush.msra.mxu0 %v7839
        %7858 = vmatpush.msra.mxu0 %v7838
        %7859 = vmatpush.msra.mxu0 %v7837
        %7860 = vmatpush.msra.mxu0 %v7836
        %7861 = vmatpush.msra.mxu0 %v7835
        %7862 = vmatmul.f32.gmra.mxu0 %v7844
        %v7863 = vpop.f32.mrf.mxu0
        %v7864 = vadd.f32 0.0, %v7863
        %7865 = vdwg.mxu0
        %v7866 = vadd.f32 %v7833, %v7864
        %s7867 = scalar_lea.vmem [#allocation6], 1344
        %v7868 = vld [vmem:[%s7867] sm:$0xff]
        %v7869 = vld [vmem:[%s7867 + $0x8] sm:$0xff]
        %v7870 = vld [vmem:[%s7867 + $0x10] sm:$0xff]
        %v7871 = vld [vmem:[%s7867 + $0x18] sm:$0xff]
        %v7872 = vld [vmem:[%s7867 + $0x20] sm:$0xff]
        %v7873 = vld [vmem:[%s7867 + $0x28] sm:$0xff]
        %v7874 = vld [vmem:[%s7867 + $0x30] sm:$0xff]
        %v7875 = vld [vmem:[%s7867 + $0x38] sm:$0xff]
        %v7877 = vsel %vm6868, %v7103, 0
        %7879 = vmatpush.msra.mxu0 0.0
        %7880 = vmatpush.msra.mxu0 0.0
        %7881 = vmatpush.msra.mxu0 0.0
        %7882 = vmatpush.msra.mxu0 0.0
        %7883 = vmatpush.msra.mxu0 0.0
        %7884 = vmatpush.msra.mxu0 0.0
        %7885 = vmatpush.msra.mxu0 0.0
        %7886 = vmatpush.msra.mxu0 0.0
        %7887 = vmatpush.msra.mxu0 %v7875
        %7888 = vmatpush.msra.mxu0 %v7874
        %7889 = vmatpush.msra.mxu0 %v7873
        %7890 = vmatpush.msra.mxu0 %v7872
        %7891 = vmatpush.msra.mxu0 %v7871
        %7892 = vmatpush.msra.mxu0 %v7870
        %7893 = vmatpush.msra.mxu0 %v7869
        %7894 = vmatpush.msra.mxu0 %v7868
        %7895 = vmatmul.f32.gmra.mxu0 %v7877
        %v7896 = vpop.f32.mrf.mxu0
        %v7897 = vadd.f32 0.0, %v7896
        %7898 = vdwg.mxu0
        %v7899 = vadd.f32 %v7866, %v7897
        %s7900 = scalar_lea.vmem [#allocation6], 1408
        %v7901 = vld [vmem:[%s7900] sm:$0xff]
        %v7902 = vld [vmem:[%s7900 + $0x8] sm:$0xff]
        %v7903 = vld [vmem:[%s7900 + $0x10] sm:$0xff]
        %v7904 = vld [vmem:[%s7900 + $0x18] sm:$0xff]
        %v7905 = vld [vmem:[%s7900 + $0x20] sm:$0xff]
        %v7906 = vld [vmem:[%s7900 + $0x28] sm:$0xff]
        %v7907 = vld [vmem:[%s7900 + $0x30] sm:$0xff]
        %v7908 = vld [vmem:[%s7900 + $0x38] sm:$0xff]
        %v7910 = vsel %vm6868, %v7110, 0
        %7912 = vmatpush.msra.mxu0 0.0
        %7913 = vmatpush.msra.mxu0 0.0
        %7914 = vmatpush.msra.mxu0 0.0
        %7915 = vmatpush.msra.mxu0 0.0
        %7916 = vmatpush.msra.mxu0 0.0
        %7917 = vmatpush.msra.mxu0 0.0
        %7918 = vmatpush.msra.mxu0 0.0
        %7919 = vmatpush.msra.mxu0 0.0
        %7920 = vmatpush.msra.mxu0 %v7908
        %7921 = vmatpush.msra.mxu0 %v7907
        %7922 = vmatpush.msra.mxu0 %v7906
        %7923 = vmatpush.msra.mxu0 %v7905
        %7924 = vmatpush.msra.mxu0 %v7904
        %7925 = vmatpush.msra.mxu0 %v7903
        %7926 = vmatpush.msra.mxu0 %v7902
        %7927 = vmatpush.msra.mxu0 %v7901
        %7928 = vmatmul.f32.gmra.mxu0 %v7910
        %v7929 = vpop.f32.mrf.mxu0
        %v7930 = vadd.f32 0.0, %v7929
        %7931 = vdwg.mxu0
        %v7932 = vadd.f32 %v7899, %v7930
        %s7933 = scalar_lea.vmem [#allocation6], 1472
        %v7934 = vld [vmem:[%s7933] sm:$0xff]
        %v7935 = vld [vmem:[%s7933 + $0x8] sm:$0xff]
        %v7936 = vld [vmem:[%s7933 + $0x10] sm:$0xff]
        %v7937 = vld [vmem:[%s7933 + $0x18] sm:$0xff]
        %v7938 = vld [vmem:[%s7933 + $0x20] sm:$0xff]
        %v7939 = vld [vmem:[%s7933 + $0x28] sm:$0xff]
        %v7940 = vld [vmem:[%s7933 + $0x30] sm:$0xff]
        %v7941 = vld [vmem:[%s7933 + $0x38] sm:$0xff]
        %v7943 = vsel %vm6868, %v7117, 0
        %7945 = vmatpush.msra.mxu0 0.0
        %7946 = vmatpush.msra.mxu0 0.0
        %7947 = vmatpush.msra.mxu0 0.0
        %7948 = vmatpush.msra.mxu0 0.0
        %7949 = vmatpush.msra.mxu0 0.0
        %7950 = vmatpush.msra.mxu0 0.0
        %7951 = vmatpush.msra.mxu0 0.0
        %7952 = vmatpush.msra.mxu0 0.0
        %7953 = vmatpush.msra.mxu0 %v7941
        %7954 = vmatpush.msra.mxu0 %v7940
        %7955 = vmatpush.msra.mxu0 %v7939
        %7956 = vmatpush.msra.mxu0 %v7938
        %7957 = vmatpush.msra.mxu0 %v7937
        %7958 = vmatpush.msra.mxu0 %v7936
        %7959 = vmatpush.msra.mxu0 %v7935
        %7960 = vmatpush.msra.mxu0 %v7934
        %7961 = vmatmul.f32.gmra.mxu0 %v7943
        %v7962 = vpop.f32.mrf.mxu0
        %v7963 = vadd.f32 0.0, %v7962
        %7964 = vdwg.mxu0
        %v7965 = vadd.f32 %v7932, %v7963
        %s7966 = scalar_lea.vmem [#allocation6], 1536
        %v7967 = vld [vmem:[%s7966] sm:$0xff]
        %v7968 = vld [vmem:[%s7966 + $0x8] sm:$0xff]
        %v7969 = vld [vmem:[%s7966 + $0x10] sm:$0xff]
        %v7970 = vld [vmem:[%s7966 + $0x18] sm:$0xff]
        %v7971 = vld [vmem:[%s7966 + $0x20] sm:$0xff]
        %v7972 = vld [vmem:[%s7966 + $0x28] sm:$0xff]
        %v7973 = vld [vmem:[%s7966 + $0x30] sm:$0xff]
        %v7974 = vld [vmem:[%s7966 + $0x38] sm:$0xff]
        %v7976 = vsel %vm6868, %v7124, 0
        %7978 = vmatpush.msra.mxu0 0.0
        %7979 = vmatpush.msra.mxu0 0.0
        %7980 = vmatpush.msra.mxu0 0.0
        %7981 = vmatpush.msra.mxu0 0.0
        %7982 = vmatpush.msra.mxu0 0.0
        %7983 = vmatpush.msra.mxu0 0.0
        %7984 = vmatpush.msra.mxu0 0.0
        %7985 = vmatpush.msra.mxu0 0.0
        %7986 = vmatpush.msra.mxu0 %v7974
        %7987 = vmatpush.msra.mxu0 %v7973
        %7988 = vmatpush.msra.mxu0 %v7972
        %7989 = vmatpush.msra.mxu0 %v7971
        %7990 = vmatpush.msra.mxu0 %v7970
        %7991 = vmatpush.msra.mxu0 %v7969
        %7992 = vmatpush.msra.mxu0 %v7968
        %7993 = vmatpush.msra.mxu0 %v7967
        %7994 = vmatmul.f32.gmra.mxu0 %v7976
        %v7995 = vpop.f32.mrf.mxu0
        %v7996 = vadd.f32 0.0, %v7995
        %7997 = vdwg.mxu0
        %v7998 = vadd.f32 %v7965, %v7996
        %s7999 = scalar_lea.vmem [#allocation6], 1600
        %v8000 = vld [vmem:[%s7999] sm:$0xff]
        %v8001 = vld [vmem:[%s7999 + $0x8] sm:$0xff]
        %v8002 = vld [vmem:[%s7999 + $0x10] sm:$0xff]
        %v8003 = vld [vmem:[%s7999 + $0x18] sm:$0xff]
        %v8004 = vld [vmem:[%s7999 + $0x20] sm:$0xff]
        %v8005 = vld [vmem:[%s7999 + $0x28] sm:$0xff]
        %v8006 = vld [vmem:[%s7999 + $0x30] sm:$0xff]
        %v8007 = vld [vmem:[%s7999 + $0x38] sm:$0xff]
        %v8009 = vsel %vm6868, %v7131, 0
        %8011 = vmatpush.msra.mxu0 0.0
        %8012 = vmatpush.msra.mxu0 0.0
        %8013 = vmatpush.msra.mxu0 0.0
        %8014 = vmatpush.msra.mxu0 0.0
        %8015 = vmatpush.msra.mxu0 0.0
        %8016 = vmatpush.msra.mxu0 0.0
        %8017 = vmatpush.msra.mxu0 0.0
        %8018 = vmatpush.msra.mxu0 0.0
        %8019 = vmatpush.msra.mxu0 %v8007
        %8020 = vmatpush.msra.mxu0 %v8006
        %8021 = vmatpush.msra.mxu0 %v8005
        %8022 = vmatpush.msra.mxu0 %v8004
        %8023 = vmatpush.msra.mxu0 %v8003
        %8024 = vmatpush.msra.mxu0 %v8002
        %8025 = vmatpush.msra.mxu0 %v8001
        %8026 = vmatpush.msra.mxu0 %v8000
        %8027 = vmatmul.f32.gmra.mxu0 %v8009
        %v8028 = vpop.f32.mrf.mxu0
        %v8029 = vadd.f32 0.0, %v8028
        %8030 = vdwg.mxu0
        %v8031 = vadd.f32 %v7998, %v8029
        %s8032 = scalar_lea.vmem [#allocation6], 1664
        %v8033 = vld [vmem:[%s8032] sm:$0xff]
        %v8034 = vld [vmem:[%s8032 + $0x8] sm:$0xff]
        %v8035 = vld [vmem:[%s8032 + $0x10] sm:$0xff]
        %v8036 = vld [vmem:[%s8032 + $0x18] sm:$0xff]
        %v8037 = vld [vmem:[%s8032 + $0x20] sm:$0xff]
        %v8038 = vld [vmem:[%s8032 + $0x28] sm:$0xff]
        %v8039 = vld [vmem:[%s8032 + $0x30] sm:$0xff]
        %v8040 = vld [vmem:[%s8032 + $0x38] sm:$0xff]
        %v8042 = vsel %vm6868, %v7138, 0
        %8044 = vmatpush.msra.mxu0 0.0
        %8045 = vmatpush.msra.mxu0 0.0
        %8046 = vmatpush.msra.mxu0 0.0
        %8047 = vmatpush.msra.mxu0 0.0
        %8048 = vmatpush.msra.mxu0 0.0
        %8049 = vmatpush.msra.mxu0 0.0
        %8050 = vmatpush.msra.mxu0 0.0
        %8051 = vmatpush.msra.mxu0 0.0
        %8052 = vmatpush.msra.mxu0 %v8040
        %8053 = vmatpush.msra.mxu0 %v8039
        %8054 = vmatpush.msra.mxu0 %v8038
        %8055 = vmatpush.msra.mxu0 %v8037
        %8056 = vmatpush.msra.mxu0 %v8036
        %8057 = vmatpush.msra.mxu0 %v8035
        %8058 = vmatpush.msra.mxu0 %v8034
        %8059 = vmatpush.msra.mxu0 %v8033
        %8060 = vmatmul.f32.gmra.mxu0 %v8042
        %v8061 = vpop.f32.mrf.mxu0
        %v8062 = vadd.f32 0.0, %v8061
        %8063 = vdwg.mxu0
        %v8064 = vadd.f32 %v8031, %v8062
        %s8065 = scalar_lea.vmem [#allocation6], 1728
        %v8066 = vld [vmem:[%s8065] sm:$0xff]
        %v8067 = vld [vmem:[%s8065 + $0x8] sm:$0xff]
        %v8068 = vld [vmem:[%s8065 + $0x10] sm:$0xff]
        %v8069 = vld [vmem:[%s8065 + $0x18] sm:$0xff]
        %v8070 = vld [vmem:[%s8065 + $0x20] sm:$0xff]
        %v8071 = vld [vmem:[%s8065 + $0x28] sm:$0xff]
        %v8072 = vld [vmem:[%s8065 + $0x30] sm:$0xff]
        %v8073 = vld [vmem:[%s8065 + $0x38] sm:$0xff]
        %v8075 = vsel %vm6868, %v7145, 0
        %8077 = vmatpush.msra.mxu0 0.0
        %8078 = vmatpush.msra.mxu0 0.0
        %8079 = vmatpush.msra.mxu0 0.0
        %8080 = vmatpush.msra.mxu0 0.0
        %8081 = vmatpush.msra.mxu0 0.0
        %8082 = vmatpush.msra.mxu0 0.0
        %8083 = vmatpush.msra.mxu0 0.0
        %8084 = vmatpush.msra.mxu0 0.0
        %8085 = vmatpush.msra.mxu0 %v8073
        %8086 = vmatpush.msra.mxu0 %v8072
        %8087 = vmatpush.msra.mxu0 %v8071
        %8088 = vmatpush.msra.mxu0 %v8070
        %8089 = vmatpush.msra.mxu0 %v8069
        %8090 = vmatpush.msra.mxu0 %v8068
        %8091 = vmatpush.msra.mxu0 %v8067
        %8092 = vmatpush.msra.mxu0 %v8066
        %8093 = vmatmul.f32.gmra.mxu0 %v8075
        %v8094 = vpop.f32.mrf.mxu0
        %v8095 = vadd.f32 0.0, %v8094
        %8096 = vdwg.mxu0
        %v8097 = vadd.f32 %v8064, %v8095
        %s8098 = scalar_lea.vmem [#allocation6], 1792
        %v8099 = vld [vmem:[%s8098] sm:$0xff]
        %v8100 = vld [vmem:[%s8098 + $0x8] sm:$0xff]
        %v8101 = vld [vmem:[%s8098 + $0x10] sm:$0xff]
        %v8102 = vld [vmem:[%s8098 + $0x18] sm:$0xff]
        %v8103 = vld [vmem:[%s8098 + $0x20] sm:$0xff]
        %v8104 = vld [vmem:[%s8098 + $0x28] sm:$0xff]
        %v8105 = vld [vmem:[%s8098 + $0x30] sm:$0xff]
        %v8106 = vld [vmem:[%s8098 + $0x38] sm:$0xff]
        %v8108 = vsel %vm6868, %v7152, 0
        %8110 = vmatpush.msra.mxu0 0.0
        %8111 = vmatpush.msra.mxu0 0.0
        %8112 = vmatpush.msra.mxu0 0.0
        %8113 = vmatpush.msra.mxu0 0.0
        %8114 = vmatpush.msra.mxu0 0.0
        %8115 = vmatpush.msra.mxu0 0.0
        %8116 = vmatpush.msra.mxu0 0.0
        %8117 = vmatpush.msra.mxu0 0.0
        %8118 = vmatpush.msra.mxu0 %v8106
        %8119 = vmatpush.msra.mxu0 %v8105
        %8120 = vmatpush.msra.mxu0 %v8104
        %8121 = vmatpush.msra.mxu0 %v8103
        %8122 = vmatpush.msra.mxu0 %v8102
        %8123 = vmatpush.msra.mxu0 %v8101
        %8124 = vmatpush.msra.mxu0 %v8100
        %8125 = vmatpush.msra.mxu0 %v8099
        %8126 = vmatmul.f32.gmra.mxu0 %v8108
        %v8127 = vpop.f32.mrf.mxu0
        %v8128 = vadd.f32 0.0, %v8127
        %8129 = vdwg.mxu0
        %v8130 = vadd.f32 %v8097, %v8128
        %s8131 = scalar_lea.vmem [#allocation6], 1856
        %v8132 = vld [vmem:[%s8131] sm:$0xff]
        %v8133 = vld [vmem:[%s8131 + $0x8] sm:$0xff]
        %v8134 = vld [vmem:[%s8131 + $0x10] sm:$0xff]
        %v8135 = vld [vmem:[%s8131 + $0x18] sm:$0xff]
        %v8136 = vld [vmem:[%s8131 + $0x20] sm:$0xff]
        %v8137 = vld [vmem:[%s8131 + $0x28] sm:$0xff]
        %v8138 = vld [vmem:[%s8131 + $0x30] sm:$0xff]
        %v8139 = vld [vmem:[%s8131 + $0x38] sm:$0xff]
        %v8141 = vsel %vm6868, %v7159, 0
        %8143 = vmatpush.msra.mxu0 0.0
        %8144 = vmatpush.msra.mxu0 0.0
        %8145 = vmatpush.msra.mxu0 0.0
        %8146 = vmatpush.msra.mxu0 0.0
        %8147 = vmatpush.msra.mxu0 0.0
        %8148 = vmatpush.msra.mxu0 0.0
        %8149 = vmatpush.msra.mxu0 0.0
        %8150 = vmatpush.msra.mxu0 0.0
        %8151 = vmatpush.msra.mxu0 %v8139
        %8152 = vmatpush.msra.mxu0 %v8138
        %8153 = vmatpush.msra.mxu0 %v8137
        %8154 = vmatpush.msra.mxu0 %v8136
        %8155 = vmatpush.msra.mxu0 %v8135
        %8156 = vmatpush.msra.mxu0 %v8134
        %8157 = vmatpush.msra.mxu0 %v8133
        %8158 = vmatpush.msra.mxu0 %v8132
        %8159 = vmatmul.f32.gmra.mxu0 %v8141
        %v8160 = vpop.f32.mrf.mxu0
        %v8161 = vadd.f32 0.0, %v8160
        %8162 = vdwg.mxu0
        %v8163 = vadd.f32 %v8130, %v8161
        %s8164 = scalar_lea.vmem [#allocation6], 1920
        %v8165 = vld [vmem:[%s8164] sm:$0xff]
        %v8166 = vld [vmem:[%s8164 + $0x8] sm:$0xff]
        %v8167 = vld [vmem:[%s8164 + $0x10] sm:$0xff]
        %v8168 = vld [vmem:[%s8164 + $0x18] sm:$0xff]
        %v8169 = vld [vmem:[%s8164 + $0x20] sm:$0xff]
        %v8170 = vld [vmem:[%s8164 + $0x28] sm:$0xff]
        %v8171 = vld [vmem:[%s8164 + $0x30] sm:$0xff]
        %v8172 = vld [vmem:[%s8164 + $0x38] sm:$0xff]
        %v8174 = vsel %vm6868, %v7166, 0
        %8176 = vmatpush.msra.mxu0 0.0
        %8177 = vmatpush.msra.mxu0 0.0
        %8178 = vmatpush.msra.mxu0 0.0
        %8179 = vmatpush.msra.mxu0 0.0
        %8180 = vmatpush.msra.mxu0 0.0
        %8181 = vmatpush.msra.mxu0 0.0
        %8182 = vmatpush.msra.mxu0 0.0
        %8183 = vmatpush.msra.mxu0 0.0
        %8184 = vmatpush.msra.mxu0 %v8172
        %8185 = vmatpush.msra.mxu0 %v8171
        %8186 = vmatpush.msra.mxu0 %v8170
        %8187 = vmatpush.msra.mxu0 %v8169
        %8188 = vmatpush.msra.mxu0 %v8168
        %8189 = vmatpush.msra.mxu0 %v8167
        %8190 = vmatpush.msra.mxu0 %v8166
        %8191 = vmatpush.msra.mxu0 %v8165
        %8192 = vmatmul.f32.gmra.mxu0 %v8174
        %v8193 = vpop.f32.mrf.mxu0
        %v8194 = vadd.f32 0.0, %v8193
        %8195 = vdwg.mxu0
        %v8196 = vadd.f32 %v8163, %v8194
        %s8197 = scalar_lea.vmem [#allocation6], 1984
        %v8198 = vld [vmem:[%s8197] sm:$0xff]
        %v8199 = vld [vmem:[%s8197 + $0x8] sm:$0xff]
        %v8200 = vld [vmem:[%s8197 + $0x10] sm:$0xff]
        %v8201 = vld [vmem:[%s8197 + $0x18] sm:$0xff]
        %v8202 = vld [vmem:[%s8197 + $0x20] sm:$0xff]
        %v8203 = vld [vmem:[%s8197 + $0x28] sm:$0xff]
        %v8204 = vld [vmem:[%s8197 + $0x30] sm:$0xff]
        %v8205 = vld [vmem:[%s8197 + $0x38] sm:$0xff]
        %v8207 = vsel %vm6868, %v7173, 0
        %8209 = vmatpush.msra.mxu0 0.0
        %8210 = vmatpush.msra.mxu0 0.0
        %8211 = vmatpush.msra.mxu0 0.0
        %8212 = vmatpush.msra.mxu0 0.0
        %8213 = vmatpush.msra.mxu0 0.0
        %8214 = vmatpush.msra.mxu0 0.0
        %8215 = vmatpush.msra.mxu0 0.0
        %8216 = vmatpush.msra.mxu0 0.0
        %8217 = vmatpush.msra.mxu0 %v8205
        %8218 = vmatpush.msra.mxu0 %v8204
        %8219 = vmatpush.msra.mxu0 %v8203
        %8220 = vmatpush.msra.mxu0 %v8202
        %8221 = vmatpush.msra.mxu0 %v8201
        %8222 = vmatpush.msra.mxu0 %v8200
        %8223 = vmatpush.msra.mxu0 %v8199
        %8224 = vmatpush.msra.mxu0 %v8198
        %8225 = vmatmul.f32.gmra.mxu0 %v8207
        %v8226 = vpop.f32.mrf.mxu0
        %v8227 = vadd.f32 0.0, %v8226
        %8228 = vdwg.mxu0
        %v8229 = vadd.f32 %v8196, %v8227
        %v8230 = vmax.f32 %v8229, 0.0
        %v8231 = vld [vmem:[%s7] sm:$0xff]
        %v8232 = vld [vmem:[%s7 + $0x8] sm:$0xff]
        %v8233 = vld [vmem:[%s7 + $0x10] sm:$0xff]
        %v8234 = vld [vmem:[%s7 + $0x18] sm:$0xff]
        %v8235 = vld [vmem:[%s7 + $0x20] sm:$0xff]
        %v8236 = vld [vmem:[%s7 + $0x28] sm:$0xff]
        %v8237 = vld [vmem:[%s7 + $0x30] sm:$0xff]
        %v8238 = vld [vmem:[%s7 + $0x38] sm:$0xff]
        %v8239 = vld [vmem:[%s7 + $0x40] sm:$0xff]
        %v8240 = vld [vmem:[%s7 + $0x48] sm:$0xff]
        %v8241 = vld [vmem:[%s7 + $0x50] sm:$0xff]
        %v8242 = vld [vmem:[%s7 + $0x58] sm:$0xff]
        %v8243 = vld [vmem:[%s7 + $0x60] sm:$0xff]
        %v8244 = vld [vmem:[%s7 + $0x68] sm:$0xff]
        %v8245 = vld [vmem:[%s7 + $0x70] sm:$0xff]
        %v8246 = vld [vmem:[%s7 + $0x78] sm:$0xff]
        %v8247 = vld [vmem:[%s8] sm:$0x1]
        %8248 = vmatpush.msra.mxu0 %v8246
        %8249 = vmatpush.msra.mxu0 %v8245
        %8250 = vmatpush.msra.mxu0 %v8244
        %8251 = vmatpush.msra.mxu0 %v8243
        %8252 = vmatpush.msra.mxu0 %v8242
        %8253 = vmatpush.msra.mxu0 %v8241
        %8254 = vmatpush.msra.mxu0 %v8240
        %8255 = vmatpush.msra.mxu0 %v8239
        %8256 = vmatpush.msra.mxu0 %v8238
        %8257 = vmatpush.msra.mxu0 %v8237
        %8258 = vmatpush.msra.mxu0 %v8236
        %8259 = vmatpush.msra.mxu0 %v8235
        %8260 = vmatpush.msra.mxu0 %v8234
        %8261 = vmatpush.msra.mxu0 %v8233
        %8262 = vmatpush.msra.mxu0 %v8232
        %8263 = vmatpush.msra.mxu0 %v8231
        %8264 = vmatmul.f32.gmra.mxu0 %v8230
        %v8265 = vpop.f32.mrf.mxu0
        %v8266 = vadd.f32 %v8247, %v8265
        %8267 = vdwg.mxu0
        %vm8268 = vcmask 57344
        %8269 = vst.msk [vmem:[%s341] sm:$0x1] %vm8268, %v8266
        %s8270 = sand.u32 %s226, 1
        %s8271 = scalar_lea.sflag [#allocation8], %s8270
        %s8272 = sand.u32 %s226, 1
        %s8273 = scalar_lea.vmem [#allocation9], %s8272
        // Predicated region
        $region61: #{music_genre_cnn_forward.1} parent=55 // pred_check
          %p8274 = pneg %p236
        $region62: #{music_genre_cnn_forward.1} parent=55 // pred_check_branch
          %8276 = sbr.rel (%p8274) target = $region64
        $region63: #{music_genre_cnn_forward.1} parent=55 // pred_region
          %8278 = vsyncadd %s8271, 0
          %s8279 = scalar_lea.hbm %s9, %s24
          %s8281 = sshll.u32 %s8273, 4
          %s8282 = int_to_ptr.vmem [resolvable:$true] %s8281
          %s8283 = sshll.u32 %s8279, 4
          %s8284 = int_to_ptr.hbm [resolvable:$true] %s8283
          %8286 = dma.vmem_to_hbm [thread:$0]  %s8282, 16, %s8284, %s8271
        $region64: #{music_genre_cnn_forward.1} parent=55 // pred_fallthru
          _
      $region56: #{music_genre_cnn_forward.1} parent=5 // pred_fallthru
        _
      %p8287 = scmp.le.s32.totalorder 2, %s19
      // Predicated region
      $region65: #{music_genre_cnn_forward.1} parent=5 // pred_check
        %p8288 = pneg %p8287
      $region66: #{music_genre_cnn_forward.1} parent=5 // pred_check_branch
        %8290 = sbr.rel (%p8288) target = $region68
      $region67: #{music_genre_cnn_forward.1} parent=5 // pred_region
        %s8291 = ssub.s32 %s19, 2
        // Predicated region
        $region69: #{music_genre_cnn_forward.1} parent=67 // pred_check
          %p8292 = pneg %p242
        $region70: #{music_genre_cnn_forward.1} parent=67 // pred_check_branch
          %8294 = sbr.rel (%p8292) target = $region72
        $region71: #{music_genre_cnn_forward.1} parent=67 // pred_region
          %s8295 = sand.u32 %s227, 1
          %s8296 = scalar_lea.sflag [#allocation8], %s8295
          %s8297 = sand.u32 %s227, 1
          %s8298 = scalar_lea.vmem [#allocation9], %s8297
          %8300 = dma.done %s8296, 16
        $region72: #{music_genre_cnn_forward.1} parent=67 // pred_fallthru
          _
      $region68: #{music_genre_cnn_forward.1} parent=5 // pred_fallthru
        _
    $region6: #{music_genre_cnn_forward.1} parent=1 // loop_footer
      %s23 = sadd.s32 1, %s19
    $region7: #{music_genre_cnn_forward.1} parent=1 // loop_footer_branch
      %18 = sbr.rel target = $region3
    $region8: #{music_genre_cnn_forward.1} parent=1 // loop_exit
      _
    %8301 = vsyncpa [#allocation7], 1
    %s8302 = scalar_lea.sflag [#allocation7], 1
    %8303 = vsyncpa %s8302, 1
    %8304 = vsyncpa [#allocation8], 1
    %s8305 = scalar_lea.sflag [#allocation8], 1
    %8306 = vsyncpa %s8305, 1

</llo_original>
